<compile_context>
chip_gen: v7x
topology: tpu7x:2x2x1
jax: 0.10.0
libtpu: 0.0.40
codegen_flags: <defaults>
</compile_context>

<pallas_src>
import functools

import numpy as np
import jax
import jax.numpy as jnp
from jax import lax
from jax.experimental import pallas as pl
from jax.experimental.pallas import tpu as pltpu

_EPS = 1e-5     # torch.nn.LayerNorm default eps
_BIG = 1e30     # additive "-inf" for masked (sparse) softmax entries

# MXU operands are bf16 (with f32 accumulation) on TPU only; the CPU /
# interpret fallback stays f32 so no unsupported bf16xbf16->f32 dot is emitted.
_ON_TPU = jax.default_backend() == "tpu"
_CDT = jnp.bfloat16 if _ON_TPU else jnp.float32


def _round_up(v, m):
    return (v + m - 1) // m * m


def _cdiv(a, b):
    return (a + b - 1) // b


def _device_kind():
    if not _ON_TPU:
        return ""
    return jax.devices()[0].device_kind.lower()


def _tc_count():
    # v7x has two TensorCores per chip: make the parallel T axis splittable.
    return 2 if "v7" in _device_kind() else 1


def _vmem_budget():
    kind = _device_kind()
    if ("v5" in kind) or ("v6" in kind):
        return 100 << 20          # 128 MiB physical VMEM, leave compiler headroom
    if "v7" in kind:
        return 56 << 20           # 64 MiB per TC, leave compiler headroom
    return 56 << 20 if _ON_TPU else 64 << 20


def _resident(shape):
    nd = len(shape)
    return pl.BlockSpec(tuple(shape), lambda i, j: (0,) * nd)


# --------------------------------------------------------------------------
# Pallas kernels
# --------------------------------------------------------------------------
def _allset_block_kernel(mask_ref, alpha_ref, xv_ref, qs_ref,
                         g0_ref, be0_ref, w1_ref, b1_ref, w2_ref, b2_ref,
                         g1_ref, be1_ref, o_ref,
                         m_scr, l_scr, acc_scr, cnt_scr, *, heads, head_dim):
    """One AllSetTransformerBlock (+ layer-level ReLU) for a (T, S) tile pair.

    Grid = (target tiles [parallel], source tiles [arbitrary]).  Flash-style
    online softmax: running per-head max / denominator / weighted sum live in
    VMEM scratch across the S axis; the epilogue (seed-query skip, LayerNorms,
    MLP, ReLU) runs on the last S tile only.
    """
    f32 = jnp.float32
    j = pl.program_id(1)
    last_j = pl.num_programs(1) - 1

    @pl.when(j == 0)
    def _():
        m_scr[...] = jnp.full(m_scr.shape, -_BIG, f32)
        l_scr[...] = jnp.zeros(l_scr.shape, f32)
        acc_scr[...] = jnp.zeros(acc_scr.shape, f32)
        cnt_scr[...] = jnp.zeros(cnt_scr.shape, f32)

    mask = mask_ref[...].astype(f32)                     # (tT, tS)  0/1
    neg_bias = (mask - 1.0) * _BIG                       # 0 present, -1e30 absent
    cnt_scr[...] += jnp.sum(mask, axis=-1, keepdims=True)

    alpha = alpha_ref[...].astype(f32)                   # (Hpad, tS) pre-transposed
    xv = xv_ref[...]                                     # (tS, hidden)  x @ V
    cdt = xv.dtype
    C = head_dim

    m_prev = m_scr[...]                                  # (tT, heads)
    l_prev = l_scr[...]
    acc_prev = acc_scr[...]                              # (tT, hidden)

    m_cols, l_cols, acc_parts = [], [], []
    for h in range(heads):                               # static unroll (heads small)
        scores = neg_bias + alpha[h:h + 1, :]            # (tT, tS)
        m_old = m_prev[:, h:h + 1]
        m_new = jnp.maximum(m_old, jnp.max(scores, axis=-1, keepdims=True))
        corr = jnp.exp(m_old - m_new)                    # always <= 1
        e = jnp.exp(scores - m_new)                      # masked entries underflow to 0
        l_cols.append(corr * l_prev[:, h:h + 1]
                      + jnp.sum(e, axis=-1, keepdims=True))
        pv = jnp.dot(e.astype(cdt), xv[:, h * C:(h + 1) * C],
                     preferred_element_type=f32)         # (tT, C)
        acc_parts.append(corr * acc_prev[:, h * C:(h + 1) * C] + pv)
        m_cols.append(m_new)

    # Single lane-dense slab stores of the running state (no per-head vst.msk).
    m_scr[...] = jnp.concatenate(m_cols, axis=-1)
    l_scr[...] = jnp.concatenate(l_cols, axis=-1)
    acc_scr[...] = jnp.concatenate(acc_parts, axis=-1)

    @pl.when(j == last_j)
    def _():
        # Deferred per-head normalization via EUP approx reciprocal; rows with
        # no incident sources (incl. padded target rows) are zeroed via `valid`.
        valid = (cnt_scr[...] > 0.0).astype(f32)         # (tT, 1)
        msg = jnp.concatenate(
            [acc_parts[h] * pl.reciprocal(l_cols[h], approx=True)
             for h in range(heads)], axis=-1)            # (tT, hidden)
        y = msg * valid + qs_ref[...]                    # seed-query skip connection

        # LayerNorm ln0 (f32)
        mu = jnp.mean(y, axis=-1, keepdims=True)
        var = jnp.mean((y - mu) ** 2, axis=-1, keepdims=True)
        y = (y - mu) * lax.rsqrt(var + _EPS) * g0_ref[...] + be0_ref[...]

        # MLP: Linear -> ReLU -> Linear (mlp_num_layers=2, mlp_dropout=0.0)
        h1 = jnp.maximum(
            jnp.dot(y.astype(cdt), w1_ref[...], preferred_element_type=f32)
            + b1_ref[...], 0.0)
        h2 = jnp.dot(h1.astype(cdt), w2_ref[...],
                     preferred_element_type=f32) + b2_ref[...]

        # Residual + ReLU, LayerNorm ln1
        z = y + jnp.maximum(h2, 0.0)
        mu = jnp.mean(z, axis=-1, keepdims=True)
        var = jnp.mean((z - mu) ** 2, axis=-1, keepdims=True)
        z = (z - mu) * lax.rsqrt(var + _EPS) * g1_ref[...] + be1_ref[...]

        # sum over number_queries=1 is identity; ReLU from AllSetTransformerLayer.
        # TODO(synk): F.dropout (p=0.2) after the ReLU omitted (inference mode).
        o_ref[...] = jnp.maximum(z, 0.0).astype(o_ref.dtype)


def _head_kernel(x_ref, w_ref, b_ref, o_ref, mx_ref):
    """Running max-pool over target tiles, then sigmoid(Linear(.)) on last tile."""
    @pl.when(pl.program_id(0) == 0)
    def _():
        mx_ref[...] = jnp.full(mx_ref.shape, -jnp.inf, mx_ref.dtype)

    mx_ref[...] = jnp.maximum(
        mx_ref[...],
        jnp.max(x_ref[...].astype(jnp.float32), axis=0, keepdims=True))

    @pl.when(pl.program_id(0) == pl.num_programs(0) - 1)
    def _():
        pooled = mx_ref[...].astype(w_ref.dtype)
        logits = jnp.dot(pooled, w_ref[...],
                         preferred_element_type=jnp.float32) + b_ref[...]
        o_ref[...] = jax.nn.sigmoid(logits)


# --------------------------------------------------------------------------
# Wrappers
# --------------------------------------------------------------------------
def allset_block(x, mask, p, *, heads, head_dim, tile_t=512, tile_s=1024):
    """One attention block: targets = rows(mask), sources = cols(mask)."""
    T, S = mask.shape
    hidden = heads * head_dim
    f32 = jnp.float32
    cdt = _CDT

    # ---- grid-invariant source projections, hoisted out of the kernel ----
    x_c = x.astype(cdt)
    alpha_t = jnp.dot(x_c, p["KQ"].astype(cdt),
                      preferred_element_type=f32).T                 # (Hpad, S)
    xv = jnp.dot(x_c, p["Vflat"].astype(cdt),
                 preferred_element_type=f32).astype(cdt)             # (S, hidden)
    Hpad = alpha_t.shape[0]

    # ---- tiling: int8 mask => T tiles multiple of 32, S tiles of 128 ----
    t_align, s_align = 32, 128
    tT = min(_round_up(int(tile_t), t_align),
             _round_up(_cdiv(T, _tc_count()), t_align))   # grid_t >= 2 on v7x
    Tp = _round_up(T, tT)
    grid_t = Tp // tT
    tS = min(_round_up(int(tile_s), s_align), _round_up(S, s_align))
    Sp = _round_up(S, tS)
    grid_s = Sp // tS

    if (Tp, Sp) != (T, S):                       # padded rows/cols are fully masked
        mask = jnp.pad(mask, ((0, Tp - T), (0, Sp - S)))
    if Sp != S:
        alpha_t = jnp.pad(alpha_t, ((0, 0), (0, Sp - S)))
        xv = jnp.pad(xv, ((0, Sp - S), (0, 0)))

    w1 = p["W1"].astype(cdt)
    w2 = p["W2"].astype(cdt)
    args = (mask, alpha_t, xv, p["Qskip"], p["g0"], p["b0"],
            w1, p["b1"], w2, p["b2"], p["g1"], p["b1n"])
    in_specs = [pl.BlockSpec((tT, tS), lambda i, j: (i, j)),
                pl.BlockSpec((Hpad, tS), lambda i, j: (0, j)),
                pl.BlockSpec((tS, hidden), lambda i, j: (j, 0))]
    in_specs += [_resident(a.shape) for a in args[3:]]
    out_spec = pl.BlockSpec((tT, hidden), lambda i, j: (i, 0))

    cb = jnp.dtype(cdt).itemsize
    vmem_need = (2 * tT * tS                                    # int8 mask tile x2 buf
                 + 2 * Hpad * tS * 4                            # alpha tile (f32) x2
                 + 2 * tS * hidden * cb                         # xV tile x2
                 + 2 * tT * hidden * cb                         # output tile x2
                 + 4 * tT * tS * 4                              # live f32 score/exp temps
                 + 2 * (2 * hidden * hidden * cb + 8 * hidden * 4)  # residents x2
                 + tT * (3 * 128 + hidden) * 4)                 # scratch (lane padded)
    vmem_limit = int(min(max(vmem_need + (8 << 20), 32 << 20), _vmem_budget()))

    cost = pl.CostEstimate(
        flops=int(2 * Tp * Sp * hidden + 4 * Tp * hidden * hidden),
        transcendentals=int(Tp * Sp * heads),
        bytes_accessed=int(Tp * Sp
                           + grid_t * Sp * (Hpad * 4 + hidden * cb)
                           + Tp * hidden * cb
                           + grid_t * grid_s * 2 * hidden * hidden * cb),
    )

    kernel = functools.partial(_allset_block_kernel, heads=heads,
                               head_dim=head_dim)
    out = pl.pallas_call(
        kernel,
        grid=(grid_t, grid_s),
        in_specs=in_specs,
        out_specs=out_spec,
        out_shape=jax.ShapeDtypeStruct((Tp, hidden), cdt),      # bf16 on TPU
        scratch_shapes=[pltpu.VMEM((tT, heads), f32),            # running max
                        pltpu.VMEM((tT, heads), f32),            # running denom
                        pltpu.VMEM((tT, hidden), f32),           # running acc
                        pltpu.VMEM((tT, 1), f32)],               # mask row count
        compiler_params=pltpu.CompilerParams(
            dimension_semantics=("parallel", "arbitrary"),
            vmem_limit_bytes=vmem_limit),
        cost_estimate=cost,
    )(*args)
    return out[:T] if Tp != T else out


def allset_head(x, W, b, *, tile_t=512):
    # TODO(synk): fusing this max-pool + sigmoid head into the epilogue of the
    # final e2v block would save one launch + one (T, hidden) HBM re-read.
    T, hidden = x.shape
    out_ch = W.shape[1]
    tT = min(_round_up(int(tile_t), 32), _round_up(T, 32))
    Tp = _round_up(T, tT)
    if Tp != T:                                   # -inf padding: neutral for max-pool
        x = jnp.pad(x, ((0, Tp - T), (0, 0)), constant_values=-jnp.inf)

    out = pl.pallas_call(
        _head_kernel,
        grid=(Tp // tT,),
        in_specs=[pl.BlockSpec((tT, hidden), lambda i: (i, 0)),
                  pl.BlockSpec(W.shape, lambda i: (0, 0)),
                  pl.BlockSpec(b.shape, lambda i: (0, 0))],
        out_specs=pl.BlockSpec((1, out_ch), lambda i: (0, 0)),
        out_shape=jax.ShapeDtypeStruct((1, out_ch), jnp.float32),
        scratch_shapes=[pltpu.VMEM((1, hidden), jnp.float32)],
        compiler_params=pltpu.CompilerParams(
            dimension_semantics=("arbitrary",)),     # running-max carry
    )(x, W.astype(_CDT), b)
    return out[0, 0]


@functools.partial(jax.jit,
                   static_argnames=("heads", "head_dim", "tile_t", "tile_s"))
def allset_transformer_forward(x0, incidence, params, *, heads, head_dim,
                               tile_t=512, tile_s=1024):
    # Dense 0/1 incidence streamed as int8 (1 byte/element); transposed once,
    # reused by every layer.
    inc = incidence.astype(jnp.int8)
    inc_t = inc.T
    x = x0
    for lp in params["layers"]:
        x1 = allset_block(x, inc_t, lp["v2e"], heads=heads, head_dim=head_dim,
                          tile_t=tile_t, tile_s=tile_s)
        x = allset_block(x1, inc, lp["e2v"], heads=heads, head_dim=head_dim,
                         tile_t=tile_t, tile_s=tile_s)
    return allset_head(x, params["W_lin"], params["b_lin"], tile_t=tile_t)


# --------------------------------------------------------------------------
# Deterministic parameter construction
# --------------------------------------------------------------------------
def init_block_params(key, in_dim, hidden, heads):
    C = hidden // heads
    ks = jax.random.split(key, 7)
    K = jax.random.normal(ks[0], (heads, in_dim, C), jnp.float32) / np.sqrt(in_dim)
    Q = jax.random.normal(ks[1], (heads, 1, C), jnp.float32) / np.sqrt(C)
    V = jax.random.normal(ks[2], (heads, in_dim, C), jnp.float32) / np.sqrt(in_dim)
    W1 = jax.random.normal(ks[3], (hidden, hidden), jnp.float32) / np.sqrt(hidden)
    b1 = jax.random.normal(ks[4], (1, hidden), jnp.float32) * 0.02
    W2 = jax.random.normal(ks[5], (hidden, hidden), jnp.float32) / np.sqrt(hidden)
    b2 = jax.random.normal(ks[6], (1, hidden), jnp.float32) * 0.02
    g0 = jnp.ones((1, hidden), jnp.float32); b0 = jnp.zeros((1, hidden), jnp.float32)
    g1 = jnp.ones((1, hidden), jnp.float32); b1n = jnp.zeros((1, hidden), jnp.float32)

    # Kernel-friendly packings (pure glue, computed once).
    Hpad = max(8, _round_up(heads, 8))
    kq = jnp.einsum("hdc,hc->dh", K, Q[:, 0, :])               # K folded into K@q
    KQ = jnp.zeros((in_dim, Hpad), jnp.float32).at[:, :heads].set(kq)
    Vflat = jnp.transpose(V, (1, 0, 2)).reshape(in_dim, hidden)  # head-major cols
    Qskip = Q.reshape(1, hidden)                               # head-major skip
    return dict(K=K, Q=Q, V=V, W1=W1, b1=b1, W2=W2, b2=b2,
                g0=g0, b0=b0, g1=g1, b1n=b1n,
                KQ=KQ, Vflat=Vflat, Qskip=Qskip)


# --------------------------------------------------------------------------
# Pure-JAX f32 reference (mirrors the PyTorch dense semantics) for validation
# --------------------------------------------------------------------------
def _ln(x, g, b):
    mu = jnp.mean(x, axis=-1, keepdims=True)
    var = jnp.mean((x - mu) ** 2, axis=-1, keepdims=True)
    return (x - mu) / jnp.sqrt(var + _EPS) * g + b


def _block_ref(x, mask, p, heads, head_dim):
    hidden = heads * head_dim
    K, Q, V = p["K"], p["Q"], p["V"]
    xK = jnp.einsum("sd,hdc->hsc", x, K)
    alpha = jnp.einsum("hqc,hsc->hqs", Q, xK)[:, 0, :]                  # (H, S)
    scores = jnp.where(mask[:, None, :] > 0, alpha[None, :, :], -_BIG)  # (T, H, S)
    w = jax.nn.softmax(scores, axis=-1) * mask[:, None, :]
    xV = jnp.einsum("sd,hdc->hsc", x, V)
    msg = jnp.einsum("ths,hsc->thc", w, xV)                             # (T, H, C)
    y = (msg + Q[None, :, 0, :]).reshape(-1, hidden)                    # head-major
    y = _ln(y, p["g0"], p["b0"])
    m = jnp.maximum(y @ p["W1"] + p["b1"], 0.0) @ p["W2"] + p["b2"]
    z = _ln(y + jnp.maximum(m, 0.0), p["g1"], p["b1n"])
    return jnp.maximum(z, 0.0)      # ReLU from the layer


def _forward_ref(x0, inc, params, heads, head_dim):
    for lp in params["layers"]:
        x1 = _block_ref(x0, inc.T, lp["v2e"], heads, head_dim)
        x0 = _block_ref(x1, inc, lp["e2v"], heads, head_dim)
    pooled = jnp.max(x0, axis=0)
    return jax.nn.sigmoid(pooled @ params["W_lin"] + params["b_lin"][0])[0]


# --------------------------------------------------------------------------
if __name__ == "__main__":
    n_nodes, n_edges = 160, 48
    in_ch, hidden, out_ch, heads, n_layers = 8, 32, 4, 4, 1
    head_dim = hidden // heads

    key = jax.random.PRNGKey(0)
    kx, kinc, kp = jax.random.split(key, 3)

    x_0 = jax.random.normal(kx, (n_nodes, in_ch), jnp.float32)
    inc = (jax.random.uniform(kinc, (n_nodes, n_edges)) < 0.2).astype(jnp.float32)
    # guarantee every node is in >=1 edge and every edge has >=1 node
    inc = jnp.maximum(inc, jax.nn.one_hot(jnp.arange(n_nodes) % n_edges,
                                          n_edges, dtype=jnp.float32))

    lkeys = jax.random.split(kp, n_layers * 2 + 1)
    layers = []
    d_in = in_ch
    for li in range(n_layers):
        layers.append(dict(
            v2e=init_block_params(lkeys[2 * li], d_in, hidden, heads),
            e2v=init_block_params(lkeys[2 * li + 1], hidden, hidden, heads)))
        d_in = hidden
    W_lin = jax.random.normal(lkeys[-1], (hidden, out_ch),
                              jnp.float32) / np.sqrt(hidden)
    b_lin = jnp.zeros((1, out_ch), jnp.float32)
    params = dict(layers=layers, W_lin=W_lin, b_lin=b_lin)

    ref = _forward_ref(x_0, inc, params, heads, head_dim)

    # default tiling: one (tT, tS) tile per block (exercises the padding paths)
    out = allset_transformer_forward(x_0, inc, params, heads=heads,
                                     head_dim=head_dim)
    out = jax.block_until_ready(out)
    np.testing.assert_allclose(np.asarray(out), np.asarray(ref),
                               rtol=5e-2, atol=5e-2)
    assert np.isfinite(np.asarray(out)).all()

    # small tiles: exercises the 2-D grid (multiple target AND source tiles),
    # the online softmax across source tiles, and the padded-tail paths
    out_tiled = allset_transformer_forward(x_0, inc, params, heads=heads,
                                           head_dim=head_dim,
                                           tile_t=32, tile_s=128)
    out_tiled = jax.block_until_ready(out_tiled)
    np.testing.assert_allclose(np.asarray(out_tiled), np.asarray(ref),
                               rtol=5e-2, atol=5e-2)

    print("KERNEL_OK")
</pallas_src>

<mosaic_0001>
module attributes {stable_mosaic.version = 11 : i64} {
  func.func @_allset_block_kernel(%arg0: i32, %arg1: i32, %arg2: memref<64x256xi8, #tpu.memory_space<vmem>>, %arg3: memref<8x256xf32, #tpu.memory_space<vmem>>, %arg4: memref<256x32xf32, #tpu.memory_space<vmem>>, %arg5: memref<1x32xf32, #tpu.memory_space<vmem>>, %arg6: memref<1x32xf32, #tpu.memory_space<vmem>>, %arg7: memref<1x32xf32, #tpu.memory_space<vmem>>, %arg8: memref<32x32xf32, #tpu.memory_space<vmem>>, %arg9: memref<1x32xf32, #tpu.memory_space<vmem>>, %arg10: memref<32x32xf32, #tpu.memory_space<vmem>>, %arg11: memref<1x32xf32, #tpu.memory_space<vmem>>, %arg12: memref<1x32xf32, #tpu.memory_space<vmem>>, %arg13: memref<1x32xf32, #tpu.memory_space<vmem>>, %arg14: memref<64x32xf32, #tpu.memory_space<vmem>>, %arg15: memref<64x4xf32, #tpu.memory_space<vmem>>, %arg16: memref<64x4xf32, #tpu.memory_space<vmem>>, %arg17: memref<64x32xf32, #tpu.memory_space<vmem>>, %arg18: memref<64x1xf32, #tpu.memory_space<vmem>>) attributes {dimension_semantics = [#tpu.dimension_semantics<parallel>, #tpu.dimension_semantics<arbitrary>], iteration_bounds = array<i64: 1, 1>, scalar_prefetch = 0 : i64, scratch_operands = 4 : i64, tpu.core_type = #tpu.core_type<tc>, window_params = [{transform_indices = @transform_0, window_bounds = array<i64: 64, 256>}, {transform_indices = @transform_1, window_bounds = array<i64: 8, 256>}, {transform_indices = @transform_2, window_bounds = array<i64: 256, 32>}, {pipeline_mode = #tpu.pipeline_mode<synchronous>, transform_indices = @transform_3, window_bounds = array<i64: 1, 32>}, {pipeline_mode = #tpu.pipeline_mode<synchronous>, transform_indices = @transform_4, window_bounds = array<i64: 1, 32>}, {pipeline_mode = #tpu.pipeline_mode<synchronous>, transform_indices = @transform_5, window_bounds = array<i64: 1, 32>}, {pipeline_mode = #tpu.pipeline_mode<synchronous>, transform_indices = @transform_6, window_bounds = array<i64: 32, 32>}, {pipeline_mode = #tpu.pipeline_mode<synchronous>, transform_indices = @transform_7, window_bounds = array<i64: 1, 32>}, {pipeline_mode = #tpu.pipeline_mode<synchronous>, transform_indices = @transform_8, window_bounds = array<i64: 32, 32>}, {pipeline_mode = #tpu.pipeline_mode<synchronous>, transform_indices = @transform_9, window_bounds = array<i64: 1, 32>}, {pipeline_mode = #tpu.pipeline_mode<synchronous>, transform_indices = @transform_10, window_bounds = array<i64: 1, 32>}, {pipeline_mode = #tpu.pipeline_mode<synchronous>, transform_indices = @transform_11, window_bounds = array<i64: 1, 32>}, {transform_indices = @transform_12, window_bounds = array<i64: 64, 32>}]} {
    %c0_i32 = arith.constant 0 : i32
    %0 = arith.cmpi eq, %arg1, %c0_i32 : i32
    %1 = arith.extui %0 : i1 to i32
    %c0_i32_0 = arith.constant 0 : i32
    %2 = arith.cmpi ne, %1, %c0_i32_0 : i32
    scf.if %2 {
      %cst_38 = arith.constant -1.000000e+30 : f32
      %120 = vector.broadcast %cst_38 : f32 to vector<64x4xf32>
      %c0_39 = arith.constant 0 : index
      %c0_40 = arith.constant 0 : index
      %121 = vector.load %arg15[%c0_39, %c0_40] : memref<64x4xf32, #tpu.memory_space<vmem>>, vector<64x4xf32>
      tpu.vector_store %arg15[%c0_39, %c0_40], %120 {strides = array<i32>} : memref<64x4xf32, #tpu.memory_space<vmem>>, vector<64x4xf32>,
      %cst_41 = arith.constant 0.000000e+00 : f32
      %122 = vector.broadcast %cst_41 : f32 to vector<64x4xf32>
      %c0_42 = arith.constant 0 : index
      %c0_43 = arith.constant 0 : index
      %123 = vector.load %arg16[%c0_42, %c0_43] : memref<64x4xf32, #tpu.memory_space<vmem>>, vector<64x4xf32>
      tpu.vector_store %arg16[%c0_42, %c0_43], %122 {strides = array<i32>} : memref<64x4xf32, #tpu.memory_space<vmem>>, vector<64x4xf32>,
      %cst_44 = arith.constant 0.000000e+00 : f32
      %124 = vector.broadcast %cst_44 : f32 to vector<64x32xf32>
      %c0_45 = arith.constant 0 : index
      %c0_46 = arith.constant 0 : index
      %125 = vector.load %arg17[%c0_45, %c0_46] : memref<64x32xf32, #tpu.memory_space<vmem>>, vector<64x32xf32>
      tpu.vector_store %arg17[%c0_45, %c0_46], %124 {strides = array<i32>} : memref<64x32xf32, #tpu.memory_space<vmem>>, vector<64x32xf32>,
      %cst_47 = arith.constant 0.000000e+00 : f32
      %126 = vector.broadcast %cst_47 : f32 to vector<64x1xf32>
      %c0_48 = arith.constant 0 : index
      %c0_49 = arith.constant 0 : index
      %127 = vector.load %arg18[%c0_48, %c0_49] : memref<64x1xf32, #tpu.memory_space<vmem>>, vector<64x1xf32>
      tpu.vector_store %arg18[%c0_48, %c0_49], %126 {strides = array<i32>} : memref<64x1xf32, #tpu.memory_space<vmem>>, vector<64x1xf32>,
    } else {
    }
    %c0 = arith.constant 0 : index
    %c0_1 = arith.constant 0 : index
    %3 = vector.load %arg2[%c0, %c0_1] : memref<64x256xi8, #tpu.memory_space<vmem>>, vector<64x256xi8>
    %4 = arith.sitofp %3 : vector<64x256xi8> to vector<64x256xf32>
    %cst = arith.constant 1.000000e+00 : f32
    %5 = vector.broadcast %cst : f32 to vector<64x256xf32>
    %6 = arith.subf %4, %5 : vector<64x256xf32>
    %cst_2 = arith.constant 1.000000e+30 : f32
    %7 = vector.broadcast %cst_2 : f32 to vector<64x256xf32>
    %8 = arith.mulf %6, %7 : vector<64x256xf32>
    %c0_3 = arith.constant 0 : index
    %c0_4 = arith.constant 0 : index
    %9 = vector.load %arg18[%c0_3, %c0_4] : memref<64x1xf32, #tpu.memory_space<vmem>>, vector<64x1xf32>
    %cst_5 = arith.constant dense<0.000000e+00> : vector<64xf32>
    %10 = vector.multi_reduction <add>, %4, %cst_5 [1] : vector<64x256xf32> to vector<64xf32>
    %11 = vector.shape_cast %10 : vector<64xf32> to vector<64x1xf32>
    %12 = arith.addf %9, %11 : vector<64x1xf32>
    %c0_6 = arith.constant 0 : index
    %c0_7 = arith.constant 0 : index
    %13 = vector.load %arg18[%c0_6, %c0_7] : memref<64x1xf32, #tpu.memory_space<vmem>>, vector<64x1xf32>
    tpu.vector_store %arg18[%c0_6, %c0_7], %12 {strides = array<i32>} : memref<64x1xf32, #tpu.memory_space<vmem>>, vector<64x1xf32>,
    %c0_8 = arith.constant 0 : index
    %c0_9 = arith.constant 0 : index
    %14 = vector.load %arg3[%c0_8, %c0_9] : memref<8x256xf32, #tpu.memory_space<vmem>>, vector<8x256xf32>
    %c0_10 = arith.constant 0 : index
    %c0_11 = arith.constant 0 : index
    %15 = vector.load %arg4[%c0_10, %c0_11] : memref<256x32xf32, #tpu.memory_space<vmem>>, vector<256x32xf32>
    %c0_12 = arith.constant 0 : index
    %c0_13 = arith.constant 0 : index
    %16 = vector.load %arg15[%c0_12, %c0_13] : memref<64x4xf32, #tpu.memory_space<vmem>>, vector<64x4xf32>
    %c0_14 = arith.constant 0 : index
    %c0_15 = arith.constant 0 : index
    %17 = vector.load %arg16[%c0_14, %c0_15] : memref<64x4xf32, #tpu.memory_space<vmem>>, vector<64x4xf32>
    %c0_16 = arith.constant 0 : index
    %c0_17 = arith.constant 0 : index
    %18 = vector.load %arg17[%c0_16, %c0_17] : memref<64x32xf32, #tpu.memory_space<vmem>>, vector<64x32xf32>
    %19 = vector.extract_strided_slice %14 {offsets = [0, 0], sizes = [1, 256], strides = [1, 1]} : vector<8x256xf32> to vector<1x256xf32>
    %20 = vector.broadcast %19 : vector<1x256xf32> to vector<64x256xf32>
    %21 = arith.addf %8, %20 : vector<64x256xf32>
    %22 = vector.extract_strided_slice %16 {offsets = [0, 0], sizes = [64, 1], strides = [1, 1]} : vector<64x4xf32> to vector<64x1xf32>
    %cst_18 = arith.constant dense<0xFF800000> : vector<64xf32>
    %23 = vector.multi_reduction <maximumf>, %21, %cst_18 [1] : vector<64x256xf32> to vector<64xf32>
    %24 = vector.shape_cast %23 : vector<64xf32> to vector<64x1xf32>
    %25 = arith.maximumf %22, %24 : vector<64x1xf32>
    %26 = arith.subf %22, %25 : vector<64x1xf32>
    %27 = math.exp %26 : vector<64x1xf32>
    %28 = vector.broadcast %25 : vector<64x1xf32> to vector<64x256xf32>
    %29 = arith.subf %21, %28 : vector<64x256xf32>
    %30 = math.exp %29 : vector<64x256xf32>
    %31 = vector.extract_strided_slice %17 {offsets = [0, 0], sizes = [64, 1], strides = [1, 1]} : vector<64x4xf32> to vector<64x1xf32>
    %32 = arith.mulf %27, %31 : vector<64x1xf32>
    %cst_19 = arith.constant dense<0.000000e+00> : vector<64xf32>
    %33 = vector.multi_reduction <add>, %30, %cst_19 [1] : vector<64x256xf32> to vector<64xf32>
    %34 = vector.shape_cast %33 : vector<64xf32> to vector<64x1xf32>
    %35 = arith.addf %32, %34 : vector<64x1xf32>
    %36 = vector.extract_strided_slice %15 {offsets = [0, 0], sizes = [256, 8], strides = [1, 1]} : vector<256x32xf32> to vector<256x8xf32>
    %cst_20 = arith.constant dense<0.000000e+00> : vector<64x8xf32>
    %37 = tpu.matmul %30, %36, %cst_20 {dimension_numbers = #tpu.dot_dimension_numbers<[1], [0], [0], [1], [0, 0, 1, 1], [], []>} : vector<64x256xf32>, vector<256x8xf32>, vector<64x8xf32> -> vector<64x8xf32>
    %38 = vector.extract_strided_slice %18 {offsets = [0, 0], sizes = [64, 8], strides = [1, 1]} : vector<64x32xf32> to vector<64x8xf32>
    %39 = vector.broadcast %27 : vector<64x1xf32> to vector<64x8xf32>
    %40 = arith.mulf %39, %38 : vector<64x8xf32>
    %41 = arith.addf %40, %37 : vector<64x8xf32>
    %42 = vector.extract_strided_slice %14 {offsets = [1, 0], sizes = [1, 256], strides = [1, 1]} : vector<8x256xf32> to vector<1x256xf32>
    %43 = vector.broadcast %42 : vector<1x256xf32> to vector<64x256xf32>
    %44 = arith.addf %8, %43 : vector<64x256xf32>
    %45 = vector.extract_strided_slice %16 {offsets = [0, 1], sizes = [64, 1], strides = [1, 1]} : vector<64x4xf32> to vector<64x1xf32>
    %cst_21 = arith.constant dense<0xFF800000> : vector<64xf32>
    %46 = vector.multi_reduction <maximumf>, %44, %cst_21 [1] : vector<64x256xf32> to vector<64xf32>
    %47 = vector.shape_cast %46 : vector<64xf32> to vector<64x1xf32>
    %48 = arith.maximumf %45, %47 : vector<64x1xf32>
    %49 = arith.subf %45, %48 : vector<64x1xf32>
    %50 = math.exp %49 : vector<64x1xf32>
    %51 = vector.broadcast %48 : vector<64x1xf32> to vector<64x256xf32>
    %52 = arith.subf %44, %51 : vector<64x256xf32>
    %53 = math.exp %52 : vector<64x256xf32>
    %54 = vector.extract_strided_slice %17 {offsets = [0, 1], sizes = [64, 1], strides = [1, 1]} : vector<64x4xf32> to vector<64x1xf32>
    %55 = arith.mulf %50, %54 : vector<64x1xf32>
    %cst_22 = arith.constant dense<0.000000e+00> : vector<64xf32>
    %56 = vector.multi_reduction <add>, %53, %cst_22 [1] : vector<64x256xf32> to vector<64xf32>
    %57 = vector.shape_cast %56 : vector<64xf32> to vector<64x1xf32>
    %58 = arith.addf %55, %57 : vector<64x1xf32>
    %59 = vector.extract_strided_slice %15 {offsets = [0, 8], sizes = [256, 8], strides = [1, 1]} : vector<256x32xf32> to vector<256x8xf32>
    %cst_23 = arith.constant dense<0.000000e+00> : vector<64x8xf32>
    %60 = tpu.matmul %53, %59, %cst_23 {dimension_numbers = #tpu.dot_dimension_numbers<[1], [0], [0], [1], [0, 0, 1, 1], [], []>} : vector<64x256xf32>, vector<256x8xf32>, vector<64x8xf32> -> vector<64x8xf32>
    %61 = vector.extract_strided_slice %18 {offsets = [0, 8], sizes = [64, 8], strides = [1, 1]} : vector<64x32xf32> to vector<64x8xf32>
    %62 = vector.broadcast %50 : vector<64x1xf32> to vector<64x8xf32>
    %63 = arith.mulf %62, %61 : vector<64x8xf32>
    %64 = arith.addf %63, %60 : vector<64x8xf32>
    %65 = vector.extract_strided_slice %14 {offsets = [2, 0], sizes = [1, 256], strides = [1, 1]} : vector<8x256xf32> to vector<1x256xf32>
    %66 = vector.broadcast %65 : vector<1x256xf32> to vector<64x256xf32>
    %67 = arith.addf %8, %66 : vector<64x256xf32>
    %68 = vector.extract_strided_slice %16 {offsets = [0, 2], sizes = [64, 1], strides = [1, 1]} : vector<64x4xf32> to vector<64x1xf32>
    %cst_24 = arith.constant dense<0xFF800000> : vector<64xf32>
    %69 = vector.multi_reduction <maximumf>, %67, %cst_24 [1] : vector<64x256xf32> to vector<64xf32>
    %70 = vector.shape_cast %69 : vector<64xf32> to vector<64x1xf32>
    %71 = arith.maximumf %68, %70 : vector<64x1xf32>
    %72 = arith.subf %68, %71 : vector<64x1xf32>
    %73 = math.exp %72 : vector<64x1xf32>
    %74 = vector.broadcast %71 : vector<64x1xf32> to vector<64x256xf32>
    %75 = arith.subf %67, %74 : vector<64x256xf32>
    %76 = math.exp %75 : vector<64x256xf32>
    %77 = vector.extract_strided_slice %17 {offsets = [0, 2], sizes = [64, 1], strides = [1, 1]} : vector<64x4xf32> to vector<64x1xf32>
    %78 = arith.mulf %73, %77 : vector<64x1xf32>
    %cst_25 = arith.constant dense<0.000000e+00> : vector<64xf32>
    %79 = vector.multi_reduction <add>, %76, %cst_25 [1] : vector<64x256xf32> to vector<64xf32>
    %80 = vector.shape_cast %79 : vector<64xf32> to vector<64x1xf32>
    %81 = arith.addf %78, %80 : vector<64x1xf32>
    %82 = vector.extract_strided_slice %15 {offsets = [0, 16], sizes = [256, 8], strides = [1, 1]} : vector<256x32xf32> to vector<256x8xf32>
    %cst_26 = arith.constant dense<0.000000e+00> : vector<64x8xf32>
    %83 = tpu.matmul %76, %82, %cst_26 {dimension_numbers = #tpu.dot_dimension_numbers<[1], [0], [0], [1], [0, 0, 1, 1], [], []>} : vector<64x256xf32>, vector<256x8xf32>, vector<64x8xf32> -> vector<64x8xf32>
    %84 = vector.extract_strided_slice %18 {offsets = [0, 16], sizes = [64, 8], strides = [1, 1]} : vector<64x32xf32> to vector<64x8xf32>
    %85 = vector.broadcast %73 : vector<64x1xf32> to vector<64x8xf32>
    %86 = arith.mulf %85, %84 : vector<64x8xf32>
    %87 = arith.addf %86, %83 : vector<64x8xf32>
    %88 = vector.extract_strided_slice %14 {offsets = [3, 0], sizes = [1, 256], strides = [1, 1]} : vector<8x256xf32> to vector<1x256xf32>
    %89 = vector.broadcast %88 : vector<1x256xf32> to vector<64x256xf32>
    %90 = arith.addf %8, %89 : vector<64x256xf32>
    %91 = vector.extract_strided_slice %16 {offsets = [0, 3], sizes = [64, 1], strides = [1, 1]} : vector<64x4xf32> to vector<64x1xf32>
    %cst_27 = arith.constant dense<0xFF800000> : vector<64xf32>
    %92 = vector.multi_reduction <maximumf>, %90, %cst_27 [1] : vector<64x256xf32> to vector<64xf32>
    %93 = vector.shape_cast %92 : vector<64xf32> to vector<64x1xf32>
    %94 = arith.maximumf %91, %93 : vector<64x1xf32>
    %95 = arith.subf %91, %94 : vector<64x1xf32>
    %96 = math.exp %95 : vector<64x1xf32>
    %97 = vector.broadcast %94 : vector<64x1xf32> to vector<64x256xf32>
    %98 = arith.subf %90, %97 : vector<64x256xf32>
    %99 = math.exp %98 : vector<64x256xf32>
    %100 = vector.extract_strided_slice %17 {offsets = [0, 3], sizes = [64, 1], strides = [1, 1]} : vector<64x4xf32> to vector<64x1xf32>
    %101 = arith.mulf %96, %100 : vector<64x1xf32>
    %cst_28 = arith.constant dense<0.000000e+00> : vector<64xf32>
    %102 = vector.multi_reduction <add>, %99, %cst_28 [1] : vector<64x256xf32> to vector<64xf32>
    %103 = vector.shape_cast %102 : vector<64xf32> to vector<64x1xf32>
    %104 = arith.addf %101, %103 : vector<64x1xf32>
    %105 = vector.extract_strided_slice %15 {offsets = [0, 24], sizes = [256, 8], strides = [1, 1]} : vector<256x32xf32> to vector<256x8xf32>
    %cst_29 = arith.constant dense<0.000000e+00> : vector<64x8xf32>
    %106 = tpu.matmul %99, %105, %cst_29 {dimension_numbers = #tpu.dot_dimension_numbers<[1], [0], [0], [1], [0, 0, 1, 1], [], []>} : vector<64x256xf32>, vector<256x8xf32>, vector<64x8xf32> -> vector<64x8xf32>
    %107 = vector.extract_strided_slice %18 {offsets = [0, 24], sizes = [64, 8], strides = [1, 1]} : vector<64x32xf32> to vector<64x8xf32>
    %108 = vector.broadcast %96 : vector<64x1xf32> to vector<64x8xf32>
    %109 = arith.mulf %108, %107 : vector<64x8xf32>
    %110 = arith.addf %109, %106 : vector<64x8xf32>
    %111 = tpu.concatenate %25, %48, %71, %94 in 1 : vector<64x1xf32>, vector<64x1xf32>, vector<64x1xf32>, vector<64x1xf32> -> vector<64x4xf32>
    %c0_30 = arith.constant 0 : index
    %c0_31 = arith.constant 0 : index
    %112 = vector.load %arg15[%c0_30, %c0_31] : memref<64x4xf32, #tpu.memory_space<vmem>>, vector<64x4xf32>
    tpu.vector_store %arg15[%c0_30, %c0_31], %111 {strides = array<i32>} : memref<64x4xf32, #tpu.memory_space<vmem>>, vector<64x4xf32>,
    %113 = tpu.concatenate %35, %58, %81, %104 in 1 : vector<64x1xf32>, vector<64x1xf32>, vector<64x1xf32>, vector<64x1xf32> -> vector<64x4xf32>
    %c0_32 = arith.constant 0 : index
    %c0_33 = arith.constant 0 : index
    %114 = vector.load %arg16[%c0_32, %c0_33] : memref<64x4xf32, #tpu.memory_space<vmem>>, vector<64x4xf32>
    tpu.vector_store %arg16[%c0_32, %c0_33], %113 {strides = array<i32>} : memref<64x4xf32, #tpu.memory_space<vmem>>, vector<64x4xf32>,
    %115 = tpu.concatenate %41, %64, %87, %110 in 1 : vector<64x8xf32>, vector<64x8xf32>, vector<64x8xf32>, vector<64x8xf32> -> vector<64x32xf32>
    %c0_34 = arith.constant 0 : index
    %c0_35 = arith.constant 0 : index
    %116 = vector.load %arg17[%c0_34, %c0_35] : memref<64x32xf32, #tpu.memory_space<vmem>>, vector<64x32xf32>
    tpu.vector_store %arg17[%c0_34, %c0_35], %115 {strides = array<i32>} : memref<64x32xf32, #tpu.memory_space<vmem>>, vector<64x32xf32>,
    %c0_i32_36 = arith.constant 0 : i32
    %117 = arith.cmpi eq, %arg1, %c0_i32_36 : i32
    %118 = arith.extui %117 : i1 to i32
    %c0_i32_37 = arith.constant 0 : i32
    %119 = arith.cmpi ne, %118, %c0_i32_37 : i32
    scf.if %119 {
      %c0_38 = arith.constant 0 : index
      %c0_39 = arith.constant 0 : index
      %120 = vector.load %arg18[%c0_38, %c0_39] : memref<64x1xf32, #tpu.memory_space<vmem>>, vector<64x1xf32>
      %cst_40 = arith.constant 0.000000e+00 : f32
      %121 = vector.broadcast %cst_40 : f32 to vector<64x1xf32>
      %122 = arith.cmpf ogt, %120, %121 : vector<64x1xf32>
      %123 = arith.extui %122 : vector<64x1xi1> to vector<64x1xi32>
      %124 = arith.sitofp %123 : vector<64x1xi32> to vector<64x1xf32>
      %125 = tpu.reciprocal %35 {approx = true} : vector<64x1xf32> -> vector<64x1xf32>
      %126 = vector.broadcast %125 : vector<64x1xf32> to vector<64x8xf32>
      %127 = arith.mulf %41, %126 : vector<64x8xf32>
      %128 = tpu.reciprocal %58 {approx = true} : vector<64x1xf32> -> vector<64x1xf32>
      %129 = vector.broadcast %128 : vector<64x1xf32> to vector<64x8xf32>
      %130 = arith.mulf %64, %129 : vector<64x8xf32>
      %131 = tpu.reciprocal %81 {approx = true} : vector<64x1xf32> -> vector<64x1xf32>
      %132 = vector.broadcast %131 : vector<64x1xf32> to vector<64x8xf32>
      %133 = arith.mulf %87, %132 : vector<64x8xf32>
      %134 = tpu.reciprocal %104 {approx = true} : vector<64x1xf32> -> vector<64x1xf32>
      %135 = vector.broadcast %134 : vector<64x1xf32> to vector<64x8xf32>
      %136 = arith.mulf %110, %135 : vector<64x8xf32>
      %137 = tpu.concatenate %127, %130, %133, %136 in 1 : vector<64x8xf32>, vector<64x8xf32>, vector<64x8xf32>, vector<64x8xf32> -> vector<64x32xf32>
      %138 = vector.broadcast %124 : vector<64x1xf32> to vector<64x32xf32>
      %139 = arith.mulf %137, %138 : vector<64x32xf32>
      %c0_41 = arith.constant 0 : index
      %c0_42 = arith.constant 0 : index
      %140 = vector.load %arg5[%c0_41, %c0_42] : memref<1x32xf32, #tpu.memory_space<vmem>>, vector<1x32xf32>
      %141 = vector.broadcast %140 : vector<1x32xf32> to vector<64x32xf32>
      %142 = arith.addf %139, %141 : vector<64x32xf32>
      %cst_43 = arith.constant dense<0.000000e+00> : vector<64xf32>
      %143 = vector.multi_reduction <add>, %142, %cst_43 [1] : vector<64x32xf32> to vector<64xf32>
      %144 = vector.shape_cast %143 : vector<64xf32> to vector<64x1xf32>
      %cst_44 = arith.constant 3.200000e+01 : f32
      %145 = vector.broadcast %cst_44 : f32 to vector<64x1xf32>
      %146 = arith.divf %144, %145 : vector<64x1xf32>
      %147 = vector.broadcast %146 : vector<64x1xf32> to vector<64x32xf32>
      %148 = arith.subf %142, %147 : vector<64x32xf32>
      %149 = arith.mulf %148, %148 : vector<64x32xf32>
      %cst_45 = arith.constant dense<0.000000e+00> : vector<64xf32>
      %150 = vector.multi_reduction <add>, %149, %cst_45 [1] : vector<64x32xf32> to vector<64xf32>
      %151 = vector.shape_cast %150 : vector<64xf32> to vector<64x1xf32>
      %cst_46 = arith.constant 3.200000e+01 : f32
      %152 = vector.broadcast %cst_46 : f32 to vector<64x1xf32>
      %153 = arith.divf %151, %152 : vector<64x1xf32>
      %154 = vector.broadcast %146 : vector<64x1xf32> to vector<64x32xf32>
      %155 = arith.subf %142, %154 : vector<64x32xf32>
      %cst_47 = arith.constant 9.99999974E-6 : f32
      %156 = vector.broadcast %cst_47 : f32 to vector<64x1xf32>
      %157 = arith.addf %153, %156 : vector<64x1xf32>
      %158 = math.rsqrt %157 : vector<64x1xf32>
      %159 = vector.broadcast %158 : vector<64x1xf32> to vector<64x32xf32>
      %160 = arith.mulf %155, %159 : vector<64x32xf32>
      %c0_48 = arith.constant 0 : index
      %c0_49 = arith.constant 0 : index
      %161 = vector.load %arg6[%c0_48, %c0_49] : memref<1x32xf32, #tpu.memory_space<vmem>>, vector<1x32xf32>
      %162 = vector.broadcast %161 : vector<1x32xf32> to vector<64x32xf32>
      %163 = arith.mulf %160, %162 : vector<64x32xf32>
      %c0_50 = arith.constant 0 : index
      %c0_51 = arith.constant 0 : index
      %164 = vector.load %arg7[%c0_50, %c0_51] : memref<1x32xf32, #tpu.memory_space<vmem>>, vector<1x32xf32>
      %165 = vector.broadcast %164 : vector<1x32xf32> to vector<64x32xf32>
      %166 = arith.addf %163, %165 : vector<64x32xf32>
      %c0_52 = arith.constant 0 : index
      %c0_53 = arith.constant 0 : index
      %167 = vector.load %arg8[%c0_52, %c0_53] : memref<32x32xf32, #tpu.memory_space<vmem>>, vector<32x32xf32>
      %cst_54 = arith.constant dense<0.000000e+00> : vector<64x32xf32>
      %168 = tpu.matmul %166, %167, %cst_54 {dimension_numbers = #tpu.dot_dimension_numbers<[1], [0], [0], [1], [0, 0, 1, 1], [], []>} : vector<64x32xf32>, vector<32x32xf32>, vector<64x32xf32> -> vector<64x32xf32>
      %c0_55 = arith.constant 0 : index
      %c0_56 = arith.constant 0 : index
      %169 = vector.load %arg9[%c0_55, %c0_56] : memref<1x32xf32, #tpu.memory_space<vmem>>, vector<1x32xf32>
      %170 = vector.broadcast %169 : vector<1x32xf32> to vector<64x32xf32>
      %171 = arith.addf %168, %170 : vector<64x32xf32>
      %cst_57 = arith.constant 0.000000e+00 : f32
      %172 = vector.broadcast %cst_57 : f32 to vector<64x32xf32>
      %173 = arith.maximumf %171, %172 : vector<64x32xf32>
      %c0_58 = arith.constant 0 : index
      %c0_59 = arith.constant 0 : index
      %174 = vector.load %arg10[%c0_58, %c0_59] : memref<32x32xf32, #tpu.memory_space<vmem>>, vector<32x32xf32>
      %cst_60 = arith.constant dense<0.000000e+00> : vector<64x32xf32>
      %175 = tpu.matmul %173, %174, %cst_60 {dimension_numbers = #tpu.dot_dimension_numbers<[1], [0], [0], [1], [0, 0, 1, 1], [], []>} : vector<64x32xf32>, vector<32x32xf32>, vector<64x32xf32> -> vector<64x32xf32>
      %c0_61 = arith.constant 0 : index
      %c0_62 = arith.constant 0 : index
      %176 = vector.load %arg11[%c0_61, %c0_62] : memref<1x32xf32, #tpu.memory_space<vmem>>, vector<1x32xf32>
      %177 = vector.broadcast %176 : vector<1x32xf32> to vector<64x32xf32>
      %178 = arith.addf %175, %177 : vector<64x32xf32>
      %cst_63 = arith.constant 0.000000e+00 : f32
      %179 = vector.broadcast %cst_63 : f32 to vector<64x32xf32>
      %180 = arith.maximumf %178, %179 : vector<64x32xf32>
      %181 = arith.addf %166, %180 : vector<64x32xf32>
      %cst_64 = arith.constant dense<0.000000e+00> : vector<64xf32>
      %182 = vector.multi_reduction <add>, %181, %cst_64 [1] : vector<64x32xf32> to vector<64xf32>
      %183 = vector.shape_cast %182 : vector<64xf32> to vector<64x1xf32>
      %cst_65 = arith.constant 3.200000e+01 : f32
      %184 = vector.broadcast %cst_65 : f32 to vector<64x1xf32>
      %185 = arith.divf %183, %184 : vector<64x1xf32>
      %186 = vector.broadcast %185 : vector<64x1xf32> to vector<64x32xf32>
      %187 = arith.subf %181, %186 : vector<64x32xf32>
      %188 = arith.mulf %187, %187 : vector<64x32xf32>
      %cst_66 = arith.constant dense<0.000000e+00> : vector<64xf32>
      %189 = vector.multi_reduction <add>, %188, %cst_66 [1] : vector<64x32xf32> to vector<64xf32>
      %190 = vector.shape_cast %189 : vector<64xf32> to vector<64x1xf32>
      %cst_67 = arith.constant 3.200000e+01 : f32
      %191 = vector.broadcast %cst_67 : f32 to vector<64x1xf32>
      %192 = arith.divf %190, %191 : vector<64x1xf32>
      %193 = vector.broadcast %185 : vector<64x1xf32> to vector<64x32xf32>
      %194 = arith.subf %181, %193 : vector<64x32xf32>
      %cst_68 = arith.constant 9.99999974E-6 : f32
      %195 = vector.broadcast %cst_68 : f32 to vector<64x1xf32>
      %196 = arith.addf %192, %195 : vector<64x1xf32>
      %197 = math.rsqrt %196 : vector<64x1xf32>
      %198 = vector.broadcast %197 : vector<64x1xf32> to vector<64x32xf32>
      %199 = arith.mulf %194, %198 : vector<64x32xf32>
      %c0_69 = arith.constant 0 : index
      %c0_70 = arith.constant 0 : index
      %200 = vector.load %arg12[%c0_69, %c0_70] : memref<1x32xf32, #tpu.memory_space<vmem>>, vector<1x32xf32>
      %201 = vector.broadcast %200 : vector<1x32xf32> to vector<64x32xf32>
      %202 = arith.mulf %199, %201 : vector<64x32xf32>
      %c0_71 = arith.constant 0 : index
      %c0_72 = arith.constant 0 : index
      %203 = vector.load %arg13[%c0_71, %c0_72] : memref<1x32xf32, #tpu.memory_space<vmem>>, vector<1x32xf32>
      %204 = vector.broadcast %203 : vector<1x32xf32> to vector<64x32xf32>
      %205 = arith.addf %202, %204 : vector<64x32xf32>
      %cst_73 = arith.constant 0.000000e+00 : f32
      %206 = vector.broadcast %cst_73 : f32 to vector<64x32xf32>
      %207 = arith.maximumf %205, %206 : vector<64x32xf32>
      %c0_74 = arith.constant 0 : index
      %c0_75 = arith.constant 0 : index
      %208 = vector.load %arg14[%c0_74, %c0_75] : memref<64x32xf32, #tpu.memory_space<vmem>>, vector<64x32xf32>
      tpu.vector_store %arg14[%c0_74, %c0_75], %207 {strides = array<i32>} : memref<64x32xf32, #tpu.memory_space<vmem>>, vector<64x32xf32>,
    } else {
    }
    return
  }
  func.func @transform_0(%arg0: i32, %arg1: i32) -> (i32, i32) {
    %c0_i32 = arith.constant 0 : i32
    return %arg0, %arg1 : i32, i32
  }
  func.func @transform_1(%arg0: i32, %arg1: i32) -> (i32, i32) {
    %c0_i32 = arith.constant 0 : i32
    %c0_i32_0 = arith.constant 0 : i32
    return %c0_i32, %arg1 : i32, i32
  }
  func.func @transform_2(%arg0: i32, %arg1: i32) -> (i32, i32) {
    %c0_i32 = arith.constant 0 : i32
    %c0_i32_0 = arith.constant 0 : i32
    return %arg1, %c0_i32 : i32, i32
  }
  func.func @transform_3(%arg0: i32, %arg1: i32) -> (i32, i32) {
    %c0_i32 = arith.constant 0 : i32
    %c0_i32_0 = arith.constant 0 : i32
    %c0_i32_1 = arith.constant 0 : i32
    return %c0_i32, %c0_i32_0 : i32, i32
  }
  func.func @transform_4(%arg0: i32, %arg1: i32) -> (i32, i32) {
    %c0_i32 = arith.constant 0 : i32
    %c0_i32_0 = arith.constant 0 : i32
    %c0_i32_1 = arith.constant 0 : i32
    return %c0_i32, %c0_i32_0 : i32, i32
  }
  func.func @transform_5(%arg0: i32, %arg1: i32) -> (i32, i32) {
    %c0_i32 = arith.constant 0 : i32
    %c0_i32_0 = arith.constant 0 : i32
    %c0_i32_1 = arith.constant 0 : i32
    return %c0_i32, %c0_i32_0 : i32, i32
  }
  func.func @transform_6(%arg0: i32, %arg1: i32) -> (i32, i32) {
    %c0_i32 = arith.constant 0 : i32
    %c0_i32_0 = arith.constant 0 : i32
    %c0_i32_1 = arith.constant 0 : i32
    return %c0_i32, %c0_i32_0 : i32, i32
  }
  func.func @transform_7(%arg0: i32, %arg1: i32) -> (i32, i32) {
    %c0_i32 = arith.constant 0 : i32
    %c0_i32_0 = arith.constant 0 : i32
    %c0_i32_1 = arith.constant 0 : i32
    return %c0_i32, %c0_i32_0 : i32, i32
  }
  func.func @transform_8(%arg0: i32, %arg1: i32) -> (i32, i32) {
    %c0_i32 = arith.constant 0 : i32
    %c0_i32_0 = arith.constant 0 : i32
    %c0_i32_1 = arith.constant 0 : i32
    return %c0_i32, %c0_i32_0 : i32, i32
  }
  func.func @transform_9(%arg0: i32, %arg1: i32) -> (i32, i32) {
    %c0_i32 = arith.constant 0 : i32
    %c0_i32_0 = arith.constant 0 : i32
    %c0_i32_1 = arith.constant 0 : i32
    return %c0_i32, %c0_i32_0 : i32, i32
  }
  func.func @transform_10(%arg0: i32, %arg1: i32) -> (i32, i32) {
    %c0_i32 = arith.constant 0 : i32
    %c0_i32_0 = arith.constant 0 : i32
    %c0_i32_1 = arith.constant 0 : i32
    return %c0_i32, %c0_i32_0 : i32, i32
  }
  func.func @transform_11(%arg0: i32, %arg1: i32) -> (i32, i32) {
    %c0_i32 = arith.constant 0 : i32
    %c0_i32_0 = arith.constant 0 : i32
    %c0_i32_1 = arith.constant 0 : i32
    return %c0_i32, %c0_i32_0 : i32, i32
  }
  func.func @transform_12(%arg0: i32, %arg1: i32) -> (i32, i32) {
    %c0_i32 = arith.constant 0 : i32
    %c0_i32_0 = arith.constant 0 : i32
    return %arg0, %c0_i32 : i32, i32
  }
}

module attributes {stable_mosaic.version = 11 : i64} {
  func.func @_head_kernel(%arg0: i32, %arg1: memref<160x32xf32, #tpu.memory_space<vmem>>, %arg2: memref<32x4xf32, #tpu.memory_space<vmem>>, %arg3: memref<1x4xf32, #tpu.memory_space<vmem>>, %arg4: memref<1x4xf32, #tpu.memory_space<vmem>>, %arg5: memref<1x32xf32, #tpu.memory_space<vmem>>) attributes {dimension_semantics = [#tpu.dimension_semantics<arbitrary>], iteration_bounds = array<i64: 1>, scalar_prefetch = 0 : i64, scratch_operands = 1 : i64, tpu.core_type = #tpu.core_type<tc>, window_params = [{transform_indices = @transform_0, window_bounds = array<i64: 160, 32>}, {pipeline_mode = #tpu.pipeline_mode<synchronous>, transform_indices = @transform_1, window_bounds = array<i64: 32, 4>}, {pipeline_mode = #tpu.pipeline_mode<synchronous>, transform_indices = @transform_2, window_bounds = array<i64: 1, 4>}, {pipeline_mode = #tpu.pipeline_mode<synchronous>, transform_indices = @transform_3, window_bounds = array<i64: 1, 4>}]} {
    %c0_i32 = arith.constant 0 : i32
    %0 = arith.cmpi eq, %arg0, %c0_i32 : i32
    %1 = arith.extui %0 : i1 to i32
    %c0_i32_0 = arith.constant 0 : i32
    %2 = arith.cmpi ne, %1, %c0_i32_0 : i32
    scf.if %2 {
      %cst_8 = arith.constant 0xFF800000 : f32
      %12 = vector.broadcast %cst_8 : f32 to vector<1x32xf32>
      %c0_9 = arith.constant 0 : index
      %c0_10 = arith.constant 0 : index
      %13 = vector.load %arg5[%c0_9, %c0_10] : memref<1x32xf32, #tpu.memory_space<vmem>>, vector<1x32xf32>
      tpu.vector_store %arg5[%c0_9, %c0_10], %12 {strides = array<i32>} : memref<1x32xf32, #tpu.memory_space<vmem>>, vector<1x32xf32>,
    } else {
    }
    %c0 = arith.constant 0 : index
    %c0_1 = arith.constant 0 : index
    %3 = vector.load %arg5[%c0, %c0_1] : memref<1x32xf32, #tpu.memory_space<vmem>>, vector<1x32xf32>
    %c0_2 = arith.constant 0 : index
    %c0_3 = arith.constant 0 : index
    %4 = vector.load %arg1[%c0_2, %c0_3] : memref<160x32xf32, #tpu.memory_space<vmem>>, vector<160x32xf32>
    %cst = arith.constant dense<0xFF800000> : vector<32xf32>
    %5 = vector.multi_reduction <maximumf>, %4, %cst [0] : vector<160x32xf32> to vector<32xf32>
    %6 = vector.shape_cast %5 : vector<32xf32> to vector<1x32xf32>
    %7 = arith.maximumf %3, %6 : vector<1x32xf32>
    %c0_4 = arith.constant 0 : index
    %c0_5 = arith.constant 0 : index
    %8 = vector.load %arg5[%c0_4, %c0_5] : memref<1x32xf32, #tpu.memory_space<vmem>>, vector<1x32xf32>
    tpu.vector_store %arg5[%c0_4, %c0_5], %7 {strides = array<i32>} : memref<1x32xf32, #tpu.memory_space<vmem>>, vector<1x32xf32>,
    %c0_i32_6 = arith.constant 0 : i32
    %9 = arith.cmpi eq, %arg0, %c0_i32_6 : i32
    %10 = arith.extui %9 : i1 to i32
    %c0_i32_7 = arith.constant 0 : i32
    %11 = arith.cmpi ne, %10, %c0_i32_7 : i32
    scf.if %11 {
      %c0_8 = arith.constant 0 : index
      %c0_9 = arith.constant 0 : index
      %12 = vector.load %arg5[%c0_8, %c0_9] : memref<1x32xf32, #tpu.memory_space<vmem>>, vector<1x32xf32>
      %c0_10 = arith.constant 0 : index
      %c0_11 = arith.constant 0 : index
      %13 = vector.load %arg2[%c0_10, %c0_11] : memref<32x4xf32, #tpu.memory_space<vmem>>, vector<32x4xf32>
      %cst_12 = arith.constant dense<0.000000e+00> : vector<1x4xf32>
      %14 = tpu.matmul %12, %13, %cst_12 {dimension_numbers = #tpu.dot_dimension_numbers<[1], [0], [0], [1], [0, 0, 1, 1], [], []>} : vector<1x32xf32>, vector<32x4xf32>, vector<1x4xf32> -> vector<1x4xf32>
      %c0_13 = arith.constant 0 : index
      %c0_14 = arith.constant 0 : index
      %15 = vector.load %arg3[%c0_13, %c0_14] : memref<1x4xf32, #tpu.memory_space<vmem>>, vector<1x4xf32>
      %16 = arith.addf %14, %15 : vector<1x4xf32>
      %17 = arith.negf %16 : vector<1x4xf32>
      %18 = math.exp %17 : vector<1x4xf32>
      %cst_15 = arith.constant 1.000000e+00 : f32
      %19 = vector.broadcast %cst_15 : f32 to vector<1x4xf32>
      %20 = arith.addf %19, %18 : vector<1x4xf32>
      %21 = arith.divf %19, %20 : vector<1x4xf32>
      %c0_16 = arith.constant 0 : index
      %c0_17 = arith.constant 0 : index
      %22 = vector.load %arg4[%c0_16, %c0_17] : memref<1x4xf32, #tpu.memory_space<vmem>>, vector<1x4xf32>
      tpu.vector_store %arg4[%c0_16, %c0_17], %21 {strides = array<i32>} : memref<1x4xf32, #tpu.memory_space<vmem>>, vector<1x4xf32>,
    } else {
    }
    return
  }
  func.func @transform_0(%arg0: i32) -> (i32, i32) {
    %c0_i32 = arith.constant 0 : i32
    %c0_i32_0 = arith.constant 0 : i32
    return %arg0, %c0_i32 : i32, i32
  }
  func.func @transform_1(%arg0: i32) -> (i32, i32) {
    %c0_i32 = arith.constant 0 : i32
    %c0_i32_0 = arith.constant 0 : i32
    %c0_i32_1 = arith.constant 0 : i32
    return %c0_i32, %c0_i32_0 : i32, i32
  }
  func.func @transform_2(%arg0: i32) -> (i32, i32) {
    %c0_i32 = arith.constant 0 : i32
    %c0_i32_0 = arith.constant 0 : i32
    %c0_i32_1 = arith.constant 0 : i32
    return %c0_i32, %c0_i32_0 : i32, i32
  }
  func.func @transform_3(%arg0: i32) -> (i32, i32) {
    %c0_i32 = arith.constant 0 : i32
    %c0_i32_0 = arith.constant 0 : i32
    %c0_i32_1 = arith.constant 0 : i32
    return %c0_i32, %c0_i32_0 : i32, i32
  }
}

module attributes {stable_mosaic.version = 11 : i64} {
  func.func @_allset_block_kernel(%arg0: i32, %arg1: i32, %arg2: memref<160x128xi8, #tpu.memory_space<vmem>>, %arg3: memref<8x128xf32, #tpu.memory_space<vmem>>, %arg4: memref<128x32xf32, #tpu.memory_space<vmem>>, %arg5: memref<1x32xf32, #tpu.memory_space<vmem>>, %arg6: memref<1x32xf32, #tpu.memory_space<vmem>>, %arg7: memref<1x32xf32, #tpu.memory_space<vmem>>, %arg8: memref<32x32xf32, #tpu.memory_space<vmem>>, %arg9: memref<1x32xf32, #tpu.memory_space<vmem>>, %arg10: memref<32x32xf32, #tpu.memory_space<vmem>>, %arg11: memref<1x32xf32, #tpu.memory_space<vmem>>, %arg12: memref<1x32xf32, #tpu.memory_space<vmem>>, %arg13: memref<1x32xf32, #tpu.memory_space<vmem>>, %arg14: memref<160x32xf32, #tpu.memory_space<vmem>>, %arg15: memref<160x4xf32, #tpu.memory_space<vmem>>, %arg16: memref<160x4xf32, #tpu.memory_space<vmem>>, %arg17: memref<160x32xf32, #tpu.memory_space<vmem>>, %arg18: memref<160x1xf32, #tpu.memory_space<vmem>>) attributes {dimension_semantics = [#tpu.dimension_semantics<parallel>, #tpu.dimension_semantics<arbitrary>], iteration_bounds = array<i64: 1, 1>, scalar_prefetch = 0 : i64, scratch_operands = 4 : i64, tpu.core_type = #tpu.core_type<tc>, window_params = [{transform_indices = @transform_0, window_bounds = array<i64: 160, 128>}, {transform_indices = @transform_1, window_bounds = array<i64: 8, 128>}, {transform_indices = @transform_2, window_bounds = array<i64: 128, 32>}, {pipeline_mode = #tpu.pipeline_mode<synchronous>, transform_indices = @transform_3, window_bounds = array<i64: 1, 32>}, {pipeline_mode = #tpu.pipeline_mode<synchronous>, transform_indices = @transform_4, window_bounds = array<i64: 1, 32>}, {pipeline_mode = #tpu.pipeline_mode<synchronous>, transform_indices = @transform_5, window_bounds = array<i64: 1, 32>}, {pipeline_mode = #tpu.pipeline_mode<synchronous>, transform_indices = @transform_6, window_bounds = array<i64: 32, 32>}, {pipeline_mode = #tpu.pipeline_mode<synchronous>, transform_indices = @transform_7, window_bounds = array<i64: 1, 32>}, {pipeline_mode = #tpu.pipeline_mode<synchronous>, transform_indices = @transform_8, window_bounds = array<i64: 32, 32>}, {pipeline_mode = #tpu.pipeline_mode<synchronous>, transform_indices = @transform_9, window_bounds = array<i64: 1, 32>}, {pipeline_mode = #tpu.pipeline_mode<synchronous>, transform_indices = @transform_10, window_bounds = array<i64: 1, 32>}, {pipeline_mode = #tpu.pipeline_mode<synchronous>, transform_indices = @transform_11, window_bounds = array<i64: 1, 32>}, {transform_indices = @transform_12, window_bounds = array<i64: 160, 32>}]} {
    %c0_i32 = arith.constant 0 : i32
    %0 = arith.cmpi eq, %arg1, %c0_i32 : i32
    %1 = arith.extui %0 : i1 to i32
    %c0_i32_0 = arith.constant 0 : i32
    %2 = arith.cmpi ne, %1, %c0_i32_0 : i32
    scf.if %2 {
      %cst_38 = arith.constant -1.000000e+30 : f32
      %120 = vector.broadcast %cst_38 : f32 to vector<160x4xf32>
      %c0_39 = arith.constant 0 : index
      %c0_40 = arith.constant 0 : index
      %121 = vector.load %arg15[%c0_39, %c0_40] : memref<160x4xf32, #tpu.memory_space<vmem>>, vector<160x4xf32>
      tpu.vector_store %arg15[%c0_39, %c0_40], %120 {strides = array<i32>} : memref<160x4xf32, #tpu.memory_space<vmem>>, vector<160x4xf32>,
      %cst_41 = arith.constant 0.000000e+00 : f32
      %122 = vector.broadcast %cst_41 : f32 to vector<160x4xf32>
      %c0_42 = arith.constant 0 : index
      %c0_43 = arith.constant 0 : index
      %123 = vector.load %arg16[%c0_42, %c0_43] : memref<160x4xf32, #tpu.memory_space<vmem>>, vector<160x4xf32>
      tpu.vector_store %arg16[%c0_42, %c0_43], %122 {strides = array<i32>} : memref<160x4xf32, #tpu.memory_space<vmem>>, vector<160x4xf32>,
      %cst_44 = arith.constant 0.000000e+00 : f32
      %124 = vector.broadcast %cst_44 : f32 to vector<160x32xf32>
      %c0_45 = arith.constant 0 : index
      %c0_46 = arith.constant 0 : index
      %125 = vector.load %arg17[%c0_45, %c0_46] : memref<160x32xf32, #tpu.memory_space<vmem>>, vector<160x32xf32>
      tpu.vector_store %arg17[%c0_45, %c0_46], %124 {strides = array<i32>} : memref<160x32xf32, #tpu.memory_space<vmem>>, vector<160x32xf32>,
      %cst_47 = arith.constant 0.000000e+00 : f32
      %126 = vector.broadcast %cst_47 : f32 to vector<160x1xf32>
      %c0_48 = arith.constant 0 : index
      %c0_49 = arith.constant 0 : index
      %127 = vector.load %arg18[%c0_48, %c0_49] : memref<160x1xf32, #tpu.memory_space<vmem>>, vector<160x1xf32>
      tpu.vector_store %arg18[%c0_48, %c0_49], %126 {strides = array<i32>} : memref<160x1xf32, #tpu.memory_space<vmem>>, vector<160x1xf32>,
    } else {
    }
    %c0 = arith.constant 0 : index
    %c0_1 = arith.constant 0 : index
    %3 = vector.load %arg2[%c0, %c0_1] : memref<160x128xi8, #tpu.memory_space<vmem>>, vector<160x128xi8>
    %4 = arith.sitofp %3 : vector<160x128xi8> to vector<160x128xf32>
    %cst = arith.constant 1.000000e+00 : f32
    %5 = vector.broadcast %cst : f32 to vector<160x128xf32>
    %6 = arith.subf %4, %5 : vector<160x128xf32>
    %cst_2 = arith.constant 1.000000e+30 : f32
    %7 = vector.broadcast %cst_2 : f32 to vector<160x128xf32>
    %8 = arith.mulf %6, %7 : vector<160x128xf32>
    %c0_3 = arith.constant 0 : index
    %c0_4 = arith.constant 0 : index
    %9 = vector.load %arg18[%c0_3, %c0_4] : memref<160x1xf32, #tpu.memory_space<vmem>>, vector<160x1xf32>
    %cst_5 = arith.constant dense<0.000000e+00> : vector<160xf32>
    %10 = vector.multi_reduction <add>, %4, %cst_5 [1] : vector<160x128xf32> to vector<160xf32>
    %11 = vector.shape_cast %10 : vector<160xf32> to vector<160x1xf32>
    %12 = arith.addf %9, %11 : vector<160x1xf32>
    %c0_6 = arith.constant 0 : index
    %c0_7 = arith.constant 0 : index
    %13 = vector.load %arg18[%c0_6, %c0_7] : memref<160x1xf32, #tpu.memory_space<vmem>>, vector<160x1xf32>
    tpu.vector_store %arg18[%c0_6, %c0_7], %12 {strides = array<i32>} : memref<160x1xf32, #tpu.memory_space<vmem>>, vector<160x1xf32>,
    %c0_8 = arith.constant 0 : index
    %c0_9 = arith.constant 0 : index
    %14 = vector.load %arg3[%c0_8, %c0_9] : memref<8x128xf32, #tpu.memory_space<vmem>>, vector<8x128xf32>
    %c0_10 = arith.constant 0 : index
    %c0_11 = arith.constant 0 : index
    %15 = vector.load %arg4[%c0_10, %c0_11] : memref<128x32xf32, #tpu.memory_space<vmem>>, vector<128x32xf32>
    %c0_12 = arith.constant 0 : index
    %c0_13 = arith.constant 0 : index
    %16 = vector.load %arg15[%c0_12, %c0_13] : memref<160x4xf32, #tpu.memory_space<vmem>>, vector<160x4xf32>
    %c0_14 = arith.constant 0 : index
    %c0_15 = arith.constant 0 : index
    %17 = vector.load %arg16[%c0_14, %c0_15] : memref<160x4xf32, #tpu.memory_space<vmem>>, vector<160x4xf32>
    %c0_16 = arith.constant 0 : index
    %c0_17 = arith.constant 0 : index
    %18 = vector.load %arg17[%c0_16, %c0_17] : memref<160x32xf32, #tpu.memory_space<vmem>>, vector<160x32xf32>
    %19 = vector.extract_strided_slice %14 {offsets = [0, 0], sizes = [1, 128], strides = [1, 1]} : vector<8x128xf32> to vector<1x128xf32>
    %20 = vector.broadcast %19 : vector<1x128xf32> to vector<160x128xf32>
    %21 = arith.addf %8, %20 : vector<160x128xf32>
    %22 = vector.extract_strided_slice %16 {offsets = [0, 0], sizes = [160, 1], strides = [1, 1]} : vector<160x4xf32> to vector<160x1xf32>
    %cst_18 = arith.constant dense<0xFF800000> : vector<160xf32>
    %23 = vector.multi_reduction <maximumf>, %21, %cst_18 [1] : vector<160x128xf32> to vector<160xf32>
    %24 = vector.shape_cast %23 : vector<160xf32> to vector<160x1xf32>
    %25 = arith.maximumf %22, %24 : vector<160x1xf32>
    %26 = arith.subf %22, %25 : vector<160x1xf32>
    %27 = math.exp %26 : vector<160x1xf32>
    %28 = vector.broadcast %25 : vector<160x1xf32> to vector<160x128xf32>
    %29 = arith.subf %21, %28 : vector<160x128xf32>
    %30 = math.exp %29 : vector<160x128xf32>
    %31 = vector.extract_strided_slice %17 {offsets = [0, 0], sizes = [160, 1], strides = [1, 1]} : vector<160x4xf32> to vector<160x1xf32>
    %32 = arith.mulf %27, %31 : vector<160x1xf32>
    %cst_19 = arith.constant dense<0.000000e+00> : vector<160xf32>
    %33 = vector.multi_reduction <add>, %30, %cst_19 [1] : vector<160x128xf32> to vector<160xf32>
    %34 = vector.shape_cast %33 : vector<160xf32> to vector<160x1xf32>
    %35 = arith.addf %32, %34 : vector<160x1xf32>
    %36 = vector.extract_strided_slice %15 {offsets = [0, 0], sizes = [128, 8], strides = [1, 1]} : vector<128x32xf32> to vector<128x8xf32>
    %cst_20 = arith.constant dense<0.000000e+00> : vector<160x8xf32>
    %37 = tpu.matmul %30, %36, %cst_20 {dimension_numbers = #tpu.dot_dimension_numbers<[1], [0], [0], [1], [0, 0, 1, 1], [], []>} : vector<160x128xf32>, vector<128x8xf32>, vector<160x8xf32> -> vector<160x8xf32>
    %38 = vector.extract_strided_slice %18 {offsets = [0, 0], sizes = [160, 8], strides = [1, 1]} : vector<160x32xf32> to vector<160x8xf32>
    %39 = vector.broadcast %27 : vector<160x1xf32> to vector<160x8xf32>
    %40 = arith.mulf %39, %38 : vector<160x8xf32>
    %41 = arith.addf %40, %37 : vector<160x8xf32>
    %42 = vector.extract_strided_slice %14 {offsets = [1, 0], sizes = [1, 128], strides = [1, 1]} : vector<8x128xf32> to vector<1x128xf32>
    %43 = vector.broadcast %42 : vector<1x128xf32> to vector<160x128xf32>
    %44 = arith.addf %8, %43 : vector<160x128xf32>
    %45 = vector.extract_strided_slice %16 {offsets = [0, 1], sizes = [160, 1], strides = [1, 1]} : vector<160x4xf32> to vector<160x1xf32>
    %cst_21 = arith.constant dense<0xFF800000> : vector<160xf32>
    %46 = vector.multi_reduction <maximumf>, %44, %cst_21 [1] : vector<160x128xf32> to vector<160xf32>
    %47 = vector.shape_cast %46 : vector<160xf32> to vector<160x1xf32>
    %48 = arith.maximumf %45, %47 : vector<160x1xf32>
    %49 = arith.subf %45, %48 : vector<160x1xf32>
    %50 = math.exp %49 : vector<160x1xf32>
    %51 = vector.broadcast %48 : vector<160x1xf32> to vector<160x128xf32>
    %52 = arith.subf %44, %51 : vector<160x128xf32>
    %53 = math.exp %52 : vector<160x128xf32>
    %54 = vector.extract_strided_slice %17 {offsets = [0, 1], sizes = [160, 1], strides = [1, 1]} : vector<160x4xf32> to vector<160x1xf32>
    %55 = arith.mulf %50, %54 : vector<160x1xf32>
    %cst_22 = arith.constant dense<0.000000e+00> : vector<160xf32>
    %56 = vector.multi_reduction <add>, %53, %cst_22 [1] : vector<160x128xf32> to vector<160xf32>
    %57 = vector.shape_cast %56 : vector<160xf32> to vector<160x1xf32>
    %58 = arith.addf %55, %57 : vector<160x1xf32>
    %59 = vector.extract_strided_slice %15 {offsets = [0, 8], sizes = [128, 8], strides = [1, 1]} : vector<128x32xf32> to vector<128x8xf32>
    %cst_23 = arith.constant dense<0.000000e+00> : vector<160x8xf32>
    %60 = tpu.matmul %53, %59, %cst_23 {dimension_numbers = #tpu.dot_dimension_numbers<[1], [0], [0], [1], [0, 0, 1, 1], [], []>} : vector<160x128xf32>, vector<128x8xf32>, vector<160x8xf32> -> vector<160x8xf32>
    %61 = vector.extract_strided_slice %18 {offsets = [0, 8], sizes = [160, 8], strides = [1, 1]} : vector<160x32xf32> to vector<160x8xf32>
    %62 = vector.broadcast %50 : vector<160x1xf32> to vector<160x8xf32>
    %63 = arith.mulf %62, %61 : vector<160x8xf32>
    %64 = arith.addf %63, %60 : vector<160x8xf32>
    %65 = vector.extract_strided_slice %14 {offsets = [2, 0], sizes = [1, 128], strides = [1, 1]} : vector<8x128xf32> to vector<1x128xf32>
    %66 = vector.broadcast %65 : vector<1x128xf32> to vector<160x128xf32>
    %67 = arith.addf %8, %66 : vector<160x128xf32>
    %68 = vector.extract_strided_slice %16 {offsets = [0, 2], sizes = [160, 1], strides = [1, 1]} : vector<160x4xf32> to vector<160x1xf32>
    %cst_24 = arith.constant dense<0xFF800000> : vector<160xf32>
    %69 = vector.multi_reduction <maximumf>, %67, %cst_24 [1] : vector<160x128xf32> to vector<160xf32>
    %70 = vector.shape_cast %69 : vector<160xf32> to vector<160x1xf32>
    %71 = arith.maximumf %68, %70 : vector<160x1xf32>
    %72 = arith.subf %68, %71 : vector<160x1xf32>
    %73 = math.exp %72 : vector<160x1xf32>
    %74 = vector.broadcast %71 : vector<160x1xf32> to vector<160x128xf32>
    %75 = arith.subf %67, %74 : vector<160x128xf32>
    %76 = math.exp %75 : vector<160x128xf32>
    %77 = vector.extract_strided_slice %17 {offsets = [0, 2], sizes = [160, 1], strides = [1, 1]} : vector<160x4xf32> to vector<160x1xf32>
    %78 = arith.mulf %73, %77 : vector<160x1xf32>
    %cst_25 = arith.constant dense<0.000000e+00> : vector<160xf32>
    %79 = vector.multi_reduction <add>, %76, %cst_25 [1] : vector<160x128xf32> to vector<160xf32>
    %80 = vector.shape_cast %79 : vector<160xf32> to vector<160x1xf32>
    %81 = arith.addf %78, %80 : vector<160x1xf32>
    %82 = vector.extract_strided_slice %15 {offsets = [0, 16], sizes = [128, 8], strides = [1, 1]} : vector<128x32xf32> to vector<128x8xf32>
    %cst_26 = arith.constant dense<0.000000e+00> : vector<160x8xf32>
    %83 = tpu.matmul %76, %82, %cst_26 {dimension_numbers = #tpu.dot_dimension_numbers<[1], [0], [0], [1], [0, 0, 1, 1], [], []>} : vector<160x128xf32>, vector<128x8xf32>, vector<160x8xf32> -> vector<160x8xf32>
    %84 = vector.extract_strided_slice %18 {offsets = [0, 16], sizes = [160, 8], strides = [1, 1]} : vector<160x32xf32> to vector<160x8xf32>
    %85 = vector.broadcast %73 : vector<160x1xf32> to vector<160x8xf32>
    %86 = arith.mulf %85, %84 : vector<160x8xf32>
    %87 = arith.addf %86, %83 : vector<160x8xf32>
    %88 = vector.extract_strided_slice %14 {offsets = [3, 0], sizes = [1, 128], strides = [1, 1]} : vector<8x128xf32> to vector<1x128xf32>
    %89 = vector.broadcast %88 : vector<1x128xf32> to vector<160x128xf32>
    %90 = arith.addf %8, %89 : vector<160x128xf32>
    %91 = vector.extract_strided_slice %16 {offsets = [0, 3], sizes = [160, 1], strides = [1, 1]} : vector<160x4xf32> to vector<160x1xf32>
    %cst_27 = arith.constant dense<0xFF800000> : vector<160xf32>
    %92 = vector.multi_reduction <maximumf>, %90, %cst_27 [1] : vector<160x128xf32> to vector<160xf32>
    %93 = vector.shape_cast %92 : vector<160xf32> to vector<160x1xf32>
    %94 = arith.maximumf %91, %93 : vector<160x1xf32>
    %95 = arith.subf %91, %94 : vector<160x1xf32>
    %96 = math.exp %95 : vector<160x1xf32>
    %97 = vector.broadcast %94 : vector<160x1xf32> to vector<160x128xf32>
    %98 = arith.subf %90, %97 : vector<160x128xf32>
    %99 = math.exp %98 : vector<160x128xf32>
    %100 = vector.extract_strided_slice %17 {offsets = [0, 3], sizes = [160, 1], strides = [1, 1]} : vector<160x4xf32> to vector<160x1xf32>
    %101 = arith.mulf %96, %100 : vector<160x1xf32>
    %cst_28 = arith.constant dense<0.000000e+00> : vector<160xf32>
    %102 = vector.multi_reduction <add>, %99, %cst_28 [1] : vector<160x128xf32> to vector<160xf32>
    %103 = vector.shape_cast %102 : vector<160xf32> to vector<160x1xf32>
    %104 = arith.addf %101, %103 : vector<160x1xf32>
    %105 = vector.extract_strided_slice %15 {offsets = [0, 24], sizes = [128, 8], strides = [1, 1]} : vector<128x32xf32> to vector<128x8xf32>
    %cst_29 = arith.constant dense<0.000000e+00> : vector<160x8xf32>
    %106 = tpu.matmul %99, %105, %cst_29 {dimension_numbers = #tpu.dot_dimension_numbers<[1], [0], [0], [1], [0, 0, 1, 1], [], []>} : vector<160x128xf32>, vector<128x8xf32>, vector<160x8xf32> -> vector<160x8xf32>
    %107 = vector.extract_strided_slice %18 {offsets = [0, 24], sizes = [160, 8], strides = [1, 1]} : vector<160x32xf32> to vector<160x8xf32>
    %108 = vector.broadcast %96 : vector<160x1xf32> to vector<160x8xf32>
    %109 = arith.mulf %108, %107 : vector<160x8xf32>
    %110 = arith.addf %109, %106 : vector<160x8xf32>
    %111 = tpu.concatenate %25, %48, %71, %94 in 1 : vector<160x1xf32>, vector<160x1xf32>, vector<160x1xf32>, vector<160x1xf32> -> vector<160x4xf32>
    %c0_30 = arith.constant 0 : index
    %c0_31 = arith.constant 0 : index
    %112 = vector.load %arg15[%c0_30, %c0_31] : memref<160x4xf32, #tpu.memory_space<vmem>>, vector<160x4xf32>
    tpu.vector_store %arg15[%c0_30, %c0_31], %111 {strides = array<i32>} : memref<160x4xf32, #tpu.memory_space<vmem>>, vector<160x4xf32>,
    %113 = tpu.concatenate %35, %58, %81, %104 in 1 : vector<160x1xf32>, vector<160x1xf32>, vector<160x1xf32>, vector<160x1xf32> -> vector<160x4xf32>
    %c0_32 = arith.constant 0 : index
    %c0_33 = arith.constant 0 : index
    %114 = vector.load %arg16[%c0_32, %c0_33] : memref<160x4xf32, #tpu.memory_space<vmem>>, vector<160x4xf32>
    tpu.vector_store %arg16[%c0_32, %c0_33], %113 {strides = array<i32>} : memref<160x4xf32, #tpu.memory_space<vmem>>, vector<160x4xf32>,
    %115 = tpu.concatenate %41, %64, %87, %110 in 1 : vector<160x8xf32>, vector<160x8xf32>, vector<160x8xf32>, vector<160x8xf32> -> vector<160x32xf32>
    %c0_34 = arith.constant 0 : index
    %c0_35 = arith.constant 0 : index
    %116 = vector.load %arg17[%c0_34, %c0_35] : memref<160x32xf32, #tpu.memory_space<vmem>>, vector<160x32xf32>
    tpu.vector_store %arg17[%c0_34, %c0_35], %115 {strides = array<i32>} : memref<160x32xf32, #tpu.memory_space<vmem>>, vector<160x32xf32>,
    %c0_i32_36 = arith.constant 0 : i32
    %117 = arith.cmpi eq, %arg1, %c0_i32_36 : i32
    %118 = arith.extui %117 : i1 to i32
    %c0_i32_37 = arith.constant 0 : i32
    %119 = arith.cmpi ne, %118, %c0_i32_37 : i32
    scf.if %119 {
      %c0_38 = arith.constant 0 : index
      %c0_39 = arith.constant 0 : index
      %120 = vector.load %arg18[%c0_38, %c0_39] : memref<160x1xf32, #tpu.memory_space<vmem>>, vector<160x1xf32>
      %cst_40 = arith.constant 0.000000e+00 : f32
      %121 = vector.broadcast %cst_40 : f32 to vector<160x1xf32>
      %122 = arith.cmpf ogt, %120, %121 : vector<160x1xf32>
      %123 = arith.extui %122 : vector<160x1xi1> to vector<160x1xi32>
      %124 = arith.sitofp %123 : vector<160x1xi32> to vector<160x1xf32>
      %125 = tpu.reciprocal %35 {approx = true} : vector<160x1xf32> -> vector<160x1xf32>
      %126 = vector.broadcast %125 : vector<160x1xf32> to vector<160x8xf32>
      %127 = arith.mulf %41, %126 : vector<160x8xf32>
      %128 = tpu.reciprocal %58 {approx = true} : vector<160x1xf32> -> vector<160x1xf32>
      %129 = vector.broadcast %128 : vector<160x1xf32> to vector<160x8xf32>
      %130 = arith.mulf %64, %129 : vector<160x8xf32>
      %131 = tpu.reciprocal %81 {approx = true} : vector<160x1xf32> -> vector<160x1xf32>
      %132 = vector.broadcast %131 : vector<160x1xf32> to vector<160x8xf32>
      %133 = arith.mulf %87, %132 : vector<160x8xf32>
      %134 = tpu.reciprocal %104 {approx = true} : vector<160x1xf32> -> vector<160x1xf32>
      %135 = vector.broadcast %134 : vector<160x1xf32> to vector<160x8xf32>
      %136 = arith.mulf %110, %135 : vector<160x8xf32>
      %137 = tpu.concatenate %127, %130, %133, %136 in 1 : vector<160x8xf32>, vector<160x8xf32>, vector<160x8xf32>, vector<160x8xf32> -> vector<160x32xf32>
      %138 = vector.broadcast %124 : vector<160x1xf32> to vector<160x32xf32>
      %139 = arith.mulf %137, %138 : vector<160x32xf32>
      %c0_41 = arith.constant 0 : index
      %c0_42 = arith.constant 0 : index
      %140 = vector.load %arg5[%c0_41, %c0_42] : memref<1x32xf32, #tpu.memory_space<vmem>>, vector<1x32xf32>
      %141 = vector.broadcast %140 : vector<1x32xf32> to vector<160x32xf32>
      %142 = arith.addf %139, %141 : vector<160x32xf32>
      %cst_43 = arith.constant dense<0.000000e+00> : vector<160xf32>
      %143 = vector.multi_reduction <add>, %142, %cst_43 [1] : vector<160x32xf32> to vector<160xf32>
      %144 = vector.shape_cast %143 : vector<160xf32> to vector<160x1xf32>
      %cst_44 = arith.constant 3.200000e+01 : f32
      %145 = vector.broadcast %cst_44 : f32 to vector<160x1xf32>
      %146 = arith.divf %144, %145 : vector<160x1xf32>
      %147 = vector.broadcast %146 : vector<160x1xf32> to vector<160x32xf32>
      %148 = arith.subf %142, %147 : vector<160x32xf32>
      %149 = arith.mulf %148, %148 : vector<160x32xf32>
      %cst_45 = arith.constant dense<0.000000e+00> : vector<160xf32>
      %150 = vector.multi_reduction <add>, %149, %cst_45 [1] : vector<160x32xf32> to vector<160xf32>
      %151 = vector.shape_cast %150 : vector<160xf32> to vector<160x1xf32>
      %cst_46 = arith.constant 3.200000e+01 : f32
      %152 = vector.broadcast %cst_46 : f32 to vector<160x1xf32>
      %153 = arith.divf %151, %152 : vector<160x1xf32>
      %154 = vector.broadcast %146 : vector<160x1xf32> to vector<160x32xf32>
      %155 = arith.subf %142, %154 : vector<160x32xf32>
      %cst_47 = arith.constant 9.99999974E-6 : f32
      %156 = vector.broadcast %cst_47 : f32 to vector<160x1xf32>
      %157 = arith.addf %153, %156 : vector<160x1xf32>
      %158 = math.rsqrt %157 : vector<160x1xf32>
      %159 = vector.broadcast %158 : vector<160x1xf32> to vector<160x32xf32>
      %160 = arith.mulf %155, %159 : vector<160x32xf32>
      %c0_48 = arith.constant 0 : index
      %c0_49 = arith.constant 0 : index
      %161 = vector.load %arg6[%c0_48, %c0_49] : memref<1x32xf32, #tpu.memory_space<vmem>>, vector<1x32xf32>
      %162 = vector.broadcast %161 : vector<1x32xf32> to vector<160x32xf32>
      %163 = arith.mulf %160, %162 : vector<160x32xf32>
      %c0_50 = arith.constant 0 : index
      %c0_51 = arith.constant 0 : index
      %164 = vector.load %arg7[%c0_50, %c0_51] : memref<1x32xf32, #tpu.memory_space<vmem>>, vector<1x32xf32>
      %165 = vector.broadcast %164 : vector<1x32xf32> to vector<160x32xf32>
      %166 = arith.addf %163, %165 : vector<160x32xf32>
      %c0_52 = arith.constant 0 : index
      %c0_53 = arith.constant 0 : index
      %167 = vector.load %arg8[%c0_52, %c0_53] : memref<32x32xf32, #tpu.memory_space<vmem>>, vector<32x32xf32>
      %cst_54 = arith.constant dense<0.000000e+00> : vector<160x32xf32>
      %168 = tpu.matmul %166, %167, %cst_54 {dimension_numbers = #tpu.dot_dimension_numbers<[1], [0], [0], [1], [0, 0, 1, 1], [], []>} : vector<160x32xf32>, vector<32x32xf32>, vector<160x32xf32> -> vector<160x32xf32>
      %c0_55 = arith.constant 0 : index
      %c0_56 = arith.constant 0 : index
      %169 = vector.load %arg9[%c0_55, %c0_56] : memref<1x32xf32, #tpu.memory_space<vmem>>, vector<1x32xf32>
      %170 = vector.broadcast %169 : vector<1x32xf32> to vector<160x32xf32>
      %171 = arith.addf %168, %170 : vector<160x32xf32>
      %cst_57 = arith.constant 0.000000e+00 : f32
      %172 = vector.broadcast %cst_57 : f32 to vector<160x32xf32>
      %173 = arith.maximumf %171, %172 : vector<160x32xf32>
      %c0_58 = arith.constant 0 : index
      %c0_59 = arith.constant 0 : index
      %174 = vector.load %arg10[%c0_58, %c0_59] : memref<32x32xf32, #tpu.memory_space<vmem>>, vector<32x32xf32>
      %cst_60 = arith.constant dense<0.000000e+00> : vector<160x32xf32>
      %175 = tpu.matmul %173, %174, %cst_60 {dimension_numbers = #tpu.dot_dimension_numbers<[1], [0], [0], [1], [0, 0, 1, 1], [], []>} : vector<160x32xf32>, vector<32x32xf32>, vector<160x32xf32> -> vector<160x32xf32>
      %c0_61 = arith.constant 0 : index
      %c0_62 = arith.constant 0 : index
      %176 = vector.load %arg11[%c0_61, %c0_62] : memref<1x32xf32, #tpu.memory_space<vmem>>, vector<1x32xf32>
      %177 = vector.broadcast %176 : vector<1x32xf32> to vector<160x32xf32>
      %178 = arith.addf %175, %177 : vector<160x32xf32>
      %cst_63 = arith.constant 0.000000e+00 : f32
      %179 = vector.broadcast %cst_63 : f32 to vector<160x32xf32>
      %180 = arith.maximumf %178, %179 : vector<160x32xf32>
      %181 = arith.addf %166, %180 : vector<160x32xf32>
      %cst_64 = arith.constant dense<0.000000e+00> : vector<160xf32>
      %182 = vector.multi_reduction <add>, %181, %cst_64 [1] : vector<160x32xf32> to vector<160xf32>
      %183 = vector.shape_cast %182 : vector<160xf32> to vector<160x1xf32>
      %cst_65 = arith.constant 3.200000e+01 : f32
      %184 = vector.broadcast %cst_65 : f32 to vector<160x1xf32>
      %185 = arith.divf %183, %184 : vector<160x1xf32>
      %186 = vector.broadcast %185 : vector<160x1xf32> to vector<160x32xf32>
      %187 = arith.subf %181, %186 : vector<160x32xf32>
      %188 = arith.mulf %187, %187 : vector<160x32xf32>
      %cst_66 = arith.constant dense<0.000000e+00> : vector<160xf32>
      %189 = vector.multi_reduction <add>, %188, %cst_66 [1] : vector<160x32xf32> to vector<160xf32>
      %190 = vector.shape_cast %189 : vector<160xf32> to vector<160x1xf32>
      %cst_67 = arith.constant 3.200000e+01 : f32
      %191 = vector.broadcast %cst_67 : f32 to vector<160x1xf32>
      %192 = arith.divf %190, %191 : vector<160x1xf32>
      %193 = vector.broadcast %185 : vector<160x1xf32> to vector<160x32xf32>
      %194 = arith.subf %181, %193 : vector<160x32xf32>
      %cst_68 = arith.constant 9.99999974E-6 : f32
      %195 = vector.broadcast %cst_68 : f32 to vector<160x1xf32>
      %196 = arith.addf %192, %195 : vector<160x1xf32>
      %197 = math.rsqrt %196 : vector<160x1xf32>
      %198 = vector.broadcast %197 : vector<160x1xf32> to vector<160x32xf32>
      %199 = arith.mulf %194, %198 : vector<160x32xf32>
      %c0_69 = arith.constant 0 : index
      %c0_70 = arith.constant 0 : index
      %200 = vector.load %arg12[%c0_69, %c0_70] : memref<1x32xf32, #tpu.memory_space<vmem>>, vector<1x32xf32>
      %201 = vector.broadcast %200 : vector<1x32xf32> to vector<160x32xf32>
      %202 = arith.mulf %199, %201 : vector<160x32xf32>
      %c0_71 = arith.constant 0 : index
      %c0_72 = arith.constant 0 : index
      %203 = vector.load %arg13[%c0_71, %c0_72] : memref<1x32xf32, #tpu.memory_space<vmem>>, vector<1x32xf32>
      %204 = vector.broadcast %203 : vector<1x32xf32> to vector<160x32xf32>
      %205 = arith.addf %202, %204 : vector<160x32xf32>
      %cst_73 = arith.constant 0.000000e+00 : f32
      %206 = vector.broadcast %cst_73 : f32 to vector<160x32xf32>
      %207 = arith.maximumf %205, %206 : vector<160x32xf32>
      %c0_74 = arith.constant 0 : index
      %c0_75 = arith.constant 0 : index
      %208 = vector.load %arg14[%c0_74, %c0_75] : memref<160x32xf32, #tpu.memory_space<vmem>>, vector<160x32xf32>
      tpu.vector_store %arg14[%c0_74, %c0_75], %207 {strides = array<i32>} : memref<160x32xf32, #tpu.memory_space<vmem>>, vector<160x32xf32>,
    } else {
    }
    return
  }
  func.func @transform_0(%arg0: i32, %arg1: i32) -> (i32, i32) {
    %c0_i32 = arith.constant 0 : i32
    return %arg0, %arg1 : i32, i32
  }
  func.func @transform_1(%arg0: i32, %arg1: i32) -> (i32, i32) {
    %c0_i32 = arith.constant 0 : i32
    %c0_i32_0 = arith.constant 0 : i32
    return %c0_i32, %arg1 : i32, i32
  }
  func.func @transform_2(%arg0: i32, %arg1: i32) -> (i32, i32) {
    %c0_i32 = arith.constant 0 : i32
    %c0_i32_0 = arith.constant 0 : i32
    return %arg1, %c0_i32 : i32, i32
  }
  func.func @transform_3(%arg0: i32, %arg1: i32) -> (i32, i32) {
    %c0_i32 = arith.constant 0 : i32
    %c0_i32_0 = arith.constant 0 : i32
    %c0_i32_1 = arith.constant 0 : i32
    return %c0_i32, %c0_i32_0 : i32, i32
  }
  func.func @transform_4(%arg0: i32, %arg1: i32) -> (i32, i32) {
    %c0_i32 = arith.constant 0 : i32
    %c0_i32_0 = arith.constant 0 : i32
    %c0_i32_1 = arith.constant 0 : i32
    return %c0_i32, %c0_i32_0 : i32, i32
  }
  func.func @transform_5(%arg0: i32, %arg1: i32) -> (i32, i32) {
    %c0_i32 = arith.constant 0 : i32
    %c0_i32_0 = arith.constant 0 : i32
    %c0_i32_1 = arith.constant 0 : i32
    return %c0_i32, %c0_i32_0 : i32, i32
  }
  func.func @transform_6(%arg0: i32, %arg1: i32) -> (i32, i32) {
    %c0_i32 = arith.constant 0 : i32
    %c0_i32_0 = arith.constant 0 : i32
    %c0_i32_1 = arith.constant 0 : i32
    return %c0_i32, %c0_i32_0 : i32, i32
  }
  func.func @transform_7(%arg0: i32, %arg1: i32) -> (i32, i32) {
    %c0_i32 = arith.constant 0 : i32
    %c0_i32_0 = arith.constant 0 : i32
    %c0_i32_1 = arith.constant 0 : i32
    return %c0_i32, %c0_i32_0 : i32, i32
  }
  func.func @transform_8(%arg0: i32, %arg1: i32) -> (i32, i32) {
    %c0_i32 = arith.constant 0 : i32
    %c0_i32_0 = arith.constant 0 : i32
    %c0_i32_1 = arith.constant 0 : i32
    return %c0_i32, %c0_i32_0 : i32, i32
  }
  func.func @transform_9(%arg0: i32, %arg1: i32) -> (i32, i32) {
    %c0_i32 = arith.constant 0 : i32
    %c0_i32_0 = arith.constant 0 : i32
    %c0_i32_1 = arith.constant 0 : i32
    return %c0_i32, %c0_i32_0 : i32, i32
  }
  func.func @transform_10(%arg0: i32, %arg1: i32) -> (i32, i32) {
    %c0_i32 = arith.constant 0 : i32
    %c0_i32_0 = arith.constant 0 : i32
    %c0_i32_1 = arith.constant 0 : i32
    return %c0_i32, %c0_i32_0 : i32, i32
  }
  func.func @transform_11(%arg0: i32, %arg1: i32) -> (i32, i32) {
    %c0_i32 = arith.constant 0 : i32
    %c0_i32_0 = arith.constant 0 : i32
    %c0_i32_1 = arith.constant 0 : i32
    return %c0_i32, %c0_i32_0 : i32, i32
  }
  func.func @transform_12(%arg0: i32, %arg1: i32) -> (i32, i32) {
    %c0_i32 = arith.constant 0 : i32
    %c0_i32_0 = arith.constant 0 : i32
    return %arg0, %c0_i32 : i32, i32
  }
}

</mosaic_0001>

<llo_original>
// kernel: allset_transformer_forward.5
$region0: #{allset_transformer_forward.5}
  #allocation0 [shape = 'u32[]', space=smem, size = 0x4, offset = 0x4, fixed_abs, tag = 'smem constant byte address 0x4 - core index']
  #allocation1 [shape = 'u32[144,128]{1,0:T(1,128)}', space=vmem, size = 0x12000, scoped, tag = 'internal scratch']
  #allocation2 [shape = 'f32[1,32]{1,0:T(1,128)}', space=vmem, size = 0x200, scoped, tag = 'scratch operand']
  %s0 = inlined_call_operand.vmem [shape: f32[160,32], index: 0, kind: input, shape index: {}]
  %s1 = inlined_call_operand.vmem [shape: f32[32,4], index: 1, kind: input, shape index: {}]
  %s2 = inlined_call_operand.vmem [shape: f32[1,4], index: 2, kind: input, shape index: {}]
  %s3 = inlined_call_operand.hbm [shape: f32[1,4], index: 3, kind: output, shape index: {}]
  %s4 = sld [smem:[#allocation0]]
  $region30: #{allset_transformer_forward.5} parent=0
    _
  %s6 = ssub.s32 1, %s4
  %s7 = scalar_select 0, %s6, %s4
  $region1: #{allset_transformer_forward.5} parent=0
    #allocation3 [shape = 'u8[512]{0}', space=vmem, size = 0x400, scoped, tag = 'output window, operand 0, single buffered']
    #allocation4 [shape = 's32[1]{0}', space=sflag, size = 0x4, scoped, tag = 'scoped memory for allset_transformer_forward.5']
    %8 = vsyncpa [#allocation4], 0
    // Predicated region
    $region2: #{allset_transformer_forward.5} parent=1 // pred_check
      _
    $region3: #{allset_transformer_forward.5} parent=1 // pred_check_branch
      %10 = sbr.rel (0) target = $region5
    $region4: #{allset_transformer_forward.5} parent=1 // pred_region
      _
    $region5: #{allset_transformer_forward.5} parent=1 // pred_fallthru
      _
    // Predicated region
    $region6: #{allset_transformer_forward.5} parent=1 // pred_check
      _
    $region7: #{allset_transformer_forward.5} parent=1 // pred_check_branch
      %12 = sbr.rel (0) target = $region9
    $region8: #{allset_transformer_forward.5} parent=1 // pred_region
      _
    $region9: #{allset_transformer_forward.5} parent=1 // pred_fallthru
      _
    // Predicated region
    $region10: #{allset_transformer_forward.5} parent=1 // pred_check
      _
    $region11: #{allset_transformer_forward.5} parent=1 // pred_check_branch
      %14 = sbr.rel (0) target = $region13
    $region12: #{allset_transformer_forward.5} parent=1 // pred_region
      _
    $region13: #{allset_transformer_forward.5} parent=1 // pred_fallthru
      _
    %p15 = scmp.eq.s32.totalorder 0, 0
    // Predicated region
    $region14: #{allset_transformer_forward.5} parent=1 // pred_check
      %p16 = pneg %p15
    $region15: #{allset_transformer_forward.5} parent=1 // pred_check_branch
      %18 = sbr.rel (%p16) target = $region17
    $region16: #{allset_transformer_forward.5} parent=1 // pred_region
      %vm19 = vcmask 253952
      %20 = vst.msk [vmem:[#allocation2] sm:$0x1] %vm19, -inf
    $region17: #{allset_transformer_forward.5} parent=1 // pred_fallthru
      _
    %v21 = vld [vmem:[#allocation2] sm:$0x1]
    %v22 = vld [vmem:[%s0] sm:$0xff]
    %v23 = vld [vmem:[%s0 + $0x8] sm:$0xff]
    %v24 = vld [vmem:[%s0 + $0x10] sm:$0xff]
    %v25 = vld [vmem:[%s0 + $0x18] sm:$0xff]
    %v26 = vld [vmem:[%s0 + $0x20] sm:$0xff]
    %v27 = vld [vmem:[%s0 + $0x28] sm:$0xff]
    %v28 = vld [vmem:[%s0 + $0x30] sm:$0xff]
    %v29 = vld [vmem:[%s0 + $0x38] sm:$0xff]
    %v30 = vld [vmem:[%s0 + $0x40] sm:$0xff]
    %v31 = vld [vmem:[%s0 + $0x48] sm:$0xff]
    %v32 = vld [vmem:[%s0 + $0x50] sm:$0xff]
    %v33 = vld [vmem:[%s0 + $0x58] sm:$0xff]
    %v34 = vld [vmem:[%s0 + $0x60] sm:$0xff]
    %v35 = vld [vmem:[%s0 + $0x68] sm:$0xff]
    %v36 = vld [vmem:[%s0 + $0x70] sm:$0xff]
    %v37 = vld [vmem:[%s0 + $0x78] sm:$0xff]
    %v38 = vld [vmem:[%s0 + $0x80] sm:$0xff]
    %v39 = vld [vmem:[%s0 + $0x88] sm:$0xff]
    %v40 = vld [vmem:[%s0 + $0x90] sm:$0xff]
    %v41 = vld [vmem:[%s0 + $0x98] sm:$0xff]
    %vm42 = vcmask 261120
    %v43 = vsel %vm42, %v22, -inf
    %v44 = vsel %vm42, %v23, -inf
    %v45 = vsel %vm42, %v24, -inf
    %v46 = vsel %vm42, %v25, -inf
    %v47 = vsel %vm42, %v26, -inf
    %v48 = vmax.f32 %v43, %v47
    %v49 = vsel %vm42, %v27, -inf
    %v50 = vmax.f32 %v44, %v49
    %v51 = vsel %vm42, %v28, -inf
    %v52 = vmax.f32 %v45, %v51
    %v53 = vsel %vm42, %v29, -inf
    %v54 = vmax.f32 %v46, %v53
    %v55 = vsel %vm42, %v30, -inf
    %v56 = vmax.f32 %v48, %v55
    %v57 = vsel %vm42, %v31, -inf
    %v58 = vmax.f32 %v50, %v57
    %v59 = vsel %vm42, %v32, -inf
    %v60 = vmax.f32 %v52, %v59
    %v61 = vsel %vm42, %v33, -inf
    %v62 = vmax.f32 %v54, %v61
    %v63 = vsel %vm42, %v34, -inf
    %v64 = vmax.f32 %v56, %v63
    %v65 = vsel %vm42, %v35, -inf
    %v66 = vmax.f32 %v58, %v65
    %v67 = vsel %vm42, %v36, -inf
    %v68 = vmax.f32 %v60, %v67
    %v69 = vsel %vm42, %v37, -inf
    %v70 = vmax.f32 %v62, %v69
    %v71 = vsel %vm42, %v38, -inf
    %v72 = vmax.f32 %v64, %v71
    %v73 = vsel %vm42, %v39, -inf
    %v74 = vmax.f32 %v66, %v73
    %v75 = vsel %vm42, %v40, -inf
    %v76 = vmax.f32 %v68, %v75
    %v77 = vsel %vm42, %v41, -inf
    %v78 = vmax.f32 %v70, %v77
    %v79 = vmax.f32 %v72, %v74
    %v80 = vmax.f32 %v76, %v78
    %v81 = vmax.f32 %v79, %v80
    %v82 = vrot.slane %v81, 4
    %v83 = vmax.f32 %v81, %v82
    %v84 = vrot.slane %v83, 2
    %v85 = vmax.f32 %v83, %v84
    %v86 = vrot.slane %v85, 1
    %v87 = vmax.f32 %v85, %v86
    %v88 = vmax.f32 %v21, %v87
    %vm89 = vcmask 253952
    %90 = vst.msk [vmem:[#allocation2] sm:$0x1] %vm89, %v88
    // Predicated region
    $region18: #{allset_transformer_forward.5} parent=1 // pred_check
      %p91 = pneg %p15
    $region19: #{allset_transformer_forward.5} parent=1 // pred_check_branch
      %93 = sbr.rel (%p91) target = $region21
    $region20: #{allset_transformer_forward.5} parent=1 // pred_region
      %v94 = vld [vmem:[#allocation2] sm:$0x1]
      %v95 = vld [vmem:[%s1] sm:$0xff]
      %v96 = vld [vmem:[%s1 + $0x8] sm:$0xff]
      %v97 = vld [vmem:[%s1 + $0x10] sm:$0xff]
      %v98 = vld [vmem:[%s1 + $0x18] sm:$0xff]
      %v99 = vld [vmem:[%s2] sm:$0x1]
      %v101 = vsel %vm42, %v94, 0
      %103 = vmatprep.subr.mxu0 0.0
      %104 = vmatpush1.msra.mxu0 %v95
      %105 = vmatprep.subr.mxu0 0.0
      %106 = vmatpush1.msra.mxu0 %v96
      %107 = vmatprep.subr.mxu0 0.0
      %108 = vmatpush1.msra.mxu0 %v97
      %109 = vmatprep.subr.mxu0 0.0
      %110 = vmatpush1.msra.mxu0 %v98
      %111 = vmatprep.subr.mxu0 0.0
      %112 = vmatpush1.msra.mxu0 0.0
      %113 = vmatprep.subr.mxu0 0.0
      %114 = vmatpush1.msra.mxu0 0.0
      %115 = vmatprep.subr.mxu0 0.0
      %116 = vmatpush1.msra.mxu0 0.0
      %117 = vmatprep.subr.mxu0 0.0
      %118 = vmatpush1.msra.mxu0 0.0
      %119 = vmatprep.subr.mxu0 0.0
      %120 = vmatpush1.msra.mxu0 0.0
      %121 = vmatprep.subr.mxu0 0.0
      %122 = vmatpush1.msra.mxu0 0.0
      %123 = vmatprep.subr.mxu0 0.0
      %124 = vmatpush1.msra.mxu0 0.0
      %125 = vmatprep.subr.mxu0 0.0
      %126 = vmatpush1.msra.mxu0 0.0
      %127 = vmatprep.subr.mxu0 0.0
      %128 = vmatpush1.msra.mxu0 0.0
      %129 = vmatprep.subr.mxu0 0.0
      %130 = vmatpush1.msra.mxu0 0.0
      %131 = vmatprep.subr.mxu0 0.0
      %132 = vmatpush1.msra.mxu0 0.0
      %133 = vmatprep.subr.mxu0 0.0
      %134 = vmatpush1.msra.mxu0 0.0
      %135 = vmatprep.subr.mxu0 0.0
      %136 = vmatpush1.msra.mxu0 0.0
      %137 = vmatprep.subr.mxu0 0.0
      %138 = vmatpush1.msra.mxu0 0.0
      %139 = vmatprep.subr.mxu0 0.0
      %140 = vmatpush1.msra.mxu0 0.0
      %141 = vmatprep.subr.mxu0 0.0
      %142 = vmatpush1.msra.mxu0 0.0
      %143 = vmatprep.subr.mxu0 0.0
      %144 = vmatpush1.msra.mxu0 0.0
      %145 = vmatprep.subr.mxu0 0.0
      %146 = vmatpush1.msra.mxu0 0.0
      %147 = vmatprep.subr.mxu0 0.0
      %148 = vmatpush1.msra.mxu0 0.0
      %149 = vmatprep.subr.mxu0 0.0
      %150 = vmatpush1.msra.mxu0 0.0
      %151 = vmatprep.subr.mxu0 0.0
      %152 = vmatpush1.msra.mxu0 0.0
      %153 = vmatprep.subr.mxu0 0.0
      %154 = vmatpush1.msra.mxu0 0.0
      %155 = vmatprep.subr.mxu0 0.0
      %156 = vmatpush1.msra.mxu0 0.0
      %157 = vmatprep.subr.mxu0 0.0
      %158 = vmatpush1.msra.mxu0 0.0
      %159 = vmatprep.subr.mxu0 0.0
      %160 = vmatpush1.msra.mxu0 0.0
      %161 = vmatprep.subr.mxu0 0.0
      %162 = vmatpush1.msra.mxu0 0.0
      %163 = vmatprep.subr.mxu0 0.0
      %164 = vmatpush1.msra.mxu0 0.0
      %165 = vmatprep.subr.mxu0 0.0
      %166 = vmatpush1.msra.mxu0 0.0
      %167 = vmatprep.mubr.f32.mxu0 0.0
      %168 = vmatmul.mubr.f32.gmra.mrb[0].mxu0 %v101
      %v169 = vpop.f32.mrb[0].mxu0
      %v170 = vadd.f32 %v99, %v169
      %v171 = vpop.f32.mrb[0].mxu0
      %172 = vdwg.mxu0
      %v173 = vxor.u32 %v170, 2147483648
      %v174 = vmul.f32 %v173, 1.442695
      %v175 = vpow.pop %v174
      %v176 = vadd.f32 %v175, 1.0
      %v177 = vrcp.pop %v176
      %v178 = vmul.f32 1.0, %v177
      %vm179 = vcmask 24576
      %180 = vst.msk [vmem:[#allocation3] sm:$0x1] %vm179, %v178
    $region21: #{allset_transformer_forward.5} parent=1 // pred_fallthru
      _
    // Predicated region
    $region22: #{allset_transformer_forward.5} parent=1 // pred_check
      _
    $region23: #{allset_transformer_forward.5} parent=1 // pred_check_branch
      %182 = sbr.rel (0) target = $region25
    $region24: #{allset_transformer_forward.5} parent=1 // pred_region
      %s184 = ssub.s32 16, 16
      %185 = vsyncadd [#allocation4], %s184
      %s187 = sshll.u32 [#allocation3], 4
      %s188 = int_to_ptr.vmem [resolvable:$true] %s187
      %190 = dma.vmem_to_hbm [thread:$0]  %s188, 16, %s3, [#allocation4]
    $region25: #{allset_transformer_forward.5} parent=1 // pred_fallthru
      _
    // Predicated region
    $region26: #{allset_transformer_forward.5} parent=1 // pred_check
      _
    $region27: #{allset_transformer_forward.5} parent=1 // pred_check_branch
      %192 = sbr.rel (0) target = $region29
    $region28: #{allset_transformer_forward.5} parent=1 // pred_region
      %193 = dma.done [#allocation4], 16
    $region29: #{allset_transformer_forward.5} parent=1 // pred_fallthru
      _
    %194 = vsyncpa [#allocation4], 1

// kernel: allset_transformer_forward.3
$region0: #{allset_transformer_forward.3}
  #allocation0 [shape = 'u32[]', space=smem, size = 0x4, offset = 0x4, fixed_abs, tag = 'smem constant byte address 0x4 - core index']
  #allocation1 [shape = 'u32[144,128]{1,0:T(1,128)}', space=vmem, size = 0x12000, scoped, tag = 'internal scratch']
  #allocation2 [shape = 'f32[64,4]{1,0:T(8,128)}', space=vmem, size = 0x8000, scoped, tag = 'scratch operand']
  #allocation3 [shape = 'f32[64,4]{1,0:T(8,128)}', space=vmem, size = 0x8000, scoped, tag = 'scratch operand']
  #allocation4 [shape = 'f32[64,32]{1,0:T(8,128)}', space=vmem, size = 0x8000, scoped, tag = 'scratch operand']
  #allocation5 [shape = 'f32[64,1]{1,0:T(8,128)}', space=vmem, size = 0x8000, scoped, tag = 'scratch operand']
  %s0 = inlined_call_operand.vmem [shape: s8[64,256], index: 0, kind: input, shape index: {}]
  %s1 = inlined_call_operand.vmem [shape: f32[8,256], index: 1, kind: input, shape index: {}]
  %s2 = inlined_call_operand.vmem [shape: f32[256,32], index: 2, kind: input, shape index: {}]
  %s3 = inlined_call_operand.vmem [shape: f32[1,32], index: 3, kind: input, shape index: {}]
  %s4 = inlined_call_operand.vmem [shape: f32[1,32], index: 4, kind: input, shape index: {}]
  %s5 = inlined_call_operand.vmem [shape: f32[1,32], index: 5, kind: input, shape index: {}]
  %s6 = inlined_call_operand.vmem [shape: f32[32,32], index: 6, kind: input, shape index: {}]
  %s7 = inlined_call_operand.vmem [shape: f32[1,32], index: 7, kind: input, shape index: {}]
  %s8 = inlined_call_operand.vmem [shape: f32[32,32], index: 8, kind: input, shape index: {}]
  %s9 = inlined_call_operand.vmem [shape: f32[1,32], index: 9, kind: input, shape index: {}]
  %s10 = inlined_call_operand.vmem [shape: f32[1,32], index: 10, kind: input, shape index: {}]
  %s11 = inlined_call_operand.vmem [shape: f32[1,32], index: 11, kind: input, shape index: {}]
  %s12 = inlined_call_operand.vmem [shape: f32[64,32], index: 12, kind: output, shape index: {}]
  %s13 = sld [smem:[#allocation0]]
  $region66: #{allset_transformer_forward.3} parent=0
    _
  %s15 = ssub.s32 1, %s13
  %s16 = scalar_select 0, %s15, %s13
  // Predicated region
  $region2: #{allset_transformer_forward.3} parent=0 // pred_check
    _
  $region3: #{allset_transformer_forward.3} parent=0 // pred_check_branch
    %18 = sbr.rel (0) target = $region5
  $region4: #{allset_transformer_forward.3} parent=0 // pred_region
    _
  $region5: #{allset_transformer_forward.3} parent=0 // pred_fallthru
    _
  // Predicated region
  $region6: #{allset_transformer_forward.3} parent=0 // pred_check
    _
  $region7: #{allset_transformer_forward.3} parent=0 // pred_check_branch
    %20 = sbr.rel (0) target = $region9
  $region8: #{allset_transformer_forward.3} parent=0 // pred_region
    _
  $region9: #{allset_transformer_forward.3} parent=0 // pred_fallthru
    _
  // Predicated region
  $region10: #{allset_transformer_forward.3} parent=0 // pred_check
    _
  $region11: #{allset_transformer_forward.3} parent=0 // pred_check_branch
    %22 = sbr.rel (0) target = $region13
  $region12: #{allset_transformer_forward.3} parent=0 // pred_region
    _
  $region13: #{allset_transformer_forward.3} parent=0 // pred_fallthru
    _
  // Predicated region
  $region14: #{allset_transformer_forward.3} parent=0 // pred_check
    _
  $region15: #{allset_transformer_forward.3} parent=0 // pred_check_branch
    %24 = sbr.rel (0) target = $region17
  $region16: #{allset_transformer_forward.3} parent=0 // pred_region
    _
  $region17: #{allset_transformer_forward.3} parent=0 // pred_fallthru
    _
  // Predicated region
  $region18: #{allset_transformer_forward.3} parent=0 // pred_check
    _
  $region19: #{allset_transformer_forward.3} parent=0 // pred_check_branch
    %26 = sbr.rel (0) target = $region21
  $region20: #{allset_transformer_forward.3} parent=0 // pred_region
    _
  $region21: #{allset_transformer_forward.3} parent=0 // pred_fallthru
    _
  // Predicated region
  $region22: #{allset_transformer_forward.3} parent=0 // pred_check
    _
  $region23: #{allset_transformer_forward.3} parent=0 // pred_check_branch
    %28 = sbr.rel (0) target = $region25
  $region24: #{allset_transformer_forward.3} parent=0 // pred_region
    _
  $region25: #{allset_transformer_forward.3} parent=0 // pred_fallthru
    _
  // Predicated region
  $region26: #{allset_transformer_forward.3} parent=0 // pred_check
    _
  $region27: #{allset_transformer_forward.3} parent=0 // pred_check_branch
    %30 = sbr.rel (0) target = $region29
  $region28: #{allset_transformer_forward.3} parent=0 // pred_region
    _
  $region29: #{allset_transformer_forward.3} parent=0 // pred_fallthru
    _
  // Predicated region
  $region30: #{allset_transformer_forward.3} parent=0 // pred_check
    _
  $region31: #{allset_transformer_forward.3} parent=0 // pred_check_branch
    %32 = sbr.rel (0) target = $region33
  $region32: #{allset_transformer_forward.3} parent=0 // pred_region
    _
  $region33: #{allset_transformer_forward.3} parent=0 // pred_fallthru
    _
  // Predicated region
  $region34: #{allset_transformer_forward.3} parent=0 // pred_check
    _
  $region35: #{allset_transformer_forward.3} parent=0 // pred_check_branch
    %34 = sbr.rel (0) target = $region37
  $region36: #{allset_transformer_forward.3} parent=0 // pred_region
    _
  $region37: #{allset_transformer_forward.3} parent=0 // pred_fallthru
    _
  // Predicated region
  $region38: #{allset_transformer_forward.3} parent=0 // pred_check
    _
  $region39: #{allset_transformer_forward.3} parent=0 // pred_check_branch
    %36 = sbr.rel (0) target = $region41
  $region40: #{allset_transformer_forward.3} parent=0 // pred_region
    _
  $region41: #{allset_transformer_forward.3} parent=0 // pred_fallthru
    _
  // Predicated region
  $region42: #{allset_transformer_forward.3} parent=0 // pred_check
    _
  $region43: #{allset_transformer_forward.3} parent=0 // pred_check_branch
    %38 = sbr.rel (0) target = $region45
  $region44: #{allset_transformer_forward.3} parent=0 // pred_region
    _
  $region45: #{allset_transformer_forward.3} parent=0 // pred_fallthru
    _
  // Predicated region
  $region46: #{allset_transformer_forward.3} parent=0 // pred_check
    _
  $region47: #{allset_transformer_forward.3} parent=0 // pred_check_branch
    %40 = sbr.rel (0) target = $region49
  $region48: #{allset_transformer_forward.3} parent=0 // pred_region
    _
  $region49: #{allset_transformer_forward.3} parent=0 // pred_fallthru
    _
  %p41 = scmp.eq.s32.totalorder 0, 0
  // Predicated region
  $region50: #{allset_transformer_forward.3} parent=0 // pred_check
    %p42 = pneg %p41
  $region51: #{allset_transformer_forward.3} parent=0 // pred_check_branch
    %44 = sbr.rel (%p42) target = $region53
  $region52: #{allset_transformer_forward.3} parent=0 // pred_region
    %vm45 = vcmask 31744
    %46 = vst.msk [vmem:[#allocation2] sm:$0xff] %vm45, -1e+30
    %47 = vst.msk [vmem:[#allocation2 + $0x8] sm:$0xff] %vm45, -1e+30
    %48 = vst.msk [vmem:[#allocation2 + $0x10] sm:$0xff] %vm45, -1e+30
    %49 = vst.msk [vmem:[#allocation2 + $0x18] sm:$0xff] %vm45, -1e+30
    %50 = vst.msk [vmem:[#allocation2 + $0x20] sm:$0xff] %vm45, -1e+30
    %51 = vst.msk [vmem:[#allocation2 + $0x28] sm:$0xff] %vm45, -1e+30
    %52 = vst.msk [vmem:[#allocation2 + $0x30] sm:$0xff] %vm45, -1e+30
    %53 = vst.msk [vmem:[#allocation2 + $0x38] sm:$0xff] %vm45, -1e+30
    %54 = vst.msk [vmem:[#allocation3] sm:$0xff] %vm45, 0.0
    %55 = vst.msk [vmem:[#allocation3 + $0x8] sm:$0xff] %vm45, 0.0
    %56 = vst.msk [vmem:[#allocation3 + $0x10] sm:$0xff] %vm45, 0.0
    %57 = vst.msk [vmem:[#allocation3 + $0x18] sm:$0xff] %vm45, 0.0
    %58 = vst.msk [vmem:[#allocation3 + $0x20] sm:$0xff] %vm45, 0.0
    %59 = vst.msk [vmem:[#allocation3 + $0x28] sm:$0xff] %vm45, 0.0
    %60 = vst.msk [vmem:[#allocation3 + $0x30] sm:$0xff] %vm45, 0.0
    %61 = vst.msk [vmem:[#allocation3 + $0x38] sm:$0xff] %vm45, 0.0
    %vm62 = vcmask 261120
    %63 = vst.msk [vmem:[#allocation4] sm:$0xff] %vm62, 0.0
    %64 = vst.msk [vmem:[#allocation4 + $0x8] sm:$0xff] %vm62, 0.0
    %65 = vst.msk [vmem:[#allocation4 + $0x10] sm:$0xff] %vm62, 0.0
    %66 = vst.msk [vmem:[#allocation4 + $0x18] sm:$0xff] %vm62, 0.0
    %67 = vst.msk [vmem:[#allocation4 + $0x20] sm:$0xff] %vm62, 0.0
    %68 = vst.msk [vmem:[#allocation4 + $0x28] sm:$0xff] %vm62, 0.0
    %69 = vst.msk [vmem:[#allocation4 + $0x30] sm:$0xff] %vm62, 0.0
    %70 = vst.msk [vmem:[#allocation4 + $0x38] sm:$0xff] %vm62, 0.0
    %vm71 = vcmask 7168
    %72 = vst.msk [vmem:[#allocation5] sm:$0xff] %vm71, 0.0
    %73 = vst.msk [vmem:[#allocation5 + $0x8] sm:$0xff] %vm71, 0.0
    %74 = vst.msk [vmem:[#allocation5 + $0x10] sm:$0xff] %vm71, 0.0
    %75 = vst.msk [vmem:[#allocation5 + $0x18] sm:$0xff] %vm71, 0.0
    %76 = vst.msk [vmem:[#allocation5 + $0x20] sm:$0xff] %vm71, 0.0
    %77 = vst.msk [vmem:[#allocation5 + $0x28] sm:$0xff] %vm71, 0.0
    %78 = vst.msk [vmem:[#allocation5 + $0x30] sm:$0xff] %vm71, 0.0
    %79 = vst.msk [vmem:[#allocation5 + $0x38] sm:$0xff] %vm71, 0.0
  $region53: #{allset_transformer_forward.3} parent=0 // pred_fallthru
    _
  %v80 = vld [vmem:[%s0] sm:$0xff]
  %v81 = vld [vmem:[%s0 + $0x8] sm:$0xff]
  %v82 = vld [vmem:[%s0 + $0x10] sm:$0xff]
  %v83 = vld [vmem:[%s0 + $0x18] sm:$0xff]
  %v84 = vunpack.c.0.s8 %v80
  %v85 = vunpack.c.0.s8 %v81
  %v86 = vunpack.c.1.s8 %v80
  %v87 = vunpack.c.1.s8 %v81
  %v88 = vunpack.c.2.s8 %v80
  %v89 = vunpack.c.2.s8 %v81
  %v90 = vunpack.c.3.s8 %v80
  %v91 = vunpack.c.3.s8 %v81
  %v92 = vunpack.c.0.s8 %v82
  %v93 = vunpack.c.0.s8 %v83
  %v94 = vunpack.c.1.s8 %v82
  %v95 = vunpack.c.1.s8 %v83
  %v96 = vunpack.c.2.s8 %v82
  %v97 = vunpack.c.2.s8 %v83
  %v98 = vunpack.c.3.s8 %v82
  %v99 = vunpack.c.3.s8 %v83
  %v100 = vcvt.s32.f32 %v84
  %v101 = vcvt.s32.f32 %v85
  %v102 = vcvt.s32.f32 %v86
  %v103 = vcvt.s32.f32 %v87
  %v104 = vcvt.s32.f32 %v88
  %v105 = vcvt.s32.f32 %v89
  %v106 = vcvt.s32.f32 %v90
  %v107 = vcvt.s32.f32 %v91
  %v108 = vcvt.s32.f32 %v92
  %v109 = vcvt.s32.f32 %v93
  %v110 = vcvt.s32.f32 %v94
  %v111 = vcvt.s32.f32 %v95
  %v112 = vcvt.s32.f32 %v96
  %v113 = vcvt.s32.f32 %v97
  %v114 = vcvt.s32.f32 %v98
  %v115 = vcvt.s32.f32 %v99
  %v116 = vsub.f32 %v100, 1.0
  %v117 = vsub.f32 %v101, 1.0
  %v118 = vsub.f32 %v102, 1.0
  %v119 = vsub.f32 %v103, 1.0
  %v120 = vsub.f32 %v104, 1.0
  %v121 = vsub.f32 %v105, 1.0
  %v122 = vsub.f32 %v106, 1.0
  %v123 = vsub.f32 %v107, 1.0
  %v124 = vsub.f32 %v108, 1.0
  %v125 = vsub.f32 %v109, 1.0
  %v126 = vsub.f32 %v110, 1.0
  %v127 = vsub.f32 %v111, 1.0
  %v128 = vsub.f32 %v112, 1.0
  %v129 = vsub.f32 %v113, 1.0
  %v130 = vsub.f32 %v114, 1.0
  %v131 = vsub.f32 %v115, 1.0
  %v132 = vmul.f32 %v116, 1e+30
  %v133 = vmul.f32 %v117, 1e+30
  %v134 = vmul.f32 %v118, 1e+30
  %v135 = vmul.f32 %v119, 1e+30
  %v136 = vmul.f32 %v120, 1e+30
  %v137 = vmul.f32 %v121, 1e+30
  %v138 = vmul.f32 %v122, 1e+30
  %v139 = vmul.f32 %v123, 1e+30
  %v140 = vmul.f32 %v124, 1e+30
  %v141 = vmul.f32 %v125, 1e+30
  %v142 = vmul.f32 %v126, 1e+30
  %v143 = vmul.f32 %v127, 1e+30
  %v144 = vmul.f32 %v128, 1e+30
  %v145 = vmul.f32 %v129, 1e+30
  %v146 = vmul.f32 %v130, 1e+30
  %v147 = vmul.f32 %v131, 1e+30
  %v148 = vld [vmem:[#allocation5] sm:$0xff]
  %v149 = vld [vmem:[#allocation5 + $0x8] sm:$0xff]
  %v150 = vld [vmem:[#allocation5 + $0x10] sm:$0xff]
  %v151 = vld [vmem:[#allocation5 + $0x18] sm:$0xff]
  %v152 = vld [vmem:[#allocation5 + $0x20] sm:$0xff]
  %v153 = vld [vmem:[#allocation5 + $0x28] sm:$0xff]
  %v154 = vld [vmem:[#allocation5 + $0x30] sm:$0xff]
  %v155 = vld [vmem:[#allocation5 + $0x38] sm:$0xff]
  %v156 = vadd.f32 %v100, %v101
  %157 = vadd.xlane.f32.xlu0 %v156
  %v158 = vpop.xlane.xlu0 %157
  %v159 = vadd.f32 %v102, %v103
  %160 = vadd.xlane.f32.xlu0 %v159
  %v161 = vpop.xlane.xlu0 %160
  %v162 = vadd.f32 %v104, %v105
  %163 = vadd.xlane.f32.xlu0 %v162
  %v164 = vpop.xlane.xlu0 %163
  %v165 = vadd.f32 %v106, %v107
  %166 = vadd.xlane.f32.xlu0 %v165
  %v167 = vpop.xlane.xlu0 %166
  %v168 = vadd.f32 %v108, %v109
  %169 = vadd.xlane.f32.xlu0 %v168
  %v170 = vpop.xlane.xlu0 %169
  %v171 = vadd.f32 %v110, %v111
  %172 = vadd.xlane.f32.xlu0 %v171
  %v173 = vpop.xlane.xlu0 %172
  %v174 = vadd.f32 %v112, %v113
  %175 = vadd.xlane.f32.xlu0 %v174
  %v176 = vpop.xlane.xlu0 %175
  %v177 = vadd.f32 %v114, %v115
  %178 = vadd.xlane.f32.xlu0 %v177
  %v179 = vpop.xlane.xlu0 %178
  %v180 = vadd.f32 %v148, %v158
  %v181 = vadd.f32 %v149, %v161
  %v182 = vadd.f32 %v150, %v164
  %v183 = vadd.f32 %v151, %v167
  %v184 = vadd.f32 %v152, %v170
  %v185 = vadd.f32 %v153, %v173
  %v186 = vadd.f32 %v154, %v176
  %v187 = vadd.f32 %v155, %v179
  %vm188 = vcmask 7168
  %189 = vst.msk [vmem:[#allocation5] sm:$0xff] %vm188, %v180
  %190 = vst.msk [vmem:[#allocation5 + $0x8] sm:$0xff] %vm188, %v181
  %191 = vst.msk [vmem:[#allocation5 + $0x10] sm:$0xff] %vm188, %v182
  %192 = vst.msk [vmem:[#allocation5 + $0x18] sm:$0xff] %vm188, %v183
  %193 = vst.msk [vmem:[#allocation5 + $0x20] sm:$0xff] %vm188, %v184
  %194 = vst.msk [vmem:[#allocation5 + $0x28] sm:$0xff] %vm188, %v185
  %195 = vst.msk [vmem:[#allocation5 + $0x30] sm:$0xff] %vm188, %v186
  %196 = vst.msk [vmem:[#allocation5 + $0x38] sm:$0xff] %vm188, %v187
  %v197 = vld [vmem:[%s1] sm:$0xff]
  %v198 = vld [vmem:[%s1 + $0x8] sm:$0xff]
  %v199 = vld [vmem:[%s2] sm:$0xff]
  %v200 = vld [vmem:[%s2 + $0x8] sm:$0xff]
  %v201 = vld [vmem:[%s2 + $0x10] sm:$0xff]
  %v202 = vld [vmem:[%s2 + $0x18] sm:$0xff]
  %v203 = vld [vmem:[%s2 + $0x20] sm:$0xff]
  %v204 = vld [vmem:[%s2 + $0x28] sm:$0xff]
  %v205 = vld [vmem:[%s2 + $0x30] sm:$0xff]
  %v206 = vld [vmem:[%s2 + $0x38] sm:$0xff]
  %v207 = vld [vmem:[%s2 + $0x40] sm:$0xff]
  %v208 = vld [vmem:[%s2 + $0x48] sm:$0xff]
  %v209 = vld [vmem:[%s2 + $0x50] sm:$0xff]
  %v210 = vld [vmem:[%s2 + $0x58] sm:$0xff]
  %v211 = vld [vmem:[%s2 + $0x60] sm:$0xff]
  %v212 = vld [vmem:[%s2 + $0x68] sm:$0xff]
  %v213 = vld [vmem:[%s2 + $0x70] sm:$0xff]
  %v214 = vld [vmem:[%s2 + $0x78] sm:$0xff]
  %v215 = vld [vmem:[%s2 + $0x80] sm:$0xff]
  %v216 = vld [vmem:[%s2 + $0x88] sm:$0xff]
  %v217 = vld [vmem:[%s2 + $0x90] sm:$0xff]
  %v218 = vld [vmem:[%s2 + $0x98] sm:$0xff]
  %v219 = vld [vmem:[%s2 + $0xa0] sm:$0xff]
  %v220 = vld [vmem:[%s2 + $0xa8] sm:$0xff]
  %v221 = vld [vmem:[%s2 + $0xb0] sm:$0xff]
  %v222 = vld [vmem:[%s2 + $0xb8] sm:$0xff]
  %v223 = vld [vmem:[%s2 + $0xc0] sm:$0xff]
  %v224 = vld [vmem:[%s2 + $0xc8] sm:$0xff]
  %v225 = vld [vmem:[%s2 + $0xd0] sm:$0xff]
  %v226 = vld [vmem:[%s2 + $0xd8] sm:$0xff]
  %v227 = vld [vmem:[%s2 + $0xe0] sm:$0xff]
  %v228 = vld [vmem:[%s2 + $0xe8] sm:$0xff]
  %v229 = vld [vmem:[%s2 + $0xf0] sm:$0xff]
  %v230 = vld [vmem:[%s2 + $0xf8] sm:$0xff]
  %v231 = vld [vmem:[#allocation2] sm:$0xff]
  %v232 = vld [vmem:[#allocation2 + $0x8] sm:$0xff]
  %v233 = vld [vmem:[#allocation2 + $0x10] sm:$0xff]
  %v234 = vld [vmem:[#allocation2 + $0x18] sm:$0xff]
  %v235 = vld [vmem:[#allocation2 + $0x20] sm:$0xff]
  %v236 = vld [vmem:[#allocation2 + $0x28] sm:$0xff]
  %v237 = vld [vmem:[#allocation2 + $0x30] sm:$0xff]
  %v238 = vld [vmem:[#allocation2 + $0x38] sm:$0xff]
  %v239 = vld [vmem:[#allocation3] sm:$0xff]
  %v240 = vld [vmem:[#allocation3 + $0x8] sm:$0xff]
  %v241 = vld [vmem:[#allocation3 + $0x10] sm:$0xff]
  %v242 = vld [vmem:[#allocation3 + $0x18] sm:$0xff]
  %v243 = vld [vmem:[#allocation3 + $0x20] sm:$0xff]
  %v244 = vld [vmem:[#allocation3 + $0x28] sm:$0xff]
  %v245 = vld [vmem:[#allocation3 + $0x30] sm:$0xff]
  %v246 = vld [vmem:[#allocation3 + $0x38] sm:$0xff]
  %v247 = vld [vmem:[#allocation4] sm:$0xff]
  %v248 = vld [vmem:[#allocation4 + $0x8] sm:$0xff]
  %v249 = vld [vmem:[#allocation4 + $0x10] sm:$0xff]
  %v250 = vld [vmem:[#allocation4 + $0x18] sm:$0xff]
  %v251 = vld [vmem:[#allocation4 + $0x20] sm:$0xff]
  %v252 = vld [vmem:[#allocation4 + $0x28] sm:$0xff]
  %v253 = vld [vmem:[#allocation4 + $0x30] sm:$0xff]
  %v254 = vld [vmem:[#allocation4 + $0x38] sm:$0xff]
  %v255 = vlaneseq
  %v256 = vshrl.u32 %v255, 7
  %v257 = vsub.s32 0, %v256
  %v258 = vrot.slane %v197, %v257
  %v259 = vlaneseq
  %v260 = vshrl.u32 %v259, 7
  %v261 = vsub.s32 0, %v260
  %v262 = vrot.slane %v198, %v261
  %v263 = vadd.f32 %v132, %v258
  %v264 = vadd.f32 %v133, %v262
  %v265 = vadd.f32 %v134, %v258
  %v266 = vadd.f32 %v135, %v262
  %v267 = vadd.f32 %v136, %v258
  %v268 = vadd.f32 %v137, %v262
  %v269 = vadd.f32 %v138, %v258
  %v270 = vadd.f32 %v139, %v262
  %v271 = vadd.f32 %v140, %v258
  %v272 = vadd.f32 %v141, %v262
  %v273 = vadd.f32 %v142, %v258
  %v274 = vadd.f32 %v143, %v262
  %v275 = vadd.f32 %v144, %v258
  %v276 = vadd.f32 %v145, %v262
  %v277 = vadd.f32 %v146, %v258
  %v278 = vadd.f32 %v147, %v262
  %v279 = vmax.f32 %v263, %v264
  %280 = vmax.xlane.f32.xlu0 %v279
  %v281 = vpop.xlane.xlu0 %280
  %v282 = vmax.f32 %v265, %v266
  %283 = vmax.xlane.f32.xlu0 %v282
  %v284 = vpop.xlane.xlu0 %283
  %v285 = vmax.f32 %v267, %v268
  %286 = vmax.xlane.f32.xlu0 %v285
  %v287 = vpop.xlane.xlu0 %286
  %v288 = vmax.f32 %v269, %v270
  %289 = vmax.xlane.f32.xlu0 %v288
  %v290 = vpop.xlane.xlu0 %289
  %v291 = vmax.f32 %v271, %v272
  %292 = vmax.xlane.f32.xlu0 %v291
  %v293 = vpop.xlane.xlu0 %292
  %v294 = vmax.f32 %v273, %v274
  %295 = vmax.xlane.f32.xlu0 %v294
  %v296 = vpop.xlane.xlu0 %295
  %v297 = vmax.f32 %v275, %v276
  %298 = vmax.xlane.f32.xlu0 %v297
  %v299 = vpop.xlane.xlu0 %298
  %v300 = vmax.f32 %v277, %v278
  %301 = vmax.xlane.f32.xlu0 %v300
  %v302 = vpop.xlane.xlu0 %301
  %v303 = vmax.f32 %v231, %v281
  %v304 = vmax.f32 %v232, %v284
  %v305 = vmax.f32 %v233, %v287
  %v306 = vmax.f32 %v234, %v290
  %v307 = vmax.f32 %v235, %v293
  %v308 = vmax.f32 %v236, %v296
  %v309 = vmax.f32 %v237, %v299
  %v310 = vmax.f32 %v238, %v302
  %v311 = vsub.f32 %v231, %v303
  %v312 = vsub.f32 %v232, %v304
  %v313 = vsub.f32 %v233, %v305
  %v314 = vsub.f32 %v234, %v306
  %v315 = vsub.f32 %v235, %v307
  %v316 = vsub.f32 %v236, %v308
  %v317 = vsub.f32 %v237, %v309
  %v318 = vsub.f32 %v238, %v310
  %v319 = vmul.f32 %v311, 1.442695
  %v320 = vpow.pop %v319
  %v321 = vmul.f32 %v312, 1.442695
  %v322 = vpow.pop %v321
  %v323 = vmul.f32 %v313, 1.442695
  %v324 = vpow.pop %v323
  %v325 = vmul.f32 %v314, 1.442695
  %v326 = vpow.pop %v325
  %v327 = vmul.f32 %v315, 1.442695
  %v328 = vpow.pop %v327
  %v329 = vmul.f32 %v316, 1.442695
  %v330 = vpow.pop %v329
  %v331 = vmul.f32 %v317, 1.442695
  %v332 = vpow.pop %v331
  %v333 = vmul.f32 %v318, 1.442695
  %v334 = vpow.pop %v333
  %336 = vset.pattern.permute.xlu0 0
  %337 = vperm.xlu0 %336, %v303
  %v338 = vpop.permute.xlu0 %337
  %341 = vset.pattern.permute.xlu0 0
  %342 = vperm.xlu0 %341, %v304
  %v343 = vpop.permute.xlu0 %342
  %346 = vset.pattern.permute.xlu0 0
  %347 = vperm.xlu0 %346, %v305
  %v348 = vpop.permute.xlu0 %347
  %351 = vset.pattern.permute.xlu0 0
  %352 = vperm.xlu0 %351, %v306
  %v353 = vpop.permute.xlu0 %352
  %356 = vset.pattern.permute.xlu0 0
  %357 = vperm.xlu0 %356, %v307
  %v358 = vpop.permute.xlu0 %357
  %361 = vset.pattern.permute.xlu0 0
  %362 = vperm.xlu0 %361, %v308
  %v363 = vpop.permute.xlu0 %362
  %366 = vset.pattern.permute.xlu0 0
  %367 = vperm.xlu0 %366, %v309
  %v368 = vpop.permute.xlu0 %367
  %371 = vset.pattern.permute.xlu0 0
  %372 = vperm.xlu0 %371, %v310
  %v373 = vpop.permute.xlu0 %372
  %v375 = vsub.f32 %v263, %v338
  %v376 = vsub.f32 %v264, %v338
  %v377 = vsub.f32 %v265, %v343
  %v378 = vsub.f32 %v266, %v343
  %v379 = vsub.f32 %v267, %v348
  %v380 = vsub.f32 %v268, %v348
  %v381 = vsub.f32 %v269, %v353
  %v382 = vsub.f32 %v270, %v353
  %v383 = vsub.f32 %v271, %v358
  %v384 = vsub.f32 %v272, %v358
  %v385 = vsub.f32 %v273, %v363
  %v386 = vsub.f32 %v274, %v363
  %v387 = vsub.f32 %v275, %v368
  %v388 = vsub.f32 %v276, %v368
  %v389 = vsub.f32 %v277, %v373
  %v390 = vsub.f32 %v278, %v373
  %v391 = vmul.f32 %v375, 1.442695
  %v392 = vpow.pop %v391
  %v393 = vmul.f32 %v376, 1.442695
  %v394 = vpow.pop %v393
  %v395 = vmul.f32 %v377, 1.442695
  %v396 = vpow.pop %v395
  %v397 = vmul.f32 %v378, 1.442695
  %v398 = vpow.pop %v397
  %v399 = vmul.f32 %v379, 1.442695
  %v400 = vpow.pop %v399
  %v401 = vmul.f32 %v380, 1.442695
  %v402 = vpow.pop %v401
  %v403 = vmul.f32 %v381, 1.442695
  %v404 = vpow.pop %v403
  %v405 = vmul.f32 %v382, 1.442695
  %v406 = vpow.pop %v405
  %v407 = vmul.f32 %v383, 1.442695
  %v408 = vpow.pop %v407
  %v409 = vmul.f32 %v384, 1.442695
  %v410 = vpow.pop %v409
  %v411 = vmul.f32 %v385, 1.442695
  %v412 = vpow.pop %v411
  %v413 = vmul.f32 %v386, 1.442695
  %v414 = vpow.pop %v413
  %v415 = vmul.f32 %v387, 1.442695
  %v416 = vpow.pop %v415
  %v417 = vmul.f32 %v388, 1.442695
  %v418 = vpow.pop %v417
  %v419 = vmul.f32 %v389, 1.442695
  %v420 = vpow.pop %v419
  %v421 = vmul.f32 %v390, 1.442695
  %v422 = vpow.pop %v421
  %v423 = vmul.f32 %v320, %v239
  %v424 = vmul.f32 %v322, %v240
  %v425 = vmul.f32 %v324, %v241
  %v426 = vmul.f32 %v326, %v242
  %v427 = vmul.f32 %v328, %v243
  %v428 = vmul.f32 %v330, %v244
  %v429 = vmul.f32 %v332, %v245
  %v430 = vmul.f32 %v334, %v246
  %v431 = vadd.f32 %v392, %v394
  %432 = vadd.xlane.f32.xlu0 %v431
  %v433 = vpop.xlane.xlu0 %432
  %v434 = vadd.f32 %v396, %v398
  %435 = vadd.xlane.f32.xlu0 %v434
  %v436 = vpop.xlane.xlu0 %435
  %v437 = vadd.f32 %v400, %v402
  %438 = vadd.xlane.f32.xlu0 %v437
  %v439 = vpop.xlane.xlu0 %438
  %v440 = vadd.f32 %v404, %v406
  %441 = vadd.xlane.f32.xlu0 %v440
  %v442 = vpop.xlane.xlu0 %441
  %v443 = vadd.f32 %v408, %v410
  %444 = vadd.xlane.f32.xlu0 %v443
  %v445 = vpop.xlane.xlu0 %444
  %v446 = vadd.f32 %v412, %v414
  %447 = vadd.xlane.f32.xlu0 %v446
  %v448 = vpop.xlane.xlu0 %447
  %v449 = vadd.f32 %v416, %v418
  %450 = vadd.xlane.f32.xlu0 %v449
  %v451 = vpop.xlane.xlu0 %450
  %v452 = vadd.f32 %v420, %v422
  %453 = vadd.xlane.f32.xlu0 %v452
  %v454 = vpop.xlane.xlu0 %453
  %v455 = vadd.f32 %v423, %v433
  %v456 = vadd.f32 %v424, %v436
  %v457 = vadd.f32 %v425, %v439
  %v458 = vadd.f32 %v426, %v442
  %v459 = vadd.f32 %v427, %v445
  %v460 = vadd.f32 %v428, %v448
  %v461 = vadd.f32 %v429, %v451
  %v462 = vadd.f32 %v430, %v454
  %463 = vmatprep.subr.mxu0 0.0
  %464 = vmatpush1.msra.mxu0 %v199
  %465 = vmatprep.subr.mxu0 0.0
  %466 = vmatpush1.msra.mxu0 %v200
  %467 = vmatprep.subr.mxu0 0.0
  %468 = vmatpush1.msra.mxu0 %v201
  %469 = vmatprep.subr.mxu0 0.0
  %470 = vmatpush1.msra.mxu0 %v202
  %471 = vmatprep.subr.mxu0 0.0
  %472 = vmatpush1.msra.mxu0 %v203
  %473 = vmatprep.subr.mxu0 0.0
  %474 = vmatpush1.msra.mxu0 %v204
  %475 = vmatprep.subr.mxu0 0.0
  %476 = vmatpush1.msra.mxu0 %v205
  %477 = vmatprep.subr.mxu0 0.0
  %478 = vmatpush1.msra.mxu0 %v206
  %479 = vmatprep.subr.mxu0 0.0
  %480 = vmatpush1.msra.mxu0 %v207
  %481 = vmatprep.subr.mxu0 0.0
  %482 = vmatpush1.msra.mxu0 %v208
  %483 = vmatprep.subr.mxu0 0.0
  %484 = vmatpush1.msra.mxu0 %v209
  %485 = vmatprep.subr.mxu0 0.0
  %486 = vmatpush1.msra.mxu0 %v210
  %487 = vmatprep.subr.mxu0 0.0
  %488 = vmatpush1.msra.mxu0 %v211
  %489 = vmatprep.subr.mxu0 0.0
  %490 = vmatpush1.msra.mxu0 %v212
  %491 = vmatprep.subr.mxu0 0.0
  %492 = vmatpush1.msra.mxu0 %v213
  %493 = vmatprep.subr.mxu0 0.0
  %494 = vmatpush1.msra.mxu0 %v214
  %495 = vmatprep.subr.mxu0 0.0
  %496 = vmatpush1.msra.mxu0 %v215
  %497 = vmatprep.subr.mxu0 0.0
  %498 = vmatpush1.msra.mxu0 %v216
  %499 = vmatprep.subr.mxu0 0.0
  %500 = vmatpush1.msra.mxu0 %v217
  %501 = vmatprep.subr.mxu0 0.0
  %502 = vmatpush1.msra.mxu0 %v218
  %503 = vmatprep.subr.mxu0 0.0
  %504 = vmatpush1.msra.mxu0 %v219
  %505 = vmatprep.subr.mxu0 0.0
  %506 = vmatpush1.msra.mxu0 %v220
  %507 = vmatprep.subr.mxu0 0.0
  %508 = vmatpush1.msra.mxu0 %v221
  %509 = vmatprep.subr.mxu0 0.0
  %510 = vmatpush1.msra.mxu0 %v222
  %511 = vmatprep.subr.mxu0 0.0
  %512 = vmatpush1.msra.mxu0 %v223
  %513 = vmatprep.subr.mxu0 0.0
  %514 = vmatpush1.msra.mxu0 %v224
  %515 = vmatprep.subr.mxu0 0.0
  %516 = vmatpush1.msra.mxu0 %v225
  %517 = vmatprep.subr.mxu0 0.0
  %518 = vmatpush1.msra.mxu0 %v226
  %519 = vmatprep.subr.mxu0 0.0
  %520 = vmatpush1.msra.mxu0 %v227
  %521 = vmatprep.subr.mxu0 0.0
  %522 = vmatpush1.msra.mxu0 %v228
  %523 = vmatprep.subr.mxu0 0.0
  %524 = vmatpush1.msra.mxu0 %v229
  %525 = vmatprep.subr.mxu0 0.0
  %526 = vmatpush1.msra.mxu0 %v230
  %527 = vmatprep.mubr.f32.mxu0 %v394
  %528 = vmatmul.mubr.f32.gmra.mrb[0].mxu0 %v392
  %v529 = vpop.f32.mrb[0].mxu0
  %v530 = vadd.f32 0.0, %v529
  %v531 = vpop.f32.mrb[0].mxu0
  %532 = vmatprep.mubr.f32.mxu0 %v398
  %533 = vmatmul.mubr.f32.gmra.mrb[0].mxu0 %v396
  %v534 = vpop.f32.mrb[0].mxu0
  %v535 = vadd.f32 0.0, %v534
  %v536 = vpop.f32.mrb[0].mxu0
  %537 = vmatprep.mubr.f32.mxu0 %v402
  %538 = vmatmul.mubr.f32.gmra.mrb[0].mxu0 %v400
  %v539 = vpop.f32.mrb[0].mxu0
  %v540 = vadd.f32 0.0, %v539
  %v541 = vpop.f32.mrb[0].mxu0
  %542 = vmatprep.mubr.f32.mxu0 %v406
  %543 = vmatmul.mubr.f32.gmra.mrb[0].mxu0 %v404
  %v544 = vpop.f32.mrb[0].mxu0
  %v545 = vadd.f32 0.0, %v544
  %v546 = vpop.f32.mrb[0].mxu0
  %547 = vmatprep.mubr.f32.mxu0 %v410
  %548 = vmatmul.mubr.f32.gmra.mrb[0].mxu0 %v408
  %v549 = vpop.f32.mrb[0].mxu0
  %v550 = vadd.f32 0.0, %v549
  %v551 = vpop.f32.mrb[0].mxu0
  %552 = vmatprep.mubr.f32.mxu0 %v414
  %553 = vmatmul.mubr.f32.gmra.mrb[0].mxu0 %v412
  %v554 = vpop.f32.mrb[0].mxu0
  %v555 = vadd.f32 0.0, %v554
  %v556 = vpop.f32.mrb[0].mxu0
  %557 = vmatprep.mubr.f32.mxu0 %v418
  %558 = vmatmul.mubr.f32.gmra.mrb[0].mxu0 %v416
  %v559 = vpop.f32.mrb[0].mxu0
  %v560 = vadd.f32 0.0, %v559
  %v561 = vpop.f32.mrb[0].mxu0
  %562 = vmatprep.mubr.f32.mxu0 %v422
  %563 = vmatmul.mubr.f32.gmra.mrb[0].mxu0 %v420
  %v564 = vpop.f32.mrb[0].mxu0
  %v565 = vadd.f32 0.0, %v564
  %v566 = vpop.f32.mrb[0].mxu0
  %567 = vdwg.mxu0
  %569 = vset.pattern.permute.xlu0 0
  %570 = vperm.xlu0 %569, %v320
  %v571 = vpop.permute.xlu0 %570
  %574 = vset.pattern.permute.xlu0 0
  %575 = vperm.xlu0 %574, %v322
  %v576 = vpop.permute.xlu0 %575
  %579 = vset.pattern.permute.xlu0 0
  %580 = vperm.xlu0 %579, %v324
  %v581 = vpop.permute.xlu0 %580
  %584 = vset.pattern.permute.xlu0 0
  %585 = vperm.xlu0 %584, %v326
  %v586 = vpop.permute.xlu0 %585
  %589 = vset.pattern.permute.xlu0 0
  %590 = vperm.xlu0 %589, %v328
  %v591 = vpop.permute.xlu0 %590
  %594 = vset.pattern.permute.xlu0 0
  %595 = vperm.xlu0 %594, %v330
  %v596 = vpop.permute.xlu0 %595
  %599 = vset.pattern.permute.xlu0 0
  %600 = vperm.xlu0 %599, %v332
  %v601 = vpop.permute.xlu0 %600
  %604 = vset.pattern.permute.xlu0 0
  %605 = vperm.xlu0 %604, %v334
  %v606 = vpop.permute.xlu0 %605
  %v608 = vmul.f32 %v571, %v247
  %v609 = vmul.f32 %v576, %v248
  %v610 = vmul.f32 %v581, %v249
  %v611 = vmul.f32 %v586, %v250
  %v612 = vmul.f32 %v591, %v251
  %v613 = vmul.f32 %v596, %v252
  %v614 = vmul.f32 %v601, %v253
  %v615 = vmul.f32 %v606, %v254
  %v616 = vadd.f32 %v608, %v530
  %v617 = vadd.f32 %v609, %v535
  %v618 = vadd.f32 %v610, %v540
  %v619 = vadd.f32 %v611, %v545
  %v620 = vadd.f32 %v612, %v550
  %v621 = vadd.f32 %v613, %v555
  %v622 = vadd.f32 %v614, %v560
  %v623 = vadd.f32 %v615, %v565
  %v624 = vlaneseq
  %v625 = vshrl.u32 %v624, 7
  %v626 = vsub.s32 1, %v625
  %v627 = vrot.slane %v197, %v626
  %v628 = vlaneseq
  %v629 = vshrl.u32 %v628, 7
  %v630 = vsub.s32 1, %v629
  %v631 = vrot.slane %v198, %v630
  %v632 = vadd.f32 %v132, %v627
  %v633 = vadd.f32 %v133, %v631
  %v634 = vadd.f32 %v134, %v627
  %v635 = vadd.f32 %v135, %v631
  %v636 = vadd.f32 %v136, %v627
  %v637 = vadd.f32 %v137, %v631
  %v638 = vadd.f32 %v138, %v627
  %v639 = vadd.f32 %v139, %v631
  %v640 = vadd.f32 %v140, %v627
  %v641 = vadd.f32 %v141, %v631
  %v642 = vadd.f32 %v142, %v627
  %v643 = vadd.f32 %v143, %v631
  %v644 = vadd.f32 %v144, %v627
  %v645 = vadd.f32 %v145, %v631
  %v646 = vadd.f32 %v146, %v627
  %v647 = vadd.f32 %v147, %v631
  %v648 = vmax.f32 %v632, %v633
  %649 = vmax.xlane.f32.xlu0 %v648
  %v650 = vpop.xlane.xlu0 %649
  %v651 = vmax.f32 %v634, %v635
  %652 = vmax.xlane.f32.xlu0 %v651
  %v653 = vpop.xlane.xlu0 %652
  %v654 = vmax.f32 %v636, %v637
  %655 = vmax.xlane.f32.xlu0 %v654
  %v656 = vpop.xlane.xlu0 %655
  %v657 = vmax.f32 %v638, %v639
  %658 = vmax.xlane.f32.xlu0 %v657
  %v659 = vpop.xlane.xlu0 %658
  %v660 = vmax.f32 %v640, %v641
  %661 = vmax.xlane.f32.xlu0 %v660
  %v662 = vpop.xlane.xlu0 %661
  %v663 = vmax.f32 %v642, %v643
  %664 = vmax.xlane.f32.xlu0 %v663
  %v665 = vpop.xlane.xlu0 %664
  %v666 = vmax.f32 %v644, %v645
  %667 = vmax.xlane.f32.xlu0 %v666
  %v668 = vpop.xlane.xlu0 %667
  %v669 = vmax.f32 %v646, %v647
  %670 = vmax.xlane.f32.xlu0 %v669
  %v671 = vpop.xlane.xlu0 %670
  %v672 = vmax.f32 %v231, %v650
  %v673 = vmax.f32 %v232, %v653
  %v674 = vmax.f32 %v233, %v656
  %v675 = vmax.f32 %v234, %v659
  %v676 = vmax.f32 %v235, %v662
  %v677 = vmax.f32 %v236, %v665
  %v678 = vmax.f32 %v237, %v668
  %v679 = vmax.f32 %v238, %v671
  %v680 = vsub.f32 %v231, %v672
  %v681 = vsub.f32 %v232, %v673
  %v682 = vsub.f32 %v233, %v674
  %v683 = vsub.f32 %v234, %v675
  %v684 = vsub.f32 %v235, %v676
  %v685 = vsub.f32 %v236, %v677
  %v686 = vsub.f32 %v237, %v678
  %v687 = vsub.f32 %v238, %v679
  %v688 = vmul.f32 %v680, 1.442695
  %v689 = vpow.pop %v688
  %v690 = vmul.f32 %v681, 1.442695
  %v691 = vpow.pop %v690
  %v692 = vmul.f32 %v682, 1.442695
  %v693 = vpow.pop %v692
  %v694 = vmul.f32 %v683, 1.442695
  %v695 = vpow.pop %v694
  %v696 = vmul.f32 %v684, 1.442695
  %v697 = vpow.pop %v696
  %v698 = vmul.f32 %v685, 1.442695
  %v699 = vpow.pop %v698
  %v700 = vmul.f32 %v686, 1.442695
  %v701 = vpow.pop %v700
  %v702 = vmul.f32 %v687, 1.442695
  %v703 = vpow.pop %v702
  %705 = vset.pattern.permute.xlu0 1
  %706 = vperm.xlu0 %705, %v672
  %v707 = vpop.permute.xlu0 %706
  %710 = vset.pattern.permute.xlu0 1
  %711 = vperm.xlu0 %710, %v673
  %v712 = vpop.permute.xlu0 %711
  %715 = vset.pattern.permute.xlu0 1
  %716 = vperm.xlu0 %715, %v674
  %v717 = vpop.permute.xlu0 %716
  %720 = vset.pattern.permute.xlu0 1
  %721 = vperm.xlu0 %720, %v675
  %v722 = vpop.permute.xlu0 %721
  %725 = vset.pattern.permute.xlu0 1
  %726 = vperm.xlu0 %725, %v676
  %v727 = vpop.permute.xlu0 %726
  %730 = vset.pattern.permute.xlu0 1
  %731 = vperm.xlu0 %730, %v677
  %v732 = vpop.permute.xlu0 %731
  %735 = vset.pattern.permute.xlu0 1
  %736 = vperm.xlu0 %735, %v678
  %v737 = vpop.permute.xlu0 %736
  %740 = vset.pattern.permute.xlu0 1
  %741 = vperm.xlu0 %740, %v679
  %v742 = vpop.permute.xlu0 %741
  %v744 = vsub.f32 %v632, %v707
  %v745 = vsub.f32 %v633, %v707
  %v746 = vsub.f32 %v634, %v712
  %v747 = vsub.f32 %v635, %v712
  %v748 = vsub.f32 %v636, %v717
  %v749 = vsub.f32 %v637, %v717
  %v750 = vsub.f32 %v638, %v722
  %v751 = vsub.f32 %v639, %v722
  %v752 = vsub.f32 %v640, %v727
  %v753 = vsub.f32 %v641, %v727
  %v754 = vsub.f32 %v642, %v732
  %v755 = vsub.f32 %v643, %v732
  %v756 = vsub.f32 %v644, %v737
  %v757 = vsub.f32 %v645, %v737
  %v758 = vsub.f32 %v646, %v742
  %v759 = vsub.f32 %v647, %v742
  %v760 = vmul.f32 %v744, 1.442695
  %v761 = vpow.pop %v760
  %v762 = vmul.f32 %v745, 1.442695
  %v763 = vpow.pop %v762
  %v764 = vmul.f32 %v746, 1.442695
  %v765 = vpow.pop %v764
  %v766 = vmul.f32 %v747, 1.442695
  %v767 = vpow.pop %v766
  %v768 = vmul.f32 %v748, 1.442695
  %v769 = vpow.pop %v768
  %v770 = vmul.f32 %v749, 1.442695
  %v771 = vpow.pop %v770
  %v772 = vmul.f32 %v750, 1.442695
  %v773 = vpow.pop %v772
  %v774 = vmul.f32 %v751, 1.442695
  %v775 = vpow.pop %v774
  %v776 = vmul.f32 %v752, 1.442695
  %v777 = vpow.pop %v776
  %v778 = vmul.f32 %v753, 1.442695
  %v779 = vpow.pop %v778
  %v780 = vmul.f32 %v754, 1.442695
  %v781 = vpow.pop %v780
  %v782 = vmul.f32 %v755, 1.442695
  %v783 = vpow.pop %v782
  %v784 = vmul.f32 %v756, 1.442695
  %v785 = vpow.pop %v784
  %v786 = vmul.f32 %v757, 1.442695
  %v787 = vpow.pop %v786
  %v788 = vmul.f32 %v758, 1.442695
  %v789 = vpow.pop %v788
  %v790 = vmul.f32 %v759, 1.442695
  %v791 = vpow.pop %v790
  %v792 = vmul.f32 %v689, %v239
  %v793 = vmul.f32 %v691, %v240
  %v794 = vmul.f32 %v693, %v241
  %v795 = vmul.f32 %v695, %v242
  %v796 = vmul.f32 %v697, %v243
  %v797 = vmul.f32 %v699, %v244
  %v798 = vmul.f32 %v701, %v245
  %v799 = vmul.f32 %v703, %v246
  %v800 = vadd.f32 %v761, %v763
  %801 = vadd.xlane.f32.xlu0 %v800
  %v802 = vpop.xlane.xlu0 %801
  %v803 = vadd.f32 %v765, %v767
  %804 = vadd.xlane.f32.xlu0 %v803
  %v805 = vpop.xlane.xlu0 %804
  %v806 = vadd.f32 %v769, %v771
  %807 = vadd.xlane.f32.xlu0 %v806
  %v808 = vpop.xlane.xlu0 %807
  %v809 = vadd.f32 %v773, %v775
  %810 = vadd.xlane.f32.xlu0 %v809
  %v811 = vpop.xlane.xlu0 %810
  %v812 = vadd.f32 %v777, %v779
  %813 = vadd.xlane.f32.xlu0 %v812
  %v814 = vpop.xlane.xlu0 %813
  %v815 = vadd.f32 %v781, %v783
  %816 = vadd.xlane.f32.xlu0 %v815
  %v817 = vpop.xlane.xlu0 %816
  %v818 = vadd.f32 %v785, %v787
  %819 = vadd.xlane.f32.xlu0 %v818
  %v820 = vpop.xlane.xlu0 %819
  %v821 = vadd.f32 %v789, %v791
  %822 = vadd.xlane.f32.xlu0 %v821
  %v823 = vpop.xlane.xlu0 %822
  %v824 = vadd.f32 %v792, %v802
  %v825 = vadd.f32 %v793, %v805
  %v826 = vadd.f32 %v794, %v808
  %v827 = vadd.f32 %v795, %v811
  %v828 = vadd.f32 %v796, %v814
  %v829 = vadd.f32 %v797, %v817
  %v830 = vadd.f32 %v798, %v820
  %v831 = vadd.f32 %v799, %v823
  %864 = vrot.lane.b32.xlu0 %v199, 120
  %v865 = vpop.permute.xlu0 %864
  %866 = vrot.lane.b32.xlu0 %v200, 120
  %v867 = vpop.permute.xlu0 %866
  %868 = vrot.lane.b32.xlu0 %v201, 120
  %v869 = vpop.permute.xlu0 %868
  %870 = vrot.lane.b32.xlu0 %v202, 120
  %v871 = vpop.permute.xlu0 %870
  %872 = vrot.lane.b32.xlu0 %v203, 120
  %v873 = vpop.permute.xlu0 %872
  %874 = vrot.lane.b32.xlu0 %v204, 120
  %v875 = vpop.permute.xlu0 %874
  %876 = vrot.lane.b32.xlu0 %v205, 120
  %v877 = vpop.permute.xlu0 %876
  %878 = vrot.lane.b32.xlu0 %v206, 120
  %v879 = vpop.permute.xlu0 %878
  %880 = vrot.lane.b32.xlu0 %v207, 120
  %v881 = vpop.permute.xlu0 %880
  %882 = vrot.lane.b32.xlu0 %v208, 120
  %v883 = vpop.permute.xlu0 %882
  %884 = vrot.lane.b32.xlu0 %v209, 120
  %v885 = vpop.permute.xlu0 %884
  %886 = vrot.lane.b32.xlu0 %v210, 120
  %v887 = vpop.permute.xlu0 %886
  %888 = vrot.lane.b32.xlu0 %v211, 120
  %v889 = vpop.permute.xlu0 %888
  %890 = vrot.lane.b32.xlu0 %v212, 120
  %v891 = vpop.permute.xlu0 %890
  %892 = vrot.lane.b32.xlu0 %v213, 120
  %v893 = vpop.permute.xlu0 %892
  %894 = vrot.lane.b32.xlu0 %v214, 120
  %v895 = vpop.permute.xlu0 %894
  %896 = vrot.lane.b32.xlu0 %v215, 120
  %v897 = vpop.permute.xlu0 %896
  %898 = vrot.lane.b32.xlu0 %v216, 120
  %v899 = vpop.permute.xlu0 %898
  %900 = vrot.lane.b32.xlu0 %v217, 120
  %v901 = vpop.permute.xlu0 %900
  %902 = vrot.lane.b32.xlu0 %v218, 120
  %v903 = vpop.permute.xlu0 %902
  %904 = vrot.lane.b32.xlu0 %v219, 120
  %v905 = vpop.permute.xlu0 %904
  %906 = vrot.lane.b32.xlu0 %v220, 120
  %v907 = vpop.permute.xlu0 %906
  %908 = vrot.lane.b32.xlu0 %v221, 120
  %v909 = vpop.permute.xlu0 %908
  %910 = vrot.lane.b32.xlu0 %v222, 120
  %v911 = vpop.permute.xlu0 %910
  %912 = vrot.lane.b32.xlu0 %v223, 120
  %v913 = vpop.permute.xlu0 %912
  %914 = vrot.lane.b32.xlu0 %v224, 120
  %v915 = vpop.permute.xlu0 %914
  %916 = vrot.lane.b32.xlu0 %v225, 120
  %v917 = vpop.permute.xlu0 %916
  %918 = vrot.lane.b32.xlu0 %v226, 120
  %v919 = vpop.permute.xlu0 %918
  %920 = vrot.lane.b32.xlu0 %v227, 120
  %v921 = vpop.permute.xlu0 %920
  %922 = vrot.lane.b32.xlu0 %v228, 120
  %v923 = vpop.permute.xlu0 %922
  %924 = vrot.lane.b32.xlu0 %v229, 120
  %v925 = vpop.permute.xlu0 %924
  %926 = vrot.lane.b32.xlu0 %v230, 120
  %v927 = vpop.permute.xlu0 %926
  %960 = vmatprep.subr.mxu0 0.0
  %961 = vmatpush1.msra.mxu0 %v865
  %962 = vmatprep.subr.mxu0 0.0
  %963 = vmatpush1.msra.mxu0 %v867
  %964 = vmatprep.subr.mxu0 0.0
  %965 = vmatpush1.msra.mxu0 %v869
  %966 = vmatprep.subr.mxu0 0.0
  %967 = vmatpush1.msra.mxu0 %v871
  %968 = vmatprep.subr.mxu0 0.0
  %969 = vmatpush1.msra.mxu0 %v873
  %970 = vmatprep.subr.mxu0 0.0
  %971 = vmatpush1.msra.mxu0 %v875
  %972 = vmatprep.subr.mxu0 0.0
  %973 = vmatpush1.msra.mxu0 %v877
  %974 = vmatprep.subr.mxu0 0.0
  %975 = vmatpush1.msra.mxu0 %v879
  %976 = vmatprep.subr.mxu0 0.0
  %977 = vmatpush1.msra.mxu0 %v881
  %978 = vmatprep.subr.mxu0 0.0
  %979 = vmatpush1.msra.mxu0 %v883
  %980 = vmatprep.subr.mxu0 0.0
  %981 = vmatpush1.msra.mxu0 %v885
  %982 = vmatprep.subr.mxu0 0.0
  %983 = vmatpush1.msra.mxu0 %v887
  %984 = vmatprep.subr.mxu0 0.0
  %985 = vmatpush1.msra.mxu0 %v889
  %986 = vmatprep.subr.mxu0 0.0
  %987 = vmatpush1.msra.mxu0 %v891
  %988 = vmatprep.subr.mxu0 0.0
  %989 = vmatpush1.msra.mxu0 %v893
  %990 = vmatprep.subr.mxu0 0.0
  %991 = vmatpush1.msra.mxu0 %v895
  %992 = vmatprep.subr.mxu0 0.0
  %993 = vmatpush1.msra.mxu0 %v897
  %994 = vmatprep.subr.mxu0 0.0
  %995 = vmatpush1.msra.mxu0 %v899
  %996 = vmatprep.subr.mxu0 0.0
  %997 = vmatpush1.msra.mxu0 %v901
  %998 = vmatprep.subr.mxu0 0.0
  %999 = vmatpush1.msra.mxu0 %v903
  %1000 = vmatprep.subr.mxu0 0.0
  %1001 = vmatpush1.msra.mxu0 %v905
  %1002 = vmatprep.subr.mxu0 0.0
  %1003 = vmatpush1.msra.mxu0 %v907
  %1004 = vmatprep.subr.mxu0 0.0
  %1005 = vmatpush1.msra.mxu0 %v909
  %1006 = vmatprep.subr.mxu0 0.0
  %1007 = vmatpush1.msra.mxu0 %v911
  %1008 = vmatprep.subr.mxu0 0.0
  %1009 = vmatpush1.msra.mxu0 %v913
  %1010 = vmatprep.subr.mxu0 0.0
  %1011 = vmatpush1.msra.mxu0 %v915
  %1012 = vmatprep.subr.mxu0 0.0
  %1013 = vmatpush1.msra.mxu0 %v917
  %1014 = vmatprep.subr.mxu0 0.0
  %1015 = vmatpush1.msra.mxu0 %v919
  %1016 = vmatprep.subr.mxu0 0.0
  %1017 = vmatpush1.msra.mxu0 %v921
  %1018 = vmatprep.subr.mxu0 0.0
  %1019 = vmatpush1.msra.mxu0 %v923
  %1020 = vmatprep.subr.mxu0 0.0
  %1021 = vmatpush1.msra.mxu0 %v925
  %1022 = vmatprep.subr.mxu0 0.0
  %1023 = vmatpush1.msra.mxu0 %v927
  %1024 = vmatprep.mubr.f32.mxu0 %v763
  %1025 = vmatmul.mubr.f32.gmra.mrb[0].mxu0 %v761
  %v1026 = vpop.f32.mrb[0].mxu0
  %v1027 = vadd.f32 0.0, %v1026
  %v1028 = vpop.f32.mrb[0].mxu0
  %1029 = vmatprep.mubr.f32.mxu0 %v767
  %1030 = vmatmul.mubr.f32.gmra.mrb[0].mxu0 %v765
  %v1031 = vpop.f32.mrb[0].mxu0
  %v1032 = vadd.f32 0.0, %v1031
  %v1033 = vpop.f32.mrb[0].mxu0
  %1034 = vmatprep.mubr.f32.mxu0 %v771
  %1035 = vmatmul.mubr.f32.gmra.mrb[0].mxu0 %v769
  %v1036 = vpop.f32.mrb[0].mxu0
  %v1037 = vadd.f32 0.0, %v1036
  %v1038 = vpop.f32.mrb[0].mxu0
  %1039 = vmatprep.mubr.f32.mxu0 %v775
  %1040 = vmatmul.mubr.f32.gmra.mrb[0].mxu0 %v773
  %v1041 = vpop.f32.mrb[0].mxu0
  %v1042 = vadd.f32 0.0, %v1041
  %v1043 = vpop.f32.mrb[0].mxu0
  %1044 = vmatprep.mubr.f32.mxu0 %v779
  %1045 = vmatmul.mubr.f32.gmra.mrb[0].mxu0 %v777
  %v1046 = vpop.f32.mrb[0].mxu0
  %v1047 = vadd.f32 0.0, %v1046
  %v1048 = vpop.f32.mrb[0].mxu0
  %1049 = vmatprep.mubr.f32.mxu0 %v783
  %1050 = vmatmul.mubr.f32.gmra.mrb[0].mxu0 %v781
  %v1051 = vpop.f32.mrb[0].mxu0
  %v1052 = vadd.f32 0.0, %v1051
  %v1053 = vpop.f32.mrb[0].mxu0
  %1054 = vmatprep.mubr.f32.mxu0 %v787
  %1055 = vmatmul.mubr.f32.gmra.mrb[0].mxu0 %v785
  %v1056 = vpop.f32.mrb[0].mxu0
  %v1057 = vadd.f32 0.0, %v1056
  %v1058 = vpop.f32.mrb[0].mxu0
  %1059 = vmatprep.mubr.f32.mxu0 %v791
  %1060 = vmatmul.mubr.f32.gmra.mrb[0].mxu0 %v789
  %v1061 = vpop.f32.mrb[0].mxu0
  %v1062 = vadd.f32 0.0, %v1061
  %v1063 = vpop.f32.mrb[0].mxu0
  %1064 = vdwg.mxu0
  %1066 = vset.pattern.permute.xlu0 1
  %1067 = vperm.xlu0 %1066, %v689
  %v1068 = vpop.permute.xlu0 %1067
  %1071 = vset.pattern.permute.xlu0 1
  %1072 = vperm.xlu0 %1071, %v691
  %v1073 = vpop.permute.xlu0 %1072
  %1076 = vset.pattern.permute.xlu0 1
  %1077 = vperm.xlu0 %1076, %v693
  %v1078 = vpop.permute.xlu0 %1077
  %1081 = vset.pattern.permute.xlu0 1
  %1082 = vperm.xlu0 %1081, %v695
  %v1083 = vpop.permute.xlu0 %1082
  %1086 = vset.pattern.permute.xlu0 1
  %1087 = vperm.xlu0 %1086, %v697
  %v1088 = vpop.permute.xlu0 %1087
  %1091 = vset.pattern.permute.xlu0 1
  %1092 = vperm.xlu0 %1091, %v699
  %v1093 = vpop.permute.xlu0 %1092
  %1096 = vset.pattern.permute.xlu0 1
  %1097 = vperm.xlu0 %1096, %v701
  %v1098 = vpop.permute.xlu0 %1097
  %1101 = vset.pattern.permute.xlu0 1
  %1102 = vperm.xlu0 %1101, %v703
  %v1103 = vpop.permute.xlu0 %1102
  %v1105 = vmul.f32 %v1068, %v247
  %v1106 = vmul.f32 %v1073, %v248
  %v1107 = vmul.f32 %v1078, %v249
  %v1108 = vmul.f32 %v1083, %v250
  %v1109 = vmul.f32 %v1088, %v251
  %v1110 = vmul.f32 %v1093, %v252
  %v1111 = vmul.f32 %v1098, %v253
  %v1112 = vmul.f32 %v1103, %v254
  %1121 = vrot.lane.b32.xlu0 %v1027, 8
  %v1122 = vpop.permute.xlu0 %1121
  %1123 = vrot.lane.b32.xlu0 %v1032, 8
  %v1124 = vpop.permute.xlu0 %1123
  %1125 = vrot.lane.b32.xlu0 %v1037, 8
  %v1126 = vpop.permute.xlu0 %1125
  %1127 = vrot.lane.b32.xlu0 %v1042, 8
  %v1128 = vpop.permute.xlu0 %1127
  %1129 = vrot.lane.b32.xlu0 %v1047, 8
  %v1130 = vpop.permute.xlu0 %1129
  %1131 = vrot.lane.b32.xlu0 %v1052, 8
  %v1132 = vpop.permute.xlu0 %1131
  %1133 = vrot.lane.b32.xlu0 %v1057, 8
  %v1134 = vpop.permute.xlu0 %1133
  %1135 = vrot.lane.b32.xlu0 %v1062, 8
  %v1136 = vpop.permute.xlu0 %1135
  %v1145 = vadd.f32 %v1105, %v1122
  %v1146 = vadd.f32 %v1106, %v1124
  %v1147 = vadd.f32 %v1107, %v1126
  %v1148 = vadd.f32 %v1108, %v1128
  %v1149 = vadd.f32 %v1109, %v1130
  %v1150 = vadd.f32 %v1110, %v1132
  %v1151 = vadd.f32 %v1111, %v1134
  %v1152 = vadd.f32 %v1112, %v1136
  %v1153 = vlaneseq
  %v1154 = vshrl.u32 %v1153, 7
  %v1155 = vsub.s32 2, %v1154
  %v1156 = vrot.slane %v197, %v1155
  %v1157 = vlaneseq
  %v1158 = vshrl.u32 %v1157, 7
  %v1159 = vsub.s32 2, %v1158
  %v1160 = vrot.slane %v198, %v1159
  %v1161 = vadd.f32 %v132, %v1156
  %v1162 = vadd.f32 %v133, %v1160
  %v1163 = vadd.f32 %v134, %v1156
  %v1164 = vadd.f32 %v135, %v1160
  %v1165 = vadd.f32 %v136, %v1156
  %v1166 = vadd.f32 %v137, %v1160
  %v1167 = vadd.f32 %v138, %v1156
  %v1168 = vadd.f32 %v139, %v1160
  %v1169 = vadd.f32 %v140, %v1156
  %v1170 = vadd.f32 %v141, %v1160
  %v1171 = vadd.f32 %v142, %v1156
  %v1172 = vadd.f32 %v143, %v1160
  %v1173 = vadd.f32 %v144, %v1156
  %v1174 = vadd.f32 %v145, %v1160
  %v1175 = vadd.f32 %v146, %v1156
  %v1176 = vadd.f32 %v147, %v1160
  %v1177 = vmax.f32 %v1161, %v1162
  %1178 = vmax.xlane.f32.xlu0 %v1177
  %v1179 = vpop.xlane.xlu0 %1178
  %v1180 = vmax.f32 %v1163, %v1164
  %1181 = vmax.xlane.f32.xlu0 %v1180
  %v1182 = vpop.xlane.xlu0 %1181
  %v1183 = vmax.f32 %v1165, %v1166
  %1184 = vmax.xlane.f32.xlu0 %v1183
  %v1185 = vpop.xlane.xlu0 %1184
  %v1186 = vmax.f32 %v1167, %v1168
  %1187 = vmax.xlane.f32.xlu0 %v1186
  %v1188 = vpop.xlane.xlu0 %1187
  %v1189 = vmax.f32 %v1169, %v1170
  %1190 = vmax.xlane.f32.xlu0 %v1189
  %v1191 = vpop.xlane.xlu0 %1190
  %v1192 = vmax.f32 %v1171, %v1172
  %1193 = vmax.xlane.f32.xlu0 %v1192
  %v1194 = vpop.xlane.xlu0 %1193
  %v1195 = vmax.f32 %v1173, %v1174
  %1196 = vmax.xlane.f32.xlu0 %v1195
  %v1197 = vpop.xlane.xlu0 %1196
  %v1198 = vmax.f32 %v1175, %v1176
  %1199 = vmax.xlane.f32.xlu0 %v1198
  %v1200 = vpop.xlane.xlu0 %1199
  %v1201 = vmax.f32 %v231, %v1179
  %v1202 = vmax.f32 %v232, %v1182
  %v1203 = vmax.f32 %v233, %v1185
  %v1204 = vmax.f32 %v234, %v1188
  %v1205 = vmax.f32 %v235, %v1191
  %v1206 = vmax.f32 %v236, %v1194
  %v1207 = vmax.f32 %v237, %v1197
  %v1208 = vmax.f32 %v238, %v1200
  %v1209 = vsub.f32 %v231, %v1201
  %v1210 = vsub.f32 %v232, %v1202
  %v1211 = vsub.f32 %v233, %v1203
  %v1212 = vsub.f32 %v234, %v1204
  %v1213 = vsub.f32 %v235, %v1205
  %v1214 = vsub.f32 %v236, %v1206
  %v1215 = vsub.f32 %v237, %v1207
  %v1216 = vsub.f32 %v238, %v1208
  %v1217 = vmul.f32 %v1209, 1.442695
  %v1218 = vpow.pop %v1217
  %v1219 = vmul.f32 %v1210, 1.442695
  %v1220 = vpow.pop %v1219
  %v1221 = vmul.f32 %v1211, 1.442695
  %v1222 = vpow.pop %v1221
  %v1223 = vmul.f32 %v1212, 1.442695
  %v1224 = vpow.pop %v1223
  %v1225 = vmul.f32 %v1213, 1.442695
  %v1226 = vpow.pop %v1225
  %v1227 = vmul.f32 %v1214, 1.442695
  %v1228 = vpow.pop %v1227
  %v1229 = vmul.f32 %v1215, 1.442695
  %v1230 = vpow.pop %v1229
  %v1231 = vmul.f32 %v1216, 1.442695
  %v1232 = vpow.pop %v1231
  %1234 = vset.pattern.permute.xlu0 2
  %1235 = vperm.xlu0 %1234, %v1201
  %v1236 = vpop.permute.xlu0 %1235
  %1239 = vset.pattern.permute.xlu0 2
  %1240 = vperm.xlu0 %1239, %v1202
  %v1241 = vpop.permute.xlu0 %1240
  %1244 = vset.pattern.permute.xlu0 2
  %1245 = vperm.xlu0 %1244, %v1203
  %v1246 = vpop.permute.xlu0 %1245
  %1249 = vset.pattern.permute.xlu0 2
  %1250 = vperm.xlu0 %1249, %v1204
  %v1251 = vpop.permute.xlu0 %1250
  %1254 = vset.pattern.permute.xlu0 2
  %1255 = vperm.xlu0 %1254, %v1205
  %v1256 = vpop.permute.xlu0 %1255
  %1259 = vset.pattern.permute.xlu0 2
  %1260 = vperm.xlu0 %1259, %v1206
  %v1261 = vpop.permute.xlu0 %1260
  %1264 = vset.pattern.permute.xlu0 2
  %1265 = vperm.xlu0 %1264, %v1207
  %v1266 = vpop.permute.xlu0 %1265
  %1269 = vset.pattern.permute.xlu0 2
  %1270 = vperm.xlu0 %1269, %v1208
  %v1271 = vpop.permute.xlu0 %1270
  %v1273 = vsub.f32 %v1161, %v1236
  %v1274 = vsub.f32 %v1162, %v1236
  %v1275 = vsub.f32 %v1163, %v1241
  %v1276 = vsub.f32 %v1164, %v1241
  %v1277 = vsub.f32 %v1165, %v1246
  %v1278 = vsub.f32 %v1166, %v1246
  %v1279 = vsub.f32 %v1167, %v1251
  %v1280 = vsub.f32 %v1168, %v1251
  %v1281 = vsub.f32 %v1169, %v1256
  %v1282 = vsub.f32 %v1170, %v1256
  %v1283 = vsub.f32 %v1171, %v1261
  %v1284 = vsub.f32 %v1172, %v1261
  %v1285 = vsub.f32 %v1173, %v1266
  %v1286 = vsub.f32 %v1174, %v1266
  %v1287 = vsub.f32 %v1175, %v1271
  %v1288 = vsub.f32 %v1176, %v1271
  %v1289 = vmul.f32 %v1273, 1.442695
  %v1290 = vpow.pop %v1289
  %v1291 = vmul.f32 %v1274, 1.442695
  %v1292 = vpow.pop %v1291
  %v1293 = vmul.f32 %v1275, 1.442695
  %v1294 = vpow.pop %v1293
  %v1295 = vmul.f32 %v1276, 1.442695
  %v1296 = vpow.pop %v1295
  %v1297 = vmul.f32 %v1277, 1.442695
  %v1298 = vpow.pop %v1297
  %v1299 = vmul.f32 %v1278, 1.442695
  %v1300 = vpow.pop %v1299
  %v1301 = vmul.f32 %v1279, 1.442695
  %v1302 = vpow.pop %v1301
  %v1303 = vmul.f32 %v1280, 1.442695
  %v1304 = vpow.pop %v1303
  %v1305 = vmul.f32 %v1281, 1.442695
  %v1306 = vpow.pop %v1305
  %v1307 = vmul.f32 %v1282, 1.442695
  %v1308 = vpow.pop %v1307
  %v1309 = vmul.f32 %v1283, 1.442695
  %v1310 = vpow.pop %v1309
  %v1311 = vmul.f32 %v1284, 1.442695
  %v1312 = vpow.pop %v1311
  %v1313 = vmul.f32 %v1285, 1.442695
  %v1314 = vpow.pop %v1313
  %v1315 = vmul.f32 %v1286, 1.442695
  %v1316 = vpow.pop %v1315
  %v1317 = vmul.f32 %v1287, 1.442695
  %v1318 = vpow.pop %v1317
  %v1319 = vmul.f32 %v1288, 1.442695
  %v1320 = vpow.pop %v1319
  %v1321 = vmul.f32 %v1218, %v239
  %v1322 = vmul.f32 %v1220, %v240
  %v1323 = vmul.f32 %v1222, %v241
  %v1324 = vmul.f32 %v1224, %v242
  %v1325 = vmul.f32 %v1226, %v243
  %v1326 = vmul.f32 %v1228, %v244
  %v1327 = vmul.f32 %v1230, %v245
  %v1328 = vmul.f32 %v1232, %v246
  %v1329 = vadd.f32 %v1290, %v1292
  %1330 = vadd.xlane.f32.xlu0 %v1329
  %v1331 = vpop.xlane.xlu0 %1330
  %v1332 = vadd.f32 %v1294, %v1296
  %1333 = vadd.xlane.f32.xlu0 %v1332
  %v1334 = vpop.xlane.xlu0 %1333
  %v1335 = vadd.f32 %v1298, %v1300
  %1336 = vadd.xlane.f32.xlu0 %v1335
  %v1337 = vpop.xlane.xlu0 %1336
  %v1338 = vadd.f32 %v1302, %v1304
  %1339 = vadd.xlane.f32.xlu0 %v1338
  %v1340 = vpop.xlane.xlu0 %1339
  %v1341 = vadd.f32 %v1306, %v1308
  %1342 = vadd.xlane.f32.xlu0 %v1341
  %v1343 = vpop.xlane.xlu0 %1342
  %v1344 = vadd.f32 %v1310, %v1312
  %1345 = vadd.xlane.f32.xlu0 %v1344
  %v1346 = vpop.xlane.xlu0 %1345
  %v1347 = vadd.f32 %v1314, %v1316
  %1348 = vadd.xlane.f32.xlu0 %v1347
  %v1349 = vpop.xlane.xlu0 %1348
  %v1350 = vadd.f32 %v1318, %v1320
  %1351 = vadd.xlane.f32.xlu0 %v1350
  %v1352 = vpop.xlane.xlu0 %1351
  %v1353 = vadd.f32 %v1321, %v1331
  %v1354 = vadd.f32 %v1322, %v1334
  %v1355 = vadd.f32 %v1323, %v1337
  %v1356 = vadd.f32 %v1324, %v1340
  %v1357 = vadd.f32 %v1325, %v1343
  %v1358 = vadd.f32 %v1326, %v1346
  %v1359 = vadd.f32 %v1327, %v1349
  %v1360 = vadd.f32 %v1328, %v1352
  %1361 = vrot.lane.b32.xlu0 %v199, 112
  %v1362 = vpop.permute.xlu0 %1361
  %1363 = vrot.lane.b32.xlu0 %v200, 112
  %v1364 = vpop.permute.xlu0 %1363
  %1365 = vrot.lane.b32.xlu0 %v201, 112
  %v1366 = vpop.permute.xlu0 %1365
  %1367 = vrot.lane.b32.xlu0 %v202, 112
  %v1368 = vpop.permute.xlu0 %1367
  %1369 = vrot.lane.b32.xlu0 %v203, 112
  %v1370 = vpop.permute.xlu0 %1369
  %1371 = vrot.lane.b32.xlu0 %v204, 112
  %v1372 = vpop.permute.xlu0 %1371
  %1373 = vrot.lane.b32.xlu0 %v205, 112
  %v1374 = vpop.permute.xlu0 %1373
  %1375 = vrot.lane.b32.xlu0 %v206, 112
  %v1376 = vpop.permute.xlu0 %1375
  %1377 = vrot.lane.b32.xlu0 %v207, 112
  %v1378 = vpop.permute.xlu0 %1377
  %1379 = vrot.lane.b32.xlu0 %v208, 112
  %v1380 = vpop.permute.xlu0 %1379
  %1381 = vrot.lane.b32.xlu0 %v209, 112
  %v1382 = vpop.permute.xlu0 %1381
  %1383 = vrot.lane.b32.xlu0 %v210, 112
  %v1384 = vpop.permute.xlu0 %1383
  %1385 = vrot.lane.b32.xlu0 %v211, 112
  %v1386 = vpop.permute.xlu0 %1385
  %1387 = vrot.lane.b32.xlu0 %v212, 112
  %v1388 = vpop.permute.xlu0 %1387
  %1389 = vrot.lane.b32.xlu0 %v213, 112
  %v1390 = vpop.permute.xlu0 %1389
  %1391 = vrot.lane.b32.xlu0 %v214, 112
  %v1392 = vpop.permute.xlu0 %1391
  %1393 = vrot.lane.b32.xlu0 %v215, 112
  %v1394 = vpop.permute.xlu0 %1393
  %1395 = vrot.lane.b32.xlu0 %v216, 112
  %v1396 = vpop.permute.xlu0 %1395
  %1397 = vrot.lane.b32.xlu0 %v217, 112
  %v1398 = vpop.permute.xlu0 %1397
  %1399 = vrot.lane.b32.xlu0 %v218, 112
  %v1400 = vpop.permute.xlu0 %1399
  %1401 = vrot.lane.b32.xlu0 %v219, 112
  %v1402 = vpop.permute.xlu0 %1401
  %1403 = vrot.lane.b32.xlu0 %v220, 112
  %v1404 = vpop.permute.xlu0 %1403
  %1405 = vrot.lane.b32.xlu0 %v221, 112
  %v1406 = vpop.permute.xlu0 %1405
  %1407 = vrot.lane.b32.xlu0 %v222, 112
  %v1408 = vpop.permute.xlu0 %1407
  %1409 = vrot.lane.b32.xlu0 %v223, 112
  %v1410 = vpop.permute.xlu0 %1409
  %1411 = vrot.lane.b32.xlu0 %v224, 112
  %v1412 = vpop.permute.xlu0 %1411
  %1413 = vrot.lane.b32.xlu0 %v225, 112
  %v1414 = vpop.permute.xlu0 %1413
  %1415 = vrot.lane.b32.xlu0 %v226, 112
  %v1416 = vpop.permute.xlu0 %1415
  %1417 = vrot.lane.b32.xlu0 %v227, 112
  %v1418 = vpop.permute.xlu0 %1417
  %1419 = vrot.lane.b32.xlu0 %v228, 112
  %v1420 = vpop.permute.xlu0 %1419
  %1421 = vrot.lane.b32.xlu0 %v229, 112
  %v1422 = vpop.permute.xlu0 %1421
  %1423 = vrot.lane.b32.xlu0 %v230, 112
  %v1424 = vpop.permute.xlu0 %1423
  %1457 = vmatprep.subr.mxu0 0.0
  %1458 = vmatpush1.msra.mxu0 %v1362
  %1459 = vmatprep.subr.mxu0 0.0
  %1460 = vmatpush1.msra.mxu0 %v1364
  %1461 = vmatprep.subr.mxu0 0.0
  %1462 = vmatpush1.msra.mxu0 %v1366
  %1463 = vmatprep.subr.mxu0 0.0
  %1464 = vmatpush1.msra.mxu0 %v1368
  %1465 = vmatprep.subr.mxu0 0.0
  %1466 = vmatpush1.msra.mxu0 %v1370
  %1467 = vmatprep.subr.mxu0 0.0
  %1468 = vmatpush1.msra.mxu0 %v1372
  %1469 = vmatprep.subr.mxu0 0.0
  %1470 = vmatpush1.msra.mxu0 %v1374
  %1471 = vmatprep.subr.mxu0 0.0
  %1472 = vmatpush1.msra.mxu0 %v1376
  %1473 = vmatprep.subr.mxu0 0.0
  %1474 = vmatpush1.msra.mxu0 %v1378
  %1475 = vmatprep.subr.mxu0 0.0
  %1476 = vmatpush1.msra.mxu0 %v1380
  %1477 = vmatprep.subr.mxu0 0.0
  %1478 = vmatpush1.msra.mxu0 %v1382
  %1479 = vmatprep.subr.mxu0 0.0
  %1480 = vmatpush1.msra.mxu0 %v1384
  %1481 = vmatprep.subr.mxu0 0.0
  %1482 = vmatpush1.msra.mxu0 %v1386
  %1483 = vmatprep.subr.mxu0 0.0
  %1484 = vmatpush1.msra.mxu0 %v1388
  %1485 = vmatprep.subr.mxu0 0.0
  %1486 = vmatpush1.msra.mxu0 %v1390
  %1487 = vmatprep.subr.mxu0 0.0
  %1488 = vmatpush1.msra.mxu0 %v1392
  %1489 = vmatprep.subr.mxu0 0.0
  %1490 = vmatpush1.msra.mxu0 %v1394
  %1491 = vmatprep.subr.mxu0 0.0
  %1492 = vmatpush1.msra.mxu0 %v1396
  %1493 = vmatprep.subr.mxu0 0.0
  %1494 = vmatpush1.msra.mxu0 %v1398
  %1495 = vmatprep.subr.mxu0 0.0
  %1496 = vmatpush1.msra.mxu0 %v1400
  %1497 = vmatprep.subr.mxu0 0.0
  %1498 = vmatpush1.msra.mxu0 %v1402
  %1499 = vmatprep.subr.mxu0 0.0
  %1500 = vmatpush1.msra.mxu0 %v1404
  %1501 = vmatprep.subr.mxu0 0.0
  %1502 = vmatpush1.msra.mxu0 %v1406
  %1503 = vmatprep.subr.mxu0 0.0
  %1504 = vmatpush1.msra.mxu0 %v1408
  %1505 = vmatprep.subr.mxu0 0.0
  %1506 = vmatpush1.msra.mxu0 %v1410
  %1507 = vmatprep.subr.mxu0 0.0
  %1508 = vmatpush1.msra.mxu0 %v1412
  %1509 = vmatprep.subr.mxu0 0.0
  %1510 = vmatpush1.msra.mxu0 %v1414
  %1511 = vmatprep.subr.mxu0 0.0
  %1512 = vmatpush1.msra.mxu0 %v1416
  %1513 = vmatprep.subr.mxu0 0.0
  %1514 = vmatpush1.msra.mxu0 %v1418
  %1515 = vmatprep.subr.mxu0 0.0
  %1516 = vmatpush1.msra.mxu0 %v1420
  %1517 = vmatprep.subr.mxu0 0.0
  %1518 = vmatpush1.msra.mxu0 %v1422
  %1519 = vmatprep.subr.mxu0 0.0
  %1520 = vmatpush1.msra.mxu0 %v1424
  %1521 = vmatprep.mubr.f32.mxu0 %v1292
  %1522 = vmatmul.mubr.f32.gmra.mrb[0].mxu0 %v1290
  %v1523 = vpop.f32.mrb[0].mxu0
  %v1524 = vadd.f32 0.0, %v1523
  %v1525 = vpop.f32.mrb[0].mxu0
  %1526 = vmatprep.mubr.f32.mxu0 %v1296
  %1527 = vmatmul.mubr.f32.gmra.mrb[0].mxu0 %v1294
  %v1528 = vpop.f32.mrb[0].mxu0
  %v1529 = vadd.f32 0.0, %v1528
  %v1530 = vpop.f32.mrb[0].mxu0
  %1531 = vmatprep.mubr.f32.mxu0 %v1300
  %1532 = vmatmul.mubr.f32.gmra.mrb[0].mxu0 %v1298
  %v1533 = vpop.f32.mrb[0].mxu0
  %v1534 = vadd.f32 0.0, %v1533
  %v1535 = vpop.f32.mrb[0].mxu0
  %1536 = vmatprep.mubr.f32.mxu0 %v1304
  %1537 = vmatmul.mubr.f32.gmra.mrb[0].mxu0 %v1302
  %v1538 = vpop.f32.mrb[0].mxu0
  %v1539 = vadd.f32 0.0, %v1538
  %v1540 = vpop.f32.mrb[0].mxu0
  %1541 = vmatprep.mubr.f32.mxu0 %v1308
  %1542 = vmatmul.mubr.f32.gmra.mrb[0].mxu0 %v1306
  %v1543 = vpop.f32.mrb[0].mxu0
  %v1544 = vadd.f32 0.0, %v1543
  %v1545 = vpop.f32.mrb[0].mxu0
  %1546 = vmatprep.mubr.f32.mxu0 %v1312
  %1547 = vmatmul.mubr.f32.gmra.mrb[0].mxu0 %v1310
  %v1548 = vpop.f32.mrb[0].mxu0
  %v1549 = vadd.f32 0.0, %v1548
  %v1550 = vpop.f32.mrb[0].mxu0
  %1551 = vmatprep.mubr.f32.mxu0 %v1316
  %1552 = vmatmul.mubr.f32.gmra.mrb[0].mxu0 %v1314
  %v1553 = vpop.f32.mrb[0].mxu0
  %v1554 = vadd.f32 0.0, %v1553
  %v1555 = vpop.f32.mrb[0].mxu0
  %1556 = vmatprep.mubr.f32.mxu0 %v1320
  %1557 = vmatmul.mubr.f32.gmra.mrb[0].mxu0 %v1318
  %v1558 = vpop.f32.mrb[0].mxu0
  %v1559 = vadd.f32 0.0, %v1558
  %v1560 = vpop.f32.mrb[0].mxu0
  %1561 = vdwg.mxu0
  %1563 = vset.pattern.permute.xlu0 2
  %1564 = vperm.xlu0 %1563, %v1218
  %v1565 = vpop.permute.xlu0 %1564
  %1568 = vset.pattern.permute.xlu0 2
  %1569 = vperm.xlu0 %1568, %v1220
  %v1570 = vpop.permute.xlu0 %1569
  %1573 = vset.pattern.permute.xlu0 2
  %1574 = vperm.xlu0 %1573, %v1222
  %v1575 = vpop.permute.xlu0 %1574
  %1578 = vset.pattern.permute.xlu0 2
  %1579 = vperm.xlu0 %1578, %v1224
  %v1580 = vpop.permute.xlu0 %1579
  %1583 = vset.pattern.permute.xlu0 2
  %1584 = vperm.xlu0 %1583, %v1226
  %v1585 = vpop.permute.xlu0 %1584
  %1588 = vset.pattern.permute.xlu0 2
  %1589 = vperm.xlu0 %1588, %v1228
  %v1590 = vpop.permute.xlu0 %1589
  %1593 = vset.pattern.permute.xlu0 2
  %1594 = vperm.xlu0 %1593, %v1230
  %v1595 = vpop.permute.xlu0 %1594
  %1598 = vset.pattern.permute.xlu0 2
  %1599 = vperm.xlu0 %1598, %v1232
  %v1600 = vpop.permute.xlu0 %1599
  %v1602 = vmul.f32 %v1565, %v247
  %v1603 = vmul.f32 %v1570, %v248
  %v1604 = vmul.f32 %v1575, %v249
  %v1605 = vmul.f32 %v1580, %v250
  %v1606 = vmul.f32 %v1585, %v251
  %v1607 = vmul.f32 %v1590, %v252
  %v1608 = vmul.f32 %v1595, %v253
  %v1609 = vmul.f32 %v1600, %v254
  %1618 = vrot.lane.b32.xlu0 %v1524, 16
  %v1619 = vpop.permute.xlu0 %1618
  %1620 = vrot.lane.b32.xlu0 %v1529, 16
  %v1621 = vpop.permute.xlu0 %1620
  %1622 = vrot.lane.b32.xlu0 %v1534, 16
  %v1623 = vpop.permute.xlu0 %1622
  %1624 = vrot.lane.b32.xlu0 %v1539, 16
  %v1625 = vpop.permute.xlu0 %1624
  %1626 = vrot.lane.b32.xlu0 %v1544, 16
  %v1627 = vpop.permute.xlu0 %1626
  %1628 = vrot.lane.b32.xlu0 %v1549, 16
  %v1629 = vpop.permute.xlu0 %1628
  %1630 = vrot.lane.b32.xlu0 %v1554, 16
  %v1631 = vpop.permute.xlu0 %1630
  %1632 = vrot.lane.b32.xlu0 %v1559, 16
  %v1633 = vpop.permute.xlu0 %1632
  %v1642 = vadd.f32 %v1602, %v1619
  %v1643 = vadd.f32 %v1603, %v1621
  %v1644 = vadd.f32 %v1604, %v1623
  %v1645 = vadd.f32 %v1605, %v1625
  %v1646 = vadd.f32 %v1606, %v1627
  %v1647 = vadd.f32 %v1607, %v1629
  %v1648 = vadd.f32 %v1608, %v1631
  %v1649 = vadd.f32 %v1609, %v1633
  %v1650 = vlaneseq
  %v1651 = vshrl.u32 %v1650, 7
  %v1652 = vsub.s32 3, %v1651
  %v1653 = vrot.slane %v197, %v1652
  %v1654 = vlaneseq
  %v1655 = vshrl.u32 %v1654, 7
  %v1656 = vsub.s32 3, %v1655
  %v1657 = vrot.slane %v198, %v1656
  %v1658 = vadd.f32 %v132, %v1653
  %v1659 = vadd.f32 %v133, %v1657
  %v1660 = vadd.f32 %v134, %v1653
  %v1661 = vadd.f32 %v135, %v1657
  %v1662 = vadd.f32 %v136, %v1653
  %v1663 = vadd.f32 %v137, %v1657
  %v1664 = vadd.f32 %v138, %v1653
  %v1665 = vadd.f32 %v139, %v1657
  %v1666 = vadd.f32 %v140, %v1653
  %v1667 = vadd.f32 %v141, %v1657
  %v1668 = vadd.f32 %v142, %v1653
  %v1669 = vadd.f32 %v143, %v1657
  %v1670 = vadd.f32 %v144, %v1653
  %v1671 = vadd.f32 %v145, %v1657
  %v1672 = vadd.f32 %v146, %v1653
  %v1673 = vadd.f32 %v147, %v1657
  %v1674 = vmax.f32 %v1658, %v1659
  %1675 = vmax.xlane.f32.xlu0 %v1674
  %v1676 = vpop.xlane.xlu0 %1675
  %v1677 = vmax.f32 %v1660, %v1661
  %1678 = vmax.xlane.f32.xlu0 %v1677
  %v1679 = vpop.xlane.xlu0 %1678
  %v1680 = vmax.f32 %v1662, %v1663
  %1681 = vmax.xlane.f32.xlu0 %v1680
  %v1682 = vpop.xlane.xlu0 %1681
  %v1683 = vmax.f32 %v1664, %v1665
  %1684 = vmax.xlane.f32.xlu0 %v1683
  %v1685 = vpop.xlane.xlu0 %1684
  %v1686 = vmax.f32 %v1666, %v1667
  %1687 = vmax.xlane.f32.xlu0 %v1686
  %v1688 = vpop.xlane.xlu0 %1687
  %v1689 = vmax.f32 %v1668, %v1669
  %1690 = vmax.xlane.f32.xlu0 %v1689
  %v1691 = vpop.xlane.xlu0 %1690
  %v1692 = vmax.f32 %v1670, %v1671
  %1693 = vmax.xlane.f32.xlu0 %v1692
  %v1694 = vpop.xlane.xlu0 %1693
  %v1695 = vmax.f32 %v1672, %v1673
  %1696 = vmax.xlane.f32.xlu0 %v1695
  %v1697 = vpop.xlane.xlu0 %1696
  %v1698 = vmax.f32 %v231, %v1676
  %v1699 = vmax.f32 %v232, %v1679
  %v1700 = vmax.f32 %v233, %v1682
  %v1701 = vmax.f32 %v234, %v1685
  %v1702 = vmax.f32 %v235, %v1688
  %v1703 = vmax.f32 %v236, %v1691
  %v1704 = vmax.f32 %v237, %v1694
  %v1705 = vmax.f32 %v238, %v1697
  %v1706 = vsub.f32 %v231, %v1698
  %v1707 = vsub.f32 %v232, %v1699
  %v1708 = vsub.f32 %v233, %v1700
  %v1709 = vsub.f32 %v234, %v1701
  %v1710 = vsub.f32 %v235, %v1702
  %v1711 = vsub.f32 %v236, %v1703
  %v1712 = vsub.f32 %v237, %v1704
  %v1713 = vsub.f32 %v238, %v1705
  %v1714 = vmul.f32 %v1706, 1.442695
  %v1715 = vpow.pop %v1714
  %v1716 = vmul.f32 %v1707, 1.442695
  %v1717 = vpow.pop %v1716
  %v1718 = vmul.f32 %v1708, 1.442695
  %v1719 = vpow.pop %v1718
  %v1720 = vmul.f32 %v1709, 1.442695
  %v1721 = vpow.pop %v1720
  %v1722 = vmul.f32 %v1710, 1.442695
  %v1723 = vpow.pop %v1722
  %v1724 = vmul.f32 %v1711, 1.442695
  %v1725 = vpow.pop %v1724
  %v1726 = vmul.f32 %v1712, 1.442695
  %v1727 = vpow.pop %v1726
  %v1728 = vmul.f32 %v1713, 1.442695
  %v1729 = vpow.pop %v1728
  %1731 = vset.pattern.permute.xlu0 3
  %1732 = vperm.xlu0 %1731, %v1698
  %v1733 = vpop.permute.xlu0 %1732
  %1736 = vset.pattern.permute.xlu0 3
  %1737 = vperm.xlu0 %1736, %v1699
  %v1738 = vpop.permute.xlu0 %1737
  %1741 = vset.pattern.permute.xlu0 3
  %1742 = vperm.xlu0 %1741, %v1700
  %v1743 = vpop.permute.xlu0 %1742
  %1746 = vset.pattern.permute.xlu0 3
  %1747 = vperm.xlu0 %1746, %v1701
  %v1748 = vpop.permute.xlu0 %1747
  %1751 = vset.pattern.permute.xlu0 3
  %1752 = vperm.xlu0 %1751, %v1702
  %v1753 = vpop.permute.xlu0 %1752
  %1756 = vset.pattern.permute.xlu0 3
  %1757 = vperm.xlu0 %1756, %v1703
  %v1758 = vpop.permute.xlu0 %1757
  %1761 = vset.pattern.permute.xlu0 3
  %1762 = vperm.xlu0 %1761, %v1704
  %v1763 = vpop.permute.xlu0 %1762
  %1766 = vset.pattern.permute.xlu0 3
  %1767 = vperm.xlu0 %1766, %v1705
  %v1768 = vpop.permute.xlu0 %1767
  %v1770 = vsub.f32 %v1658, %v1733
  %v1771 = vsub.f32 %v1659, %v1733
  %v1772 = vsub.f32 %v1660, %v1738
  %v1773 = vsub.f32 %v1661, %v1738
  %v1774 = vsub.f32 %v1662, %v1743
  %v1775 = vsub.f32 %v1663, %v1743
  %v1776 = vsub.f32 %v1664, %v1748
  %v1777 = vsub.f32 %v1665, %v1748
  %v1778 = vsub.f32 %v1666, %v1753
  %v1779 = vsub.f32 %v1667, %v1753
  %v1780 = vsub.f32 %v1668, %v1758
  %v1781 = vsub.f32 %v1669, %v1758
  %v1782 = vsub.f32 %v1670, %v1763
  %v1783 = vsub.f32 %v1671, %v1763
  %v1784 = vsub.f32 %v1672, %v1768
  %v1785 = vsub.f32 %v1673, %v1768
  %v1786 = vmul.f32 %v1770, 1.442695
  %v1787 = vpow.pop %v1786
  %v1788 = vmul.f32 %v1771, 1.442695
  %v1789 = vpow.pop %v1788
  %v1790 = vmul.f32 %v1772, 1.442695
  %v1791 = vpow.pop %v1790
  %v1792 = vmul.f32 %v1773, 1.442695
  %v1793 = vpow.pop %v1792
  %v1794 = vmul.f32 %v1774, 1.442695
  %v1795 = vpow.pop %v1794
  %v1796 = vmul.f32 %v1775, 1.442695
  %v1797 = vpow.pop %v1796
  %v1798 = vmul.f32 %v1776, 1.442695
  %v1799 = vpow.pop %v1798
  %v1800 = vmul.f32 %v1777, 1.442695
  %v1801 = vpow.pop %v1800
  %v1802 = vmul.f32 %v1778, 1.442695
  %v1803 = vpow.pop %v1802
  %v1804 = vmul.f32 %v1779, 1.442695
  %v1805 = vpow.pop %v1804
  %v1806 = vmul.f32 %v1780, 1.442695
  %v1807 = vpow.pop %v1806
  %v1808 = vmul.f32 %v1781, 1.442695
  %v1809 = vpow.pop %v1808
  %v1810 = vmul.f32 %v1782, 1.442695
  %v1811 = vpow.pop %v1810
  %v1812 = vmul.f32 %v1783, 1.442695
  %v1813 = vpow.pop %v1812
  %v1814 = vmul.f32 %v1784, 1.442695
  %v1815 = vpow.pop %v1814
  %v1816 = vmul.f32 %v1785, 1.442695
  %v1817 = vpow.pop %v1816
  %v1818 = vmul.f32 %v1715, %v239
  %v1819 = vmul.f32 %v1717, %v240
  %v1820 = vmul.f32 %v1719, %v241
  %v1821 = vmul.f32 %v1721, %v242
  %v1822 = vmul.f32 %v1723, %v243
  %v1823 = vmul.f32 %v1725, %v244
  %v1824 = vmul.f32 %v1727, %v245
  %v1825 = vmul.f32 %v1729, %v246
  %v1826 = vadd.f32 %v1787, %v1789
  %1827 = vadd.xlane.f32.xlu0 %v1826
  %v1828 = vpop.xlane.xlu0 %1827
  %v1829 = vadd.f32 %v1791, %v1793
  %1830 = vadd.xlane.f32.xlu0 %v1829
  %v1831 = vpop.xlane.xlu0 %1830
  %v1832 = vadd.f32 %v1795, %v1797
  %1833 = vadd.xlane.f32.xlu0 %v1832
  %v1834 = vpop.xlane.xlu0 %1833
  %v1835 = vadd.f32 %v1799, %v1801
  %1836 = vadd.xlane.f32.xlu0 %v1835
  %v1837 = vpop.xlane.xlu0 %1836
  %v1838 = vadd.f32 %v1803, %v1805
  %1839 = vadd.xlane.f32.xlu0 %v1838
  %v1840 = vpop.xlane.xlu0 %1839
  %v1841 = vadd.f32 %v1807, %v1809
  %1842 = vadd.xlane.f32.xlu0 %v1841
  %v1843 = vpop.xlane.xlu0 %1842
  %v1844 = vadd.f32 %v1811, %v1813
  %1845 = vadd.xlane.f32.xlu0 %v1844
  %v1846 = vpop.xlane.xlu0 %1845
  %v1847 = vadd.f32 %v1815, %v1817
  %1848 = vadd.xlane.f32.xlu0 %v1847
  %v1849 = vpop.xlane.xlu0 %1848
  %v1850 = vadd.f32 %v1818, %v1828
  %v1851 = vadd.f32 %v1819, %v1831
  %v1852 = vadd.f32 %v1820, %v1834
  %v1853 = vadd.f32 %v1821, %v1837
  %v1854 = vadd.f32 %v1822, %v1840
  %v1855 = vadd.f32 %v1823, %v1843
  %v1856 = vadd.f32 %v1824, %v1846
  %v1857 = vadd.f32 %v1825, %v1849
  %1858 = vrot.lane.b32.xlu0 %v199, 104
  %v1859 = vpop.permute.xlu0 %1858
  %1860 = vrot.lane.b32.xlu0 %v200, 104
  %v1861 = vpop.permute.xlu0 %1860
  %1862 = vrot.lane.b32.xlu0 %v201, 104
  %v1863 = vpop.permute.xlu0 %1862
  %1864 = vrot.lane.b32.xlu0 %v202, 104
  %v1865 = vpop.permute.xlu0 %1864
  %1866 = vrot.lane.b32.xlu0 %v203, 104
  %v1867 = vpop.permute.xlu0 %1866
  %1868 = vrot.lane.b32.xlu0 %v204, 104
  %v1869 = vpop.permute.xlu0 %1868
  %1870 = vrot.lane.b32.xlu0 %v205, 104
  %v1871 = vpop.permute.xlu0 %1870
  %1872 = vrot.lane.b32.xlu0 %v206, 104
  %v1873 = vpop.permute.xlu0 %1872
  %1874 = vrot.lane.b32.xlu0 %v207, 104
  %v1875 = vpop.permute.xlu0 %1874
  %1876 = vrot.lane.b32.xlu0 %v208, 104
  %v1877 = vpop.permute.xlu0 %1876
  %1878 = vrot.lane.b32.xlu0 %v209, 104
  %v1879 = vpop.permute.xlu0 %1878
  %1880 = vrot.lane.b32.xlu0 %v210, 104
  %v1881 = vpop.permute.xlu0 %1880
  %1882 = vrot.lane.b32.xlu0 %v211, 104
  %v1883 = vpop.permute.xlu0 %1882
  %1884 = vrot.lane.b32.xlu0 %v212, 104
  %v1885 = vpop.permute.xlu0 %1884
  %1886 = vrot.lane.b32.xlu0 %v213, 104
  %v1887 = vpop.permute.xlu0 %1886
  %1888 = vrot.lane.b32.xlu0 %v214, 104
  %v1889 = vpop.permute.xlu0 %1888
  %1890 = vrot.lane.b32.xlu0 %v215, 104
  %v1891 = vpop.permute.xlu0 %1890
  %1892 = vrot.lane.b32.xlu0 %v216, 104
  %v1893 = vpop.permute.xlu0 %1892
  %1894 = vrot.lane.b32.xlu0 %v217, 104
  %v1895 = vpop.permute.xlu0 %1894
  %1896 = vrot.lane.b32.xlu0 %v218, 104
  %v1897 = vpop.permute.xlu0 %1896
  %1898 = vrot.lane.b32.xlu0 %v219, 104
  %v1899 = vpop.permute.xlu0 %1898
  %1900 = vrot.lane.b32.xlu0 %v220, 104
  %v1901 = vpop.permute.xlu0 %1900
  %1902 = vrot.lane.b32.xlu0 %v221, 104
  %v1903 = vpop.permute.xlu0 %1902
  %1904 = vrot.lane.b32.xlu0 %v222, 104
  %v1905 = vpop.permute.xlu0 %1904
  %1906 = vrot.lane.b32.xlu0 %v223, 104
  %v1907 = vpop.permute.xlu0 %1906
  %1908 = vrot.lane.b32.xlu0 %v224, 104
  %v1909 = vpop.permute.xlu0 %1908
  %1910 = vrot.lane.b32.xlu0 %v225, 104
  %v1911 = vpop.permute.xlu0 %1910
  %1912 = vrot.lane.b32.xlu0 %v226, 104
  %v1913 = vpop.permute.xlu0 %1912
  %1914 = vrot.lane.b32.xlu0 %v227, 104
  %v1915 = vpop.permute.xlu0 %1914
  %1916 = vrot.lane.b32.xlu0 %v228, 104
  %v1917 = vpop.permute.xlu0 %1916
  %1918 = vrot.lane.b32.xlu0 %v229, 104
  %v1919 = vpop.permute.xlu0 %1918
  %1920 = vrot.lane.b32.xlu0 %v230, 104
  %v1921 = vpop.permute.xlu0 %1920
  %1954 = vmatprep.subr.mxu0 0.0
  %1955 = vmatpush1.msra.mxu0 %v1859
  %1956 = vmatprep.subr.mxu0 0.0
  %1957 = vmatpush1.msra.mxu0 %v1861
  %1958 = vmatprep.subr.mxu0 0.0
  %1959 = vmatpush1.msra.mxu0 %v1863
  %1960 = vmatprep.subr.mxu0 0.0
  %1961 = vmatpush1.msra.mxu0 %v1865
  %1962 = vmatprep.subr.mxu0 0.0
  %1963 = vmatpush1.msra.mxu0 %v1867
  %1964 = vmatprep.subr.mxu0 0.0
  %1965 = vmatpush1.msra.mxu0 %v1869
  %1966 = vmatprep.subr.mxu0 0.0
  %1967 = vmatpush1.msra.mxu0 %v1871
  %1968 = vmatprep.subr.mxu0 0.0
  %1969 = vmatpush1.msra.mxu0 %v1873
  %1970 = vmatprep.subr.mxu0 0.0
  %1971 = vmatpush1.msra.mxu0 %v1875
  %1972 = vmatprep.subr.mxu0 0.0
  %1973 = vmatpush1.msra.mxu0 %v1877
  %1974 = vmatprep.subr.mxu0 0.0
  %1975 = vmatpush1.msra.mxu0 %v1879
  %1976 = vmatprep.subr.mxu0 0.0
  %1977 = vmatpush1.msra.mxu0 %v1881
  %1978 = vmatprep.subr.mxu0 0.0
  %1979 = vmatpush1.msra.mxu0 %v1883
  %1980 = vmatprep.subr.mxu0 0.0
  %1981 = vmatpush1.msra.mxu0 %v1885
  %1982 = vmatprep.subr.mxu0 0.0
  %1983 = vmatpush1.msra.mxu0 %v1887
  %1984 = vmatprep.subr.mxu0 0.0
  %1985 = vmatpush1.msra.mxu0 %v1889
  %1986 = vmatprep.subr.mxu0 0.0
  %1987 = vmatpush1.msra.mxu0 %v1891
  %1988 = vmatprep.subr.mxu0 0.0
  %1989 = vmatpush1.msra.mxu0 %v1893
  %1990 = vmatprep.subr.mxu0 0.0
  %1991 = vmatpush1.msra.mxu0 %v1895
  %1992 = vmatprep.subr.mxu0 0.0
  %1993 = vmatpush1.msra.mxu0 %v1897
  %1994 = vmatprep.subr.mxu0 0.0
  %1995 = vmatpush1.msra.mxu0 %v1899
  %1996 = vmatprep.subr.mxu0 0.0
  %1997 = vmatpush1.msra.mxu0 %v1901
  %1998 = vmatprep.subr.mxu0 0.0
  %1999 = vmatpush1.msra.mxu0 %v1903
  %2000 = vmatprep.subr.mxu0 0.0
  %2001 = vmatpush1.msra.mxu0 %v1905
  %2002 = vmatprep.subr.mxu0 0.0
  %2003 = vmatpush1.msra.mxu0 %v1907
  %2004 = vmatprep.subr.mxu0 0.0
  %2005 = vmatpush1.msra.mxu0 %v1909
  %2006 = vmatprep.subr.mxu0 0.0
  %2007 = vmatpush1.msra.mxu0 %v1911
  %2008 = vmatprep.subr.mxu0 0.0
  %2009 = vmatpush1.msra.mxu0 %v1913
  %2010 = vmatprep.subr.mxu0 0.0
  %2011 = vmatpush1.msra.mxu0 %v1915
  %2012 = vmatprep.subr.mxu0 0.0
  %2013 = vmatpush1.msra.mxu0 %v1917
  %2014 = vmatprep.subr.mxu0 0.0
  %2015 = vmatpush1.msra.mxu0 %v1919
  %2016 = vmatprep.subr.mxu0 0.0
  %2017 = vmatpush1.msra.mxu0 %v1921
  %2018 = vmatprep.mubr.f32.mxu0 %v1789
  %2019 = vmatmul.mubr.f32.gmra.mrb[0].mxu0 %v1787
  %v2020 = vpop.f32.mrb[0].mxu0
  %v2021 = vadd.f32 0.0, %v2020
  %v2022 = vpop.f32.mrb[0].mxu0
  %2023 = vmatprep.mubr.f32.mxu0 %v1793
  %2024 = vmatmul.mubr.f32.gmra.mrb[0].mxu0 %v1791
  %v2025 = vpop.f32.mrb[0].mxu0
  %v2026 = vadd.f32 0.0, %v2025
  %v2027 = vpop.f32.mrb[0].mxu0
  %2028 = vmatprep.mubr.f32.mxu0 %v1797
  %2029 = vmatmul.mubr.f32.gmra.mrb[0].mxu0 %v1795
  %v2030 = vpop.f32.mrb[0].mxu0
  %v2031 = vadd.f32 0.0, %v2030
  %v2032 = vpop.f32.mrb[0].mxu0
  %2033 = vmatprep.mubr.f32.mxu0 %v1801
  %2034 = vmatmul.mubr.f32.gmra.mrb[0].mxu0 %v1799
  %v2035 = vpop.f32.mrb[0].mxu0
  %v2036 = vadd.f32 0.0, %v2035
  %v2037 = vpop.f32.mrb[0].mxu0
  %2038 = vmatprep.mubr.f32.mxu0 %v1805
  %2039 = vmatmul.mubr.f32.gmra.mrb[0].mxu0 %v1803
  %v2040 = vpop.f32.mrb[0].mxu0
  %v2041 = vadd.f32 0.0, %v2040
  %v2042 = vpop.f32.mrb[0].mxu0
  %2043 = vmatprep.mubr.f32.mxu0 %v1809
  %2044 = vmatmul.mubr.f32.gmra.mrb[0].mxu0 %v1807
  %v2045 = vpop.f32.mrb[0].mxu0
  %v2046 = vadd.f32 0.0, %v2045
  %v2047 = vpop.f32.mrb[0].mxu0
  %2048 = vmatprep.mubr.f32.mxu0 %v1813
  %2049 = vmatmul.mubr.f32.gmra.mrb[0].mxu0 %v1811
  %v2050 = vpop.f32.mrb[0].mxu0
  %v2051 = vadd.f32 0.0, %v2050
  %v2052 = vpop.f32.mrb[0].mxu0
  %2053 = vmatprep.mubr.f32.mxu0 %v1817
  %2054 = vmatmul.mubr.f32.gmra.mrb[0].mxu0 %v1815
  %v2055 = vpop.f32.mrb[0].mxu0
  %v2056 = vadd.f32 0.0, %v2055
  %v2057 = vpop.f32.mrb[0].mxu0
  %2058 = vdwg.mxu0
  %2060 = vset.pattern.permute.xlu0 3
  %2061 = vperm.xlu0 %2060, %v1715
  %v2062 = vpop.permute.xlu0 %2061
  %2065 = vset.pattern.permute.xlu0 3
  %2066 = vperm.xlu0 %2065, %v1717
  %v2067 = vpop.permute.xlu0 %2066
  %2070 = vset.pattern.permute.xlu0 3
  %2071 = vperm.xlu0 %2070, %v1719
  %v2072 = vpop.permute.xlu0 %2071
  %2075 = vset.pattern.permute.xlu0 3
  %2076 = vperm.xlu0 %2075, %v1721
  %v2077 = vpop.permute.xlu0 %2076
  %2080 = vset.pattern.permute.xlu0 3
  %2081 = vperm.xlu0 %2080, %v1723
  %v2082 = vpop.permute.xlu0 %2081
  %2085 = vset.pattern.permute.xlu0 3
  %2086 = vperm.xlu0 %2085, %v1725
  %v2087 = vpop.permute.xlu0 %2086
  %2090 = vset.pattern.permute.xlu0 3
  %2091 = vperm.xlu0 %2090, %v1727
  %v2092 = vpop.permute.xlu0 %2091
  %2095 = vset.pattern.permute.xlu0 3
  %2096 = vperm.xlu0 %2095, %v1729
  %v2097 = vpop.permute.xlu0 %2096
  %v2099 = vmul.f32 %v2062, %v247
  %v2100 = vmul.f32 %v2067, %v248
  %v2101 = vmul.f32 %v2072, %v249
  %v2102 = vmul.f32 %v2077, %v250
  %v2103 = vmul.f32 %v2082, %v251
  %v2104 = vmul.f32 %v2087, %v252
  %v2105 = vmul.f32 %v2092, %v253
  %v2106 = vmul.f32 %v2097, %v254
  %2115 = vrot.lane.b32.xlu0 %v2021, 24
  %v2116 = vpop.permute.xlu0 %2115
  %2117 = vrot.lane.b32.xlu0 %v2026, 24
  %v2118 = vpop.permute.xlu0 %2117
  %2119 = vrot.lane.b32.xlu0 %v2031, 24
  %v2120 = vpop.permute.xlu0 %2119
  %2121 = vrot.lane.b32.xlu0 %v2036, 24
  %v2122 = vpop.permute.xlu0 %2121
  %2123 = vrot.lane.b32.xlu0 %v2041, 24
  %v2124 = vpop.permute.xlu0 %2123
  %2125 = vrot.lane.b32.xlu0 %v2046, 24
  %v2126 = vpop.permute.xlu0 %2125
  %2127 = vrot.lane.b32.xlu0 %v2051, 24
  %v2128 = vpop.permute.xlu0 %2127
  %2129 = vrot.lane.b32.xlu0 %v2056, 24
  %v2130 = vpop.permute.xlu0 %2129
  %v2139 = vadd.f32 %v2099, %v2116
  %v2140 = vadd.f32 %v2100, %v2118
  %v2141 = vadd.f32 %v2101, %v2120
  %v2142 = vadd.f32 %v2102, %v2122
  %v2143 = vadd.f32 %v2103, %v2124
  %v2144 = vadd.f32 %v2104, %v2126
  %v2145 = vadd.f32 %v2105, %v2128
  %v2146 = vadd.f32 %v2106, %v2130
  %v2147 = vsel %vm188, %v303, %v672
  %v2148 = vsel %vm188, %v304, %v673
  %v2149 = vsel %vm188, %v305, %v674
  %v2150 = vsel %vm188, %v306, %v675
  %v2151 = vsel %vm188, %v307, %v676
  %v2152 = vsel %vm188, %v308, %v677
  %v2153 = vsel %vm188, %v309, %v678
  %v2154 = vsel %vm188, %v310, %v679
  %vm2155 = vcmask 15360
  %v2156 = vsel %vm2155, %v2147, %v1201
  %v2157 = vsel %vm2155, %v2148, %v1202
  %v2158 = vsel %vm2155, %v2149, %v1203
  %v2159 = vsel %vm2155, %v2150, %v1204
  %v2160 = vsel %vm2155, %v2151, %v1205
  %v2161 = vsel %vm2155, %v2152, %v1206
  %v2162 = vsel %vm2155, %v2153, %v1207
  %v2163 = vsel %vm2155, %v2154, %v1208
  %vm2164 = vcmask 23552
  %v2165 = vsel %vm2164, %v2156, %v1698
  %v2166 = vsel %vm2164, %v2157, %v1699
  %v2167 = vsel %vm2164, %v2158, %v1700
  %v2168 = vsel %vm2164, %v2159, %v1701
  %v2169 = vsel %vm2164, %v2160, %v1702
  %v2170 = vsel %vm2164, %v2161, %v1703
  %v2171 = vsel %vm2164, %v2162, %v1704
  %v2172 = vsel %vm2164, %v2163, %v1705
  %vm2173 = vcmask 31744
  %2174 = vst.msk [vmem:[#allocation2] sm:$0xff] %vm2173, %v2165
  %2175 = vst.msk [vmem:[#allocation2 + $0x8] sm:$0xff] %vm2173, %v2166
  %2176 = vst.msk [vmem:[#allocation2 + $0x10] sm:$0xff] %vm2173, %v2167
  %2177 = vst.msk [vmem:[#allocation2 + $0x18] sm:$0xff] %vm2173, %v2168
  %2178 = vst.msk [vmem:[#allocation2 + $0x20] sm:$0xff] %vm2173, %v2169
  %2179 = vst.msk [vmem:[#allocation2 + $0x28] sm:$0xff] %vm2173, %v2170
  %2180 = vst.msk [vmem:[#allocation2 + $0x30] sm:$0xff] %vm2173, %v2171
  %2181 = vst.msk [vmem:[#allocation2 + $0x38] sm:$0xff] %vm2173, %v2172
  %v2182 = vsel %vm188, %v455, %v824
  %v2183 = vsel %vm188, %v456, %v825
  %v2184 = vsel %vm188, %v457, %v826
  %v2185 = vsel %vm188, %v458, %v827
  %v2186 = vsel %vm188, %v459, %v828
  %v2187 = vsel %vm188, %v460, %v829
  %v2188 = vsel %vm188, %v461, %v830
  %v2189 = vsel %vm188, %v462, %v831
  %v2190 = vsel %vm2155, %v2182, %v1353
  %v2191 = vsel %vm2155, %v2183, %v1354
  %v2192 = vsel %vm2155, %v2184, %v1355
  %v2193 = vsel %vm2155, %v2185, %v1356
  %v2194 = vsel %vm2155, %v2186, %v1357
  %v2195 = vsel %vm2155, %v2187, %v1358
  %v2196 = vsel %vm2155, %v2188, %v1359
  %v2197 = vsel %vm2155, %v2189, %v1360
  %v2198 = vsel %vm2164, %v2190, %v1850
  %v2199 = vsel %vm2164, %v2191, %v1851
  %v2200 = vsel %vm2164, %v2192, %v1852
  %v2201 = vsel %vm2164, %v2193, %v1853
  %v2202 = vsel %vm2164, %v2194, %v1854
  %v2203 = vsel %vm2164, %v2195, %v1855
  %v2204 = vsel %vm2164, %v2196, %v1856
  %v2205 = vsel %vm2164, %v2197, %v1857
  %2206 = vst.msk [vmem:[#allocation3] sm:$0xff] %vm2173, %v2198
  %2207 = vst.msk [vmem:[#allocation3 + $0x8] sm:$0xff] %vm2173, %v2199
  %2208 = vst.msk [vmem:[#allocation3 + $0x10] sm:$0xff] %vm2173, %v2200
  %2209 = vst.msk [vmem:[#allocation3 + $0x18] sm:$0xff] %vm2173, %v2201
  %2210 = vst.msk [vmem:[#allocation3 + $0x20] sm:$0xff] %vm2173, %v2202
  %2211 = vst.msk [vmem:[#allocation3 + $0x28] sm:$0xff] %vm2173, %v2203
  %2212 = vst.msk [vmem:[#allocation3 + $0x30] sm:$0xff] %vm2173, %v2204
  %2213 = vst.msk [vmem:[#allocation3 + $0x38] sm:$0xff] %vm2173, %v2205
  %vm2214 = vcmask 64512
  %v2215 = vsel %vm2214, %v616, %v1145
  %v2216 = vsel %vm2214, %v617, %v1146
  %v2217 = vsel %vm2214, %v618, %v1147
  %v2218 = vsel %vm2214, %v619, %v1148
  %v2219 = vsel %vm2214, %v620, %v1149
  %v2220 = vsel %vm2214, %v621, %v1150
  %v2221 = vsel %vm2214, %v622, %v1151
  %v2222 = vsel %vm2214, %v623, %v1152
  %vm2223 = vcmask 130048
  %v2224 = vsel %vm2223, %v2215, %v1642
  %v2225 = vsel %vm2223, %v2216, %v1643
  %v2226 = vsel %vm2223, %v2217, %v1644
  %v2227 = vsel %vm2223, %v2218, %v1645
  %v2228 = vsel %vm2223, %v2219, %v1646
  %v2229 = vsel %vm2223, %v2220, %v1647
  %v2230 = vsel %vm2223, %v2221, %v1648
  %v2231 = vsel %vm2223, %v2222, %v1649
  %vm2232 = vcmask 195584
  %v2233 = vsel %vm2232, %v2224, %v2139
  %v2234 = vsel %vm2232, %v2225, %v2140
  %v2235 = vsel %vm2232, %v2226, %v2141
  %v2236 = vsel %vm2232, %v2227, %v2142
  %v2237 = vsel %vm2232, %v2228, %v2143
  %v2238 = vsel %vm2232, %v2229, %v2144
  %v2239 = vsel %vm2232, %v2230, %v2145
  %v2240 = vsel %vm2232, %v2231, %v2146
  %vm2241 = vcmask 261120
  %2242 = vst.msk [vmem:[#allocation4] sm:$0xff] %vm2241, %v2233
  %2243 = vst.msk [vmem:[#allocation4 + $0x8] sm:$0xff] %vm2241, %v2234
  %2244 = vst.msk [vmem:[#allocation4 + $0x10] sm:$0xff] %vm2241, %v2235
  %2245 = vst.msk [vmem:[#allocation4 + $0x18] sm:$0xff] %vm2241, %v2236
  %2246 = vst.msk [vmem:[#allocation4 + $0x20] sm:$0xff] %vm2241, %v2237
  %2247 = vst.msk [vmem:[#allocation4 + $0x28] sm:$0xff] %vm2241, %v2238
  %2248 = vst.msk [vmem:[#allocation4 + $0x30] sm:$0xff] %vm2241, %v2239
  %2249 = vst.msk [vmem:[#allocation4 + $0x38] sm:$0xff] %vm2241, %v2240
  // Predicated region
  $region54: #{allset_transformer_forward.3} parent=0 // pred_check
    %p2250 = pneg %p41
  $region55: #{allset_transformer_forward.3} parent=0 // pred_check_branch
    %2252 = sbr.rel (%p2250) target = $region57
  $region56: #{allset_transformer_forward.3} parent=0 // pred_region
    %v2253 = vld [vmem:[#allocation5] sm:$0xff]
    %v2254 = vld [vmem:[#allocation5 + $0x8] sm:$0xff]
    %v2255 = vld [vmem:[#allocation5 + $0x10] sm:$0xff]
    %v2256 = vld [vmem:[#allocation5 + $0x18] sm:$0xff]
    %v2257 = vld [vmem:[#allocation5 + $0x20] sm:$0xff]
    %v2258 = vld [vmem:[#allocation5 + $0x28] sm:$0xff]
    %v2259 = vld [vmem:[#allocation5 + $0x30] sm:$0xff]
    %v2260 = vld [vmem:[#allocation5 + $0x38] sm:$0xff]
    %vm2261 = vcmp.gt.f32.partialorder %v2253, 0.0
    %vm2262 = vcmp.gt.f32.partialorder %v2254, 0.0
    %vm2263 = vcmp.gt.f32.partialorder %v2255, 0.0
    %vm2264 = vcmp.gt.f32.partialorder %v2256, 0.0
    %vm2265 = vcmp.gt.f32.partialorder %v2257, 0.0
    %vm2266 = vcmp.gt.f32.partialorder %v2258, 0.0
    %vm2267 = vcmp.gt.f32.partialorder %v2259, 0.0
    %vm2268 = vcmp.gt.f32.partialorder %v2260, 0.0
    %v2269 = vsel %vm2261, 1, 0
    %v2270 = vsel %vm2262, 1, 0
    %v2271 = vsel %vm2263, 1, 0
    %v2272 = vsel %vm2264, 1, 0
    %v2273 = vsel %vm2265, 1, 0
    %v2274 = vsel %vm2266, 1, 0
    %v2275 = vsel %vm2267, 1, 0
    %v2276 = vsel %vm2268, 1, 0
    %v2277 = vcvt.s32.f32 %v2269
    %v2278 = vcvt.s32.f32 %v2270
    %v2279 = vcvt.s32.f32 %v2271
    %v2280 = vcvt.s32.f32 %v2272
    %v2281 = vcvt.s32.f32 %v2273
    %v2282 = vcvt.s32.f32 %v2274
    %v2283 = vcvt.s32.f32 %v2275
    %v2284 = vcvt.s32.f32 %v2276
    %v2285 = vrcp.pop %v455
    %v2286 = vrcp.pop %v456
    %v2287 = vrcp.pop %v457
    %v2288 = vrcp.pop %v458
    %v2289 = vrcp.pop %v459
    %v2290 = vrcp.pop %v460
    %v2291 = vrcp.pop %v461
    %v2292 = vrcp.pop %v462
    %2294 = vset.pattern.permute.xlu0 0
    %2295 = vperm.xlu0 %2294, %v2285
    %v2296 = vpop.permute.xlu0 %2295
    %2299 = vset.pattern.permute.xlu0 0
    %2300 = vperm.xlu0 %2299, %v2286
    %v2301 = vpop.permute.xlu0 %2300
    %2304 = vset.pattern.permute.xlu0 0
    %2305 = vperm.xlu0 %2304, %v2287
    %v2306 = vpop.permute.xlu0 %2305
    %2309 = vset.pattern.permute.xlu0 0
    %2310 = vperm.xlu0 %2309, %v2288
    %v2311 = vpop.permute.xlu0 %2310
    %2314 = vset.pattern.permute.xlu0 0
    %2315 = vperm.xlu0 %2314, %v2289
    %v2316 = vpop.permute.xlu0 %2315
    %2319 = vset.pattern.permute.xlu0 0
    %2320 = vperm.xlu0 %2319, %v2290
    %v2321 = vpop.permute.xlu0 %2320
    %2324 = vset.pattern.permute.xlu0 0
    %2325 = vperm.xlu0 %2324, %v2291
    %v2326 = vpop.permute.xlu0 %2325
    %2329 = vset.pattern.permute.xlu0 0
    %2330 = vperm.xlu0 %2329, %v2292
    %v2331 = vpop.permute.xlu0 %2330
    %v2333 = vmul.f32 %v616, %v2296
    %v2334 = vmul.f32 %v617, %v2301
    %v2335 = vmul.f32 %v618, %v2306
    %v2336 = vmul.f32 %v619, %v2311
    %v2337 = vmul.f32 %v620, %v2316
    %v2338 = vmul.f32 %v621, %v2321
    %v2339 = vmul.f32 %v622, %v2326
    %v2340 = vmul.f32 %v623, %v2331
    %v2341 = vrcp.pop %v824
    %v2342 = vrcp.pop %v825
    %v2343 = vrcp.pop %v826
    %v2344 = vrcp.pop %v827
    %v2345 = vrcp.pop %v828
    %v2346 = vrcp.pop %v829
    %v2347 = vrcp.pop %v830
    %v2348 = vrcp.pop %v831
    %2350 = vset.pattern.permute.xlu0 1
    %2351 = vperm.xlu0 %2350, %v2341
    %v2352 = vpop.permute.xlu0 %2351
    %2355 = vset.pattern.permute.xlu0 1
    %2356 = vperm.xlu0 %2355, %v2342
    %v2357 = vpop.permute.xlu0 %2356
    %2360 = vset.pattern.permute.xlu0 1
    %2361 = vperm.xlu0 %2360, %v2343
    %v2362 = vpop.permute.xlu0 %2361
    %2365 = vset.pattern.permute.xlu0 1
    %2366 = vperm.xlu0 %2365, %v2344
    %v2367 = vpop.permute.xlu0 %2366
    %2370 = vset.pattern.permute.xlu0 1
    %2371 = vperm.xlu0 %2370, %v2345
    %v2372 = vpop.permute.xlu0 %2371
    %2375 = vset.pattern.permute.xlu0 1
    %2376 = vperm.xlu0 %2375, %v2346
    %v2377 = vpop.permute.xlu0 %2376
    %2380 = vset.pattern.permute.xlu0 1
    %2381 = vperm.xlu0 %2380, %v2347
    %v2382 = vpop.permute.xlu0 %2381
    %2385 = vset.pattern.permute.xlu0 1
    %2386 = vperm.xlu0 %2385, %v2348
    %v2387 = vpop.permute.xlu0 %2386
    %v2389 = vmul.f32 %v1145, %v2352
    %v2390 = vmul.f32 %v1146, %v2357
    %v2391 = vmul.f32 %v1147, %v2362
    %v2392 = vmul.f32 %v1148, %v2367
    %v2393 = vmul.f32 %v1149, %v2372
    %v2394 = vmul.f32 %v1150, %v2377
    %v2395 = vmul.f32 %v1151, %v2382
    %v2396 = vmul.f32 %v1152, %v2387
    %v2397 = vrcp.pop %v1353
    %v2398 = vrcp.pop %v1354
    %v2399 = vrcp.pop %v1355
    %v2400 = vrcp.pop %v1356
    %v2401 = vrcp.pop %v1357
    %v2402 = vrcp.pop %v1358
    %v2403 = vrcp.pop %v1359
    %v2404 = vrcp.pop %v1360
    %2406 = vset.pattern.permute.xlu0 2
    %2407 = vperm.xlu0 %2406, %v2397
    %v2408 = vpop.permute.xlu0 %2407
    %2411 = vset.pattern.permute.xlu0 2
    %2412 = vperm.xlu0 %2411, %v2398
    %v2413 = vpop.permute.xlu0 %2412
    %2416 = vset.pattern.permute.xlu0 2
    %2417 = vperm.xlu0 %2416, %v2399
    %v2418 = vpop.permute.xlu0 %2417
    %2421 = vset.pattern.permute.xlu0 2
    %2422 = vperm.xlu0 %2421, %v2400
    %v2423 = vpop.permute.xlu0 %2422
    %2426 = vset.pattern.permute.xlu0 2
    %2427 = vperm.xlu0 %2426, %v2401
    %v2428 = vpop.permute.xlu0 %2427
    %2431 = vset.pattern.permute.xlu0 2
    %2432 = vperm.xlu0 %2431, %v2402
    %v2433 = vpop.permute.xlu0 %2432
    %2436 = vset.pattern.permute.xlu0 2
    %2437 = vperm.xlu0 %2436, %v2403
    %v2438 = vpop.permute.xlu0 %2437
    %2441 = vset.pattern.permute.xlu0 2
    %2442 = vperm.xlu0 %2441, %v2404
    %v2443 = vpop.permute.xlu0 %2442
    %v2445 = vmul.f32 %v1642, %v2408
    %v2446 = vmul.f32 %v1643, %v2413
    %v2447 = vmul.f32 %v1644, %v2418
    %v2448 = vmul.f32 %v1645, %v2423
    %v2449 = vmul.f32 %v1646, %v2428
    %v2450 = vmul.f32 %v1647, %v2433
    %v2451 = vmul.f32 %v1648, %v2438
    %v2452 = vmul.f32 %v1649, %v2443
    %v2453 = vrcp.pop %v1850
    %v2454 = vrcp.pop %v1851
    %v2455 = vrcp.pop %v1852
    %v2456 = vrcp.pop %v1853
    %v2457 = vrcp.pop %v1854
    %v2458 = vrcp.pop %v1855
    %v2459 = vrcp.pop %v1856
    %v2460 = vrcp.pop %v1857
    %2462 = vset.pattern.permute.xlu0 3
    %2463 = vperm.xlu0 %2462, %v2453
    %v2464 = vpop.permute.xlu0 %2463
    %2467 = vset.pattern.permute.xlu0 3
    %2468 = vperm.xlu0 %2467, %v2454
    %v2469 = vpop.permute.xlu0 %2468
    %2472 = vset.pattern.permute.xlu0 3
    %2473 = vperm.xlu0 %2472, %v2455
    %v2474 = vpop.permute.xlu0 %2473
    %2477 = vset.pattern.permute.xlu0 3
    %2478 = vperm.xlu0 %2477, %v2456
    %v2479 = vpop.permute.xlu0 %2478
    %2482 = vset.pattern.permute.xlu0 3
    %2483 = vperm.xlu0 %2482, %v2457
    %v2484 = vpop.permute.xlu0 %2483
    %2487 = vset.pattern.permute.xlu0 3
    %2488 = vperm.xlu0 %2487, %v2458
    %v2489 = vpop.permute.xlu0 %2488
    %2492 = vset.pattern.permute.xlu0 3
    %2493 = vperm.xlu0 %2492, %v2459
    %v2494 = vpop.permute.xlu0 %2493
    %2497 = vset.pattern.permute.xlu0 3
    %2498 = vperm.xlu0 %2497, %v2460
    %v2499 = vpop.permute.xlu0 %2498
    %v2501 = vmul.f32 %v2139, %v2464
    %v2502 = vmul.f32 %v2140, %v2469
    %v2503 = vmul.f32 %v2141, %v2474
    %v2504 = vmul.f32 %v2142, %v2479
    %v2505 = vmul.f32 %v2143, %v2484
    %v2506 = vmul.f32 %v2144, %v2489
    %v2507 = vmul.f32 %v2145, %v2494
    %v2508 = vmul.f32 %v2146, %v2499
    %v2509 = vsel %vm2214, %v2333, %v2389
    %v2510 = vsel %vm2214, %v2334, %v2390
    %v2511 = vsel %vm2214, %v2335, %v2391
    %v2512 = vsel %vm2214, %v2336, %v2392
    %v2513 = vsel %vm2214, %v2337, %v2393
    %v2514 = vsel %vm2214, %v2338, %v2394
    %v2515 = vsel %vm2214, %v2339, %v2395
    %v2516 = vsel %vm2214, %v2340, %v2396
    %v2517 = vsel %vm2223, %v2509, %v2445
    %v2518 = vsel %vm2223, %v2510, %v2446
    %v2519 = vsel %vm2223, %v2511, %v2447
    %v2520 = vsel %vm2223, %v2512, %v2448
    %v2521 = vsel %vm2223, %v2513, %v2449
    %v2522 = vsel %vm2223, %v2514, %v2450
    %v2523 = vsel %vm2223, %v2515, %v2451
    %v2524 = vsel %vm2223, %v2516, %v2452
    %v2525 = vsel %vm2232, %v2517, %v2501
    %v2526 = vsel %vm2232, %v2518, %v2502
    %v2527 = vsel %vm2232, %v2519, %v2503
    %v2528 = vsel %vm2232, %v2520, %v2504
    %v2529 = vsel %vm2232, %v2521, %v2505
    %v2530 = vsel %vm2232, %v2522, %v2506
    %v2531 = vsel %vm2232, %v2523, %v2507
    %v2532 = vsel %vm2232, %v2524, %v2508
    %2534 = vset.pattern.permute.xlu0 0
    %2535 = vperm.xlu0 %2534, %v2277
    %v2536 = vpop.permute.xlu0 %2535
    %2539 = vset.pattern.permute.xlu0 0
    %2540 = vperm.xlu0 %2539, %v2278
    %v2541 = vpop.permute.xlu0 %2540
    %2544 = vset.pattern.permute.xlu0 0
    %2545 = vperm.xlu0 %2544, %v2279
    %v2546 = vpop.permute.xlu0 %2545
    %2549 = vset.pattern.permute.xlu0 0
    %2550 = vperm.xlu0 %2549, %v2280
    %v2551 = vpop.permute.xlu0 %2550
    %2554 = vset.pattern.permute.xlu0 0
    %2555 = vperm.xlu0 %2554, %v2281
    %v2556 = vpop.permute.xlu0 %2555
    %2559 = vset.pattern.permute.xlu0 0
    %2560 = vperm.xlu0 %2559, %v2282
    %v2561 = vpop.permute.xlu0 %2560
    %2564 = vset.pattern.permute.xlu0 0
    %2565 = vperm.xlu0 %2564, %v2283
    %v2566 = vpop.permute.xlu0 %2565
    %2569 = vset.pattern.permute.xlu0 0
    %2570 = vperm.xlu0 %2569, %v2284
    %v2571 = vpop.permute.xlu0 %2570
    %v2573 = vmul.f32 %v2525, %v2536
    %v2574 = vmul.f32 %v2526, %v2541
    %v2575 = vmul.f32 %v2527, %v2546
    %v2576 = vmul.f32 %v2528, %v2551
    %v2577 = vmul.f32 %v2529, %v2556
    %v2578 = vmul.f32 %v2530, %v2561
    %v2579 = vmul.f32 %v2531, %v2566
    %v2580 = vmul.f32 %v2532, %v2571
    %v2581 = vld [vmem:[%s3] sm:$0x1]
    %v2583 = vlaneseq
    %v2584 = vshrl.u32 %v2583, 7
    %v2585 = vsub.s32 0, %v2584
    %v2586 = vrot.slane %v2581, %v2585
    %v2588 = vadd.f32 %v2573, %v2586
    %v2589 = vadd.f32 %v2574, %v2586
    %v2590 = vadd.f32 %v2575, %v2586
    %v2591 = vadd.f32 %v2576, %v2586
    %v2592 = vadd.f32 %v2577, %v2586
    %v2593 = vadd.f32 %v2578, %v2586
    %v2594 = vadd.f32 %v2579, %v2586
    %v2595 = vadd.f32 %v2580, %v2586
    %v2596 = vsel %vm2241, %v2588, 0.0
    %2597 = vadd.xlane.f32.xlu0 %v2596
    %v2598 = vpop.xlane.xlu0 %2597
    %v2599 = vsel %vm2241, %v2589, 0.0
    %2600 = vadd.xlane.f32.xlu0 %v2599
    %v2601 = vpop.xlane.xlu0 %2600
    %v2602 = vsel %vm2241, %v2590, 0.0
    %2603 = vadd.xlane.f32.xlu0 %v2602
    %v2604 = vpop.xlane.xlu0 %2603
    %v2605 = vsel %vm2241, %v2591, 0.0
    %2606 = vadd.xlane.f32.xlu0 %v2605
    %v2607 = vpop.xlane.xlu0 %2606
    %v2608 = vsel %vm2241, %v2592, 0.0
    %2609 = vadd.xlane.f32.xlu0 %v2608
    %v2610 = vpop.xlane.xlu0 %2609
    %v2611 = vsel %vm2241, %v2593, 0.0
    %2612 = vadd.xlane.f32.xlu0 %v2611
    %v2613 = vpop.xlane.xlu0 %2612
    %v2614 = vsel %vm2241, %v2594, 0.0
    %2615 = vadd.xlane.f32.xlu0 %v2614
    %v2616 = vpop.xlane.xlu0 %2615
    %v2617 = vsel %vm2241, %v2595, 0.0
    %2618 = vadd.xlane.f32.xlu0 %v2617
    %v2619 = vpop.xlane.xlu0 %2618
    %v2620 = vrcp.pop 32.0
    %v2621 = vmul.f32 %v2598, %v2620
    %v2622 = vmul.f32 %v2601, %v2620
    %v2623 = vmul.f32 %v2604, %v2620
    %v2624 = vmul.f32 %v2607, %v2620
    %v2625 = vmul.f32 %v2610, %v2620
    %v2626 = vmul.f32 %v2613, %v2620
    %v2627 = vmul.f32 %v2616, %v2620
    %v2628 = vmul.f32 %v2619, %v2620
    %v2629 = vsub.f32 %v2588, %v2621
    %v2630 = vsub.f32 %v2589, %v2622
    %v2631 = vsub.f32 %v2590, %v2623
    %v2632 = vsub.f32 %v2591, %v2624
    %v2633 = vsub.f32 %v2592, %v2625
    %v2634 = vsub.f32 %v2593, %v2626
    %v2635 = vsub.f32 %v2594, %v2627
    %v2636 = vsub.f32 %v2595, %v2628
    %v2637 = vmul.f32 %v2629, %v2629
    %v2638 = vmul.f32 %v2630, %v2630
    %v2639 = vmul.f32 %v2631, %v2631
    %v2640 = vmul.f32 %v2632, %v2632
    %v2641 = vmul.f32 %v2633, %v2633
    %v2642 = vmul.f32 %v2634, %v2634
    %v2643 = vmul.f32 %v2635, %v2635
    %v2644 = vmul.f32 %v2636, %v2636
    %v2645 = vsel %vm2241, %v2637, 0.0
    %2646 = vadd.xlane.f32.xlu0 %v2645
    %v2647 = vpop.xlane.xlu0 %2646
    %v2648 = vsel %vm2241, %v2638, 0.0
    %2649 = vadd.xlane.f32.xlu0 %v2648
    %v2650 = vpop.xlane.xlu0 %2649
    %v2651 = vsel %vm2241, %v2639, 0.0
    %2652 = vadd.xlane.f32.xlu0 %v2651
    %v2653 = vpop.xlane.xlu0 %2652
    %v2654 = vsel %vm2241, %v2640, 0.0
    %2655 = vadd.xlane.f32.xlu0 %v2654
    %v2656 = vpop.xlane.xlu0 %2655
    %v2657 = vsel %vm2241, %v2641, 0.0
    %2658 = vadd.xlane.f32.xlu0 %v2657
    %v2659 = vpop.xlane.xlu0 %2658
    %v2660 = vsel %vm2241, %v2642, 0.0
    %2661 = vadd.xlane.f32.xlu0 %v2660
    %v2662 = vpop.xlane.xlu0 %2661
    %v2663 = vsel %vm2241, %v2643, 0.0
    %2664 = vadd.xlane.f32.xlu0 %v2663
    %v2665 = vpop.xlane.xlu0 %2664
    %v2666 = vsel %vm2241, %v2644, 0.0
    %2667 = vadd.xlane.f32.xlu0 %v2666
    %v2668 = vpop.xlane.xlu0 %2667
    %v2669 = vmul.f32 %v2647, %v2620
    %v2670 = vmul.f32 %v2650, %v2620
    %v2671 = vmul.f32 %v2653, %v2620
    %v2672 = vmul.f32 %v2656, %v2620
    %v2673 = vmul.f32 %v2659, %v2620
    %v2674 = vmul.f32 %v2662, %v2620
    %v2675 = vmul.f32 %v2665, %v2620
    %v2676 = vmul.f32 %v2668, %v2620
    %v2677 = vadd.f32 %v2669, 1e-05
    %v2678 = vadd.f32 %v2670, 1e-05
    %v2679 = vadd.f32 %v2671, 1e-05
    %v2680 = vadd.f32 %v2672, 1e-05
    %v2681 = vadd.f32 %v2673, 1e-05
    %v2682 = vadd.f32 %v2674, 1e-05
    %v2683 = vadd.f32 %v2675, 1e-05
    %v2684 = vadd.f32 %v2676, 1e-05
    %v2685 = vrsqrt.pop %v2677
    %v2686 = vrsqrt.pop %v2678
    %v2687 = vrsqrt.pop %v2679
    %v2688 = vrsqrt.pop %v2680
    %v2689 = vrsqrt.pop %v2681
    %v2690 = vrsqrt.pop %v2682
    %v2691 = vrsqrt.pop %v2683
    %v2692 = vrsqrt.pop %v2684
    %v2693 = vmul.f32 %v2629, %v2685
    %v2694 = vmul.f32 %v2630, %v2686
    %v2695 = vmul.f32 %v2631, %v2687
    %v2696 = vmul.f32 %v2632, %v2688
    %v2697 = vmul.f32 %v2633, %v2689
    %v2698 = vmul.f32 %v2634, %v2690
    %v2699 = vmul.f32 %v2635, %v2691
    %v2700 = vmul.f32 %v2636, %v2692
    %v2701 = vld [vmem:[%s4] sm:$0x1]
    %v2703 = vlaneseq
    %v2704 = vshrl.u32 %v2703, 7
    %v2705 = vsub.s32 0, %v2704
    %v2706 = vrot.slane %v2701, %v2705
    %v2708 = vmul.f32 %v2693, %v2706
    %v2709 = vmul.f32 %v2694, %v2706
    %v2710 = vmul.f32 %v2695, %v2706
    %v2711 = vmul.f32 %v2696, %v2706
    %v2712 = vmul.f32 %v2697, %v2706
    %v2713 = vmul.f32 %v2698, %v2706
    %v2714 = vmul.f32 %v2699, %v2706
    %v2715 = vmul.f32 %v2700, %v2706
    %v2716 = vld [vmem:[%s5] sm:$0x1]
    %v2718 = vlaneseq
    %v2719 = vshrl.u32 %v2718, 7
    %v2720 = vsub.s32 0, %v2719
    %v2721 = vrot.slane %v2716, %v2720
    %v2723 = vadd.f32 %v2708, %v2721
    %v2724 = vadd.f32 %v2709, %v2721
    %v2725 = vadd.f32 %v2710, %v2721
    %v2726 = vadd.f32 %v2711, %v2721
    %v2727 = vadd.f32 %v2712, %v2721
    %v2728 = vadd.f32 %v2713, %v2721
    %v2729 = vadd.f32 %v2714, %v2721
    %v2730 = vadd.f32 %v2715, %v2721
    %v2731 = vld [vmem:[%s6] sm:$0xff]
    %v2732 = vld [vmem:[%s6 + $0x8] sm:$0xff]
    %v2733 = vld [vmem:[%s6 + $0x10] sm:$0xff]
    %v2734 = vld [vmem:[%s6 + $0x18] sm:$0xff]
    %v2735 = vld [vmem:[%s7] sm:$0x1]
    %v2737 = vlaneseq
    %v2738 = vshrl.u32 %v2737, 7
    %v2739 = vsub.s32 0, %v2738
    %v2740 = vrot.slane %v2735, %v2739
    %v2743 = vsel %vm2241, %v2723, 0
    %v2746 = vsel %vm2241, %v2724, 0
    %v2749 = vsel %vm2241, %v2725, 0
    %v2752 = vsel %vm2241, %v2726, 0
    %v2755 = vsel %vm2241, %v2727, 0
    %v2758 = vsel %vm2241, %v2728, 0
    %v2761 = vsel %vm2241, %v2729, 0
    %v2764 = vsel %vm2241, %v2730, 0
    %2766 = vmatprep.subr.mxu0 0.0
    %2767 = vmatpush1.msra.mxu0 %v2731
    %2768 = vmatprep.subr.mxu0 0.0
    %2769 = vmatpush1.msra.mxu0 %v2732
    %2770 = vmatprep.subr.mxu0 0.0
    %2771 = vmatpush1.msra.mxu0 %v2733
    %2772 = vmatprep.subr.mxu0 0.0
    %2773 = vmatpush1.msra.mxu0 %v2734
    %2774 = vmatprep.subr.mxu0 0.0
    %2775 = vmatpush1.msra.mxu0 0.0
    %2776 = vmatprep.subr.mxu0 0.0
    %2777 = vmatpush1.msra.mxu0 0.0
    %2778 = vmatprep.subr.mxu0 0.0
    %2779 = vmatpush1.msra.mxu0 0.0
    %2780 = vmatprep.subr.mxu0 0.0
    %2781 = vmatpush1.msra.mxu0 0.0
    %2782 = vmatprep.subr.mxu0 0.0
    %2783 = vmatpush1.msra.mxu0 0.0
    %2784 = vmatprep.subr.mxu0 0.0
    %2785 = vmatpush1.msra.mxu0 0.0
    %2786 = vmatprep.subr.mxu0 0.0
    %2787 = vmatpush1.msra.mxu0 0.0
    %2788 = vmatprep.subr.mxu0 0.0
    %2789 = vmatpush1.msra.mxu0 0.0
    %2790 = vmatprep.subr.mxu0 0.0
    %2791 = vmatpush1.msra.mxu0 0.0
    %2792 = vmatprep.subr.mxu0 0.0
    %2793 = vmatpush1.msra.mxu0 0.0
    %2794 = vmatprep.subr.mxu0 0.0
    %2795 = vmatpush1.msra.mxu0 0.0
    %2796 = vmatprep.subr.mxu0 0.0
    %2797 = vmatpush1.msra.mxu0 0.0
    %2798 = vmatprep.subr.mxu0 0.0
    %2799 = vmatpush1.msra.mxu0 0.0
    %2800 = vmatprep.subr.mxu0 0.0
    %2801 = vmatpush1.msra.mxu0 0.0
    %2802 = vmatprep.subr.mxu0 0.0
    %2803 = vmatpush1.msra.mxu0 0.0
    %2804 = vmatprep.subr.mxu0 0.0
    %2805 = vmatpush1.msra.mxu0 0.0
    %2806 = vmatprep.subr.mxu0 0.0
    %2807 = vmatpush1.msra.mxu0 0.0
    %2808 = vmatprep.subr.mxu0 0.0
    %2809 = vmatpush1.msra.mxu0 0.0
    %2810 = vmatprep.subr.mxu0 0.0
    %2811 = vmatpush1.msra.mxu0 0.0
    %2812 = vmatprep.subr.mxu0 0.0
    %2813 = vmatpush1.msra.mxu0 0.0
    %2814 = vmatprep.subr.mxu0 0.0
    %2815 = vmatpush1.msra.mxu0 0.0
    %2816 = vmatprep.subr.mxu0 0.0
    %2817 = vmatpush1.msra.mxu0 0.0
    %2818 = vmatprep.subr.mxu0 0.0
    %2819 = vmatpush1.msra.mxu0 0.0
    %2820 = vmatprep.subr.mxu0 0.0
    %2821 = vmatpush1.msra.mxu0 0.0
    %2822 = vmatprep.subr.mxu0 0.0
    %2823 = vmatpush1.msra.mxu0 0.0
    %2824 = vmatprep.subr.mxu0 0.0
    %2825 = vmatpush1.msra.mxu0 0.0
    %2826 = vmatprep.subr.mxu0 0.0
    %2827 = vmatpush1.msra.mxu0 0.0
    %2828 = vmatprep.subr.mxu0 0.0
    %2829 = vmatpush1.msra.mxu0 0.0
    %2830 = vmatprep.mubr.f32.mxu0 0.0
    %2831 = vmatmul.mubr.f32.gmra.mrb[0].mxu0 %v2743
    %v2832 = vpop.f32.mrb[0].mxu0
    %v2833 = vadd.f32 %v2740, %v2832
    %v2834 = vpop.f32.mrb[0].mxu0
    %2835 = vmatprep.mubr.f32.mxu0 0.0
    %2836 = vmatmul.mubr.f32.gmra.mrb[0].mxu0 %v2746
    %v2837 = vpop.f32.mrb[0].mxu0
    %v2838 = vadd.f32 %v2740, %v2837
    %v2839 = vpop.f32.mrb[0].mxu0
    %2840 = vmatprep.mubr.f32.mxu0 0.0
    %2841 = vmatmul.mubr.f32.gmra.mrb[0].mxu0 %v2749
    %v2842 = vpop.f32.mrb[0].mxu0
    %v2843 = vadd.f32 %v2740, %v2842
    %v2844 = vpop.f32.mrb[0].mxu0
    %2845 = vmatprep.mubr.f32.mxu0 0.0
    %2846 = vmatmul.mubr.f32.gmra.mrb[0].mxu0 %v2752
    %v2847 = vpop.f32.mrb[0].mxu0
    %v2848 = vadd.f32 %v2740, %v2847
    %v2849 = vpop.f32.mrb[0].mxu0
    %2850 = vmatprep.mubr.f32.mxu0 0.0
    %2851 = vmatmul.mubr.f32.gmra.mrb[0].mxu0 %v2755
    %v2852 = vpop.f32.mrb[0].mxu0
    %v2853 = vadd.f32 %v2740, %v2852
    %v2854 = vpop.f32.mrb[0].mxu0
    %2855 = vmatprep.mubr.f32.mxu0 0.0
    %2856 = vmatmul.mubr.f32.gmra.mrb[0].mxu0 %v2758
    %v2857 = vpop.f32.mrb[0].mxu0
    %v2858 = vadd.f32 %v2740, %v2857
    %v2859 = vpop.f32.mrb[0].mxu0
    %2860 = vmatprep.mubr.f32.mxu0 0.0
    %2861 = vmatmul.mubr.f32.gmra.mrb[0].mxu0 %v2761
    %v2862 = vpop.f32.mrb[0].mxu0
    %v2863 = vadd.f32 %v2740, %v2862
    %v2864 = vpop.f32.mrb[0].mxu0
    %2865 = vmatprep.mubr.f32.mxu0 0.0
    %2866 = vmatmul.mubr.f32.gmra.mrb[0].mxu0 %v2764
    %v2867 = vpop.f32.mrb[0].mxu0
    %v2868 = vadd.f32 %v2740, %v2867
    %v2869 = vpop.f32.mrb[0].mxu0
    %2870 = vdwg.mxu0
    %v2871 = vmax.f32 %v2833, 0.0
    %v2872 = vmax.f32 %v2838, 0.0
    %v2873 = vmax.f32 %v2843, 0.0
    %v2874 = vmax.f32 %v2848, 0.0
    %v2875 = vmax.f32 %v2853, 0.0
    %v2876 = vmax.f32 %v2858, 0.0
    %v2877 = vmax.f32 %v2863, 0.0
    %v2878 = vmax.f32 %v2868, 0.0
    %v2879 = vld [vmem:[%s8] sm:$0xff]
    %v2880 = vld [vmem:[%s8 + $0x8] sm:$0xff]
    %v2881 = vld [vmem:[%s8 + $0x10] sm:$0xff]
    %v2882 = vld [vmem:[%s8 + $0x18] sm:$0xff]
    %v2883 = vld [vmem:[%s9] sm:$0x1]
    %v2885 = vlaneseq
    %v2886 = vshrl.u32 %v2885, 7
    %v2887 = vsub.s32 0, %v2886
    %v2888 = vrot.slane %v2883, %v2887
    %v2891 = vsel %vm2241, %v2871, 0
    %v2894 = vsel %vm2241, %v2872, 0
    %v2897 = vsel %vm2241, %v2873, 0
    %v2900 = vsel %vm2241, %v2874, 0
    %v2903 = vsel %vm2241, %v2875, 0
    %v2906 = vsel %vm2241, %v2876, 0
    %v2909 = vsel %vm2241, %v2877, 0
    %v2912 = vsel %vm2241, %v2878, 0
    %2914 = vmatprep.subr.mxu0 0.0
    %2915 = vmatpush1.msra.mxu0 %v2879
    %2916 = vmatprep.subr.mxu0 0.0
    %2917 = vmatpush1.msra.mxu0 %v2880
    %2918 = vmatprep.subr.mxu0 0.0
    %2919 = vmatpush1.msra.mxu0 %v2881
    %2920 = vmatprep.subr.mxu0 0.0
    %2921 = vmatpush1.msra.mxu0 %v2882
    %2922 = vmatprep.subr.mxu0 0.0
    %2923 = vmatpush1.msra.mxu0 0.0
    %2924 = vmatprep.subr.mxu0 0.0
    %2925 = vmatpush1.msra.mxu0 0.0
    %2926 = vmatprep.subr.mxu0 0.0
    %2927 = vmatpush1.msra.mxu0 0.0
    %2928 = vmatprep.subr.mxu0 0.0
    %2929 = vmatpush1.msra.mxu0 0.0
    %2930 = vmatprep.subr.mxu0 0.0
    %2931 = vmatpush1.msra.mxu0 0.0
    %2932 = vmatprep.subr.mxu0 0.0
    %2933 = vmatpush1.msra.mxu0 0.0
    %2934 = vmatprep.subr.mxu0 0.0
    %2935 = vmatpush1.msra.mxu0 0.0
    %2936 = vmatprep.subr.mxu0 0.0
    %2937 = vmatpush1.msra.mxu0 0.0
    %2938 = vmatprep.subr.mxu0 0.0
    %2939 = vmatpush1.msra.mxu0 0.0
    %2940 = vmatprep.subr.mxu0 0.0
    %2941 = vmatpush1.msra.mxu0 0.0
    %2942 = vmatprep.subr.mxu0 0.0
    %2943 = vmatpush1.msra.mxu0 0.0
    %2944 = vmatprep.subr.mxu0 0.0
    %2945 = vmatpush1.msra.mxu0 0.0
    %2946 = vmatprep.subr.mxu0 0.0
    %2947 = vmatpush1.msra.mxu0 0.0
    %2948 = vmatprep.subr.mxu0 0.0
    %2949 = vmatpush1.msra.mxu0 0.0
    %2950 = vmatprep.subr.mxu0 0.0
    %2951 = vmatpush1.msra.mxu0 0.0
    %2952 = vmatprep.subr.mxu0 0.0
    %2953 = vmatpush1.msra.mxu0 0.0
    %2954 = vmatprep.subr.mxu0 0.0
    %2955 = vmatpush1.msra.mxu0 0.0
    %2956 = vmatprep.subr.mxu0 0.0
    %2957 = vmatpush1.msra.mxu0 0.0
    %2958 = vmatprep.subr.mxu0 0.0
    %2959 = vmatpush1.msra.mxu0 0.0
    %2960 = vmatprep.subr.mxu0 0.0
    %2961 = vmatpush1.msra.mxu0 0.0
    %2962 = vmatprep.subr.mxu0 0.0
    %2963 = vmatpush1.msra.mxu0 0.0
    %2964 = vmatprep.subr.mxu0 0.0
    %2965 = vmatpush1.msra.mxu0 0.0
    %2966 = vmatprep.subr.mxu0 0.0
    %2967 = vmatpush1.msra.mxu0 0.0
    %2968 = vmatprep.subr.mxu0 0.0
    %2969 = vmatpush1.msra.mxu0 0.0
    %2970 = vmatprep.subr.mxu0 0.0
    %2971 = vmatpush1.msra.mxu0 0.0
    %2972 = vmatprep.subr.mxu0 0.0
    %2973 = vmatpush1.msra.mxu0 0.0
    %2974 = vmatprep.subr.mxu0 0.0
    %2975 = vmatpush1.msra.mxu0 0.0
    %2976 = vmatprep.subr.mxu0 0.0
    %2977 = vmatpush1.msra.mxu0 0.0
    %2978 = vmatprep.mubr.f32.mxu0 0.0
    %2979 = vmatmul.mubr.f32.gmra.mrb[0].mxu0 %v2891
    %v2980 = vpop.f32.mrb[0].mxu0
    %v2981 = vadd.f32 %v2888, %v2980
    %v2982 = vpop.f32.mrb[0].mxu0
    %2983 = vmatprep.mubr.f32.mxu0 0.0
    %2984 = vmatmul.mubr.f32.gmra.mrb[0].mxu0 %v2894
    %v2985 = vpop.f32.mrb[0].mxu0
    %v2986 = vadd.f32 %v2888, %v2985
    %v2987 = vpop.f32.mrb[0].mxu0
    %2988 = vmatprep.mubr.f32.mxu0 0.0
    %2989 = vmatmul.mubr.f32.gmra.mrb[0].mxu0 %v2897
    %v2990 = vpop.f32.mrb[0].mxu0
    %v2991 = vadd.f32 %v2888, %v2990
    %v2992 = vpop.f32.mrb[0].mxu0
    %2993 = vmatprep.mubr.f32.mxu0 0.0
    %2994 = vmatmul.mubr.f32.gmra.mrb[0].mxu0 %v2900
    %v2995 = vpop.f32.mrb[0].mxu0
    %v2996 = vadd.f32 %v2888, %v2995
    %v2997 = vpop.f32.mrb[0].mxu0
    %2998 = vmatprep.mubr.f32.mxu0 0.0
    %2999 = vmatmul.mubr.f32.gmra.mrb[0].mxu0 %v2903
    %v3000 = vpop.f32.mrb[0].mxu0
    %v3001 = vadd.f32 %v2888, %v3000
    %v3002 = vpop.f32.mrb[0].mxu0
    %3003 = vmatprep.mubr.f32.mxu0 0.0
    %3004 = vmatmul.mubr.f32.gmra.mrb[0].mxu0 %v2906
    %v3005 = vpop.f32.mrb[0].mxu0
    %v3006 = vadd.f32 %v2888, %v3005
    %v3007 = vpop.f32.mrb[0].mxu0
    %3008 = vmatprep.mubr.f32.mxu0 0.0
    %3009 = vmatmul.mubr.f32.gmra.mrb[0].mxu0 %v2909
    %v3010 = vpop.f32.mrb[0].mxu0
    %v3011 = vadd.f32 %v2888, %v3010
    %v3012 = vpop.f32.mrb[0].mxu0
    %3013 = vmatprep.mubr.f32.mxu0 0.0
    %3014 = vmatmul.mubr.f32.gmra.mrb[0].mxu0 %v2912
    %v3015 = vpop.f32.mrb[0].mxu0
    %v3016 = vadd.f32 %v2888, %v3015
    %v3017 = vpop.f32.mrb[0].mxu0
    %3018 = vdwg.mxu0
    %v3019 = vmax.f32 %v2981, 0.0
    %v3020 = vmax.f32 %v2986, 0.0
    %v3021 = vmax.f32 %v2991, 0.0
    %v3022 = vmax.f32 %v2996, 0.0
    %v3023 = vmax.f32 %v3001, 0.0
    %v3024 = vmax.f32 %v3006, 0.0
    %v3025 = vmax.f32 %v3011, 0.0
    %v3026 = vmax.f32 %v3016, 0.0
    %v3027 = vadd.f32 %v2723, %v3019
    %v3028 = vadd.f32 %v2724, %v3020
    %v3029 = vadd.f32 %v2725, %v3021
    %v3030 = vadd.f32 %v2726, %v3022
    %v3031 = vadd.f32 %v2727, %v3023
    %v3032 = vadd.f32 %v2728, %v3024
    %v3033 = vadd.f32 %v2729, %v3025
    %v3034 = vadd.f32 %v2730, %v3026
    %v3035 = vsel %vm2241, %v3027, 0.0
    %3036 = vadd.xlane.f32.xlu0 %v3035
    %v3037 = vpop.xlane.xlu0 %3036
    %v3038 = vsel %vm2241, %v3028, 0.0
    %3039 = vadd.xlane.f32.xlu0 %v3038
    %v3040 = vpop.xlane.xlu0 %3039
    %v3041 = vsel %vm2241, %v3029, 0.0
    %3042 = vadd.xlane.f32.xlu0 %v3041
    %v3043 = vpop.xlane.xlu0 %3042
    %v3044 = vsel %vm2241, %v3030, 0.0
    %3045 = vadd.xlane.f32.xlu0 %v3044
    %v3046 = vpop.xlane.xlu0 %3045
    %v3047 = vsel %vm2241, %v3031, 0.0
    %3048 = vadd.xlane.f32.xlu0 %v3047
    %v3049 = vpop.xlane.xlu0 %3048
    %v3050 = vsel %vm2241, %v3032, 0.0
    %3051 = vadd.xlane.f32.xlu0 %v3050
    %v3052 = vpop.xlane.xlu0 %3051
    %v3053 = vsel %vm2241, %v3033, 0.0
    %3054 = vadd.xlane.f32.xlu0 %v3053
    %v3055 = vpop.xlane.xlu0 %3054
    %v3056 = vsel %vm2241, %v3034, 0.0
    %3057 = vadd.xlane.f32.xlu0 %v3056
    %v3058 = vpop.xlane.xlu0 %3057
    %v3059 = vmul.f32 %v3037, %v2620
    %v3060 = vmul.f32 %v3040, %v2620
    %v3061 = vmul.f32 %v3043, %v2620
    %v3062 = vmul.f32 %v3046, %v2620
    %v3063 = vmul.f32 %v3049, %v2620
    %v3064 = vmul.f32 %v3052, %v2620
    %v3065 = vmul.f32 %v3055, %v2620
    %v3066 = vmul.f32 %v3058, %v2620
    %v3067 = vsub.f32 %v3027, %v3059
    %v3068 = vsub.f32 %v3028, %v3060
    %v3069 = vsub.f32 %v3029, %v3061
    %v3070 = vsub.f32 %v3030, %v3062
    %v3071 = vsub.f32 %v3031, %v3063
    %v3072 = vsub.f32 %v3032, %v3064
    %v3073 = vsub.f32 %v3033, %v3065
    %v3074 = vsub.f32 %v3034, %v3066
    %v3075 = vmul.f32 %v3067, %v3067
    %v3076 = vmul.f32 %v3068, %v3068
    %v3077 = vmul.f32 %v3069, %v3069
    %v3078 = vmul.f32 %v3070, %v3070
    %v3079 = vmul.f32 %v3071, %v3071
    %v3080 = vmul.f32 %v3072, %v3072
    %v3081 = vmul.f32 %v3073, %v3073
    %v3082 = vmul.f32 %v3074, %v3074
    %v3083 = vsel %vm2241, %v3075, 0.0
    %3084 = vadd.xlane.f32.xlu0 %v3083
    %v3085 = vpop.xlane.xlu0 %3084
    %v3086 = vsel %vm2241, %v3076, 0.0
    %3087 = vadd.xlane.f32.xlu0 %v3086
    %v3088 = vpop.xlane.xlu0 %3087
    %v3089 = vsel %vm2241, %v3077, 0.0
    %3090 = vadd.xlane.f32.xlu0 %v3089
    %v3091 = vpop.xlane.xlu0 %3090
    %v3092 = vsel %vm2241, %v3078, 0.0
    %3093 = vadd.xlane.f32.xlu0 %v3092
    %v3094 = vpop.xlane.xlu0 %3093
    %v3095 = vsel %vm2241, %v3079, 0.0
    %3096 = vadd.xlane.f32.xlu0 %v3095
    %v3097 = vpop.xlane.xlu0 %3096
    %v3098 = vsel %vm2241, %v3080, 0.0
    %3099 = vadd.xlane.f32.xlu0 %v3098
    %v3100 = vpop.xlane.xlu0 %3099
    %v3101 = vsel %vm2241, %v3081, 0.0
    %3102 = vadd.xlane.f32.xlu0 %v3101
    %v3103 = vpop.xlane.xlu0 %3102
    %v3104 = vsel %vm2241, %v3082, 0.0
    %3105 = vadd.xlane.f32.xlu0 %v3104
    %v3106 = vpop.xlane.xlu0 %3105
    %v3107 = vmul.f32 %v3085, %v2620
    %v3108 = vmul.f32 %v3088, %v2620
    %v3109 = vmul.f32 %v3091, %v2620
    %v3110 = vmul.f32 %v3094, %v2620
    %v3111 = vmul.f32 %v3097, %v2620
    %v3112 = vmul.f32 %v3100, %v2620
    %v3113 = vmul.f32 %v3103, %v2620
    %v3114 = vmul.f32 %v3106, %v2620
    %v3115 = vadd.f32 %v3107, 1e-05
    %v3116 = vadd.f32 %v3108, 1e-05
    %v3117 = vadd.f32 %v3109, 1e-05
    %v3118 = vadd.f32 %v3110, 1e-05
    %v3119 = vadd.f32 %v3111, 1e-05
    %v3120 = vadd.f32 %v3112, 1e-05
    %v3121 = vadd.f32 %v3113, 1e-05
    %v3122 = vadd.f32 %v3114, 1e-05
    %v3123 = vrsqrt.pop %v3115
    %v3124 = vrsqrt.pop %v3116
    %v3125 = vrsqrt.pop %v3117
    %v3126 = vrsqrt.pop %v3118
    %v3127 = vrsqrt.pop %v3119
    %v3128 = vrsqrt.pop %v3120
    %v3129 = vrsqrt.pop %v3121
    %v3130 = vrsqrt.pop %v3122
    %v3131 = vmul.f32 %v3067, %v3123
    %v3132 = vmul.f32 %v3068, %v3124
    %v3133 = vmul.f32 %v3069, %v3125
    %v3134 = vmul.f32 %v3070, %v3126
    %v3135 = vmul.f32 %v3071, %v3127
    %v3136 = vmul.f32 %v3072, %v3128
    %v3137 = vmul.f32 %v3073, %v3129
    %v3138 = vmul.f32 %v3074, %v3130
    %v3139 = vld [vmem:[%s10] sm:$0x1]
    %v3141 = vlaneseq
    %v3142 = vshrl.u32 %v3141, 7
    %v3143 = vsub.s32 0, %v3142
    %v3144 = vrot.slane %v3139, %v3143
    %v3146 = vmul.f32 %v3131, %v3144
    %v3147 = vmul.f32 %v3132, %v3144
    %v3148 = vmul.f32 %v3133, %v3144
    %v3149 = vmul.f32 %v3134, %v3144
    %v3150 = vmul.f32 %v3135, %v3144
    %v3151 = vmul.f32 %v3136, %v3144
    %v3152 = vmul.f32 %v3137, %v3144
    %v3153 = vmul.f32 %v3138, %v3144
    %v3154 = vld [vmem:[%s11] sm:$0x1]
    %v3156 = vlaneseq
    %v3157 = vshrl.u32 %v3156, 7
    %v3158 = vsub.s32 0, %v3157
    %v3159 = vrot.slane %v3154, %v3158
    %v3161 = vadd.f32 %v3146, %v3159
    %v3162 = vadd.f32 %v3147, %v3159
    %v3163 = vadd.f32 %v3148, %v3159
    %v3164 = vadd.f32 %v3149, %v3159
    %v3165 = vadd.f32 %v3150, %v3159
    %v3166 = vadd.f32 %v3151, %v3159
    %v3167 = vadd.f32 %v3152, %v3159
    %v3168 = vadd.f32 %v3153, %v3159
    %v3169 = vmax.f32 %v3161, 0.0
    %v3170 = vmax.f32 %v3162, 0.0
    %v3171 = vmax.f32 %v3163, 0.0
    %v3172 = vmax.f32 %v3164, 0.0
    %v3173 = vmax.f32 %v3165, 0.0
    %v3174 = vmax.f32 %v3166, 0.0
    %v3175 = vmax.f32 %v3167, 0.0
    %v3176 = vmax.f32 %v3168, 0.0
    %3177 = vst.msk [vmem:[%s12] sm:$0xff] %vm2241, %v3169
    %3178 = vst.msk [vmem:[%s12 + $0x8] sm:$0xff] %vm2241, %v3170
    %3179 = vst.msk [vmem:[%s12 + $0x10] sm:$0xff] %vm2241, %v3171
    %3180 = vst.msk [vmem:[%s12 + $0x18] sm:$0xff] %vm2241, %v3172
    %3181 = vst.msk [vmem:[%s12 + $0x20] sm:$0xff] %vm2241, %v3173
    %3182 = vst.msk [vmem:[%s12 + $0x28] sm:$0xff] %vm2241, %v3174
    %3183 = vst.msk [vmem:[%s12 + $0x30] sm:$0xff] %vm2241, %v3175
    %3184 = vst.msk [vmem:[%s12 + $0x38] sm:$0xff] %vm2241, %v3176
  $region57: #{allset_transformer_forward.3} parent=0 // pred_fallthru
    _
  // Predicated region
  $region58: #{allset_transformer_forward.3} parent=0 // pred_check
    _
  $region59: #{allset_transformer_forward.3} parent=0 // pred_check_branch
    %3186 = sbr.rel (0) target = $region61
  $region60: #{allset_transformer_forward.3} parent=0 // pred_region
    _
  $region61: #{allset_transformer_forward.3} parent=0 // pred_fallthru
    _
  // Predicated region
  $region62: #{allset_transformer_forward.3} parent=0 // pred_check
    _
  $region63: #{allset_transformer_forward.3} parent=0 // pred_check_branch
    %3188 = sbr.rel (0) target = $region65
  $region64: #{allset_transformer_forward.3} parent=0 // pred_region
    _
  $region65: #{allset_transformer_forward.3} parent=0 // pred_fallthru
    _

// kernel: allset_transformer_forward.4
$region0: #{allset_transformer_forward.4}
  #allocation0 [shape = 'u32[]', space=smem, size = 0x4, offset = 0x4, fixed_abs, tag = 'smem constant byte address 0x4 - core index']
  #allocation1 [shape = 'u32[144,128]{1,0:T(1,128)}', space=vmem, size = 0x12000, scoped, tag = 'internal scratch']
  #allocation2 [shape = 'f32[160,4]{1,0:T(8,128)}', space=vmem, size = 0x14000, scoped, tag = 'scratch operand']
  #allocation3 [shape = 'f32[160,4]{1,0:T(8,128)}', space=vmem, size = 0x14000, scoped, tag = 'scratch operand']
  #allocation4 [shape = 'f32[160,32]{1,0:T(8,128)}', space=vmem, size = 0x14000, scoped, tag = 'scratch operand']
  #allocation5 [shape = 'f32[160,1]{1,0:T(8,128)}', space=vmem, size = 0x14000, scoped, tag = 'scratch operand']
  %s0 = inlined_call_operand.vmem [shape: s8[160,128], index: 0, kind: input, shape index: {}]
  %s1 = inlined_call_operand.vmem [shape: f32[8,128], index: 1, kind: input, shape index: {}]
  %s2 = inlined_call_operand.vmem [shape: f32[128,32], index: 2, kind: input, shape index: {}]
  %s3 = inlined_call_operand.vmem [shape: f32[1,32], index: 3, kind: input, shape index: {}]
  %s4 = inlined_call_operand.vmem [shape: f32[1,32], index: 4, kind: input, shape index: {}]
  %s5 = inlined_call_operand.vmem [shape: f32[1,32], index: 5, kind: input, shape index: {}]
  %s6 = inlined_call_operand.vmem [shape: f32[32,32], index: 6, kind: input, shape index: {}]
  %s7 = inlined_call_operand.vmem [shape: f32[1,32], index: 7, kind: input, shape index: {}]
  %s8 = inlined_call_operand.vmem [shape: f32[32,32], index: 8, kind: input, shape index: {}]
  %s9 = inlined_call_operand.vmem [shape: f32[1,32], index: 9, kind: input, shape index: {}]
  %s10 = inlined_call_operand.vmem [shape: f32[1,32], index: 10, kind: input, shape index: {}]
  %s11 = inlined_call_operand.vmem [shape: f32[1,32], index: 11, kind: input, shape index: {}]
  %s12 = inlined_call_operand.vmem [shape: f32[160,32], index: 12, kind: output, shape index: {}]
  %s13 = sld [smem:[#allocation0]]
  $region66: #{allset_transformer_forward.4} parent=0
    _
  %s15 = ssub.s32 1, %s13
  %s16 = scalar_select 0, %s15, %s13
  // Predicated region
  $region2: #{allset_transformer_forward.4} parent=0 // pred_check
    _
  $region3: #{allset_transformer_forward.4} parent=0 // pred_check_branch
    %18 = sbr.rel (0) target = $region5
  $region4: #{allset_transformer_forward.4} parent=0 // pred_region
    _
  $region5: #{allset_transformer_forward.4} parent=0 // pred_fallthru
    _
  // Predicated region
  $region6: #{allset_transformer_forward.4} parent=0 // pred_check
    _
  $region7: #{allset_transformer_forward.4} parent=0 // pred_check_branch
    %20 = sbr.rel (0) target = $region9
  $region8: #{allset_transformer_forward.4} parent=0 // pred_region
    _
  $region9: #{allset_transformer_forward.4} parent=0 // pred_fallthru
    _
  // Predicated region
  $region10: #{allset_transformer_forward.4} parent=0 // pred_check
    _
  $region11: #{allset_transformer_forward.4} parent=0 // pred_check_branch
    %22 = sbr.rel (0) target = $region13
  $region12: #{allset_transformer_forward.4} parent=0 // pred_region
    _
  $region13: #{allset_transformer_forward.4} parent=0 // pred_fallthru
    _
  // Predicated region
  $region14: #{allset_transformer_forward.4} parent=0 // pred_check
    _
  $region15: #{allset_transformer_forward.4} parent=0 // pred_check_branch
    %24 = sbr.rel (0) target = $region17
  $region16: #{allset_transformer_forward.4} parent=0 // pred_region
    _
  $region17: #{allset_transformer_forward.4} parent=0 // pred_fallthru
    _
  // Predicated region
  $region18: #{allset_transformer_forward.4} parent=0 // pred_check
    _
  $region19: #{allset_transformer_forward.4} parent=0 // pred_check_branch
    %26 = sbr.rel (0) target = $region21
  $region20: #{allset_transformer_forward.4} parent=0 // pred_region
    _
  $region21: #{allset_transformer_forward.4} parent=0 // pred_fallthru
    _
  // Predicated region
  $region22: #{allset_transformer_forward.4} parent=0 // pred_check
    _
  $region23: #{allset_transformer_forward.4} parent=0 // pred_check_branch
    %28 = sbr.rel (0) target = $region25
  $region24: #{allset_transformer_forward.4} parent=0 // pred_region
    _
  $region25: #{allset_transformer_forward.4} parent=0 // pred_fallthru
    _
  // Predicated region
  $region26: #{allset_transformer_forward.4} parent=0 // pred_check
    _
  $region27: #{allset_transformer_forward.4} parent=0 // pred_check_branch
    %30 = sbr.rel (0) target = $region29
  $region28: #{allset_transformer_forward.4} parent=0 // pred_region
    _
  $region29: #{allset_transformer_forward.4} parent=0 // pred_fallthru
    _
  // Predicated region
  $region30: #{allset_transformer_forward.4} parent=0 // pred_check
    _
  $region31: #{allset_transformer_forward.4} parent=0 // pred_check_branch
    %32 = sbr.rel (0) target = $region33
  $region32: #{allset_transformer_forward.4} parent=0 // pred_region
    _
  $region33: #{allset_transformer_forward.4} parent=0 // pred_fallthru
    _
  // Predicated region
  $region34: #{allset_transformer_forward.4} parent=0 // pred_check
    _
  $region35: #{allset_transformer_forward.4} parent=0 // pred_check_branch
    %34 = sbr.rel (0) target = $region37
  $region36: #{allset_transformer_forward.4} parent=0 // pred_region
    _
  $region37: #{allset_transformer_forward.4} parent=0 // pred_fallthru
    _
  // Predicated region
  $region38: #{allset_transformer_forward.4} parent=0 // pred_check
    _
  $region39: #{allset_transformer_forward.4} parent=0 // pred_check_branch
    %36 = sbr.rel (0) target = $region41
  $region40: #{allset_transformer_forward.4} parent=0 // pred_region
    _
  $region41: #{allset_transformer_forward.4} parent=0 // pred_fallthru
    _
  // Predicated region
  $region42: #{allset_transformer_forward.4} parent=0 // pred_check
    _
  $region43: #{allset_transformer_forward.4} parent=0 // pred_check_branch
    %38 = sbr.rel (0) target = $region45
  $region44: #{allset_transformer_forward.4} parent=0 // pred_region
    _
  $region45: #{allset_transformer_forward.4} parent=0 // pred_fallthru
    _
  // Predicated region
  $region46: #{allset_transformer_forward.4} parent=0 // pred_check
    _
  $region47: #{allset_transformer_forward.4} parent=0 // pred_check_branch
    %40 = sbr.rel (0) target = $region49
  $region48: #{allset_transformer_forward.4} parent=0 // pred_region
    _
  $region49: #{allset_transformer_forward.4} parent=0 // pred_fallthru
    _
  %p41 = scmp.eq.s32.totalorder 0, 0
  // Predicated region
  $region50: #{allset_transformer_forward.4} parent=0 // pred_check
    %p42 = pneg %p41
  $region51: #{allset_transformer_forward.4} parent=0 // pred_check_branch
    %44 = sbr.rel (%p42) target = $region53
  $region52: #{allset_transformer_forward.4} parent=0 // pred_region
    %vm45 = vcmask 31744
    %46 = vst.msk [vmem:[#allocation2] sm:$0xff] %vm45, -1e+30
    %47 = vst.msk [vmem:[#allocation2 + $0x8] sm:$0xff] %vm45, -1e+30
    %48 = vst.msk [vmem:[#allocation2 + $0x10] sm:$0xff] %vm45, -1e+30
    %49 = vst.msk [vmem:[#allocation2 + $0x18] sm:$0xff] %vm45, -1e+30
    %50 = vst.msk [vmem:[#allocation2 + $0x20] sm:$0xff] %vm45, -1e+30
    %51 = vst.msk [vmem:[#allocation2 + $0x28] sm:$0xff] %vm45, -1e+30
    %52 = vst.msk [vmem:[#allocation2 + $0x30] sm:$0xff] %vm45, -1e+30
    %53 = vst.msk [vmem:[#allocation2 + $0x38] sm:$0xff] %vm45, -1e+30
    %54 = vst.msk [vmem:[#allocation2 + $0x40] sm:$0xff] %vm45, -1e+30
    %55 = vst.msk [vmem:[#allocation2 + $0x48] sm:$0xff] %vm45, -1e+30
    %56 = vst.msk [vmem:[#allocation2 + $0x50] sm:$0xff] %vm45, -1e+30
    %57 = vst.msk [vmem:[#allocation2 + $0x58] sm:$0xff] %vm45, -1e+30
    %58 = vst.msk [vmem:[#allocation2 + $0x60] sm:$0xff] %vm45, -1e+30
    %59 = vst.msk [vmem:[#allocation2 + $0x68] sm:$0xff] %vm45, -1e+30
    %60 = vst.msk [vmem:[#allocation2 + $0x70] sm:$0xff] %vm45, -1e+30
    %61 = vst.msk [vmem:[#allocation2 + $0x78] sm:$0xff] %vm45, -1e+30
    %62 = vst.msk [vmem:[#allocation2 + $0x80] sm:$0xff] %vm45, -1e+30
    %63 = vst.msk [vmem:[#allocation2 + $0x88] sm:$0xff] %vm45, -1e+30
    %64 = vst.msk [vmem:[#allocation2 + $0x90] sm:$0xff] %vm45, -1e+30
    %65 = vst.msk [vmem:[#allocation2 + $0x98] sm:$0xff] %vm45, -1e+30
    %66 = vst.msk [vmem:[#allocation3] sm:$0xff] %vm45, 0.0
    %67 = vst.msk [vmem:[#allocation3 + $0x8] sm:$0xff] %vm45, 0.0
    %68 = vst.msk [vmem:[#allocation3 + $0x10] sm:$0xff] %vm45, 0.0
    %69 = vst.msk [vmem:[#allocation3 + $0x18] sm:$0xff] %vm45, 0.0
    %70 = vst.msk [vmem:[#allocation3 + $0x20] sm:$0xff] %vm45, 0.0
    %71 = vst.msk [vmem:[#allocation3 + $0x28] sm:$0xff] %vm45, 0.0
    %72 = vst.msk [vmem:[#allocation3 + $0x30] sm:$0xff] %vm45, 0.0
    %73 = vst.msk [vmem:[#allocation3 + $0x38] sm:$0xff] %vm45, 0.0
    %74 = vst.msk [vmem:[#allocation3 + $0x40] sm:$0xff] %vm45, 0.0
    %75 = vst.msk [vmem:[#allocation3 + $0x48] sm:$0xff] %vm45, 0.0
    %76 = vst.msk [vmem:[#allocation3 + $0x50] sm:$0xff] %vm45, 0.0
    %77 = vst.msk [vmem:[#allocation3 + $0x58] sm:$0xff] %vm45, 0.0
    %78 = vst.msk [vmem:[#allocation3 + $0x60] sm:$0xff] %vm45, 0.0
    %79 = vst.msk [vmem:[#allocation3 + $0x68] sm:$0xff] %vm45, 0.0
    %80 = vst.msk [vmem:[#allocation3 + $0x70] sm:$0xff] %vm45, 0.0
    %81 = vst.msk [vmem:[#allocation3 + $0x78] sm:$0xff] %vm45, 0.0
    %82 = vst.msk [vmem:[#allocation3 + $0x80] sm:$0xff] %vm45, 0.0
    %83 = vst.msk [vmem:[#allocation3 + $0x88] sm:$0xff] %vm45, 0.0
    %84 = vst.msk [vmem:[#allocation3 + $0x90] sm:$0xff] %vm45, 0.0
    %85 = vst.msk [vmem:[#allocation3 + $0x98] sm:$0xff] %vm45, 0.0
    %vm86 = vcmask 261120
    %87 = vst.msk [vmem:[#allocation4] sm:$0xff] %vm86, 0.0
    %88 = vst.msk [vmem:[#allocation4 + $0x8] sm:$0xff] %vm86, 0.0
    %89 = vst.msk [vmem:[#allocation4 + $0x10] sm:$0xff] %vm86, 0.0
    %90 = vst.msk [vmem:[#allocation4 + $0x18] sm:$0xff] %vm86, 0.0
    %91 = vst.msk [vmem:[#allocation4 + $0x20] sm:$0xff] %vm86, 0.0
    %92 = vst.msk [vmem:[#allocation4 + $0x28] sm:$0xff] %vm86, 0.0
    %93 = vst.msk [vmem:[#allocation4 + $0x30] sm:$0xff] %vm86, 0.0
    %94 = vst.msk [vmem:[#allocation4 + $0x38] sm:$0xff] %vm86, 0.0
    %95 = vst.msk [vmem:[#allocation4 + $0x40] sm:$0xff] %vm86, 0.0
    %96 = vst.msk [vmem:[#allocation4 + $0x48] sm:$0xff] %vm86, 0.0
    %97 = vst.msk [vmem:[#allocation4 + $0x50] sm:$0xff] %vm86, 0.0
    %98 = vst.msk [vmem:[#allocation4 + $0x58] sm:$0xff] %vm86, 0.0
    %99 = vst.msk [vmem:[#allocation4 + $0x60] sm:$0xff] %vm86, 0.0
    %100 = vst.msk [vmem:[#allocation4 + $0x68] sm:$0xff] %vm86, 0.0
    %101 = vst.msk [vmem:[#allocation4 + $0x70] sm:$0xff] %vm86, 0.0
    %102 = vst.msk [vmem:[#allocation4 + $0x78] sm:$0xff] %vm86, 0.0
    %103 = vst.msk [vmem:[#allocation4 + $0x80] sm:$0xff] %vm86, 0.0
    %104 = vst.msk [vmem:[#allocation4 + $0x88] sm:$0xff] %vm86, 0.0
    %105 = vst.msk [vmem:[#allocation4 + $0x90] sm:$0xff] %vm86, 0.0
    %106 = vst.msk [vmem:[#allocation4 + $0x98] sm:$0xff] %vm86, 0.0
    %vm107 = vcmask 7168
    %108 = vst.msk [vmem:[#allocation5] sm:$0xff] %vm107, 0.0
    %109 = vst.msk [vmem:[#allocation5 + $0x8] sm:$0xff] %vm107, 0.0
    %110 = vst.msk [vmem:[#allocation5 + $0x10] sm:$0xff] %vm107, 0.0
    %111 = vst.msk [vmem:[#allocation5 + $0x18] sm:$0xff] %vm107, 0.0
    %112 = vst.msk [vmem:[#allocation5 + $0x20] sm:$0xff] %vm107, 0.0
    %113 = vst.msk [vmem:[#allocation5 + $0x28] sm:$0xff] %vm107, 0.0
    %114 = vst.msk [vmem:[#allocation5 + $0x30] sm:$0xff] %vm107, 0.0
    %115 = vst.msk [vmem:[#allocation5 + $0x38] sm:$0xff] %vm107, 0.0
    %116 = vst.msk [vmem:[#allocation5 + $0x40] sm:$0xff] %vm107, 0.0
    %117 = vst.msk [vmem:[#allocation5 + $0x48] sm:$0xff] %vm107, 0.0
    %118 = vst.msk [vmem:[#allocation5 + $0x50] sm:$0xff] %vm107, 0.0
    %119 = vst.msk [vmem:[#allocation5 + $0x58] sm:$0xff] %vm107, 0.0
    %120 = vst.msk [vmem:[#allocation5 + $0x60] sm:$0xff] %vm107, 0.0
    %121 = vst.msk [vmem:[#allocation5 + $0x68] sm:$0xff] %vm107, 0.0
    %122 = vst.msk [vmem:[#allocation5 + $0x70] sm:$0xff] %vm107, 0.0
    %123 = vst.msk [vmem:[#allocation5 + $0x78] sm:$0xff] %vm107, 0.0
    %124 = vst.msk [vmem:[#allocation5 + $0x80] sm:$0xff] %vm107, 0.0
    %125 = vst.msk [vmem:[#allocation5 + $0x88] sm:$0xff] %vm107, 0.0
    %126 = vst.msk [vmem:[#allocation5 + $0x90] sm:$0xff] %vm107, 0.0
    %127 = vst.msk [vmem:[#allocation5 + $0x98] sm:$0xff] %vm107, 0.0
  $region53: #{allset_transformer_forward.4} parent=0 // pred_fallthru
    _
  %v128 = vld [vmem:[%s0] sm:$0xff]
  %v129 = vld [vmem:[%s0 + $0x8] sm:$0xff]
  %v130 = vld [vmem:[%s0 + $0x10] sm:$0xff]
  %v131 = vld [vmem:[%s0 + $0x18] sm:$0xff]
  %v132 = vld [vmem:[%s0 + $0x20] sm:$0xff]
  %v133 = vunpack.c.0.s8 %v128
  %v134 = vunpack.c.1.s8 %v128
  %v135 = vunpack.c.2.s8 %v128
  %v136 = vunpack.c.3.s8 %v128
  %v137 = vunpack.c.0.s8 %v129
  %v138 = vunpack.c.1.s8 %v129
  %v139 = vunpack.c.2.s8 %v129
  %v140 = vunpack.c.3.s8 %v129
  %v141 = vunpack.c.0.s8 %v130
  %v142 = vunpack.c.1.s8 %v130
  %v143 = vunpack.c.2.s8 %v130
  %v144 = vunpack.c.3.s8 %v130
  %v145 = vunpack.c.0.s8 %v131
  %v146 = vunpack.c.1.s8 %v131
  %v147 = vunpack.c.2.s8 %v131
  %v148 = vunpack.c.3.s8 %v131
  %v149 = vunpack.c.0.s8 %v132
  %v150 = vunpack.c.1.s8 %v132
  %v151 = vunpack.c.2.s8 %v132
  %v152 = vunpack.c.3.s8 %v132
  %v153 = vcvt.s32.f32 %v133
  %v154 = vcvt.s32.f32 %v134
  %v155 = vcvt.s32.f32 %v135
  %v156 = vcvt.s32.f32 %v136
  %v157 = vcvt.s32.f32 %v137
  %v158 = vcvt.s32.f32 %v138
  %v159 = vcvt.s32.f32 %v139
  %v160 = vcvt.s32.f32 %v140
  %v161 = vcvt.s32.f32 %v141
  %v162 = vcvt.s32.f32 %v142
  %v163 = vcvt.s32.f32 %v143
  %v164 = vcvt.s32.f32 %v144
  %v165 = vcvt.s32.f32 %v145
  %v166 = vcvt.s32.f32 %v146
  %v167 = vcvt.s32.f32 %v147
  %v168 = vcvt.s32.f32 %v148
  %v169 = vcvt.s32.f32 %v149
  %v170 = vcvt.s32.f32 %v150
  %v171 = vcvt.s32.f32 %v151
  %v172 = vcvt.s32.f32 %v152
  %v173 = vsub.f32 %v153, 1.0
  %v174 = vsub.f32 %v154, 1.0
  %v175 = vsub.f32 %v155, 1.0
  %v176 = vsub.f32 %v156, 1.0
  %v177 = vsub.f32 %v157, 1.0
  %v178 = vsub.f32 %v158, 1.0
  %v179 = vsub.f32 %v159, 1.0
  %v180 = vsub.f32 %v160, 1.0
  %v181 = vsub.f32 %v161, 1.0
  %v182 = vsub.f32 %v162, 1.0
  %v183 = vsub.f32 %v163, 1.0
  %v184 = vsub.f32 %v164, 1.0
  %v185 = vsub.f32 %v165, 1.0
  %v186 = vsub.f32 %v166, 1.0
  %v187 = vsub.f32 %v167, 1.0
  %v188 = vsub.f32 %v168, 1.0
  %v189 = vsub.f32 %v169, 1.0
  %v190 = vsub.f32 %v170, 1.0
  %v191 = vsub.f32 %v171, 1.0
  %v192 = vsub.f32 %v172, 1.0
  %v193 = vmul.f32 %v173, 1e+30
  %v194 = vmul.f32 %v174, 1e+30
  %v195 = vmul.f32 %v175, 1e+30
  %v196 = vmul.f32 %v176, 1e+30
  %v197 = vmul.f32 %v177, 1e+30
  %v198 = vmul.f32 %v178, 1e+30
  %v199 = vmul.f32 %v179, 1e+30
  %v200 = vmul.f32 %v180, 1e+30
  %v201 = vmul.f32 %v181, 1e+30
  %v202 = vmul.f32 %v182, 1e+30
  %v203 = vmul.f32 %v183, 1e+30
  %v204 = vmul.f32 %v184, 1e+30
  %v205 = vmul.f32 %v185, 1e+30
  %v206 = vmul.f32 %v186, 1e+30
  %v207 = vmul.f32 %v187, 1e+30
  %v208 = vmul.f32 %v188, 1e+30
  %v209 = vmul.f32 %v189, 1e+30
  %v210 = vmul.f32 %v190, 1e+30
  %v211 = vmul.f32 %v191, 1e+30
  %v212 = vmul.f32 %v192, 1e+30
  %v213 = vld [vmem:[#allocation5] sm:$0xff]
  %v214 = vld [vmem:[#allocation5 + $0x8] sm:$0xff]
  %v215 = vld [vmem:[#allocation5 + $0x10] sm:$0xff]
  %v216 = vld [vmem:[#allocation5 + $0x18] sm:$0xff]
  %v217 = vld [vmem:[#allocation5 + $0x20] sm:$0xff]
  %v218 = vld [vmem:[#allocation5 + $0x28] sm:$0xff]
  %v219 = vld [vmem:[#allocation5 + $0x30] sm:$0xff]
  %v220 = vld [vmem:[#allocation5 + $0x38] sm:$0xff]
  %v221 = vld [vmem:[#allocation5 + $0x40] sm:$0xff]
  %v222 = vld [vmem:[#allocation5 + $0x48] sm:$0xff]
  %v223 = vld [vmem:[#allocation5 + $0x50] sm:$0xff]
  %v224 = vld [vmem:[#allocation5 + $0x58] sm:$0xff]
  %v225 = vld [vmem:[#allocation5 + $0x60] sm:$0xff]
  %v226 = vld [vmem:[#allocation5 + $0x68] sm:$0xff]
  %v227 = vld [vmem:[#allocation5 + $0x70] sm:$0xff]
  %v228 = vld [vmem:[#allocation5 + $0x78] sm:$0xff]
  %v229 = vld [vmem:[#allocation5 + $0x80] sm:$0xff]
  %v230 = vld [vmem:[#allocation5 + $0x88] sm:$0xff]
  %v231 = vld [vmem:[#allocation5 + $0x90] sm:$0xff]
  %v232 = vld [vmem:[#allocation5 + $0x98] sm:$0xff]
  %233 = vadd.xlane.f32.xlu0 %v153
  %v234 = vpop.xlane.xlu0 %233
  %235 = vadd.xlane.f32.xlu0 %v154
  %v236 = vpop.xlane.xlu0 %235
  %237 = vadd.xlane.f32.xlu0 %v155
  %v238 = vpop.xlane.xlu0 %237
  %239 = vadd.xlane.f32.xlu0 %v156
  %v240 = vpop.xlane.xlu0 %239
  %241 = vadd.xlane.f32.xlu0 %v157
  %v242 = vpop.xlane.xlu0 %241
  %243 = vadd.xlane.f32.xlu0 %v158
  %v244 = vpop.xlane.xlu0 %243
  %245 = vadd.xlane.f32.xlu0 %v159
  %v246 = vpop.xlane.xlu0 %245
  %247 = vadd.xlane.f32.xlu0 %v160
  %v248 = vpop.xlane.xlu0 %247
  %249 = vadd.xlane.f32.xlu0 %v161
  %v250 = vpop.xlane.xlu0 %249
  %251 = vadd.xlane.f32.xlu0 %v162
  %v252 = vpop.xlane.xlu0 %251
  %253 = vadd.xlane.f32.xlu0 %v163
  %v254 = vpop.xlane.xlu0 %253
  %255 = vadd.xlane.f32.xlu0 %v164
  %v256 = vpop.xlane.xlu0 %255
  %257 = vadd.xlane.f32.xlu0 %v165
  %v258 = vpop.xlane.xlu0 %257
  %259 = vadd.xlane.f32.xlu0 %v166
  %v260 = vpop.xlane.xlu0 %259
  %261 = vadd.xlane.f32.xlu0 %v167
  %v262 = vpop.xlane.xlu0 %261
  %263 = vadd.xlane.f32.xlu0 %v168
  %v264 = vpop.xlane.xlu0 %263
  %265 = vadd.xlane.f32.xlu0 %v169
  %v266 = vpop.xlane.xlu0 %265
  %267 = vadd.xlane.f32.xlu0 %v170
  %v268 = vpop.xlane.xlu0 %267
  %269 = vadd.xlane.f32.xlu0 %v171
  %v270 = vpop.xlane.xlu0 %269
  %271 = vadd.xlane.f32.xlu0 %v172
  %v272 = vpop.xlane.xlu0 %271
  %v273 = vadd.f32 %v213, %v234
  %v274 = vadd.f32 %v214, %v236
  %v275 = vadd.f32 %v215, %v238
  %v276 = vadd.f32 %v216, %v240
  %v277 = vadd.f32 %v217, %v242
  %v278 = vadd.f32 %v218, %v244
  %v279 = vadd.f32 %v219, %v246
  %v280 = vadd.f32 %v220, %v248
  %v281 = vadd.f32 %v221, %v250
  %v282 = vadd.f32 %v222, %v252
  %v283 = vadd.f32 %v223, %v254
  %v284 = vadd.f32 %v224, %v256
  %v285 = vadd.f32 %v225, %v258
  %v286 = vadd.f32 %v226, %v260
  %v287 = vadd.f32 %v227, %v262
  %v288 = vadd.f32 %v228, %v264
  %v289 = vadd.f32 %v229, %v266
  %v290 = vadd.f32 %v230, %v268
  %v291 = vadd.f32 %v231, %v270
  %v292 = vadd.f32 %v232, %v272
  %vm293 = vcmask 7168
  %294 = vst.msk [vmem:[#allocation5] sm:$0xff] %vm293, %v273
  %295 = vst.msk [vmem:[#allocation5 + $0x8] sm:$0xff] %vm293, %v274
  %296 = vst.msk [vmem:[#allocation5 + $0x10] sm:$0xff] %vm293, %v275
  %297 = vst.msk [vmem:[#allocation5 + $0x18] sm:$0xff] %vm293, %v276
  %298 = vst.msk [vmem:[#allocation5 + $0x20] sm:$0xff] %vm293, %v277
  %299 = vst.msk [vmem:[#allocation5 + $0x28] sm:$0xff] %vm293, %v278
  %300 = vst.msk [vmem:[#allocation5 + $0x30] sm:$0xff] %vm293, %v279
  %301 = vst.msk [vmem:[#allocation5 + $0x38] sm:$0xff] %vm293, %v280
  %302 = vst.msk [vmem:[#allocation5 + $0x40] sm:$0xff] %vm293, %v281
  %303 = vst.msk [vmem:[#allocation5 + $0x48] sm:$0xff] %vm293, %v282
  %304 = vst.msk [vmem:[#allocation5 + $0x50] sm:$0xff] %vm293, %v283
  %305 = vst.msk [vmem:[#allocation5 + $0x58] sm:$0xff] %vm293, %v284
  %306 = vst.msk [vmem:[#allocation5 + $0x60] sm:$0xff] %vm293, %v285
  %307 = vst.msk [vmem:[#allocation5 + $0x68] sm:$0xff] %vm293, %v286
  %308 = vst.msk [vmem:[#allocation5 + $0x70] sm:$0xff] %vm293, %v287
  %309 = vst.msk [vmem:[#allocation5 + $0x78] sm:$0xff] %vm293, %v288
  %310 = vst.msk [vmem:[#allocation5 + $0x80] sm:$0xff] %vm293, %v289
  %311 = vst.msk [vmem:[#allocation5 + $0x88] sm:$0xff] %vm293, %v290
  %312 = vst.msk [vmem:[#allocation5 + $0x90] sm:$0xff] %vm293, %v291
  %313 = vst.msk [vmem:[#allocation5 + $0x98] sm:$0xff] %vm293, %v292
  %v314 = vld [vmem:[%s1] sm:$0xff]
  %v315 = vld [vmem:[%s2] sm:$0xff]
  %v316 = vld [vmem:[%s2 + $0x8] sm:$0xff]
  %v317 = vld [vmem:[%s2 + $0x10] sm:$0xff]
  %v318 = vld [vmem:[%s2 + $0x18] sm:$0xff]
  %v319 = vld [vmem:[%s2 + $0x20] sm:$0xff]
  %v320 = vld [vmem:[%s2 + $0x28] sm:$0xff]
  %v321 = vld [vmem:[%s2 + $0x30] sm:$0xff]
  %v322 = vld [vmem:[%s2 + $0x38] sm:$0xff]
  %v323 = vld [vmem:[%s2 + $0x40] sm:$0xff]
  %v324 = vld [vmem:[%s2 + $0x48] sm:$0xff]
  %v325 = vld [vmem:[%s2 + $0x50] sm:$0xff]
  %v326 = vld [vmem:[%s2 + $0x58] sm:$0xff]
  %v327 = vld [vmem:[%s2 + $0x60] sm:$0xff]
  %v328 = vld [vmem:[%s2 + $0x68] sm:$0xff]
  %v329 = vld [vmem:[%s2 + $0x70] sm:$0xff]
  %v330 = vld [vmem:[%s2 + $0x78] sm:$0xff]
  %v331 = vld [vmem:[#allocation2] sm:$0xff]
  %v332 = vld [vmem:[#allocation2 + $0x8] sm:$0xff]
  %v333 = vld [vmem:[#allocation2 + $0x10] sm:$0xff]
  %v334 = vld [vmem:[#allocation2 + $0x18] sm:$0xff]
  %v335 = vld [vmem:[#allocation2 + $0x20] sm:$0xff]
  %v336 = vld [vmem:[#allocation2 + $0x28] sm:$0xff]
  %v337 = vld [vmem:[#allocation2 + $0x30] sm:$0xff]
  %v338 = vld [vmem:[#allocation2 + $0x38] sm:$0xff]
  %v339 = vld [vmem:[#allocation2 + $0x40] sm:$0xff]
  %v340 = vld [vmem:[#allocation2 + $0x48] sm:$0xff]
  %v341 = vld [vmem:[#allocation2 + $0x50] sm:$0xff]
  %v342 = vld [vmem:[#allocation2 + $0x58] sm:$0xff]
  %v343 = vld [vmem:[#allocation2 + $0x60] sm:$0xff]
  %v344 = vld [vmem:[#allocation2 + $0x68] sm:$0xff]
  %v345 = vld [vmem:[#allocation2 + $0x70] sm:$0xff]
  %v346 = vld [vmem:[#allocation2 + $0x78] sm:$0xff]
  %v347 = vld [vmem:[#allocation2 + $0x80] sm:$0xff]
  %v348 = vld [vmem:[#allocation2 + $0x88] sm:$0xff]
  %v349 = vld [vmem:[#allocation2 + $0x90] sm:$0xff]
  %v350 = vld [vmem:[#allocation2 + $0x98] sm:$0xff]
  %v351 = vld [vmem:[#allocation3] sm:$0xff]
  %v352 = vld [vmem:[#allocation3 + $0x8] sm:$0xff]
  %v353 = vld [vmem:[#allocation3 + $0x10] sm:$0xff]
  %v354 = vld [vmem:[#allocation3 + $0x18] sm:$0xff]
  %v355 = vld [vmem:[#allocation3 + $0x20] sm:$0xff]
  %v356 = vld [vmem:[#allocation3 + $0x28] sm:$0xff]
  %v357 = vld [vmem:[#allocation3 + $0x30] sm:$0xff]
  %v358 = vld [vmem:[#allocation3 + $0x38] sm:$0xff]
  %v359 = vld [vmem:[#allocation3 + $0x40] sm:$0xff]
  %v360 = vld [vmem:[#allocation3 + $0x48] sm:$0xff]
  %v361 = vld [vmem:[#allocation3 + $0x50] sm:$0xff]
  %v362 = vld [vmem:[#allocation3 + $0x58] sm:$0xff]
  %v363 = vld [vmem:[#allocation3 + $0x60] sm:$0xff]
  %v364 = vld [vmem:[#allocation3 + $0x68] sm:$0xff]
  %v365 = vld [vmem:[#allocation3 + $0x70] sm:$0xff]
  %v366 = vld [vmem:[#allocation3 + $0x78] sm:$0xff]
  %v367 = vld [vmem:[#allocation3 + $0x80] sm:$0xff]
  %v368 = vld [vmem:[#allocation3 + $0x88] sm:$0xff]
  %v369 = vld [vmem:[#allocation3 + $0x90] sm:$0xff]
  %v370 = vld [vmem:[#allocation3 + $0x98] sm:$0xff]
  %v371 = vld [vmem:[#allocation4] sm:$0xff]
  %v372 = vld [vmem:[#allocation4 + $0x8] sm:$0xff]
  %v373 = vld [vmem:[#allocation4 + $0x10] sm:$0xff]
  %v374 = vld [vmem:[#allocation4 + $0x18] sm:$0xff]
  %v375 = vld [vmem:[#allocation4 + $0x20] sm:$0xff]
  %v376 = vld [vmem:[#allocation4 + $0x28] sm:$0xff]
  %v377 = vld [vmem:[#allocation4 + $0x30] sm:$0xff]
  %v378 = vld [vmem:[#allocation4 + $0x38] sm:$0xff]
  %v379 = vld [vmem:[#allocation4 + $0x40] sm:$0xff]
  %v380 = vld [vmem:[#allocation4 + $0x48] sm:$0xff]
  %v381 = vld [vmem:[#allocation4 + $0x50] sm:$0xff]
  %v382 = vld [vmem:[#allocation4 + $0x58] sm:$0xff]
  %v383 = vld [vmem:[#allocation4 + $0x60] sm:$0xff]
  %v384 = vld [vmem:[#allocation4 + $0x68] sm:$0xff]
  %v385 = vld [vmem:[#allocation4 + $0x70] sm:$0xff]
  %v386 = vld [vmem:[#allocation4 + $0x78] sm:$0xff]
  %v387 = vld [vmem:[#allocation4 + $0x80] sm:$0xff]
  %v388 = vld [vmem:[#allocation4 + $0x88] sm:$0xff]
  %v389 = vld [vmem:[#allocation4 + $0x90] sm:$0xff]
  %v390 = vld [vmem:[#allocation4 + $0x98] sm:$0xff]
  %v391 = vlaneseq
  %v392 = vshrl.u32 %v391, 7
  %v393 = vsub.s32 0, %v392
  %v394 = vrot.slane %v314, %v393
  %v395 = vadd.f32 %v193, %v394
  %v396 = vadd.f32 %v194, %v394
  %v397 = vadd.f32 %v195, %v394
  %v398 = vadd.f32 %v196, %v394
  %v399 = vadd.f32 %v197, %v394
  %v400 = vadd.f32 %v198, %v394
  %v401 = vadd.f32 %v199, %v394
  %v402 = vadd.f32 %v200, %v394
  %v403 = vadd.f32 %v201, %v394
  %v404 = vadd.f32 %v202, %v394
  %v405 = vadd.f32 %v203, %v394
  %v406 = vadd.f32 %v204, %v394
  %v407 = vadd.f32 %v205, %v394
  %v408 = vadd.f32 %v206, %v394
  %v409 = vadd.f32 %v207, %v394
  %v410 = vadd.f32 %v208, %v394
  %v411 = vadd.f32 %v209, %v394
  %v412 = vadd.f32 %v210, %v394
  %v413 = vadd.f32 %v211, %v394
  %v414 = vadd.f32 %v212, %v394
  %415 = vmax.xlane.f32.xlu0 %v395
  %v416 = vpop.xlane.xlu0 %415
  %417 = vmax.xlane.f32.xlu0 %v396
  %v418 = vpop.xlane.xlu0 %417
  %419 = vmax.xlane.f32.xlu0 %v397
  %v420 = vpop.xlane.xlu0 %419
  %421 = vmax.xlane.f32.xlu0 %v398
  %v422 = vpop.xlane.xlu0 %421
  %423 = vmax.xlane.f32.xlu0 %v399
  %v424 = vpop.xlane.xlu0 %423
  %425 = vmax.xlane.f32.xlu0 %v400
  %v426 = vpop.xlane.xlu0 %425
  %427 = vmax.xlane.f32.xlu0 %v401
  %v428 = vpop.xlane.xlu0 %427
  %429 = vmax.xlane.f32.xlu0 %v402
  %v430 = vpop.xlane.xlu0 %429
  %431 = vmax.xlane.f32.xlu0 %v403
  %v432 = vpop.xlane.xlu0 %431
  %433 = vmax.xlane.f32.xlu0 %v404
  %v434 = vpop.xlane.xlu0 %433
  %435 = vmax.xlane.f32.xlu0 %v405
  %v436 = vpop.xlane.xlu0 %435
  %437 = vmax.xlane.f32.xlu0 %v406
  %v438 = vpop.xlane.xlu0 %437
  %439 = vmax.xlane.f32.xlu0 %v407
  %v440 = vpop.xlane.xlu0 %439
  %441 = vmax.xlane.f32.xlu0 %v408
  %v442 = vpop.xlane.xlu0 %441
  %443 = vmax.xlane.f32.xlu0 %v409
  %v444 = vpop.xlane.xlu0 %443
  %445 = vmax.xlane.f32.xlu0 %v410
  %v446 = vpop.xlane.xlu0 %445
  %447 = vmax.xlane.f32.xlu0 %v411
  %v448 = vpop.xlane.xlu0 %447
  %449 = vmax.xlane.f32.xlu0 %v412
  %v450 = vpop.xlane.xlu0 %449
  %451 = vmax.xlane.f32.xlu0 %v413
  %v452 = vpop.xlane.xlu0 %451
  %453 = vmax.xlane.f32.xlu0 %v414
  %v454 = vpop.xlane.xlu0 %453
  %v455 = vmax.f32 %v331, %v416
  %v456 = vmax.f32 %v332, %v418
  %v457 = vmax.f32 %v333, %v420
  %v458 = vmax.f32 %v334, %v422
  %v459 = vmax.f32 %v335, %v424
  %v460 = vmax.f32 %v336, %v426
  %v461 = vmax.f32 %v337, %v428
  %v462 = vmax.f32 %v338, %v430
  %v463 = vmax.f32 %v339, %v432
  %v464 = vmax.f32 %v340, %v434
  %v465 = vmax.f32 %v341, %v436
  %v466 = vmax.f32 %v342, %v438
  %v467 = vmax.f32 %v343, %v440
  %v468 = vmax.f32 %v344, %v442
  %v469 = vmax.f32 %v345, %v444
  %v470 = vmax.f32 %v346, %v446
  %v471 = vmax.f32 %v347, %v448
  %v472 = vmax.f32 %v348, %v450
  %v473 = vmax.f32 %v349, %v452
  %v474 = vmax.f32 %v350, %v454
  %v475 = vsub.f32 %v331, %v455
  %v476 = vsub.f32 %v332, %v456
  %v477 = vsub.f32 %v333, %v457
  %v478 = vsub.f32 %v334, %v458
  %v479 = vsub.f32 %v335, %v459
  %v480 = vsub.f32 %v336, %v460
  %v481 = vsub.f32 %v337, %v461
  %v482 = vsub.f32 %v338, %v462
  %v483 = vsub.f32 %v339, %v463
  %v484 = vsub.f32 %v340, %v464
  %v485 = vsub.f32 %v341, %v465
  %v486 = vsub.f32 %v342, %v466
  %v487 = vsub.f32 %v343, %v467
  %v488 = vsub.f32 %v344, %v468
  %v489 = vsub.f32 %v345, %v469
  %v490 = vsub.f32 %v346, %v470
  %v491 = vsub.f32 %v347, %v471
  %v492 = vsub.f32 %v348, %v472
  %v493 = vsub.f32 %v349, %v473
  %v494 = vsub.f32 %v350, %v474
  %v495 = vmul.f32 %v475, 1.442695
  %v496 = vpow.pop %v495
  %v497 = vmul.f32 %v476, 1.442695
  %v498 = vpow.pop %v497
  %v499 = vmul.f32 %v477, 1.442695
  %v500 = vpow.pop %v499
  %v501 = vmul.f32 %v478, 1.442695
  %v502 = vpow.pop %v501
  %v503 = vmul.f32 %v479, 1.442695
  %v504 = vpow.pop %v503
  %v505 = vmul.f32 %v480, 1.442695
  %v506 = vpow.pop %v505
  %v507 = vmul.f32 %v481, 1.442695
  %v508 = vpow.pop %v507
  %v509 = vmul.f32 %v482, 1.442695
  %v510 = vpow.pop %v509
  %v511 = vmul.f32 %v483, 1.442695
  %v512 = vpow.pop %v511
  %v513 = vmul.f32 %v484, 1.442695
  %v514 = vpow.pop %v513
  %v515 = vmul.f32 %v485, 1.442695
  %v516 = vpow.pop %v515
  %v517 = vmul.f32 %v486, 1.442695
  %v518 = vpow.pop %v517
  %v519 = vmul.f32 %v487, 1.442695
  %v520 = vpow.pop %v519
  %v521 = vmul.f32 %v488, 1.442695
  %v522 = vpow.pop %v521
  %v523 = vmul.f32 %v489, 1.442695
  %v524 = vpow.pop %v523
  %v525 = vmul.f32 %v490, 1.442695
  %v526 = vpow.pop %v525
  %v527 = vmul.f32 %v491, 1.442695
  %v528 = vpow.pop %v527
  %v529 = vmul.f32 %v492, 1.442695
  %v530 = vpow.pop %v529
  %v531 = vmul.f32 %v493, 1.442695
  %v532 = vpow.pop %v531
  %v533 = vmul.f32 %v494, 1.442695
  %v534 = vpow.pop %v533
  %536 = vset.pattern.permute.xlu0 0
  %537 = vperm.xlu0 %536, %v455
  %v538 = vpop.permute.xlu0 %537
  %541 = vset.pattern.permute.xlu0 0
  %542 = vperm.xlu0 %541, %v456
  %v543 = vpop.permute.xlu0 %542
  %546 = vset.pattern.permute.xlu0 0
  %547 = vperm.xlu0 %546, %v457
  %v548 = vpop.permute.xlu0 %547
  %551 = vset.pattern.permute.xlu0 0
  %552 = vperm.xlu0 %551, %v458
  %v553 = vpop.permute.xlu0 %552
  %556 = vset.pattern.permute.xlu0 0
  %557 = vperm.xlu0 %556, %v459
  %v558 = vpop.permute.xlu0 %557
  %561 = vset.pattern.permute.xlu0 0
  %562 = vperm.xlu0 %561, %v460
  %v563 = vpop.permute.xlu0 %562
  %566 = vset.pattern.permute.xlu0 0
  %567 = vperm.xlu0 %566, %v461
  %v568 = vpop.permute.xlu0 %567
  %571 = vset.pattern.permute.xlu0 0
  %572 = vperm.xlu0 %571, %v462
  %v573 = vpop.permute.xlu0 %572
  %576 = vset.pattern.permute.xlu0 0
  %577 = vperm.xlu0 %576, %v463
  %v578 = vpop.permute.xlu0 %577
  %581 = vset.pattern.permute.xlu0 0
  %582 = vperm.xlu0 %581, %v464
  %v583 = vpop.permute.xlu0 %582
  %586 = vset.pattern.permute.xlu0 0
  %587 = vperm.xlu0 %586, %v465
  %v588 = vpop.permute.xlu0 %587
  %591 = vset.pattern.permute.xlu0 0
  %592 = vperm.xlu0 %591, %v466
  %v593 = vpop.permute.xlu0 %592
  %596 = vset.pattern.permute.xlu0 0
  %597 = vperm.xlu0 %596, %v467
  %v598 = vpop.permute.xlu0 %597
  %601 = vset.pattern.permute.xlu0 0
  %602 = vperm.xlu0 %601, %v468
  %v603 = vpop.permute.xlu0 %602
  %606 = vset.pattern.permute.xlu0 0
  %607 = vperm.xlu0 %606, %v469
  %v608 = vpop.permute.xlu0 %607
  %611 = vset.pattern.permute.xlu0 0
  %612 = vperm.xlu0 %611, %v470
  %v613 = vpop.permute.xlu0 %612
  %616 = vset.pattern.permute.xlu0 0
  %617 = vperm.xlu0 %616, %v471
  %v618 = vpop.permute.xlu0 %617
  %621 = vset.pattern.permute.xlu0 0
  %622 = vperm.xlu0 %621, %v472
  %v623 = vpop.permute.xlu0 %622
  %626 = vset.pattern.permute.xlu0 0
  %627 = vperm.xlu0 %626, %v473
  %v628 = vpop.permute.xlu0 %627
  %631 = vset.pattern.permute.xlu0 0
  %632 = vperm.xlu0 %631, %v474
  %v633 = vpop.permute.xlu0 %632
  %v635 = vsub.f32 %v395, %v538
  %v636 = vsub.f32 %v396, %v543
  %v637 = vsub.f32 %v397, %v548
  %v638 = vsub.f32 %v398, %v553
  %v639 = vsub.f32 %v399, %v558
  %v640 = vsub.f32 %v400, %v563
  %v641 = vsub.f32 %v401, %v568
  %v642 = vsub.f32 %v402, %v573
  %v643 = vsub.f32 %v403, %v578
  %v644 = vsub.f32 %v404, %v583
  %v645 = vsub.f32 %v405, %v588
  %v646 = vsub.f32 %v406, %v593
  %v647 = vsub.f32 %v407, %v598
  %v648 = vsub.f32 %v408, %v603
  %v649 = vsub.f32 %v409, %v608
  %v650 = vsub.f32 %v410, %v613
  %v651 = vsub.f32 %v411, %v618
  %v652 = vsub.f32 %v412, %v623
  %v653 = vsub.f32 %v413, %v628
  %v654 = vsub.f32 %v414, %v633
  %v655 = vmul.f32 %v635, 1.442695
  %v656 = vpow.pop %v655
  %v657 = vmul.f32 %v636, 1.442695
  %v658 = vpow.pop %v657
  %v659 = vmul.f32 %v637, 1.442695
  %v660 = vpow.pop %v659
  %v661 = vmul.f32 %v638, 1.442695
  %v662 = vpow.pop %v661
  %v663 = vmul.f32 %v639, 1.442695
  %v664 = vpow.pop %v663
  %v665 = vmul.f32 %v640, 1.442695
  %v666 = vpow.pop %v665
  %v667 = vmul.f32 %v641, 1.442695
  %v668 = vpow.pop %v667
  %v669 = vmul.f32 %v642, 1.442695
  %v670 = vpow.pop %v669
  %v671 = vmul.f32 %v643, 1.442695
  %v672 = vpow.pop %v671
  %v673 = vmul.f32 %v644, 1.442695
  %v674 = vpow.pop %v673
  %v675 = vmul.f32 %v645, 1.442695
  %v676 = vpow.pop %v675
  %v677 = vmul.f32 %v646, 1.442695
  %v678 = vpow.pop %v677
  %v679 = vmul.f32 %v647, 1.442695
  %v680 = vpow.pop %v679
  %v681 = vmul.f32 %v648, 1.442695
  %v682 = vpow.pop %v681
  %v683 = vmul.f32 %v649, 1.442695
  %v684 = vpow.pop %v683
  %v685 = vmul.f32 %v650, 1.442695
  %v686 = vpow.pop %v685
  %v687 = vmul.f32 %v651, 1.442695
  %v688 = vpow.pop %v687
  %v689 = vmul.f32 %v652, 1.442695
  %v690 = vpow.pop %v689
  %v691 = vmul.f32 %v653, 1.442695
  %v692 = vpow.pop %v691
  %v693 = vmul.f32 %v654, 1.442695
  %v694 = vpow.pop %v693
  %v695 = vmul.f32 %v496, %v351
  %v696 = vmul.f32 %v498, %v352
  %v697 = vmul.f32 %v500, %v353
  %v698 = vmul.f32 %v502, %v354
  %v699 = vmul.f32 %v504, %v355
  %v700 = vmul.f32 %v506, %v356
  %v701 = vmul.f32 %v508, %v357
  %v702 = vmul.f32 %v510, %v358
  %v703 = vmul.f32 %v512, %v359
  %v704 = vmul.f32 %v514, %v360
  %v705 = vmul.f32 %v516, %v361
  %v706 = vmul.f32 %v518, %v362
  %v707 = vmul.f32 %v520, %v363
  %v708 = vmul.f32 %v522, %v364
  %v709 = vmul.f32 %v524, %v365
  %v710 = vmul.f32 %v526, %v366
  %v711 = vmul.f32 %v528, %v367
  %v712 = vmul.f32 %v530, %v368
  %v713 = vmul.f32 %v532, %v369
  %v714 = vmul.f32 %v534, %v370
  %715 = vadd.xlane.f32.xlu0 %v656
  %v716 = vpop.xlane.xlu0 %715
  %717 = vadd.xlane.f32.xlu0 %v658
  %v718 = vpop.xlane.xlu0 %717
  %719 = vadd.xlane.f32.xlu0 %v660
  %v720 = vpop.xlane.xlu0 %719
  %721 = vadd.xlane.f32.xlu0 %v662
  %v722 = vpop.xlane.xlu0 %721
  %723 = vadd.xlane.f32.xlu0 %v664
  %v724 = vpop.xlane.xlu0 %723
  %725 = vadd.xlane.f32.xlu0 %v666
  %v726 = vpop.xlane.xlu0 %725
  %727 = vadd.xlane.f32.xlu0 %v668
  %v728 = vpop.xlane.xlu0 %727
  %729 = vadd.xlane.f32.xlu0 %v670
  %v730 = vpop.xlane.xlu0 %729
  %731 = vadd.xlane.f32.xlu0 %v672
  %v732 = vpop.xlane.xlu0 %731
  %733 = vadd.xlane.f32.xlu0 %v674
  %v734 = vpop.xlane.xlu0 %733
  %735 = vadd.xlane.f32.xlu0 %v676
  %v736 = vpop.xlane.xlu0 %735
  %737 = vadd.xlane.f32.xlu0 %v678
  %v738 = vpop.xlane.xlu0 %737
  %739 = vadd.xlane.f32.xlu0 %v680
  %v740 = vpop.xlane.xlu0 %739
  %741 = vadd.xlane.f32.xlu0 %v682
  %v742 = vpop.xlane.xlu0 %741
  %743 = vadd.xlane.f32.xlu0 %v684
  %v744 = vpop.xlane.xlu0 %743
  %745 = vadd.xlane.f32.xlu0 %v686
  %v746 = vpop.xlane.xlu0 %745
  %747 = vadd.xlane.f32.xlu0 %v688
  %v748 = vpop.xlane.xlu0 %747
  %749 = vadd.xlane.f32.xlu0 %v690
  %v750 = vpop.xlane.xlu0 %749
  %751 = vadd.xlane.f32.xlu0 %v692
  %v752 = vpop.xlane.xlu0 %751
  %753 = vadd.xlane.f32.xlu0 %v694
  %v754 = vpop.xlane.xlu0 %753
  %v755 = vadd.f32 %v695, %v716
  %v756 = vadd.f32 %v696, %v718
  %v757 = vadd.f32 %v697, %v720
  %v758 = vadd.f32 %v698, %v722
  %v759 = vadd.f32 %v699, %v724
  %v760 = vadd.f32 %v700, %v726
  %v761 = vadd.f32 %v701, %v728
  %v762 = vadd.f32 %v702, %v730
  %v763 = vadd.f32 %v703, %v732
  %v764 = vadd.f32 %v704, %v734
  %v765 = vadd.f32 %v705, %v736
  %v766 = vadd.f32 %v706, %v738
  %v767 = vadd.f32 %v707, %v740
  %v768 = vadd.f32 %v708, %v742
  %v769 = vadd.f32 %v709, %v744
  %v770 = vadd.f32 %v710, %v746
  %v771 = vadd.f32 %v711, %v748
  %v772 = vadd.f32 %v712, %v750
  %v773 = vadd.f32 %v713, %v752
  %v774 = vadd.f32 %v714, %v754
  %775 = vmatprep.subr.mxu0 0.0
  %776 = vmatpush1.msra.mxu0 %v315
  %777 = vmatprep.subr.mxu0 0.0
  %778 = vmatpush1.msra.mxu0 %v316
  %779 = vmatprep.subr.mxu0 0.0
  %780 = vmatpush1.msra.mxu0 %v317
  %781 = vmatprep.subr.mxu0 0.0
  %782 = vmatpush1.msra.mxu0 %v318
  %783 = vmatprep.subr.mxu0 0.0
  %784 = vmatpush1.msra.mxu0 %v319
  %785 = vmatprep.subr.mxu0 0.0
  %786 = vmatpush1.msra.mxu0 %v320
  %787 = vmatprep.subr.mxu0 0.0
  %788 = vmatpush1.msra.mxu0 %v321
  %789 = vmatprep.subr.mxu0 0.0
  %790 = vmatpush1.msra.mxu0 %v322
  %791 = vmatprep.subr.mxu0 0.0
  %792 = vmatpush1.msra.mxu0 %v323
  %793 = vmatprep.subr.mxu0 0.0
  %794 = vmatpush1.msra.mxu0 %v324
  %795 = vmatprep.subr.mxu0 0.0
  %796 = vmatpush1.msra.mxu0 %v325
  %797 = vmatprep.subr.mxu0 0.0
  %798 = vmatpush1.msra.mxu0 %v326
  %799 = vmatprep.subr.mxu0 0.0
  %800 = vmatpush1.msra.mxu0 %v327
  %801 = vmatprep.subr.mxu0 0.0
  %802 = vmatpush1.msra.mxu0 %v328
  %803 = vmatprep.subr.mxu0 0.0
  %804 = vmatpush1.msra.mxu0 %v329
  %805 = vmatprep.subr.mxu0 0.0
  %806 = vmatpush1.msra.mxu0 %v330
  %807 = vmatprep.subr.mxu0 0.0
  %808 = vmatpush1.msra.mxu0 0.0
  %809 = vmatprep.subr.mxu0 0.0
  %810 = vmatpush1.msra.mxu0 0.0
  %811 = vmatprep.subr.mxu0 0.0
  %812 = vmatpush1.msra.mxu0 0.0
  %813 = vmatprep.subr.mxu0 0.0
  %814 = vmatpush1.msra.mxu0 0.0
  %815 = vmatprep.subr.mxu0 0.0
  %816 = vmatpush1.msra.mxu0 0.0
  %817 = vmatprep.subr.mxu0 0.0
  %818 = vmatpush1.msra.mxu0 0.0
  %819 = vmatprep.subr.mxu0 0.0
  %820 = vmatpush1.msra.mxu0 0.0
  %821 = vmatprep.subr.mxu0 0.0
  %822 = vmatpush1.msra.mxu0 0.0
  %823 = vmatprep.subr.mxu0 0.0
  %824 = vmatpush1.msra.mxu0 0.0
  %825 = vmatprep.subr.mxu0 0.0
  %826 = vmatpush1.msra.mxu0 0.0
  %827 = vmatprep.subr.mxu0 0.0
  %828 = vmatpush1.msra.mxu0 0.0
  %829 = vmatprep.subr.mxu0 0.0
  %830 = vmatpush1.msra.mxu0 0.0
  %831 = vmatprep.subr.mxu0 0.0
  %832 = vmatpush1.msra.mxu0 0.0
  %833 = vmatprep.subr.mxu0 0.0
  %834 = vmatpush1.msra.mxu0 0.0
  %835 = vmatprep.subr.mxu0 0.0
  %836 = vmatpush1.msra.mxu0 0.0
  %837 = vmatprep.subr.mxu0 0.0
  %838 = vmatpush1.msra.mxu0 0.0
  %839 = vmatprep.mubr.f32.mxu0 0.0
  %840 = vmatmul.mubr.f32.gmra.mrb[0].mxu0 %v656
  %v841 = vpop.f32.mrb[0].mxu0
  %v842 = vadd.f32 0.0, %v841
  %v843 = vpop.f32.mrb[0].mxu0
  %844 = vmatprep.mubr.f32.mxu0 0.0
  %845 = vmatmul.mubr.f32.gmra.mrb[0].mxu0 %v658
  %v846 = vpop.f32.mrb[0].mxu0
  %v847 = vadd.f32 0.0, %v846
  %v848 = vpop.f32.mrb[0].mxu0
  %849 = vmatprep.mubr.f32.mxu0 0.0
  %850 = vmatmul.mubr.f32.gmra.mrb[0].mxu0 %v660
  %v851 = vpop.f32.mrb[0].mxu0
  %v852 = vadd.f32 0.0, %v851
  %v853 = vpop.f32.mrb[0].mxu0
  %854 = vmatprep.mubr.f32.mxu0 0.0
  %855 = vmatmul.mubr.f32.gmra.mrb[0].mxu0 %v662
  %v856 = vpop.f32.mrb[0].mxu0
  %v857 = vadd.f32 0.0, %v856
  %v858 = vpop.f32.mrb[0].mxu0
  %859 = vmatprep.mubr.f32.mxu0 0.0
  %860 = vmatmul.mubr.f32.gmra.mrb[0].mxu0 %v664
  %v861 = vpop.f32.mrb[0].mxu0
  %v862 = vadd.f32 0.0, %v861
  %v863 = vpop.f32.mrb[0].mxu0
  %864 = vmatprep.mubr.f32.mxu0 0.0
  %865 = vmatmul.mubr.f32.gmra.mrb[0].mxu0 %v666
  %v866 = vpop.f32.mrb[0].mxu0
  %v867 = vadd.f32 0.0, %v866
  %v868 = vpop.f32.mrb[0].mxu0
  %869 = vmatprep.mubr.f32.mxu0 0.0
  %870 = vmatmul.mubr.f32.gmra.mrb[0].mxu0 %v668
  %v871 = vpop.f32.mrb[0].mxu0
  %v872 = vadd.f32 0.0, %v871
  %v873 = vpop.f32.mrb[0].mxu0
  %874 = vmatprep.mubr.f32.mxu0 0.0
  %875 = vmatmul.mubr.f32.gmra.mrb[0].mxu0 %v670
  %v876 = vpop.f32.mrb[0].mxu0
  %v877 = vadd.f32 0.0, %v876
  %v878 = vpop.f32.mrb[0].mxu0
  %879 = vmatprep.mubr.f32.mxu0 0.0
  %880 = vmatmul.mubr.f32.gmra.mrb[0].mxu0 %v672
  %v881 = vpop.f32.mrb[0].mxu0
  %v882 = vadd.f32 0.0, %v881
  %v883 = vpop.f32.mrb[0].mxu0
  %884 = vmatprep.mubr.f32.mxu0 0.0
  %885 = vmatmul.mubr.f32.gmra.mrb[0].mxu0 %v674
  %v886 = vpop.f32.mrb[0].mxu0
  %v887 = vadd.f32 0.0, %v886
  %v888 = vpop.f32.mrb[0].mxu0
  %889 = vmatprep.mubr.f32.mxu0 0.0
  %890 = vmatmul.mubr.f32.gmra.mrb[0].mxu0 %v676
  %v891 = vpop.f32.mrb[0].mxu0
  %v892 = vadd.f32 0.0, %v891
  %v893 = vpop.f32.mrb[0].mxu0
  %894 = vmatprep.mubr.f32.mxu0 0.0
  %895 = vmatmul.mubr.f32.gmra.mrb[0].mxu0 %v678
  %v896 = vpop.f32.mrb[0].mxu0
  %v897 = vadd.f32 0.0, %v896
  %v898 = vpop.f32.mrb[0].mxu0
  %899 = vmatprep.mubr.f32.mxu0 0.0
  %900 = vmatmul.mubr.f32.gmra.mrb[0].mxu0 %v680
  %v901 = vpop.f32.mrb[0].mxu0
  %v902 = vadd.f32 0.0, %v901
  %v903 = vpop.f32.mrb[0].mxu0
  %904 = vmatprep.mubr.f32.mxu0 0.0
  %905 = vmatmul.mubr.f32.gmra.mrb[0].mxu0 %v682
  %v906 = vpop.f32.mrb[0].mxu0
  %v907 = vadd.f32 0.0, %v906
  %v908 = vpop.f32.mrb[0].mxu0
  %909 = vmatprep.mubr.f32.mxu0 0.0
  %910 = vmatmul.mubr.f32.gmra.mrb[0].mxu0 %v684
  %v911 = vpop.f32.mrb[0].mxu0
  %v912 = vadd.f32 0.0, %v911
  %v913 = vpop.f32.mrb[0].mxu0
  %914 = vmatprep.mubr.f32.mxu0 0.0
  %915 = vmatmul.mubr.f32.gmra.mrb[0].mxu0 %v686
  %v916 = vpop.f32.mrb[0].mxu0
  %v917 = vadd.f32 0.0, %v916
  %v918 = vpop.f32.mrb[0].mxu0
  %919 = vmatprep.mubr.f32.mxu0 0.0
  %920 = vmatmul.mubr.f32.gmra.mrb[0].mxu0 %v688
  %v921 = vpop.f32.mrb[0].mxu0
  %v922 = vadd.f32 0.0, %v921
  %v923 = vpop.f32.mrb[0].mxu0
  %924 = vmatprep.mubr.f32.mxu0 0.0
  %925 = vmatmul.mubr.f32.gmra.mrb[0].mxu0 %v690
  %v926 = vpop.f32.mrb[0].mxu0
  %v927 = vadd.f32 0.0, %v926
  %v928 = vpop.f32.mrb[0].mxu0
  %929 = vmatprep.mubr.f32.mxu0 0.0
  %930 = vmatmul.mubr.f32.gmra.mrb[0].mxu0 %v692
  %v931 = vpop.f32.mrb[0].mxu0
  %v932 = vadd.f32 0.0, %v931
  %v933 = vpop.f32.mrb[0].mxu0
  %934 = vmatprep.mubr.f32.mxu0 0.0
  %935 = vmatmul.mubr.f32.gmra.mrb[0].mxu0 %v694
  %v936 = vpop.f32.mrb[0].mxu0
  %v937 = vadd.f32 0.0, %v936
  %v938 = vpop.f32.mrb[0].mxu0
  %939 = vdwg.mxu0
  %941 = vset.pattern.permute.xlu0 0
  %942 = vperm.xlu0 %941, %v496
  %v943 = vpop.permute.xlu0 %942
  %946 = vset.pattern.permute.xlu0 0
  %947 = vperm.xlu0 %946, %v498
  %v948 = vpop.permute.xlu0 %947
  %951 = vset.pattern.permute.xlu0 0
  %952 = vperm.xlu0 %951, %v500
  %v953 = vpop.permute.xlu0 %952
  %956 = vset.pattern.permute.xlu0 0
  %957 = vperm.xlu0 %956, %v502
  %v958 = vpop.permute.xlu0 %957
  %961 = vset.pattern.permute.xlu0 0
  %962 = vperm.xlu0 %961, %v504
  %v963 = vpop.permute.xlu0 %962
  %966 = vset.pattern.permute.xlu0 0
  %967 = vperm.xlu0 %966, %v506
  %v968 = vpop.permute.xlu0 %967
  %971 = vset.pattern.permute.xlu0 0
  %972 = vperm.xlu0 %971, %v508
  %v973 = vpop.permute.xlu0 %972
  %976 = vset.pattern.permute.xlu0 0
  %977 = vperm.xlu0 %976, %v510
  %v978 = vpop.permute.xlu0 %977
  %981 = vset.pattern.permute.xlu0 0
  %982 = vperm.xlu0 %981, %v512
  %v983 = vpop.permute.xlu0 %982
  %986 = vset.pattern.permute.xlu0 0
  %987 = vperm.xlu0 %986, %v514
  %v988 = vpop.permute.xlu0 %987
  %991 = vset.pattern.permute.xlu0 0
  %992 = vperm.xlu0 %991, %v516
  %v993 = vpop.permute.xlu0 %992
  %996 = vset.pattern.permute.xlu0 0
  %997 = vperm.xlu0 %996, %v518
  %v998 = vpop.permute.xlu0 %997
  %1001 = vset.pattern.permute.xlu0 0
  %1002 = vperm.xlu0 %1001, %v520
  %v1003 = vpop.permute.xlu0 %1002
  %1006 = vset.pattern.permute.xlu0 0
  %1007 = vperm.xlu0 %1006, %v522
  %v1008 = vpop.permute.xlu0 %1007
  %1011 = vset.pattern.permute.xlu0 0
  %1012 = vperm.xlu0 %1011, %v524
  %v1013 = vpop.permute.xlu0 %1012
  %1016 = vset.pattern.permute.xlu0 0
  %1017 = vperm.xlu0 %1016, %v526
  %v1018 = vpop.permute.xlu0 %1017
  %1021 = vset.pattern.permute.xlu0 0
  %1022 = vperm.xlu0 %1021, %v528
  %v1023 = vpop.permute.xlu0 %1022
  %1026 = vset.pattern.permute.xlu0 0
  %1027 = vperm.xlu0 %1026, %v530
  %v1028 = vpop.permute.xlu0 %1027
  %1031 = vset.pattern.permute.xlu0 0
  %1032 = vperm.xlu0 %1031, %v532
  %v1033 = vpop.permute.xlu0 %1032
  %1036 = vset.pattern.permute.xlu0 0
  %1037 = vperm.xlu0 %1036, %v534
  %v1038 = vpop.permute.xlu0 %1037
  %v1040 = vmul.f32 %v943, %v371
  %v1041 = vmul.f32 %v948, %v372
  %v1042 = vmul.f32 %v953, %v373
  %v1043 = vmul.f32 %v958, %v374
  %v1044 = vmul.f32 %v963, %v375
  %v1045 = vmul.f32 %v968, %v376
  %v1046 = vmul.f32 %v973, %v377
  %v1047 = vmul.f32 %v978, %v378
  %v1048 = vmul.f32 %v983, %v379
  %v1049 = vmul.f32 %v988, %v380
  %v1050 = vmul.f32 %v993, %v381
  %v1051 = vmul.f32 %v998, %v382
  %v1052 = vmul.f32 %v1003, %v383
  %v1053 = vmul.f32 %v1008, %v384
  %v1054 = vmul.f32 %v1013, %v385
  %v1055 = vmul.f32 %v1018, %v386
  %v1056 = vmul.f32 %v1023, %v387
  %v1057 = vmul.f32 %v1028, %v388
  %v1058 = vmul.f32 %v1033, %v389
  %v1059 = vmul.f32 %v1038, %v390
  %v1060 = vadd.f32 %v1040, %v842
  %v1061 = vadd.f32 %v1041, %v847
  %v1062 = vadd.f32 %v1042, %v852
  %v1063 = vadd.f32 %v1043, %v857
  %v1064 = vadd.f32 %v1044, %v862
  %v1065 = vadd.f32 %v1045, %v867
  %v1066 = vadd.f32 %v1046, %v872
  %v1067 = vadd.f32 %v1047, %v877
  %v1068 = vadd.f32 %v1048, %v882
  %v1069 = vadd.f32 %v1049, %v887
  %v1070 = vadd.f32 %v1050, %v892
  %v1071 = vadd.f32 %v1051, %v897
  %v1072 = vadd.f32 %v1052, %v902
  %v1073 = vadd.f32 %v1053, %v907
  %v1074 = vadd.f32 %v1054, %v912
  %v1075 = vadd.f32 %v1055, %v917
  %v1076 = vadd.f32 %v1056, %v922
  %v1077 = vadd.f32 %v1057, %v927
  %v1078 = vadd.f32 %v1058, %v932
  %v1079 = vadd.f32 %v1059, %v937
  %v1080 = vlaneseq
  %v1081 = vshrl.u32 %v1080, 7
  %v1082 = vsub.s32 1, %v1081
  %v1083 = vrot.slane %v314, %v1082
  %v1084 = vadd.f32 %v193, %v1083
  %v1085 = vadd.f32 %v194, %v1083
  %v1086 = vadd.f32 %v195, %v1083
  %v1087 = vadd.f32 %v196, %v1083
  %v1088 = vadd.f32 %v197, %v1083
  %v1089 = vadd.f32 %v198, %v1083
  %v1090 = vadd.f32 %v199, %v1083
  %v1091 = vadd.f32 %v200, %v1083
  %v1092 = vadd.f32 %v201, %v1083
  %v1093 = vadd.f32 %v202, %v1083
  %v1094 = vadd.f32 %v203, %v1083
  %v1095 = vadd.f32 %v204, %v1083
  %v1096 = vadd.f32 %v205, %v1083
  %v1097 = vadd.f32 %v206, %v1083
  %v1098 = vadd.f32 %v207, %v1083
  %v1099 = vadd.f32 %v208, %v1083
  %v1100 = vadd.f32 %v209, %v1083
  %v1101 = vadd.f32 %v210, %v1083
  %v1102 = vadd.f32 %v211, %v1083
  %v1103 = vadd.f32 %v212, %v1083
  %1104 = vmax.xlane.f32.xlu0 %v1084
  %v1105 = vpop.xlane.xlu0 %1104
  %1106 = vmax.xlane.f32.xlu0 %v1085
  %v1107 = vpop.xlane.xlu0 %1106
  %1108 = vmax.xlane.f32.xlu0 %v1086
  %v1109 = vpop.xlane.xlu0 %1108
  %1110 = vmax.xlane.f32.xlu0 %v1087
  %v1111 = vpop.xlane.xlu0 %1110
  %1112 = vmax.xlane.f32.xlu0 %v1088
  %v1113 = vpop.xlane.xlu0 %1112
  %1114 = vmax.xlane.f32.xlu0 %v1089
  %v1115 = vpop.xlane.xlu0 %1114
  %1116 = vmax.xlane.f32.xlu0 %v1090
  %v1117 = vpop.xlane.xlu0 %1116
  %1118 = vmax.xlane.f32.xlu0 %v1091
  %v1119 = vpop.xlane.xlu0 %1118
  %1120 = vmax.xlane.f32.xlu0 %v1092
  %v1121 = vpop.xlane.xlu0 %1120
  %1122 = vmax.xlane.f32.xlu0 %v1093
  %v1123 = vpop.xlane.xlu0 %1122
  %1124 = vmax.xlane.f32.xlu0 %v1094
  %v1125 = vpop.xlane.xlu0 %1124
  %1126 = vmax.xlane.f32.xlu0 %v1095
  %v1127 = vpop.xlane.xlu0 %1126
  %1128 = vmax.xlane.f32.xlu0 %v1096
  %v1129 = vpop.xlane.xlu0 %1128
  %1130 = vmax.xlane.f32.xlu0 %v1097
  %v1131 = vpop.xlane.xlu0 %1130
  %1132 = vmax.xlane.f32.xlu0 %v1098
  %v1133 = vpop.xlane.xlu0 %1132
  %1134 = vmax.xlane.f32.xlu0 %v1099
  %v1135 = vpop.xlane.xlu0 %1134
  %1136 = vmax.xlane.f32.xlu0 %v1100
  %v1137 = vpop.xlane.xlu0 %1136
  %1138 = vmax.xlane.f32.xlu0 %v1101
  %v1139 = vpop.xlane.xlu0 %1138
  %1140 = vmax.xlane.f32.xlu0 %v1102
  %v1141 = vpop.xlane.xlu0 %1140
  %1142 = vmax.xlane.f32.xlu0 %v1103
  %v1143 = vpop.xlane.xlu0 %1142
  %v1144 = vmax.f32 %v331, %v1105
  %v1145 = vmax.f32 %v332, %v1107
  %v1146 = vmax.f32 %v333, %v1109
  %v1147 = vmax.f32 %v334, %v1111
  %v1148 = vmax.f32 %v335, %v1113
  %v1149 = vmax.f32 %v336, %v1115
  %v1150 = vmax.f32 %v337, %v1117
  %v1151 = vmax.f32 %v338, %v1119
  %v1152 = vmax.f32 %v339, %v1121
  %v1153 = vmax.f32 %v340, %v1123
  %v1154 = vmax.f32 %v341, %v1125
  %v1155 = vmax.f32 %v342, %v1127
  %v1156 = vmax.f32 %v343, %v1129
  %v1157 = vmax.f32 %v344, %v1131
  %v1158 = vmax.f32 %v345, %v1133
  %v1159 = vmax.f32 %v346, %v1135
  %v1160 = vmax.f32 %v347, %v1137
  %v1161 = vmax.f32 %v348, %v1139
  %v1162 = vmax.f32 %v349, %v1141
  %v1163 = vmax.f32 %v350, %v1143
  %v1164 = vsub.f32 %v331, %v1144
  %v1165 = vsub.f32 %v332, %v1145
  %v1166 = vsub.f32 %v333, %v1146
  %v1167 = vsub.f32 %v334, %v1147
  %v1168 = vsub.f32 %v335, %v1148
  %v1169 = vsub.f32 %v336, %v1149
  %v1170 = vsub.f32 %v337, %v1150
  %v1171 = vsub.f32 %v338, %v1151
  %v1172 = vsub.f32 %v339, %v1152
  %v1173 = vsub.f32 %v340, %v1153
  %v1174 = vsub.f32 %v341, %v1154
  %v1175 = vsub.f32 %v342, %v1155
  %v1176 = vsub.f32 %v343, %v1156
  %v1177 = vsub.f32 %v344, %v1157
  %v1178 = vsub.f32 %v345, %v1158
  %v1179 = vsub.f32 %v346, %v1159
  %v1180 = vsub.f32 %v347, %v1160
  %v1181 = vsub.f32 %v348, %v1161
  %v1182 = vsub.f32 %v349, %v1162
  %v1183 = vsub.f32 %v350, %v1163
  %v1184 = vmul.f32 %v1164, 1.442695
  %v1185 = vpow.pop %v1184
  %v1186 = vmul.f32 %v1165, 1.442695
  %v1187 = vpow.pop %v1186
  %v1188 = vmul.f32 %v1166, 1.442695
  %v1189 = vpow.pop %v1188
  %v1190 = vmul.f32 %v1167, 1.442695
  %v1191 = vpow.pop %v1190
  %v1192 = vmul.f32 %v1168, 1.442695
  %v1193 = vpow.pop %v1192
  %v1194 = vmul.f32 %v1169, 1.442695
  %v1195 = vpow.pop %v1194
  %v1196 = vmul.f32 %v1170, 1.442695
  %v1197 = vpow.pop %v1196
  %v1198 = vmul.f32 %v1171, 1.442695
  %v1199 = vpow.pop %v1198
  %v1200 = vmul.f32 %v1172, 1.442695
  %v1201 = vpow.pop %v1200
  %v1202 = vmul.f32 %v1173, 1.442695
  %v1203 = vpow.pop %v1202
  %v1204 = vmul.f32 %v1174, 1.442695
  %v1205 = vpow.pop %v1204
  %v1206 = vmul.f32 %v1175, 1.442695
  %v1207 = vpow.pop %v1206
  %v1208 = vmul.f32 %v1176, 1.442695
  %v1209 = vpow.pop %v1208
  %v1210 = vmul.f32 %v1177, 1.442695
  %v1211 = vpow.pop %v1210
  %v1212 = vmul.f32 %v1178, 1.442695
  %v1213 = vpow.pop %v1212
  %v1214 = vmul.f32 %v1179, 1.442695
  %v1215 = vpow.pop %v1214
  %v1216 = vmul.f32 %v1180, 1.442695
  %v1217 = vpow.pop %v1216
  %v1218 = vmul.f32 %v1181, 1.442695
  %v1219 = vpow.pop %v1218
  %v1220 = vmul.f32 %v1182, 1.442695
  %v1221 = vpow.pop %v1220
  %v1222 = vmul.f32 %v1183, 1.442695
  %v1223 = vpow.pop %v1222
  %1225 = vset.pattern.permute.xlu0 1
  %1226 = vperm.xlu0 %1225, %v1144
  %v1227 = vpop.permute.xlu0 %1226
  %1230 = vset.pattern.permute.xlu0 1
  %1231 = vperm.xlu0 %1230, %v1145
  %v1232 = vpop.permute.xlu0 %1231
  %1235 = vset.pattern.permute.xlu0 1
  %1236 = vperm.xlu0 %1235, %v1146
  %v1237 = vpop.permute.xlu0 %1236
  %1240 = vset.pattern.permute.xlu0 1
  %1241 = vperm.xlu0 %1240, %v1147
  %v1242 = vpop.permute.xlu0 %1241
  %1245 = vset.pattern.permute.xlu0 1
  %1246 = vperm.xlu0 %1245, %v1148
  %v1247 = vpop.permute.xlu0 %1246
  %1250 = vset.pattern.permute.xlu0 1
  %1251 = vperm.xlu0 %1250, %v1149
  %v1252 = vpop.permute.xlu0 %1251
  %1255 = vset.pattern.permute.xlu0 1
  %1256 = vperm.xlu0 %1255, %v1150
  %v1257 = vpop.permute.xlu0 %1256
  %1260 = vset.pattern.permute.xlu0 1
  %1261 = vperm.xlu0 %1260, %v1151
  %v1262 = vpop.permute.xlu0 %1261
  %1265 = vset.pattern.permute.xlu0 1
  %1266 = vperm.xlu0 %1265, %v1152
  %v1267 = vpop.permute.xlu0 %1266
  %1270 = vset.pattern.permute.xlu0 1
  %1271 = vperm.xlu0 %1270, %v1153
  %v1272 = vpop.permute.xlu0 %1271
  %1275 = vset.pattern.permute.xlu0 1
  %1276 = vperm.xlu0 %1275, %v1154
  %v1277 = vpop.permute.xlu0 %1276
  %1280 = vset.pattern.permute.xlu0 1
  %1281 = vperm.xlu0 %1280, %v1155
  %v1282 = vpop.permute.xlu0 %1281
  %1285 = vset.pattern.permute.xlu0 1
  %1286 = vperm.xlu0 %1285, %v1156
  %v1287 = vpop.permute.xlu0 %1286
  %1290 = vset.pattern.permute.xlu0 1
  %1291 = vperm.xlu0 %1290, %v1157
  %v1292 = vpop.permute.xlu0 %1291
  %1295 = vset.pattern.permute.xlu0 1
  %1296 = vperm.xlu0 %1295, %v1158
  %v1297 = vpop.permute.xlu0 %1296
  %1300 = vset.pattern.permute.xlu0 1
  %1301 = vperm.xlu0 %1300, %v1159
  %v1302 = vpop.permute.xlu0 %1301
  %1305 = vset.pattern.permute.xlu0 1
  %1306 = vperm.xlu0 %1305, %v1160
  %v1307 = vpop.permute.xlu0 %1306
  %1310 = vset.pattern.permute.xlu0 1
  %1311 = vperm.xlu0 %1310, %v1161
  %v1312 = vpop.permute.xlu0 %1311
  %1315 = vset.pattern.permute.xlu0 1
  %1316 = vperm.xlu0 %1315, %v1162
  %v1317 = vpop.permute.xlu0 %1316
  %1320 = vset.pattern.permute.xlu0 1
  %1321 = vperm.xlu0 %1320, %v1163
  %v1322 = vpop.permute.xlu0 %1321
  %v1324 = vsub.f32 %v1084, %v1227
  %v1325 = vsub.f32 %v1085, %v1232
  %v1326 = vsub.f32 %v1086, %v1237
  %v1327 = vsub.f32 %v1087, %v1242
  %v1328 = vsub.f32 %v1088, %v1247
  %v1329 = vsub.f32 %v1089, %v1252
  %v1330 = vsub.f32 %v1090, %v1257
  %v1331 = vsub.f32 %v1091, %v1262
  %v1332 = vsub.f32 %v1092, %v1267
  %v1333 = vsub.f32 %v1093, %v1272
  %v1334 = vsub.f32 %v1094, %v1277
  %v1335 = vsub.f32 %v1095, %v1282
  %v1336 = vsub.f32 %v1096, %v1287
  %v1337 = vsub.f32 %v1097, %v1292
  %v1338 = vsub.f32 %v1098, %v1297
  %v1339 = vsub.f32 %v1099, %v1302
  %v1340 = vsub.f32 %v1100, %v1307
  %v1341 = vsub.f32 %v1101, %v1312
  %v1342 = vsub.f32 %v1102, %v1317
  %v1343 = vsub.f32 %v1103, %v1322
  %v1344 = vmul.f32 %v1324, 1.442695
  %v1345 = vpow.pop %v1344
  %v1346 = vmul.f32 %v1325, 1.442695
  %v1347 = vpow.pop %v1346
  %v1348 = vmul.f32 %v1326, 1.442695
  %v1349 = vpow.pop %v1348
  %v1350 = vmul.f32 %v1327, 1.442695
  %v1351 = vpow.pop %v1350
  %v1352 = vmul.f32 %v1328, 1.442695
  %v1353 = vpow.pop %v1352
  %v1354 = vmul.f32 %v1329, 1.442695
  %v1355 = vpow.pop %v1354
  %v1356 = vmul.f32 %v1330, 1.442695
  %v1357 = vpow.pop %v1356
  %v1358 = vmul.f32 %v1331, 1.442695
  %v1359 = vpow.pop %v1358
  %v1360 = vmul.f32 %v1332, 1.442695
  %v1361 = vpow.pop %v1360
  %v1362 = vmul.f32 %v1333, 1.442695
  %v1363 = vpow.pop %v1362
  %v1364 = vmul.f32 %v1334, 1.442695
  %v1365 = vpow.pop %v1364
  %v1366 = vmul.f32 %v1335, 1.442695
  %v1367 = vpow.pop %v1366
  %v1368 = vmul.f32 %v1336, 1.442695
  %v1369 = vpow.pop %v1368
  %v1370 = vmul.f32 %v1337, 1.442695
  %v1371 = vpow.pop %v1370
  %v1372 = vmul.f32 %v1338, 1.442695
  %v1373 = vpow.pop %v1372
  %v1374 = vmul.f32 %v1339, 1.442695
  %v1375 = vpow.pop %v1374
  %v1376 = vmul.f32 %v1340, 1.442695
  %v1377 = vpow.pop %v1376
  %v1378 = vmul.f32 %v1341, 1.442695
  %v1379 = vpow.pop %v1378
  %v1380 = vmul.f32 %v1342, 1.442695
  %v1381 = vpow.pop %v1380
  %v1382 = vmul.f32 %v1343, 1.442695
  %v1383 = vpow.pop %v1382
  %v1384 = vmul.f32 %v1185, %v351
  %v1385 = vmul.f32 %v1187, %v352
  %v1386 = vmul.f32 %v1189, %v353
  %v1387 = vmul.f32 %v1191, %v354
  %v1388 = vmul.f32 %v1193, %v355
  %v1389 = vmul.f32 %v1195, %v356
  %v1390 = vmul.f32 %v1197, %v357
  %v1391 = vmul.f32 %v1199, %v358
  %v1392 = vmul.f32 %v1201, %v359
  %v1393 = vmul.f32 %v1203, %v360
  %v1394 = vmul.f32 %v1205, %v361
  %v1395 = vmul.f32 %v1207, %v362
  %v1396 = vmul.f32 %v1209, %v363
  %v1397 = vmul.f32 %v1211, %v364
  %v1398 = vmul.f32 %v1213, %v365
  %v1399 = vmul.f32 %v1215, %v366
  %v1400 = vmul.f32 %v1217, %v367
  %v1401 = vmul.f32 %v1219, %v368
  %v1402 = vmul.f32 %v1221, %v369
  %v1403 = vmul.f32 %v1223, %v370
  %1404 = vadd.xlane.f32.xlu0 %v1345
  %v1405 = vpop.xlane.xlu0 %1404
  %1406 = vadd.xlane.f32.xlu0 %v1347
  %v1407 = vpop.xlane.xlu0 %1406
  %1408 = vadd.xlane.f32.xlu0 %v1349
  %v1409 = vpop.xlane.xlu0 %1408
  %1410 = vadd.xlane.f32.xlu0 %v1351
  %v1411 = vpop.xlane.xlu0 %1410
  %1412 = vadd.xlane.f32.xlu0 %v1353
  %v1413 = vpop.xlane.xlu0 %1412
  %1414 = vadd.xlane.f32.xlu0 %v1355
  %v1415 = vpop.xlane.xlu0 %1414
  %1416 = vadd.xlane.f32.xlu0 %v1357
  %v1417 = vpop.xlane.xlu0 %1416
  %1418 = vadd.xlane.f32.xlu0 %v1359
  %v1419 = vpop.xlane.xlu0 %1418
  %1420 = vadd.xlane.f32.xlu0 %v1361
  %v1421 = vpop.xlane.xlu0 %1420
  %1422 = vadd.xlane.f32.xlu0 %v1363
  %v1423 = vpop.xlane.xlu0 %1422
  %1424 = vadd.xlane.f32.xlu0 %v1365
  %v1425 = vpop.xlane.xlu0 %1424
  %1426 = vadd.xlane.f32.xlu0 %v1367
  %v1427 = vpop.xlane.xlu0 %1426
  %1428 = vadd.xlane.f32.xlu0 %v1369
  %v1429 = vpop.xlane.xlu0 %1428
  %1430 = vadd.xlane.f32.xlu0 %v1371
  %v1431 = vpop.xlane.xlu0 %1430
  %1432 = vadd.xlane.f32.xlu0 %v1373
  %v1433 = vpop.xlane.xlu0 %1432
  %1434 = vadd.xlane.f32.xlu0 %v1375
  %v1435 = vpop.xlane.xlu0 %1434
  %1436 = vadd.xlane.f32.xlu0 %v1377
  %v1437 = vpop.xlane.xlu0 %1436
  %1438 = vadd.xlane.f32.xlu0 %v1379
  %v1439 = vpop.xlane.xlu0 %1438
  %1440 = vadd.xlane.f32.xlu0 %v1381
  %v1441 = vpop.xlane.xlu0 %1440
  %1442 = vadd.xlane.f32.xlu0 %v1383
  %v1443 = vpop.xlane.xlu0 %1442
  %v1444 = vadd.f32 %v1384, %v1405
  %v1445 = vadd.f32 %v1385, %v1407
  %v1446 = vadd.f32 %v1386, %v1409
  %v1447 = vadd.f32 %v1387, %v1411
  %v1448 = vadd.f32 %v1388, %v1413
  %v1449 = vadd.f32 %v1389, %v1415
  %v1450 = vadd.f32 %v1390, %v1417
  %v1451 = vadd.f32 %v1391, %v1419
  %v1452 = vadd.f32 %v1392, %v1421
  %v1453 = vadd.f32 %v1393, %v1423
  %v1454 = vadd.f32 %v1394, %v1425
  %v1455 = vadd.f32 %v1395, %v1427
  %v1456 = vadd.f32 %v1396, %v1429
  %v1457 = vadd.f32 %v1397, %v1431
  %v1458 = vadd.f32 %v1398, %v1433
  %v1459 = vadd.f32 %v1399, %v1435
  %v1460 = vadd.f32 %v1400, %v1437
  %v1461 = vadd.f32 %v1401, %v1439
  %v1462 = vadd.f32 %v1402, %v1441
  %v1463 = vadd.f32 %v1403, %v1443
  %1480 = vrot.lane.b32.xlu0 %v315, 120
  %v1481 = vpop.permute.xlu0 %1480
  %1482 = vrot.lane.b32.xlu0 %v316, 120
  %v1483 = vpop.permute.xlu0 %1482
  %1484 = vrot.lane.b32.xlu0 %v317, 120
  %v1485 = vpop.permute.xlu0 %1484
  %1486 = vrot.lane.b32.xlu0 %v318, 120
  %v1487 = vpop.permute.xlu0 %1486
  %1488 = vrot.lane.b32.xlu0 %v319, 120
  %v1489 = vpop.permute.xlu0 %1488
  %1490 = vrot.lane.b32.xlu0 %v320, 120
  %v1491 = vpop.permute.xlu0 %1490
  %1492 = vrot.lane.b32.xlu0 %v321, 120
  %v1493 = vpop.permute.xlu0 %1492
  %1494 = vrot.lane.b32.xlu0 %v322, 120
  %v1495 = vpop.permute.xlu0 %1494
  %1496 = vrot.lane.b32.xlu0 %v323, 120
  %v1497 = vpop.permute.xlu0 %1496
  %1498 = vrot.lane.b32.xlu0 %v324, 120
  %v1499 = vpop.permute.xlu0 %1498
  %1500 = vrot.lane.b32.xlu0 %v325, 120
  %v1501 = vpop.permute.xlu0 %1500
  %1502 = vrot.lane.b32.xlu0 %v326, 120
  %v1503 = vpop.permute.xlu0 %1502
  %1504 = vrot.lane.b32.xlu0 %v327, 120
  %v1505 = vpop.permute.xlu0 %1504
  %1506 = vrot.lane.b32.xlu0 %v328, 120
  %v1507 = vpop.permute.xlu0 %1506
  %1508 = vrot.lane.b32.xlu0 %v329, 120
  %v1509 = vpop.permute.xlu0 %1508
  %1510 = vrot.lane.b32.xlu0 %v330, 120
  %v1511 = vpop.permute.xlu0 %1510
  %1528 = vmatprep.subr.mxu0 0.0
  %1529 = vmatpush1.msra.mxu0 %v1481
  %1530 = vmatprep.subr.mxu0 0.0
  %1531 = vmatpush1.msra.mxu0 %v1483
  %1532 = vmatprep.subr.mxu0 0.0
  %1533 = vmatpush1.msra.mxu0 %v1485
  %1534 = vmatprep.subr.mxu0 0.0
  %1535 = vmatpush1.msra.mxu0 %v1487
  %1536 = vmatprep.subr.mxu0 0.0
  %1537 = vmatpush1.msra.mxu0 %v1489
  %1538 = vmatprep.subr.mxu0 0.0
  %1539 = vmatpush1.msra.mxu0 %v1491
  %1540 = vmatprep.subr.mxu0 0.0
  %1541 = vmatpush1.msra.mxu0 %v1493
  %1542 = vmatprep.subr.mxu0 0.0
  %1543 = vmatpush1.msra.mxu0 %v1495
  %1544 = vmatprep.subr.mxu0 0.0
  %1545 = vmatpush1.msra.mxu0 %v1497
  %1546 = vmatprep.subr.mxu0 0.0
  %1547 = vmatpush1.msra.mxu0 %v1499
  %1548 = vmatprep.subr.mxu0 0.0
  %1549 = vmatpush1.msra.mxu0 %v1501
  %1550 = vmatprep.subr.mxu0 0.0
  %1551 = vmatpush1.msra.mxu0 %v1503
  %1552 = vmatprep.subr.mxu0 0.0
  %1553 = vmatpush1.msra.mxu0 %v1505
  %1554 = vmatprep.subr.mxu0 0.0
  %1555 = vmatpush1.msra.mxu0 %v1507
  %1556 = vmatprep.subr.mxu0 0.0
  %1557 = vmatpush1.msra.mxu0 %v1509
  %1558 = vmatprep.subr.mxu0 0.0
  %1559 = vmatpush1.msra.mxu0 %v1511
  %1560 = vmatprep.subr.mxu0 0.0
  %1561 = vmatpush1.msra.mxu0 0.0
  %1562 = vmatprep.subr.mxu0 0.0
  %1563 = vmatpush1.msra.mxu0 0.0
  %1564 = vmatprep.subr.mxu0 0.0
  %1565 = vmatpush1.msra.mxu0 0.0
  %1566 = vmatprep.subr.mxu0 0.0
  %1567 = vmatpush1.msra.mxu0 0.0
  %1568 = vmatprep.subr.mxu0 0.0
  %1569 = vmatpush1.msra.mxu0 0.0
  %1570 = vmatprep.subr.mxu0 0.0
  %1571 = vmatpush1.msra.mxu0 0.0
  %1572 = vmatprep.subr.mxu0 0.0
  %1573 = vmatpush1.msra.mxu0 0.0
  %1574 = vmatprep.subr.mxu0 0.0
  %1575 = vmatpush1.msra.mxu0 0.0
  %1576 = vmatprep.subr.mxu0 0.0
  %1577 = vmatpush1.msra.mxu0 0.0
  %1578 = vmatprep.subr.mxu0 0.0
  %1579 = vmatpush1.msra.mxu0 0.0
  %1580 = vmatprep.subr.mxu0 0.0
  %1581 = vmatpush1.msra.mxu0 0.0
  %1582 = vmatprep.subr.mxu0 0.0
  %1583 = vmatpush1.msra.mxu0 0.0
  %1584 = vmatprep.subr.mxu0 0.0
  %1585 = vmatpush1.msra.mxu0 0.0
  %1586 = vmatprep.subr.mxu0 0.0
  %1587 = vmatpush1.msra.mxu0 0.0
  %1588 = vmatprep.subr.mxu0 0.0
  %1589 = vmatpush1.msra.mxu0 0.0
  %1590 = vmatprep.subr.mxu0 0.0
  %1591 = vmatpush1.msra.mxu0 0.0
  %1592 = vmatprep.mubr.f32.mxu0 0.0
  %1593 = vmatmul.mubr.f32.gmra.mrb[0].mxu0 %v1345
  %v1594 = vpop.f32.mrb[0].mxu0
  %v1595 = vadd.f32 0.0, %v1594
  %v1596 = vpop.f32.mrb[0].mxu0
  %1597 = vmatprep.mubr.f32.mxu0 0.0
  %1598 = vmatmul.mubr.f32.gmra.mrb[0].mxu0 %v1347
  %v1599 = vpop.f32.mrb[0].mxu0
  %v1600 = vadd.f32 0.0, %v1599
  %v1601 = vpop.f32.mrb[0].mxu0
  %1602 = vmatprep.mubr.f32.mxu0 0.0
  %1603 = vmatmul.mubr.f32.gmra.mrb[0].mxu0 %v1349
  %v1604 = vpop.f32.mrb[0].mxu0
  %v1605 = vadd.f32 0.0, %v1604
  %v1606 = vpop.f32.mrb[0].mxu0
  %1607 = vmatprep.mubr.f32.mxu0 0.0
  %1608 = vmatmul.mubr.f32.gmra.mrb[0].mxu0 %v1351
  %v1609 = vpop.f32.mrb[0].mxu0
  %v1610 = vadd.f32 0.0, %v1609
  %v1611 = vpop.f32.mrb[0].mxu0
  %1612 = vmatprep.mubr.f32.mxu0 0.0
  %1613 = vmatmul.mubr.f32.gmra.mrb[0].mxu0 %v1353
  %v1614 = vpop.f32.mrb[0].mxu0
  %v1615 = vadd.f32 0.0, %v1614
  %v1616 = vpop.f32.mrb[0].mxu0
  %1617 = vmatprep.mubr.f32.mxu0 0.0
  %1618 = vmatmul.mubr.f32.gmra.mrb[0].mxu0 %v1355
  %v1619 = vpop.f32.mrb[0].mxu0
  %v1620 = vadd.f32 0.0, %v1619
  %v1621 = vpop.f32.mrb[0].mxu0
  %1622 = vmatprep.mubr.f32.mxu0 0.0
  %1623 = vmatmul.mubr.f32.gmra.mrb[0].mxu0 %v1357
  %v1624 = vpop.f32.mrb[0].mxu0
  %v1625 = vadd.f32 0.0, %v1624
  %v1626 = vpop.f32.mrb[0].mxu0
  %1627 = vmatprep.mubr.f32.mxu0 0.0
  %1628 = vmatmul.mubr.f32.gmra.mrb[0].mxu0 %v1359
  %v1629 = vpop.f32.mrb[0].mxu0
  %v1630 = vadd.f32 0.0, %v1629
  %v1631 = vpop.f32.mrb[0].mxu0
  %1632 = vmatprep.mubr.f32.mxu0 0.0
  %1633 = vmatmul.mubr.f32.gmra.mrb[0].mxu0 %v1361
  %v1634 = vpop.f32.mrb[0].mxu0
  %v1635 = vadd.f32 0.0, %v1634
  %v1636 = vpop.f32.mrb[0].mxu0
  %1637 = vmatprep.mubr.f32.mxu0 0.0
  %1638 = vmatmul.mubr.f32.gmra.mrb[0].mxu0 %v1363
  %v1639 = vpop.f32.mrb[0].mxu0
  %v1640 = vadd.f32 0.0, %v1639
  %v1641 = vpop.f32.mrb[0].mxu0
  %1642 = vmatprep.mubr.f32.mxu0 0.0
  %1643 = vmatmul.mubr.f32.gmra.mrb[0].mxu0 %v1365
  %v1644 = vpop.f32.mrb[0].mxu0
  %v1645 = vadd.f32 0.0, %v1644
  %v1646 = vpop.f32.mrb[0].mxu0
  %1647 = vmatprep.mubr.f32.mxu0 0.0
  %1648 = vmatmul.mubr.f32.gmra.mrb[0].mxu0 %v1367
  %v1649 = vpop.f32.mrb[0].mxu0
  %v1650 = vadd.f32 0.0, %v1649
  %v1651 = vpop.f32.mrb[0].mxu0
  %1652 = vmatprep.mubr.f32.mxu0 0.0
  %1653 = vmatmul.mubr.f32.gmra.mrb[0].mxu0 %v1369
  %v1654 = vpop.f32.mrb[0].mxu0
  %v1655 = vadd.f32 0.0, %v1654
  %v1656 = vpop.f32.mrb[0].mxu0
  %1657 = vmatprep.mubr.f32.mxu0 0.0
  %1658 = vmatmul.mubr.f32.gmra.mrb[0].mxu0 %v1371
  %v1659 = vpop.f32.mrb[0].mxu0
  %v1660 = vadd.f32 0.0, %v1659
  %v1661 = vpop.f32.mrb[0].mxu0
  %1662 = vmatprep.mubr.f32.mxu0 0.0
  %1663 = vmatmul.mubr.f32.gmra.mrb[0].mxu0 %v1373
  %v1664 = vpop.f32.mrb[0].mxu0
  %v1665 = vadd.f32 0.0, %v1664
  %v1666 = vpop.f32.mrb[0].mxu0
  %1667 = vmatprep.mubr.f32.mxu0 0.0
  %1668 = vmatmul.mubr.f32.gmra.mrb[0].mxu0 %v1375
  %v1669 = vpop.f32.mrb[0].mxu0
  %v1670 = vadd.f32 0.0, %v1669
  %v1671 = vpop.f32.mrb[0].mxu0
  %1672 = vmatprep.mubr.f32.mxu0 0.0
  %1673 = vmatmul.mubr.f32.gmra.mrb[0].mxu0 %v1377
  %v1674 = vpop.f32.mrb[0].mxu0
  %v1675 = vadd.f32 0.0, %v1674
  %v1676 = vpop.f32.mrb[0].mxu0
  %1677 = vmatprep.mubr.f32.mxu0 0.0
  %1678 = vmatmul.mubr.f32.gmra.mrb[0].mxu0 %v1379
  %v1679 = vpop.f32.mrb[0].mxu0
  %v1680 = vadd.f32 0.0, %v1679
  %v1681 = vpop.f32.mrb[0].mxu0
  %1682 = vmatprep.mubr.f32.mxu0 0.0
  %1683 = vmatmul.mubr.f32.gmra.mrb[0].mxu0 %v1381
  %v1684 = vpop.f32.mrb[0].mxu0
  %v1685 = vadd.f32 0.0, %v1684
  %v1686 = vpop.f32.mrb[0].mxu0
  %1687 = vmatprep.mubr.f32.mxu0 0.0
  %1688 = vmatmul.mubr.f32.gmra.mrb[0].mxu0 %v1383
  %v1689 = vpop.f32.mrb[0].mxu0
  %v1690 = vadd.f32 0.0, %v1689
  %v1691 = vpop.f32.mrb[0].mxu0
  %1692 = vdwg.mxu0
  %1694 = vset.pattern.permute.xlu0 1
  %1695 = vperm.xlu0 %1694, %v1185
  %v1696 = vpop.permute.xlu0 %1695
  %1699 = vset.pattern.permute.xlu0 1
  %1700 = vperm.xlu0 %1699, %v1187
  %v1701 = vpop.permute.xlu0 %1700
  %1704 = vset.pattern.permute.xlu0 1
  %1705 = vperm.xlu0 %1704, %v1189
  %v1706 = vpop.permute.xlu0 %1705
  %1709 = vset.pattern.permute.xlu0 1
  %1710 = vperm.xlu0 %1709, %v1191
  %v1711 = vpop.permute.xlu0 %1710
  %1714 = vset.pattern.permute.xlu0 1
  %1715 = vperm.xlu0 %1714, %v1193
  %v1716 = vpop.permute.xlu0 %1715
  %1719 = vset.pattern.permute.xlu0 1
  %1720 = vperm.xlu0 %1719, %v1195
  %v1721 = vpop.permute.xlu0 %1720
  %1724 = vset.pattern.permute.xlu0 1
  %1725 = vperm.xlu0 %1724, %v1197
  %v1726 = vpop.permute.xlu0 %1725
  %1729 = vset.pattern.permute.xlu0 1
  %1730 = vperm.xlu0 %1729, %v1199
  %v1731 = vpop.permute.xlu0 %1730
  %1734 = vset.pattern.permute.xlu0 1
  %1735 = vperm.xlu0 %1734, %v1201
  %v1736 = vpop.permute.xlu0 %1735
  %1739 = vset.pattern.permute.xlu0 1
  %1740 = vperm.xlu0 %1739, %v1203
  %v1741 = vpop.permute.xlu0 %1740
  %1744 = vset.pattern.permute.xlu0 1
  %1745 = vperm.xlu0 %1744, %v1205
  %v1746 = vpop.permute.xlu0 %1745
  %1749 = vset.pattern.permute.xlu0 1
  %1750 = vperm.xlu0 %1749, %v1207
  %v1751 = vpop.permute.xlu0 %1750
  %1754 = vset.pattern.permute.xlu0 1
  %1755 = vperm.xlu0 %1754, %v1209
  %v1756 = vpop.permute.xlu0 %1755
  %1759 = vset.pattern.permute.xlu0 1
  %1760 = vperm.xlu0 %1759, %v1211
  %v1761 = vpop.permute.xlu0 %1760
  %1764 = vset.pattern.permute.xlu0 1
  %1765 = vperm.xlu0 %1764, %v1213
  %v1766 = vpop.permute.xlu0 %1765
  %1769 = vset.pattern.permute.xlu0 1
  %1770 = vperm.xlu0 %1769, %v1215
  %v1771 = vpop.permute.xlu0 %1770
  %1774 = vset.pattern.permute.xlu0 1
  %1775 = vperm.xlu0 %1774, %v1217
  %v1776 = vpop.permute.xlu0 %1775
  %1779 = vset.pattern.permute.xlu0 1
  %1780 = vperm.xlu0 %1779, %v1219
  %v1781 = vpop.permute.xlu0 %1780
  %1784 = vset.pattern.permute.xlu0 1
  %1785 = vperm.xlu0 %1784, %v1221
  %v1786 = vpop.permute.xlu0 %1785
  %1789 = vset.pattern.permute.xlu0 1
  %1790 = vperm.xlu0 %1789, %v1223
  %v1791 = vpop.permute.xlu0 %1790
  %v1793 = vmul.f32 %v1696, %v371
  %v1794 = vmul.f32 %v1701, %v372
  %v1795 = vmul.f32 %v1706, %v373
  %v1796 = vmul.f32 %v1711, %v374
  %v1797 = vmul.f32 %v1716, %v375
  %v1798 = vmul.f32 %v1721, %v376
  %v1799 = vmul.f32 %v1726, %v377
  %v1800 = vmul.f32 %v1731, %v378
  %v1801 = vmul.f32 %v1736, %v379
  %v1802 = vmul.f32 %v1741, %v380
  %v1803 = vmul.f32 %v1746, %v381
  %v1804 = vmul.f32 %v1751, %v382
  %v1805 = vmul.f32 %v1756, %v383
  %v1806 = vmul.f32 %v1761, %v384
  %v1807 = vmul.f32 %v1766, %v385
  %v1808 = vmul.f32 %v1771, %v386
  %v1809 = vmul.f32 %v1776, %v387
  %v1810 = vmul.f32 %v1781, %v388
  %v1811 = vmul.f32 %v1786, %v389
  %v1812 = vmul.f32 %v1791, %v390
  %1833 = vrot.lane.b32.xlu0 %v1595, 8
  %v1834 = vpop.permute.xlu0 %1833
  %1835 = vrot.lane.b32.xlu0 %v1600, 8
  %v1836 = vpop.permute.xlu0 %1835
  %1837 = vrot.lane.b32.xlu0 %v1605, 8
  %v1838 = vpop.permute.xlu0 %1837
  %1839 = vrot.lane.b32.xlu0 %v1610, 8
  %v1840 = vpop.permute.xlu0 %1839
  %1841 = vrot.lane.b32.xlu0 %v1615, 8
  %v1842 = vpop.permute.xlu0 %1841
  %1843 = vrot.lane.b32.xlu0 %v1620, 8
  %v1844 = vpop.permute.xlu0 %1843
  %1845 = vrot.lane.b32.xlu0 %v1625, 8
  %v1846 = vpop.permute.xlu0 %1845
  %1847 = vrot.lane.b32.xlu0 %v1630, 8
  %v1848 = vpop.permute.xlu0 %1847
  %1849 = vrot.lane.b32.xlu0 %v1635, 8
  %v1850 = vpop.permute.xlu0 %1849
  %1851 = vrot.lane.b32.xlu0 %v1640, 8
  %v1852 = vpop.permute.xlu0 %1851
  %1853 = vrot.lane.b32.xlu0 %v1645, 8
  %v1854 = vpop.permute.xlu0 %1853
  %1855 = vrot.lane.b32.xlu0 %v1650, 8
  %v1856 = vpop.permute.xlu0 %1855
  %1857 = vrot.lane.b32.xlu0 %v1655, 8
  %v1858 = vpop.permute.xlu0 %1857
  %1859 = vrot.lane.b32.xlu0 %v1660, 8
  %v1860 = vpop.permute.xlu0 %1859
  %1861 = vrot.lane.b32.xlu0 %v1665, 8
  %v1862 = vpop.permute.xlu0 %1861
  %1863 = vrot.lane.b32.xlu0 %v1670, 8
  %v1864 = vpop.permute.xlu0 %1863
  %1865 = vrot.lane.b32.xlu0 %v1675, 8
  %v1866 = vpop.permute.xlu0 %1865
  %1867 = vrot.lane.b32.xlu0 %v1680, 8
  %v1868 = vpop.permute.xlu0 %1867
  %1869 = vrot.lane.b32.xlu0 %v1685, 8
  %v1870 = vpop.permute.xlu0 %1869
  %1871 = vrot.lane.b32.xlu0 %v1690, 8
  %v1872 = vpop.permute.xlu0 %1871
  %v1893 = vadd.f32 %v1793, %v1834
  %v1894 = vadd.f32 %v1794, %v1836
  %v1895 = vadd.f32 %v1795, %v1838
  %v1896 = vadd.f32 %v1796, %v1840
  %v1897 = vadd.f32 %v1797, %v1842
  %v1898 = vadd.f32 %v1798, %v1844
  %v1899 = vadd.f32 %v1799, %v1846
  %v1900 = vadd.f32 %v1800, %v1848
  %v1901 = vadd.f32 %v1801, %v1850
  %v1902 = vadd.f32 %v1802, %v1852
  %v1903 = vadd.f32 %v1803, %v1854
  %v1904 = vadd.f32 %v1804, %v1856
  %v1905 = vadd.f32 %v1805, %v1858
  %v1906 = vadd.f32 %v1806, %v1860
  %v1907 = vadd.f32 %v1807, %v1862
  %v1908 = vadd.f32 %v1808, %v1864
  %v1909 = vadd.f32 %v1809, %v1866
  %v1910 = vadd.f32 %v1810, %v1868
  %v1911 = vadd.f32 %v1811, %v1870
  %v1912 = vadd.f32 %v1812, %v1872
  %v1913 = vlaneseq
  %v1914 = vshrl.u32 %v1913, 7
  %v1915 = vsub.s32 2, %v1914
  %v1916 = vrot.slane %v314, %v1915
  %v1917 = vadd.f32 %v193, %v1916
  %v1918 = vadd.f32 %v194, %v1916
  %v1919 = vadd.f32 %v195, %v1916
  %v1920 = vadd.f32 %v196, %v1916
  %v1921 = vadd.f32 %v197, %v1916
  %v1922 = vadd.f32 %v198, %v1916
  %v1923 = vadd.f32 %v199, %v1916
  %v1924 = vadd.f32 %v200, %v1916
  %v1925 = vadd.f32 %v201, %v1916
  %v1926 = vadd.f32 %v202, %v1916
  %v1927 = vadd.f32 %v203, %v1916
  %v1928 = vadd.f32 %v204, %v1916
  %v1929 = vadd.f32 %v205, %v1916
  %v1930 = vadd.f32 %v206, %v1916
  %v1931 = vadd.f32 %v207, %v1916
  %v1932 = vadd.f32 %v208, %v1916
  %v1933 = vadd.f32 %v209, %v1916
  %v1934 = vadd.f32 %v210, %v1916
  %v1935 = vadd.f32 %v211, %v1916
  %v1936 = vadd.f32 %v212, %v1916
  %1937 = vmax.xlane.f32.xlu0 %v1917
  %v1938 = vpop.xlane.xlu0 %1937
  %1939 = vmax.xlane.f32.xlu0 %v1918
  %v1940 = vpop.xlane.xlu0 %1939
  %1941 = vmax.xlane.f32.xlu0 %v1919
  %v1942 = vpop.xlane.xlu0 %1941
  %1943 = vmax.xlane.f32.xlu0 %v1920
  %v1944 = vpop.xlane.xlu0 %1943
  %1945 = vmax.xlane.f32.xlu0 %v1921
  %v1946 = vpop.xlane.xlu0 %1945
  %1947 = vmax.xlane.f32.xlu0 %v1922
  %v1948 = vpop.xlane.xlu0 %1947
  %1949 = vmax.xlane.f32.xlu0 %v1923
  %v1950 = vpop.xlane.xlu0 %1949
  %1951 = vmax.xlane.f32.xlu0 %v1924
  %v1952 = vpop.xlane.xlu0 %1951
  %1953 = vmax.xlane.f32.xlu0 %v1925
  %v1954 = vpop.xlane.xlu0 %1953
  %1955 = vmax.xlane.f32.xlu0 %v1926
  %v1956 = vpop.xlane.xlu0 %1955
  %1957 = vmax.xlane.f32.xlu0 %v1927
  %v1958 = vpop.xlane.xlu0 %1957
  %1959 = vmax.xlane.f32.xlu0 %v1928
  %v1960 = vpop.xlane.xlu0 %1959
  %1961 = vmax.xlane.f32.xlu0 %v1929
  %v1962 = vpop.xlane.xlu0 %1961
  %1963 = vmax.xlane.f32.xlu0 %v1930
  %v1964 = vpop.xlane.xlu0 %1963
  %1965 = vmax.xlane.f32.xlu0 %v1931
  %v1966 = vpop.xlane.xlu0 %1965
  %1967 = vmax.xlane.f32.xlu0 %v1932
  %v1968 = vpop.xlane.xlu0 %1967
  %1969 = vmax.xlane.f32.xlu0 %v1933
  %v1970 = vpop.xlane.xlu0 %1969
  %1971 = vmax.xlane.f32.xlu0 %v1934
  %v1972 = vpop.xlane.xlu0 %1971
  %1973 = vmax.xlane.f32.xlu0 %v1935
  %v1974 = vpop.xlane.xlu0 %1973
  %1975 = vmax.xlane.f32.xlu0 %v1936
  %v1976 = vpop.xlane.xlu0 %1975
  %v1977 = vmax.f32 %v331, %v1938
  %v1978 = vmax.f32 %v332, %v1940
  %v1979 = vmax.f32 %v333, %v1942
  %v1980 = vmax.f32 %v334, %v1944
  %v1981 = vmax.f32 %v335, %v1946
  %v1982 = vmax.f32 %v336, %v1948
  %v1983 = vmax.f32 %v337, %v1950
  %v1984 = vmax.f32 %v338, %v1952
  %v1985 = vmax.f32 %v339, %v1954
  %v1986 = vmax.f32 %v340, %v1956
  %v1987 = vmax.f32 %v341, %v1958
  %v1988 = vmax.f32 %v342, %v1960
  %v1989 = vmax.f32 %v343, %v1962
  %v1990 = vmax.f32 %v344, %v1964
  %v1991 = vmax.f32 %v345, %v1966
  %v1992 = vmax.f32 %v346, %v1968
  %v1993 = vmax.f32 %v347, %v1970
  %v1994 = vmax.f32 %v348, %v1972
  %v1995 = vmax.f32 %v349, %v1974
  %v1996 = vmax.f32 %v350, %v1976
  %v1997 = vsub.f32 %v331, %v1977
  %v1998 = vsub.f32 %v332, %v1978
  %v1999 = vsub.f32 %v333, %v1979
  %v2000 = vsub.f32 %v334, %v1980
  %v2001 = vsub.f32 %v335, %v1981
  %v2002 = vsub.f32 %v336, %v1982
  %v2003 = vsub.f32 %v337, %v1983
  %v2004 = vsub.f32 %v338, %v1984
  %v2005 = vsub.f32 %v339, %v1985
  %v2006 = vsub.f32 %v340, %v1986
  %v2007 = vsub.f32 %v341, %v1987
  %v2008 = vsub.f32 %v342, %v1988
  %v2009 = vsub.f32 %v343, %v1989
  %v2010 = vsub.f32 %v344, %v1990
  %v2011 = vsub.f32 %v345, %v1991
  %v2012 = vsub.f32 %v346, %v1992
  %v2013 = vsub.f32 %v347, %v1993
  %v2014 = vsub.f32 %v348, %v1994
  %v2015 = vsub.f32 %v349, %v1995
  %v2016 = vsub.f32 %v350, %v1996
  %v2017 = vmul.f32 %v1997, 1.442695
  %v2018 = vpow.pop %v2017
  %v2019 = vmul.f32 %v1998, 1.442695
  %v2020 = vpow.pop %v2019
  %v2021 = vmul.f32 %v1999, 1.442695
  %v2022 = vpow.pop %v2021
  %v2023 = vmul.f32 %v2000, 1.442695
  %v2024 = vpow.pop %v2023
  %v2025 = vmul.f32 %v2001, 1.442695
  %v2026 = vpow.pop %v2025
  %v2027 = vmul.f32 %v2002, 1.442695
  %v2028 = vpow.pop %v2027
  %v2029 = vmul.f32 %v2003, 1.442695
  %v2030 = vpow.pop %v2029
  %v2031 = vmul.f32 %v2004, 1.442695
  %v2032 = vpow.pop %v2031
  %v2033 = vmul.f32 %v2005, 1.442695
  %v2034 = vpow.pop %v2033
  %v2035 = vmul.f32 %v2006, 1.442695
  %v2036 = vpow.pop %v2035
  %v2037 = vmul.f32 %v2007, 1.442695
  %v2038 = vpow.pop %v2037
  %v2039 = vmul.f32 %v2008, 1.442695
  %v2040 = vpow.pop %v2039
  %v2041 = vmul.f32 %v2009, 1.442695
  %v2042 = vpow.pop %v2041
  %v2043 = vmul.f32 %v2010, 1.442695
  %v2044 = vpow.pop %v2043
  %v2045 = vmul.f32 %v2011, 1.442695
  %v2046 = vpow.pop %v2045
  %v2047 = vmul.f32 %v2012, 1.442695
  %v2048 = vpow.pop %v2047
  %v2049 = vmul.f32 %v2013, 1.442695
  %v2050 = vpow.pop %v2049
  %v2051 = vmul.f32 %v2014, 1.442695
  %v2052 = vpow.pop %v2051
  %v2053 = vmul.f32 %v2015, 1.442695
  %v2054 = vpow.pop %v2053
  %v2055 = vmul.f32 %v2016, 1.442695
  %v2056 = vpow.pop %v2055
  %2058 = vset.pattern.permute.xlu0 2
  %2059 = vperm.xlu0 %2058, %v1977
  %v2060 = vpop.permute.xlu0 %2059
  %2063 = vset.pattern.permute.xlu0 2
  %2064 = vperm.xlu0 %2063, %v1978
  %v2065 = vpop.permute.xlu0 %2064
  %2068 = vset.pattern.permute.xlu0 2
  %2069 = vperm.xlu0 %2068, %v1979
  %v2070 = vpop.permute.xlu0 %2069
  %2073 = vset.pattern.permute.xlu0 2
  %2074 = vperm.xlu0 %2073, %v1980
  %v2075 = vpop.permute.xlu0 %2074
  %2078 = vset.pattern.permute.xlu0 2
  %2079 = vperm.xlu0 %2078, %v1981
  %v2080 = vpop.permute.xlu0 %2079
  %2083 = vset.pattern.permute.xlu0 2
  %2084 = vperm.xlu0 %2083, %v1982
  %v2085 = vpop.permute.xlu0 %2084
  %2088 = vset.pattern.permute.xlu0 2
  %2089 = vperm.xlu0 %2088, %v1983
  %v2090 = vpop.permute.xlu0 %2089
  %2093 = vset.pattern.permute.xlu0 2
  %2094 = vperm.xlu0 %2093, %v1984
  %v2095 = vpop.permute.xlu0 %2094
  %2098 = vset.pattern.permute.xlu0 2
  %2099 = vperm.xlu0 %2098, %v1985
  %v2100 = vpop.permute.xlu0 %2099
  %2103 = vset.pattern.permute.xlu0 2
  %2104 = vperm.xlu0 %2103, %v1986
  %v2105 = vpop.permute.xlu0 %2104
  %2108 = vset.pattern.permute.xlu0 2
  %2109 = vperm.xlu0 %2108, %v1987
  %v2110 = vpop.permute.xlu0 %2109
  %2113 = vset.pattern.permute.xlu0 2
  %2114 = vperm.xlu0 %2113, %v1988
  %v2115 = vpop.permute.xlu0 %2114
  %2118 = vset.pattern.permute.xlu0 2
  %2119 = vperm.xlu0 %2118, %v1989
  %v2120 = vpop.permute.xlu0 %2119
  %2123 = vset.pattern.permute.xlu0 2
  %2124 = vperm.xlu0 %2123, %v1990
  %v2125 = vpop.permute.xlu0 %2124
  %2128 = vset.pattern.permute.xlu0 2
  %2129 = vperm.xlu0 %2128, %v1991
  %v2130 = vpop.permute.xlu0 %2129
  %2133 = vset.pattern.permute.xlu0 2
  %2134 = vperm.xlu0 %2133, %v1992
  %v2135 = vpop.permute.xlu0 %2134
  %2138 = vset.pattern.permute.xlu0 2
  %2139 = vperm.xlu0 %2138, %v1993
  %v2140 = vpop.permute.xlu0 %2139
  %2143 = vset.pattern.permute.xlu0 2
  %2144 = vperm.xlu0 %2143, %v1994
  %v2145 = vpop.permute.xlu0 %2144
  %2148 = vset.pattern.permute.xlu0 2
  %2149 = vperm.xlu0 %2148, %v1995
  %v2150 = vpop.permute.xlu0 %2149
  %2153 = vset.pattern.permute.xlu0 2
  %2154 = vperm.xlu0 %2153, %v1996
  %v2155 = vpop.permute.xlu0 %2154
  %v2157 = vsub.f32 %v1917, %v2060
  %v2158 = vsub.f32 %v1918, %v2065
  %v2159 = vsub.f32 %v1919, %v2070
  %v2160 = vsub.f32 %v1920, %v2075
  %v2161 = vsub.f32 %v1921, %v2080
  %v2162 = vsub.f32 %v1922, %v2085
  %v2163 = vsub.f32 %v1923, %v2090
  %v2164 = vsub.f32 %v1924, %v2095
  %v2165 = vsub.f32 %v1925, %v2100
  %v2166 = vsub.f32 %v1926, %v2105
  %v2167 = vsub.f32 %v1927, %v2110
  %v2168 = vsub.f32 %v1928, %v2115
  %v2169 = vsub.f32 %v1929, %v2120
  %v2170 = vsub.f32 %v1930, %v2125
  %v2171 = vsub.f32 %v1931, %v2130
  %v2172 = vsub.f32 %v1932, %v2135
  %v2173 = vsub.f32 %v1933, %v2140
  %v2174 = vsub.f32 %v1934, %v2145
  %v2175 = vsub.f32 %v1935, %v2150
  %v2176 = vsub.f32 %v1936, %v2155
  %v2177 = vmul.f32 %v2157, 1.442695
  %v2178 = vpow.pop %v2177
  %v2179 = vmul.f32 %v2158, 1.442695
  %v2180 = vpow.pop %v2179
  %v2181 = vmul.f32 %v2159, 1.442695
  %v2182 = vpow.pop %v2181
  %v2183 = vmul.f32 %v2160, 1.442695
  %v2184 = vpow.pop %v2183
  %v2185 = vmul.f32 %v2161, 1.442695
  %v2186 = vpow.pop %v2185
  %v2187 = vmul.f32 %v2162, 1.442695
  %v2188 = vpow.pop %v2187
  %v2189 = vmul.f32 %v2163, 1.442695
  %v2190 = vpow.pop %v2189
  %v2191 = vmul.f32 %v2164, 1.442695
  %v2192 = vpow.pop %v2191
  %v2193 = vmul.f32 %v2165, 1.442695
  %v2194 = vpow.pop %v2193
  %v2195 = vmul.f32 %v2166, 1.442695
  %v2196 = vpow.pop %v2195
  %v2197 = vmul.f32 %v2167, 1.442695
  %v2198 = vpow.pop %v2197
  %v2199 = vmul.f32 %v2168, 1.442695
  %v2200 = vpow.pop %v2199
  %v2201 = vmul.f32 %v2169, 1.442695
  %v2202 = vpow.pop %v2201
  %v2203 = vmul.f32 %v2170, 1.442695
  %v2204 = vpow.pop %v2203
  %v2205 = vmul.f32 %v2171, 1.442695
  %v2206 = vpow.pop %v2205
  %v2207 = vmul.f32 %v2172, 1.442695
  %v2208 = vpow.pop %v2207
  %v2209 = vmul.f32 %v2173, 1.442695
  %v2210 = vpow.pop %v2209
  %v2211 = vmul.f32 %v2174, 1.442695
  %v2212 = vpow.pop %v2211
  %v2213 = vmul.f32 %v2175, 1.442695
  %v2214 = vpow.pop %v2213
  %v2215 = vmul.f32 %v2176, 1.442695
  %v2216 = vpow.pop %v2215
  %v2217 = vmul.f32 %v2018, %v351
  %v2218 = vmul.f32 %v2020, %v352
  %v2219 = vmul.f32 %v2022, %v353
  %v2220 = vmul.f32 %v2024, %v354
  %v2221 = vmul.f32 %v2026, %v355
  %v2222 = vmul.f32 %v2028, %v356
  %v2223 = vmul.f32 %v2030, %v357
  %v2224 = vmul.f32 %v2032, %v358
  %v2225 = vmul.f32 %v2034, %v359
  %v2226 = vmul.f32 %v2036, %v360
  %v2227 = vmul.f32 %v2038, %v361
  %v2228 = vmul.f32 %v2040, %v362
  %v2229 = vmul.f32 %v2042, %v363
  %v2230 = vmul.f32 %v2044, %v364
  %v2231 = vmul.f32 %v2046, %v365
  %v2232 = vmul.f32 %v2048, %v366
  %v2233 = vmul.f32 %v2050, %v367
  %v2234 = vmul.f32 %v2052, %v368
  %v2235 = vmul.f32 %v2054, %v369
  %v2236 = vmul.f32 %v2056, %v370
  %2237 = vadd.xlane.f32.xlu0 %v2178
  %v2238 = vpop.xlane.xlu0 %2237
  %2239 = vadd.xlane.f32.xlu0 %v2180
  %v2240 = vpop.xlane.xlu0 %2239
  %2241 = vadd.xlane.f32.xlu0 %v2182
  %v2242 = vpop.xlane.xlu0 %2241
  %2243 = vadd.xlane.f32.xlu0 %v2184
  %v2244 = vpop.xlane.xlu0 %2243
  %2245 = vadd.xlane.f32.xlu0 %v2186
  %v2246 = vpop.xlane.xlu0 %2245
  %2247 = vadd.xlane.f32.xlu0 %v2188
  %v2248 = vpop.xlane.xlu0 %2247
  %2249 = vadd.xlane.f32.xlu0 %v2190
  %v2250 = vpop.xlane.xlu0 %2249
  %2251 = vadd.xlane.f32.xlu0 %v2192
  %v2252 = vpop.xlane.xlu0 %2251
  %2253 = vadd.xlane.f32.xlu0 %v2194
  %v2254 = vpop.xlane.xlu0 %2253
  %2255 = vadd.xlane.f32.xlu0 %v2196
  %v2256 = vpop.xlane.xlu0 %2255
  %2257 = vadd.xlane.f32.xlu0 %v2198
  %v2258 = vpop.xlane.xlu0 %2257
  %2259 = vadd.xlane.f32.xlu0 %v2200
  %v2260 = vpop.xlane.xlu0 %2259
  %2261 = vadd.xlane.f32.xlu0 %v2202
  %v2262 = vpop.xlane.xlu0 %2261
  %2263 = vadd.xlane.f32.xlu0 %v2204
  %v2264 = vpop.xlane.xlu0 %2263
  %2265 = vadd.xlane.f32.xlu0 %v2206
  %v2266 = vpop.xlane.xlu0 %2265
  %2267 = vadd.xlane.f32.xlu0 %v2208
  %v2268 = vpop.xlane.xlu0 %2267
  %2269 = vadd.xlane.f32.xlu0 %v2210
  %v2270 = vpop.xlane.xlu0 %2269
  %2271 = vadd.xlane.f32.xlu0 %v2212
  %v2272 = vpop.xlane.xlu0 %2271
  %2273 = vadd.xlane.f32.xlu0 %v2214
  %v2274 = vpop.xlane.xlu0 %2273
  %2275 = vadd.xlane.f32.xlu0 %v2216
  %v2276 = vpop.xlane.xlu0 %2275
  %v2277 = vadd.f32 %v2217, %v2238
  %v2278 = vadd.f32 %v2218, %v2240
  %v2279 = vadd.f32 %v2219, %v2242
  %v2280 = vadd.f32 %v2220, %v2244
  %v2281 = vadd.f32 %v2221, %v2246
  %v2282 = vadd.f32 %v2222, %v2248
  %v2283 = vadd.f32 %v2223, %v2250
  %v2284 = vadd.f32 %v2224, %v2252
  %v2285 = vadd.f32 %v2225, %v2254
  %v2286 = vadd.f32 %v2226, %v2256
  %v2287 = vadd.f32 %v2227, %v2258
  %v2288 = vadd.f32 %v2228, %v2260
  %v2289 = vadd.f32 %v2229, %v2262
  %v2290 = vadd.f32 %v2230, %v2264
  %v2291 = vadd.f32 %v2231, %v2266
  %v2292 = vadd.f32 %v2232, %v2268
  %v2293 = vadd.f32 %v2233, %v2270
  %v2294 = vadd.f32 %v2234, %v2272
  %v2295 = vadd.f32 %v2235, %v2274
  %v2296 = vadd.f32 %v2236, %v2276
  %2297 = vrot.lane.b32.xlu0 %v315, 112
  %v2298 = vpop.permute.xlu0 %2297
  %2299 = vrot.lane.b32.xlu0 %v316, 112
  %v2300 = vpop.permute.xlu0 %2299
  %2301 = vrot.lane.b32.xlu0 %v317, 112
  %v2302 = vpop.permute.xlu0 %2301
  %2303 = vrot.lane.b32.xlu0 %v318, 112
  %v2304 = vpop.permute.xlu0 %2303
  %2305 = vrot.lane.b32.xlu0 %v319, 112
  %v2306 = vpop.permute.xlu0 %2305
  %2307 = vrot.lane.b32.xlu0 %v320, 112
  %v2308 = vpop.permute.xlu0 %2307
  %2309 = vrot.lane.b32.xlu0 %v321, 112
  %v2310 = vpop.permute.xlu0 %2309
  %2311 = vrot.lane.b32.xlu0 %v322, 112
  %v2312 = vpop.permute.xlu0 %2311
  %2313 = vrot.lane.b32.xlu0 %v323, 112
  %v2314 = vpop.permute.xlu0 %2313
  %2315 = vrot.lane.b32.xlu0 %v324, 112
  %v2316 = vpop.permute.xlu0 %2315
  %2317 = vrot.lane.b32.xlu0 %v325, 112
  %v2318 = vpop.permute.xlu0 %2317
  %2319 = vrot.lane.b32.xlu0 %v326, 112
  %v2320 = vpop.permute.xlu0 %2319
  %2321 = vrot.lane.b32.xlu0 %v327, 112
  %v2322 = vpop.permute.xlu0 %2321
  %2323 = vrot.lane.b32.xlu0 %v328, 112
  %v2324 = vpop.permute.xlu0 %2323
  %2325 = vrot.lane.b32.xlu0 %v329, 112
  %v2326 = vpop.permute.xlu0 %2325
  %2327 = vrot.lane.b32.xlu0 %v330, 112
  %v2328 = vpop.permute.xlu0 %2327
  %2345 = vmatprep.subr.mxu0 0.0
  %2346 = vmatpush1.msra.mxu0 %v2298
  %2347 = vmatprep.subr.mxu0 0.0
  %2348 = vmatpush1.msra.mxu0 %v2300
  %2349 = vmatprep.subr.mxu0 0.0
  %2350 = vmatpush1.msra.mxu0 %v2302
  %2351 = vmatprep.subr.mxu0 0.0
  %2352 = vmatpush1.msra.mxu0 %v2304
  %2353 = vmatprep.subr.mxu0 0.0
  %2354 = vmatpush1.msra.mxu0 %v2306
  %2355 = vmatprep.subr.mxu0 0.0
  %2356 = vmatpush1.msra.mxu0 %v2308
  %2357 = vmatprep.subr.mxu0 0.0
  %2358 = vmatpush1.msra.mxu0 %v2310
  %2359 = vmatprep.subr.mxu0 0.0
  %2360 = vmatpush1.msra.mxu0 %v2312
  %2361 = vmatprep.subr.mxu0 0.0
  %2362 = vmatpush1.msra.mxu0 %v2314
  %2363 = vmatprep.subr.mxu0 0.0
  %2364 = vmatpush1.msra.mxu0 %v2316
  %2365 = vmatprep.subr.mxu0 0.0
  %2366 = vmatpush1.msra.mxu0 %v2318
  %2367 = vmatprep.subr.mxu0 0.0
  %2368 = vmatpush1.msra.mxu0 %v2320
  %2369 = vmatprep.subr.mxu0 0.0
  %2370 = vmatpush1.msra.mxu0 %v2322
  %2371 = vmatprep.subr.mxu0 0.0
  %2372 = vmatpush1.msra.mxu0 %v2324
  %2373 = vmatprep.subr.mxu0 0.0
  %2374 = vmatpush1.msra.mxu0 %v2326
  %2375 = vmatprep.subr.mxu0 0.0
  %2376 = vmatpush1.msra.mxu0 %v2328
  %2377 = vmatprep.subr.mxu0 0.0
  %2378 = vmatpush1.msra.mxu0 0.0
  %2379 = vmatprep.subr.mxu0 0.0
  %2380 = vmatpush1.msra.mxu0 0.0
  %2381 = vmatprep.subr.mxu0 0.0
  %2382 = vmatpush1.msra.mxu0 0.0
  %2383 = vmatprep.subr.mxu0 0.0
  %2384 = vmatpush1.msra.mxu0 0.0
  %2385 = vmatprep.subr.mxu0 0.0
  %2386 = vmatpush1.msra.mxu0 0.0
  %2387 = vmatprep.subr.mxu0 0.0
  %2388 = vmatpush1.msra.mxu0 0.0
  %2389 = vmatprep.subr.mxu0 0.0
  %2390 = vmatpush1.msra.mxu0 0.0
  %2391 = vmatprep.subr.mxu0 0.0
  %2392 = vmatpush1.msra.mxu0 0.0
  %2393 = vmatprep.subr.mxu0 0.0
  %2394 = vmatpush1.msra.mxu0 0.0
  %2395 = vmatprep.subr.mxu0 0.0
  %2396 = vmatpush1.msra.mxu0 0.0
  %2397 = vmatprep.subr.mxu0 0.0
  %2398 = vmatpush1.msra.mxu0 0.0
  %2399 = vmatprep.subr.mxu0 0.0
  %2400 = vmatpush1.msra.mxu0 0.0
  %2401 = vmatprep.subr.mxu0 0.0
  %2402 = vmatpush1.msra.mxu0 0.0
  %2403 = vmatprep.subr.mxu0 0.0
  %2404 = vmatpush1.msra.mxu0 0.0
  %2405 = vmatprep.subr.mxu0 0.0
  %2406 = vmatpush1.msra.mxu0 0.0
  %2407 = vmatprep.subr.mxu0 0.0
  %2408 = vmatpush1.msra.mxu0 0.0
  %2409 = vmatprep.mubr.f32.mxu0 0.0
  %2410 = vmatmul.mubr.f32.gmra.mrb[0].mxu0 %v2178
  %v2411 = vpop.f32.mrb[0].mxu0
  %v2412 = vadd.f32 0.0, %v2411
  %v2413 = vpop.f32.mrb[0].mxu0
  %2414 = vmatprep.mubr.f32.mxu0 0.0
  %2415 = vmatmul.mubr.f32.gmra.mrb[0].mxu0 %v2180
  %v2416 = vpop.f32.mrb[0].mxu0
  %v2417 = vadd.f32 0.0, %v2416
  %v2418 = vpop.f32.mrb[0].mxu0
  %2419 = vmatprep.mubr.f32.mxu0 0.0
  %2420 = vmatmul.mubr.f32.gmra.mrb[0].mxu0 %v2182
  %v2421 = vpop.f32.mrb[0].mxu0
  %v2422 = vadd.f32 0.0, %v2421
  %v2423 = vpop.f32.mrb[0].mxu0
  %2424 = vmatprep.mubr.f32.mxu0 0.0
  %2425 = vmatmul.mubr.f32.gmra.mrb[0].mxu0 %v2184
  %v2426 = vpop.f32.mrb[0].mxu0
  %v2427 = vadd.f32 0.0, %v2426
  %v2428 = vpop.f32.mrb[0].mxu0
  %2429 = vmatprep.mubr.f32.mxu0 0.0
  %2430 = vmatmul.mubr.f32.gmra.mrb[0].mxu0 %v2186
  %v2431 = vpop.f32.mrb[0].mxu0
  %v2432 = vadd.f32 0.0, %v2431
  %v2433 = vpop.f32.mrb[0].mxu0
  %2434 = vmatprep.mubr.f32.mxu0 0.0
  %2435 = vmatmul.mubr.f32.gmra.mrb[0].mxu0 %v2188
  %v2436 = vpop.f32.mrb[0].mxu0
  %v2437 = vadd.f32 0.0, %v2436
  %v2438 = vpop.f32.mrb[0].mxu0
  %2439 = vmatprep.mubr.f32.mxu0 0.0
  %2440 = vmatmul.mubr.f32.gmra.mrb[0].mxu0 %v2190
  %v2441 = vpop.f32.mrb[0].mxu0
  %v2442 = vadd.f32 0.0, %v2441
  %v2443 = vpop.f32.mrb[0].mxu0
  %2444 = vmatprep.mubr.f32.mxu0 0.0
  %2445 = vmatmul.mubr.f32.gmra.mrb[0].mxu0 %v2192
  %v2446 = vpop.f32.mrb[0].mxu0
  %v2447 = vadd.f32 0.0, %v2446
  %v2448 = vpop.f32.mrb[0].mxu0
  %2449 = vmatprep.mubr.f32.mxu0 0.0
  %2450 = vmatmul.mubr.f32.gmra.mrb[0].mxu0 %v2194
  %v2451 = vpop.f32.mrb[0].mxu0
  %v2452 = vadd.f32 0.0, %v2451
  %v2453 = vpop.f32.mrb[0].mxu0
  %2454 = vmatprep.mubr.f32.mxu0 0.0
  %2455 = vmatmul.mubr.f32.gmra.mrb[0].mxu0 %v2196
  %v2456 = vpop.f32.mrb[0].mxu0
  %v2457 = vadd.f32 0.0, %v2456
  %v2458 = vpop.f32.mrb[0].mxu0
  %2459 = vmatprep.mubr.f32.mxu0 0.0
  %2460 = vmatmul.mubr.f32.gmra.mrb[0].mxu0 %v2198
  %v2461 = vpop.f32.mrb[0].mxu0
  %v2462 = vadd.f32 0.0, %v2461
  %v2463 = vpop.f32.mrb[0].mxu0
  %2464 = vmatprep.mubr.f32.mxu0 0.0
  %2465 = vmatmul.mubr.f32.gmra.mrb[0].mxu0 %v2200
  %v2466 = vpop.f32.mrb[0].mxu0
  %v2467 = vadd.f32 0.0, %v2466
  %v2468 = vpop.f32.mrb[0].mxu0
  %2469 = vmatprep.mubr.f32.mxu0 0.0
  %2470 = vmatmul.mubr.f32.gmra.mrb[0].mxu0 %v2202
  %v2471 = vpop.f32.mrb[0].mxu0
  %v2472 = vadd.f32 0.0, %v2471
  %v2473 = vpop.f32.mrb[0].mxu0
  %2474 = vmatprep.mubr.f32.mxu0 0.0
  %2475 = vmatmul.mubr.f32.gmra.mrb[0].mxu0 %v2204
  %v2476 = vpop.f32.mrb[0].mxu0
  %v2477 = vadd.f32 0.0, %v2476
  %v2478 = vpop.f32.mrb[0].mxu0
  %2479 = vmatprep.mubr.f32.mxu0 0.0
  %2480 = vmatmul.mubr.f32.gmra.mrb[0].mxu0 %v2206
  %v2481 = vpop.f32.mrb[0].mxu0
  %v2482 = vadd.f32 0.0, %v2481
  %v2483 = vpop.f32.mrb[0].mxu0
  %2484 = vmatprep.mubr.f32.mxu0 0.0
  %2485 = vmatmul.mubr.f32.gmra.mrb[0].mxu0 %v2208
  %v2486 = vpop.f32.mrb[0].mxu0
  %v2487 = vadd.f32 0.0, %v2486
  %v2488 = vpop.f32.mrb[0].mxu0
  %2489 = vmatprep.mubr.f32.mxu0 0.0
  %2490 = vmatmul.mubr.f32.gmra.mrb[0].mxu0 %v2210
  %v2491 = vpop.f32.mrb[0].mxu0
  %v2492 = vadd.f32 0.0, %v2491
  %v2493 = vpop.f32.mrb[0].mxu0
  %2494 = vmatprep.mubr.f32.mxu0 0.0
  %2495 = vmatmul.mubr.f32.gmra.mrb[0].mxu0 %v2212
  %v2496 = vpop.f32.mrb[0].mxu0
  %v2497 = vadd.f32 0.0, %v2496
  %v2498 = vpop.f32.mrb[0].mxu0
  %2499 = vmatprep.mubr.f32.mxu0 0.0
  %2500 = vmatmul.mubr.f32.gmra.mrb[0].mxu0 %v2214
  %v2501 = vpop.f32.mrb[0].mxu0
  %v2502 = vadd.f32 0.0, %v2501
  %v2503 = vpop.f32.mrb[0].mxu0
  %2504 = vmatprep.mubr.f32.mxu0 0.0
  %2505 = vmatmul.mubr.f32.gmra.mrb[0].mxu0 %v2216
  %v2506 = vpop.f32.mrb[0].mxu0
  %v2507 = vadd.f32 0.0, %v2506
  %v2508 = vpop.f32.mrb[0].mxu0
  %2509 = vdwg.mxu0
  %2511 = vset.pattern.permute.xlu0 2
  %2512 = vperm.xlu0 %2511, %v2018
  %v2513 = vpop.permute.xlu0 %2512
  %2516 = vset.pattern.permute.xlu0 2
  %2517 = vperm.xlu0 %2516, %v2020
  %v2518 = vpop.permute.xlu0 %2517
  %2521 = vset.pattern.permute.xlu0 2
  %2522 = vperm.xlu0 %2521, %v2022
  %v2523 = vpop.permute.xlu0 %2522
  %2526 = vset.pattern.permute.xlu0 2
  %2527 = vperm.xlu0 %2526, %v2024
  %v2528 = vpop.permute.xlu0 %2527
  %2531 = vset.pattern.permute.xlu0 2
  %2532 = vperm.xlu0 %2531, %v2026
  %v2533 = vpop.permute.xlu0 %2532
  %2536 = vset.pattern.permute.xlu0 2
  %2537 = vperm.xlu0 %2536, %v2028
  %v2538 = vpop.permute.xlu0 %2537
  %2541 = vset.pattern.permute.xlu0 2
  %2542 = vperm.xlu0 %2541, %v2030
  %v2543 = vpop.permute.xlu0 %2542
  %2546 = vset.pattern.permute.xlu0 2
  %2547 = vperm.xlu0 %2546, %v2032
  %v2548 = vpop.permute.xlu0 %2547
  %2551 = vset.pattern.permute.xlu0 2
  %2552 = vperm.xlu0 %2551, %v2034
  %v2553 = vpop.permute.xlu0 %2552
  %2556 = vset.pattern.permute.xlu0 2
  %2557 = vperm.xlu0 %2556, %v2036
  %v2558 = vpop.permute.xlu0 %2557
  %2561 = vset.pattern.permute.xlu0 2
  %2562 = vperm.xlu0 %2561, %v2038
  %v2563 = vpop.permute.xlu0 %2562
  %2566 = vset.pattern.permute.xlu0 2
  %2567 = vperm.xlu0 %2566, %v2040
  %v2568 = vpop.permute.xlu0 %2567
  %2571 = vset.pattern.permute.xlu0 2
  %2572 = vperm.xlu0 %2571, %v2042
  %v2573 = vpop.permute.xlu0 %2572
  %2576 = vset.pattern.permute.xlu0 2
  %2577 = vperm.xlu0 %2576, %v2044
  %v2578 = vpop.permute.xlu0 %2577
  %2581 = vset.pattern.permute.xlu0 2
  %2582 = vperm.xlu0 %2581, %v2046
  %v2583 = vpop.permute.xlu0 %2582
  %2586 = vset.pattern.permute.xlu0 2
  %2587 = vperm.xlu0 %2586, %v2048
  %v2588 = vpop.permute.xlu0 %2587
  %2591 = vset.pattern.permute.xlu0 2
  %2592 = vperm.xlu0 %2591, %v2050
  %v2593 = vpop.permute.xlu0 %2592
  %2596 = vset.pattern.permute.xlu0 2
  %2597 = vperm.xlu0 %2596, %v2052
  %v2598 = vpop.permute.xlu0 %2597
  %2601 = vset.pattern.permute.xlu0 2
  %2602 = vperm.xlu0 %2601, %v2054
  %v2603 = vpop.permute.xlu0 %2602
  %2606 = vset.pattern.permute.xlu0 2
  %2607 = vperm.xlu0 %2606, %v2056
  %v2608 = vpop.permute.xlu0 %2607
  %v2610 = vmul.f32 %v2513, %v371
  %v2611 = vmul.f32 %v2518, %v372
  %v2612 = vmul.f32 %v2523, %v373
  %v2613 = vmul.f32 %v2528, %v374
  %v2614 = vmul.f32 %v2533, %v375
  %v2615 = vmul.f32 %v2538, %v376
  %v2616 = vmul.f32 %v2543, %v377
  %v2617 = vmul.f32 %v2548, %v378
  %v2618 = vmul.f32 %v2553, %v379
  %v2619 = vmul.f32 %v2558, %v380
  %v2620 = vmul.f32 %v2563, %v381
  %v2621 = vmul.f32 %v2568, %v382
  %v2622 = vmul.f32 %v2573, %v383
  %v2623 = vmul.f32 %v2578, %v384
  %v2624 = vmul.f32 %v2583, %v385
  %v2625 = vmul.f32 %v2588, %v386
  %v2626 = vmul.f32 %v2593, %v387
  %v2627 = vmul.f32 %v2598, %v388
  %v2628 = vmul.f32 %v2603, %v389
  %v2629 = vmul.f32 %v2608, %v390
  %2650 = vrot.lane.b32.xlu0 %v2412, 16
  %v2651 = vpop.permute.xlu0 %2650
  %2652 = vrot.lane.b32.xlu0 %v2417, 16
  %v2653 = vpop.permute.xlu0 %2652
  %2654 = vrot.lane.b32.xlu0 %v2422, 16
  %v2655 = vpop.permute.xlu0 %2654
  %2656 = vrot.lane.b32.xlu0 %v2427, 16
  %v2657 = vpop.permute.xlu0 %2656
  %2658 = vrot.lane.b32.xlu0 %v2432, 16
  %v2659 = vpop.permute.xlu0 %2658
  %2660 = vrot.lane.b32.xlu0 %v2437, 16
  %v2661 = vpop.permute.xlu0 %2660
  %2662 = vrot.lane.b32.xlu0 %v2442, 16
  %v2663 = vpop.permute.xlu0 %2662
  %2664 = vrot.lane.b32.xlu0 %v2447, 16
  %v2665 = vpop.permute.xlu0 %2664
  %2666 = vrot.lane.b32.xlu0 %v2452, 16
  %v2667 = vpop.permute.xlu0 %2666
  %2668 = vrot.lane.b32.xlu0 %v2457, 16
  %v2669 = vpop.permute.xlu0 %2668
  %2670 = vrot.lane.b32.xlu0 %v2462, 16
  %v2671 = vpop.permute.xlu0 %2670
  %2672 = vrot.lane.b32.xlu0 %v2467, 16
  %v2673 = vpop.permute.xlu0 %2672
  %2674 = vrot.lane.b32.xlu0 %v2472, 16
  %v2675 = vpop.permute.xlu0 %2674
  %2676 = vrot.lane.b32.xlu0 %v2477, 16
  %v2677 = vpop.permute.xlu0 %2676
  %2678 = vrot.lane.b32.xlu0 %v2482, 16
  %v2679 = vpop.permute.xlu0 %2678
  %2680 = vrot.lane.b32.xlu0 %v2487, 16
  %v2681 = vpop.permute.xlu0 %2680
  %2682 = vrot.lane.b32.xlu0 %v2492, 16
  %v2683 = vpop.permute.xlu0 %2682
  %2684 = vrot.lane.b32.xlu0 %v2497, 16
  %v2685 = vpop.permute.xlu0 %2684
  %2686 = vrot.lane.b32.xlu0 %v2502, 16
  %v2687 = vpop.permute.xlu0 %2686
  %2688 = vrot.lane.b32.xlu0 %v2507, 16
  %v2689 = vpop.permute.xlu0 %2688
  %v2710 = vadd.f32 %v2610, %v2651
  %v2711 = vadd.f32 %v2611, %v2653
  %v2712 = vadd.f32 %v2612, %v2655
  %v2713 = vadd.f32 %v2613, %v2657
  %v2714 = vadd.f32 %v2614, %v2659
  %v2715 = vadd.f32 %v2615, %v2661
  %v2716 = vadd.f32 %v2616, %v2663
  %v2717 = vadd.f32 %v2617, %v2665
  %v2718 = vadd.f32 %v2618, %v2667
  %v2719 = vadd.f32 %v2619, %v2669
  %v2720 = vadd.f32 %v2620, %v2671
  %v2721 = vadd.f32 %v2621, %v2673
  %v2722 = vadd.f32 %v2622, %v2675
  %v2723 = vadd.f32 %v2623, %v2677
  %v2724 = vadd.f32 %v2624, %v2679
  %v2725 = vadd.f32 %v2625, %v2681
  %v2726 = vadd.f32 %v2626, %v2683
  %v2727 = vadd.f32 %v2627, %v2685
  %v2728 = vadd.f32 %v2628, %v2687
  %v2729 = vadd.f32 %v2629, %v2689
  %v2730 = vlaneseq
  %v2731 = vshrl.u32 %v2730, 7
  %v2732 = vsub.s32 3, %v2731
  %v2733 = vrot.slane %v314, %v2732
  %v2734 = vadd.f32 %v193, %v2733
  %v2735 = vadd.f32 %v194, %v2733
  %v2736 = vadd.f32 %v195, %v2733
  %v2737 = vadd.f32 %v196, %v2733
  %v2738 = vadd.f32 %v197, %v2733
  %v2739 = vadd.f32 %v198, %v2733
  %v2740 = vadd.f32 %v199, %v2733
  %v2741 = vadd.f32 %v200, %v2733
  %v2742 = vadd.f32 %v201, %v2733
  %v2743 = vadd.f32 %v202, %v2733
  %v2744 = vadd.f32 %v203, %v2733
  %v2745 = vadd.f32 %v204, %v2733
  %v2746 = vadd.f32 %v205, %v2733
  %v2747 = vadd.f32 %v206, %v2733
  %v2748 = vadd.f32 %v207, %v2733
  %v2749 = vadd.f32 %v208, %v2733
  %v2750 = vadd.f32 %v209, %v2733
  %v2751 = vadd.f32 %v210, %v2733
  %v2752 = vadd.f32 %v211, %v2733
  %v2753 = vadd.f32 %v212, %v2733
  %2754 = vmax.xlane.f32.xlu0 %v2734
  %v2755 = vpop.xlane.xlu0 %2754
  %2756 = vmax.xlane.f32.xlu0 %v2735
  %v2757 = vpop.xlane.xlu0 %2756
  %2758 = vmax.xlane.f32.xlu0 %v2736
  %v2759 = vpop.xlane.xlu0 %2758
  %2760 = vmax.xlane.f32.xlu0 %v2737
  %v2761 = vpop.xlane.xlu0 %2760
  %2762 = vmax.xlane.f32.xlu0 %v2738
  %v2763 = vpop.xlane.xlu0 %2762
  %2764 = vmax.xlane.f32.xlu0 %v2739
  %v2765 = vpop.xlane.xlu0 %2764
  %2766 = vmax.xlane.f32.xlu0 %v2740
  %v2767 = vpop.xlane.xlu0 %2766
  %2768 = vmax.xlane.f32.xlu0 %v2741
  %v2769 = vpop.xlane.xlu0 %2768
  %2770 = vmax.xlane.f32.xlu0 %v2742
  %v2771 = vpop.xlane.xlu0 %2770
  %2772 = vmax.xlane.f32.xlu0 %v2743
  %v2773 = vpop.xlane.xlu0 %2772
  %2774 = vmax.xlane.f32.xlu0 %v2744
  %v2775 = vpop.xlane.xlu0 %2774
  %2776 = vmax.xlane.f32.xlu0 %v2745
  %v2777 = vpop.xlane.xlu0 %2776
  %2778 = vmax.xlane.f32.xlu0 %v2746
  %v2779 = vpop.xlane.xlu0 %2778
  %2780 = vmax.xlane.f32.xlu0 %v2747
  %v2781 = vpop.xlane.xlu0 %2780
  %2782 = vmax.xlane.f32.xlu0 %v2748
  %v2783 = vpop.xlane.xlu0 %2782
  %2784 = vmax.xlane.f32.xlu0 %v2749
  %v2785 = vpop.xlane.xlu0 %2784
  %2786 = vmax.xlane.f32.xlu0 %v2750
  %v2787 = vpop.xlane.xlu0 %2786
  %2788 = vmax.xlane.f32.xlu0 %v2751
  %v2789 = vpop.xlane.xlu0 %2788
  %2790 = vmax.xlane.f32.xlu0 %v2752
  %v2791 = vpop.xlane.xlu0 %2790
  %2792 = vmax.xlane.f32.xlu0 %v2753
  %v2793 = vpop.xlane.xlu0 %2792
  %v2794 = vmax.f32 %v331, %v2755
  %v2795 = vmax.f32 %v332, %v2757
  %v2796 = vmax.f32 %v333, %v2759
  %v2797 = vmax.f32 %v334, %v2761
  %v2798 = vmax.f32 %v335, %v2763
  %v2799 = vmax.f32 %v336, %v2765
  %v2800 = vmax.f32 %v337, %v2767
  %v2801 = vmax.f32 %v338, %v2769
  %v2802 = vmax.f32 %v339, %v2771
  %v2803 = vmax.f32 %v340, %v2773
  %v2804 = vmax.f32 %v341, %v2775
  %v2805 = vmax.f32 %v342, %v2777
  %v2806 = vmax.f32 %v343, %v2779
  %v2807 = vmax.f32 %v344, %v2781
  %v2808 = vmax.f32 %v345, %v2783
  %v2809 = vmax.f32 %v346, %v2785
  %v2810 = vmax.f32 %v347, %v2787
  %v2811 = vmax.f32 %v348, %v2789
  %v2812 = vmax.f32 %v349, %v2791
  %v2813 = vmax.f32 %v350, %v2793
  %v2814 = vsub.f32 %v331, %v2794
  %v2815 = vsub.f32 %v332, %v2795
  %v2816 = vsub.f32 %v333, %v2796
  %v2817 = vsub.f32 %v334, %v2797
  %v2818 = vsub.f32 %v335, %v2798
  %v2819 = vsub.f32 %v336, %v2799
  %v2820 = vsub.f32 %v337, %v2800
  %v2821 = vsub.f32 %v338, %v2801
  %v2822 = vsub.f32 %v339, %v2802
  %v2823 = vsub.f32 %v340, %v2803
  %v2824 = vsub.f32 %v341, %v2804
  %v2825 = vsub.f32 %v342, %v2805
  %v2826 = vsub.f32 %v343, %v2806
  %v2827 = vsub.f32 %v344, %v2807
  %v2828 = vsub.f32 %v345, %v2808
  %v2829 = vsub.f32 %v346, %v2809
  %v2830 = vsub.f32 %v347, %v2810
  %v2831 = vsub.f32 %v348, %v2811
  %v2832 = vsub.f32 %v349, %v2812
  %v2833 = vsub.f32 %v350, %v2813
  %v2834 = vmul.f32 %v2814, 1.442695
  %v2835 = vpow.pop %v2834
  %v2836 = vmul.f32 %v2815, 1.442695
  %v2837 = vpow.pop %v2836
  %v2838 = vmul.f32 %v2816, 1.442695
  %v2839 = vpow.pop %v2838
  %v2840 = vmul.f32 %v2817, 1.442695
  %v2841 = vpow.pop %v2840
  %v2842 = vmul.f32 %v2818, 1.442695
  %v2843 = vpow.pop %v2842
  %v2844 = vmul.f32 %v2819, 1.442695
  %v2845 = vpow.pop %v2844
  %v2846 = vmul.f32 %v2820, 1.442695
  %v2847 = vpow.pop %v2846
  %v2848 = vmul.f32 %v2821, 1.442695
  %v2849 = vpow.pop %v2848
  %v2850 = vmul.f32 %v2822, 1.442695
  %v2851 = vpow.pop %v2850
  %v2852 = vmul.f32 %v2823, 1.442695
  %v2853 = vpow.pop %v2852
  %v2854 = vmul.f32 %v2824, 1.442695
  %v2855 = vpow.pop %v2854
  %v2856 = vmul.f32 %v2825, 1.442695
  %v2857 = vpow.pop %v2856
  %v2858 = vmul.f32 %v2826, 1.442695
  %v2859 = vpow.pop %v2858
  %v2860 = vmul.f32 %v2827, 1.442695
  %v2861 = vpow.pop %v2860
  %v2862 = vmul.f32 %v2828, 1.442695
  %v2863 = vpow.pop %v2862
  %v2864 = vmul.f32 %v2829, 1.442695
  %v2865 = vpow.pop %v2864
  %v2866 = vmul.f32 %v2830, 1.442695
  %v2867 = vpow.pop %v2866
  %v2868 = vmul.f32 %v2831, 1.442695
  %v2869 = vpow.pop %v2868
  %v2870 = vmul.f32 %v2832, 1.442695
  %v2871 = vpow.pop %v2870
  %v2872 = vmul.f32 %v2833, 1.442695
  %v2873 = vpow.pop %v2872
  %2875 = vset.pattern.permute.xlu0 3
  %2876 = vperm.xlu0 %2875, %v2794
  %v2877 = vpop.permute.xlu0 %2876
  %2880 = vset.pattern.permute.xlu0 3
  %2881 = vperm.xlu0 %2880, %v2795
  %v2882 = vpop.permute.xlu0 %2881
  %2885 = vset.pattern.permute.xlu0 3
  %2886 = vperm.xlu0 %2885, %v2796
  %v2887 = vpop.permute.xlu0 %2886
  %2890 = vset.pattern.permute.xlu0 3
  %2891 = vperm.xlu0 %2890, %v2797
  %v2892 = vpop.permute.xlu0 %2891
  %2895 = vset.pattern.permute.xlu0 3
  %2896 = vperm.xlu0 %2895, %v2798
  %v2897 = vpop.permute.xlu0 %2896
  %2900 = vset.pattern.permute.xlu0 3
  %2901 = vperm.xlu0 %2900, %v2799
  %v2902 = vpop.permute.xlu0 %2901
  %2905 = vset.pattern.permute.xlu0 3
  %2906 = vperm.xlu0 %2905, %v2800
  %v2907 = vpop.permute.xlu0 %2906
  %2910 = vset.pattern.permute.xlu0 3
  %2911 = vperm.xlu0 %2910, %v2801
  %v2912 = vpop.permute.xlu0 %2911
  %2915 = vset.pattern.permute.xlu0 3
  %2916 = vperm.xlu0 %2915, %v2802
  %v2917 = vpop.permute.xlu0 %2916
  %2920 = vset.pattern.permute.xlu0 3
  %2921 = vperm.xlu0 %2920, %v2803
  %v2922 = vpop.permute.xlu0 %2921
  %2925 = vset.pattern.permute.xlu0 3
  %2926 = vperm.xlu0 %2925, %v2804
  %v2927 = vpop.permute.xlu0 %2926
  %2930 = vset.pattern.permute.xlu0 3
  %2931 = vperm.xlu0 %2930, %v2805
  %v2932 = vpop.permute.xlu0 %2931
  %2935 = vset.pattern.permute.xlu0 3
  %2936 = vperm.xlu0 %2935, %v2806
  %v2937 = vpop.permute.xlu0 %2936
  %2940 = vset.pattern.permute.xlu0 3
  %2941 = vperm.xlu0 %2940, %v2807
  %v2942 = vpop.permute.xlu0 %2941
  %2945 = vset.pattern.permute.xlu0 3
  %2946 = vperm.xlu0 %2945, %v2808
  %v2947 = vpop.permute.xlu0 %2946
  %2950 = vset.pattern.permute.xlu0 3
  %2951 = vperm.xlu0 %2950, %v2809
  %v2952 = vpop.permute.xlu0 %2951
  %2955 = vset.pattern.permute.xlu0 3
  %2956 = vperm.xlu0 %2955, %v2810
  %v2957 = vpop.permute.xlu0 %2956
  %2960 = vset.pattern.permute.xlu0 3
  %2961 = vperm.xlu0 %2960, %v2811
  %v2962 = vpop.permute.xlu0 %2961
  %2965 = vset.pattern.permute.xlu0 3
  %2966 = vperm.xlu0 %2965, %v2812
  %v2967 = vpop.permute.xlu0 %2966
  %2970 = vset.pattern.permute.xlu0 3
  %2971 = vperm.xlu0 %2970, %v2813
  %v2972 = vpop.permute.xlu0 %2971
  %v2974 = vsub.f32 %v2734, %v2877
  %v2975 = vsub.f32 %v2735, %v2882
  %v2976 = vsub.f32 %v2736, %v2887
  %v2977 = vsub.f32 %v2737, %v2892
  %v2978 = vsub.f32 %v2738, %v2897
  %v2979 = vsub.f32 %v2739, %v2902
  %v2980 = vsub.f32 %v2740, %v2907
  %v2981 = vsub.f32 %v2741, %v2912
  %v2982 = vsub.f32 %v2742, %v2917
  %v2983 = vsub.f32 %v2743, %v2922
  %v2984 = vsub.f32 %v2744, %v2927
  %v2985 = vsub.f32 %v2745, %v2932
  %v2986 = vsub.f32 %v2746, %v2937
  %v2987 = vsub.f32 %v2747, %v2942
  %v2988 = vsub.f32 %v2748, %v2947
  %v2989 = vsub.f32 %v2749, %v2952
  %v2990 = vsub.f32 %v2750, %v2957
  %v2991 = vsub.f32 %v2751, %v2962
  %v2992 = vsub.f32 %v2752, %v2967
  %v2993 = vsub.f32 %v2753, %v2972
  %v2994 = vmul.f32 %v2974, 1.442695
  %v2995 = vpow.pop %v2994
  %v2996 = vmul.f32 %v2975, 1.442695
  %v2997 = vpow.pop %v2996
  %v2998 = vmul.f32 %v2976, 1.442695
  %v2999 = vpow.pop %v2998
  %v3000 = vmul.f32 %v2977, 1.442695
  %v3001 = vpow.pop %v3000
  %v3002 = vmul.f32 %v2978, 1.442695
  %v3003 = vpow.pop %v3002
  %v3004 = vmul.f32 %v2979, 1.442695
  %v3005 = vpow.pop %v3004
  %v3006 = vmul.f32 %v2980, 1.442695
  %v3007 = vpow.pop %v3006
  %v3008 = vmul.f32 %v2981, 1.442695
  %v3009 = vpow.pop %v3008
  %v3010 = vmul.f32 %v2982, 1.442695
  %v3011 = vpow.pop %v3010
  %v3012 = vmul.f32 %v2983, 1.442695
  %v3013 = vpow.pop %v3012
  %v3014 = vmul.f32 %v2984, 1.442695
  %v3015 = vpow.pop %v3014
  %v3016 = vmul.f32 %v2985, 1.442695
  %v3017 = vpow.pop %v3016
  %v3018 = vmul.f32 %v2986, 1.442695
  %v3019 = vpow.pop %v3018
  %v3020 = vmul.f32 %v2987, 1.442695
  %v3021 = vpow.pop %v3020
  %v3022 = vmul.f32 %v2988, 1.442695
  %v3023 = vpow.pop %v3022
  %v3024 = vmul.f32 %v2989, 1.442695
  %v3025 = vpow.pop %v3024
  %v3026 = vmul.f32 %v2990, 1.442695
  %v3027 = vpow.pop %v3026
  %v3028 = vmul.f32 %v2991, 1.442695
  %v3029 = vpow.pop %v3028
  %v3030 = vmul.f32 %v2992, 1.442695
  %v3031 = vpow.pop %v3030
  %v3032 = vmul.f32 %v2993, 1.442695
  %v3033 = vpow.pop %v3032
  %v3034 = vmul.f32 %v2835, %v351
  %v3035 = vmul.f32 %v2837, %v352
  %v3036 = vmul.f32 %v2839, %v353
  %v3037 = vmul.f32 %v2841, %v354
  %v3038 = vmul.f32 %v2843, %v355
  %v3039 = vmul.f32 %v2845, %v356
  %v3040 = vmul.f32 %v2847, %v357
  %v3041 = vmul.f32 %v2849, %v358
  %v3042 = vmul.f32 %v2851, %v359
  %v3043 = vmul.f32 %v2853, %v360
  %v3044 = vmul.f32 %v2855, %v361
  %v3045 = vmul.f32 %v2857, %v362
  %v3046 = vmul.f32 %v2859, %v363
  %v3047 = vmul.f32 %v2861, %v364
  %v3048 = vmul.f32 %v2863, %v365
  %v3049 = vmul.f32 %v2865, %v366
  %v3050 = vmul.f32 %v2867, %v367
  %v3051 = vmul.f32 %v2869, %v368
  %v3052 = vmul.f32 %v2871, %v369
  %v3053 = vmul.f32 %v2873, %v370
  %3054 = vadd.xlane.f32.xlu0 %v2995
  %v3055 = vpop.xlane.xlu0 %3054
  %3056 = vadd.xlane.f32.xlu0 %v2997
  %v3057 = vpop.xlane.xlu0 %3056
  %3058 = vadd.xlane.f32.xlu0 %v2999
  %v3059 = vpop.xlane.xlu0 %3058
  %3060 = vadd.xlane.f32.xlu0 %v3001
  %v3061 = vpop.xlane.xlu0 %3060
  %3062 = vadd.xlane.f32.xlu0 %v3003
  %v3063 = vpop.xlane.xlu0 %3062
  %3064 = vadd.xlane.f32.xlu0 %v3005
  %v3065 = vpop.xlane.xlu0 %3064
  %3066 = vadd.xlane.f32.xlu0 %v3007
  %v3067 = vpop.xlane.xlu0 %3066
  %3068 = vadd.xlane.f32.xlu0 %v3009
  %v3069 = vpop.xlane.xlu0 %3068
  %3070 = vadd.xlane.f32.xlu0 %v3011
  %v3071 = vpop.xlane.xlu0 %3070
  %3072 = vadd.xlane.f32.xlu0 %v3013
  %v3073 = vpop.xlane.xlu0 %3072
  %3074 = vadd.xlane.f32.xlu0 %v3015
  %v3075 = vpop.xlane.xlu0 %3074
  %3076 = vadd.xlane.f32.xlu0 %v3017
  %v3077 = vpop.xlane.xlu0 %3076
  %3078 = vadd.xlane.f32.xlu0 %v3019
  %v3079 = vpop.xlane.xlu0 %3078
  %3080 = vadd.xlane.f32.xlu0 %v3021
  %v3081 = vpop.xlane.xlu0 %3080
  %3082 = vadd.xlane.f32.xlu0 %v3023
  %v3083 = vpop.xlane.xlu0 %3082
  %3084 = vadd.xlane.f32.xlu0 %v3025
  %v3085 = vpop.xlane.xlu0 %3084
  %3086 = vadd.xlane.f32.xlu0 %v3027
  %v3087 = vpop.xlane.xlu0 %3086
  %3088 = vadd.xlane.f32.xlu0 %v3029
  %v3089 = vpop.xlane.xlu0 %3088
  %3090 = vadd.xlane.f32.xlu0 %v3031
  %v3091 = vpop.xlane.xlu0 %3090
  %3092 = vadd.xlane.f32.xlu0 %v3033
  %v3093 = vpop.xlane.xlu0 %3092
  %v3094 = vadd.f32 %v3034, %v3055
  %v3095 = vadd.f32 %v3035, %v3057
  %v3096 = vadd.f32 %v3036, %v3059
  %v3097 = vadd.f32 %v3037, %v3061
  %v3098 = vadd.f32 %v3038, %v3063
  %v3099 = vadd.f32 %v3039, %v3065
  %v3100 = vadd.f32 %v3040, %v3067
  %v3101 = vadd.f32 %v3041, %v3069
  %v3102 = vadd.f32 %v3042, %v3071
  %v3103 = vadd.f32 %v3043, %v3073
  %v3104 = vadd.f32 %v3044, %v3075
  %v3105 = vadd.f32 %v3045, %v3077
  %v3106 = vadd.f32 %v3046, %v3079
  %v3107 = vadd.f32 %v3047, %v3081
  %v3108 = vadd.f32 %v3048, %v3083
  %v3109 = vadd.f32 %v3049, %v3085
  %v3110 = vadd.f32 %v3050, %v3087
  %v3111 = vadd.f32 %v3051, %v3089
  %v3112 = vadd.f32 %v3052, %v3091
  %v3113 = vadd.f32 %v3053, %v3093
  %3114 = vrot.lane.b32.xlu0 %v315, 104
  %v3115 = vpop.permute.xlu0 %3114
  %3116 = vrot.lane.b32.xlu0 %v316, 104
  %v3117 = vpop.permute.xlu0 %3116
  %3118 = vrot.lane.b32.xlu0 %v317, 104
  %v3119 = vpop.permute.xlu0 %3118
  %3120 = vrot.lane.b32.xlu0 %v318, 104
  %v3121 = vpop.permute.xlu0 %3120
  %3122 = vrot.lane.b32.xlu0 %v319, 104
  %v3123 = vpop.permute.xlu0 %3122
  %3124 = vrot.lane.b32.xlu0 %v320, 104
  %v3125 = vpop.permute.xlu0 %3124
  %3126 = vrot.lane.b32.xlu0 %v321, 104
  %v3127 = vpop.permute.xlu0 %3126
  %3128 = vrot.lane.b32.xlu0 %v322, 104
  %v3129 = vpop.permute.xlu0 %3128
  %3130 = vrot.lane.b32.xlu0 %v323, 104
  %v3131 = vpop.permute.xlu0 %3130
  %3132 = vrot.lane.b32.xlu0 %v324, 104
  %v3133 = vpop.permute.xlu0 %3132
  %3134 = vrot.lane.b32.xlu0 %v325, 104
  %v3135 = vpop.permute.xlu0 %3134
  %3136 = vrot.lane.b32.xlu0 %v326, 104
  %v3137 = vpop.permute.xlu0 %3136
  %3138 = vrot.lane.b32.xlu0 %v327, 104
  %v3139 = vpop.permute.xlu0 %3138
  %3140 = vrot.lane.b32.xlu0 %v328, 104
  %v3141 = vpop.permute.xlu0 %3140
  %3142 = vrot.lane.b32.xlu0 %v329, 104
  %v3143 = vpop.permute.xlu0 %3142
  %3144 = vrot.lane.b32.xlu0 %v330, 104
  %v3145 = vpop.permute.xlu0 %3144
  %3162 = vmatprep.subr.mxu0 0.0
  %3163 = vmatpush1.msra.mxu0 %v3115
  %3164 = vmatprep.subr.mxu0 0.0
  %3165 = vmatpush1.msra.mxu0 %v3117
  %3166 = vmatprep.subr.mxu0 0.0
  %3167 = vmatpush1.msra.mxu0 %v3119
  %3168 = vmatprep.subr.mxu0 0.0
  %3169 = vmatpush1.msra.mxu0 %v3121
  %3170 = vmatprep.subr.mxu0 0.0
  %3171 = vmatpush1.msra.mxu0 %v3123
  %3172 = vmatprep.subr.mxu0 0.0
  %3173 = vmatpush1.msra.mxu0 %v3125
  %3174 = vmatprep.subr.mxu0 0.0
  %3175 = vmatpush1.msra.mxu0 %v3127
  %3176 = vmatprep.subr.mxu0 0.0
  %3177 = vmatpush1.msra.mxu0 %v3129
  %3178 = vmatprep.subr.mxu0 0.0
  %3179 = vmatpush1.msra.mxu0 %v3131
  %3180 = vmatprep.subr.mxu0 0.0
  %3181 = vmatpush1.msra.mxu0 %v3133
  %3182 = vmatprep.subr.mxu0 0.0
  %3183 = vmatpush1.msra.mxu0 %v3135
  %3184 = vmatprep.subr.mxu0 0.0
  %3185 = vmatpush1.msra.mxu0 %v3137
  %3186 = vmatprep.subr.mxu0 0.0
  %3187 = vmatpush1.msra.mxu0 %v3139
  %3188 = vmatprep.subr.mxu0 0.0
  %3189 = vmatpush1.msra.mxu0 %v3141
  %3190 = vmatprep.subr.mxu0 0.0
  %3191 = vmatpush1.msra.mxu0 %v3143
  %3192 = vmatprep.subr.mxu0 0.0
  %3193 = vmatpush1.msra.mxu0 %v3145
  %3194 = vmatprep.subr.mxu0 0.0
  %3195 = vmatpush1.msra.mxu0 0.0
  %3196 = vmatprep.subr.mxu0 0.0
  %3197 = vmatpush1.msra.mxu0 0.0
  %3198 = vmatprep.subr.mxu0 0.0
  %3199 = vmatpush1.msra.mxu0 0.0
  %3200 = vmatprep.subr.mxu0 0.0
  %3201 = vmatpush1.msra.mxu0 0.0
  %3202 = vmatprep.subr.mxu0 0.0
  %3203 = vmatpush1.msra.mxu0 0.0
  %3204 = vmatprep.subr.mxu0 0.0
  %3205 = vmatpush1.msra.mxu0 0.0
  %3206 = vmatprep.subr.mxu0 0.0
  %3207 = vmatpush1.msra.mxu0 0.0
  %3208 = vmatprep.subr.mxu0 0.0
  %3209 = vmatpush1.msra.mxu0 0.0
  %3210 = vmatprep.subr.mxu0 0.0
  %3211 = vmatpush1.msra.mxu0 0.0
  %3212 = vmatprep.subr.mxu0 0.0
  %3213 = vmatpush1.msra.mxu0 0.0
  %3214 = vmatprep.subr.mxu0 0.0
  %3215 = vmatpush1.msra.mxu0 0.0
  %3216 = vmatprep.subr.mxu0 0.0
  %3217 = vmatpush1.msra.mxu0 0.0
  %3218 = vmatprep.subr.mxu0 0.0
  %3219 = vmatpush1.msra.mxu0 0.0
  %3220 = vmatprep.subr.mxu0 0.0
  %3221 = vmatpush1.msra.mxu0 0.0
  %3222 = vmatprep.subr.mxu0 0.0
  %3223 = vmatpush1.msra.mxu0 0.0
  %3224 = vmatprep.subr.mxu0 0.0
  %3225 = vmatpush1.msra.mxu0 0.0
  %3226 = vmatprep.mubr.f32.mxu0 0.0
  %3227 = vmatmul.mubr.f32.gmra.mrb[0].mxu0 %v2995
  %v3228 = vpop.f32.mrb[0].mxu0
  %v3229 = vadd.f32 0.0, %v3228
  %v3230 = vpop.f32.mrb[0].mxu0
  %3231 = vmatprep.mubr.f32.mxu0 0.0
  %3232 = vmatmul.mubr.f32.gmra.mrb[0].mxu0 %v2997
  %v3233 = vpop.f32.mrb[0].mxu0
  %v3234 = vadd.f32 0.0, %v3233
  %v3235 = vpop.f32.mrb[0].mxu0
  %3236 = vmatprep.mubr.f32.mxu0 0.0
  %3237 = vmatmul.mubr.f32.gmra.mrb[0].mxu0 %v2999
  %v3238 = vpop.f32.mrb[0].mxu0
  %v3239 = vadd.f32 0.0, %v3238
  %v3240 = vpop.f32.mrb[0].mxu0
  %3241 = vmatprep.mubr.f32.mxu0 0.0
  %3242 = vmatmul.mubr.f32.gmra.mrb[0].mxu0 %v3001
  %v3243 = vpop.f32.mrb[0].mxu0
  %v3244 = vadd.f32 0.0, %v3243
  %v3245 = vpop.f32.mrb[0].mxu0
  %3246 = vmatprep.mubr.f32.mxu0 0.0
  %3247 = vmatmul.mubr.f32.gmra.mrb[0].mxu0 %v3003
  %v3248 = vpop.f32.mrb[0].mxu0
  %v3249 = vadd.f32 0.0, %v3248
  %v3250 = vpop.f32.mrb[0].mxu0
  %3251 = vmatprep.mubr.f32.mxu0 0.0
  %3252 = vmatmul.mubr.f32.gmra.mrb[0].mxu0 %v3005
  %v3253 = vpop.f32.mrb[0].mxu0
  %v3254 = vadd.f32 0.0, %v3253
  %v3255 = vpop.f32.mrb[0].mxu0
  %3256 = vmatprep.mubr.f32.mxu0 0.0
  %3257 = vmatmul.mubr.f32.gmra.mrb[0].mxu0 %v3007
  %v3258 = vpop.f32.mrb[0].mxu0
  %v3259 = vadd.f32 0.0, %v3258
  %v3260 = vpop.f32.mrb[0].mxu0
  %3261 = vmatprep.mubr.f32.mxu0 0.0
  %3262 = vmatmul.mubr.f32.gmra.mrb[0].mxu0 %v3009
  %v3263 = vpop.f32.mrb[0].mxu0
  %v3264 = vadd.f32 0.0, %v3263
  %v3265 = vpop.f32.mrb[0].mxu0
  %3266 = vmatprep.mubr.f32.mxu0 0.0
  %3267 = vmatmul.mubr.f32.gmra.mrb[0].mxu0 %v3011
  %v3268 = vpop.f32.mrb[0].mxu0
  %v3269 = vadd.f32 0.0, %v3268
  %v3270 = vpop.f32.mrb[0].mxu0
  %3271 = vmatprep.mubr.f32.mxu0 0.0
  %3272 = vmatmul.mubr.f32.gmra.mrb[0].mxu0 %v3013
  %v3273 = vpop.f32.mrb[0].mxu0
  %v3274 = vadd.f32 0.0, %v3273
  %v3275 = vpop.f32.mrb[0].mxu0
  %3276 = vmatprep.mubr.f32.mxu0 0.0
  %3277 = vmatmul.mubr.f32.gmra.mrb[0].mxu0 %v3015
  %v3278 = vpop.f32.mrb[0].mxu0
  %v3279 = vadd.f32 0.0, %v3278
  %v3280 = vpop.f32.mrb[0].mxu0
  %3281 = vmatprep.mubr.f32.mxu0 0.0
  %3282 = vmatmul.mubr.f32.gmra.mrb[0].mxu0 %v3017
  %v3283 = vpop.f32.mrb[0].mxu0
  %v3284 = vadd.f32 0.0, %v3283
  %v3285 = vpop.f32.mrb[0].mxu0
  %3286 = vmatprep.mubr.f32.mxu0 0.0
  %3287 = vmatmul.mubr.f32.gmra.mrb[0].mxu0 %v3019
  %v3288 = vpop.f32.mrb[0].mxu0
  %v3289 = vadd.f32 0.0, %v3288
  %v3290 = vpop.f32.mrb[0].mxu0
  %3291 = vmatprep.mubr.f32.mxu0 0.0
  %3292 = vmatmul.mubr.f32.gmra.mrb[0].mxu0 %v3021
  %v3293 = vpop.f32.mrb[0].mxu0
  %v3294 = vadd.f32 0.0, %v3293
  %v3295 = vpop.f32.mrb[0].mxu0
  %3296 = vmatprep.mubr.f32.mxu0 0.0
  %3297 = vmatmul.mubr.f32.gmra.mrb[0].mxu0 %v3023
  %v3298 = vpop.f32.mrb[0].mxu0
  %v3299 = vadd.f32 0.0, %v3298
  %v3300 = vpop.f32.mrb[0].mxu0
  %3301 = vmatprep.mubr.f32.mxu0 0.0
  %3302 = vmatmul.mubr.f32.gmra.mrb[0].mxu0 %v3025
  %v3303 = vpop.f32.mrb[0].mxu0
  %v3304 = vadd.f32 0.0, %v3303
  %v3305 = vpop.f32.mrb[0].mxu0
  %3306 = vmatprep.mubr.f32.mxu0 0.0
  %3307 = vmatmul.mubr.f32.gmra.mrb[0].mxu0 %v3027
  %v3308 = vpop.f32.mrb[0].mxu0
  %v3309 = vadd.f32 0.0, %v3308
  %v3310 = vpop.f32.mrb[0].mxu0
  %3311 = vmatprep.mubr.f32.mxu0 0.0
  %3312 = vmatmul.mubr.f32.gmra.mrb[0].mxu0 %v3029
  %v3313 = vpop.f32.mrb[0].mxu0
  %v3314 = vadd.f32 0.0, %v3313
  %v3315 = vpop.f32.mrb[0].mxu0
  %3316 = vmatprep.mubr.f32.mxu0 0.0
  %3317 = vmatmul.mubr.f32.gmra.mrb[0].mxu0 %v3031
  %v3318 = vpop.f32.mrb[0].mxu0
  %v3319 = vadd.f32 0.0, %v3318
  %v3320 = vpop.f32.mrb[0].mxu0
  %3321 = vmatprep.mubr.f32.mxu0 0.0
  %3322 = vmatmul.mubr.f32.gmra.mrb[0].mxu0 %v3033
  %v3323 = vpop.f32.mrb[0].mxu0
  %v3324 = vadd.f32 0.0, %v3323
  %v3325 = vpop.f32.mrb[0].mxu0
  %3326 = vdwg.mxu0
  %3328 = vset.pattern.permute.xlu0 3
  %3329 = vperm.xlu0 %3328, %v2835
  %v3330 = vpop.permute.xlu0 %3329
  %3333 = vset.pattern.permute.xlu0 3
  %3334 = vperm.xlu0 %3333, %v2837
  %v3335 = vpop.permute.xlu0 %3334
  %3338 = vset.pattern.permute.xlu0 3
  %3339 = vperm.xlu0 %3338, %v2839
  %v3340 = vpop.permute.xlu0 %3339
  %3343 = vset.pattern.permute.xlu0 3
  %3344 = vperm.xlu0 %3343, %v2841
  %v3345 = vpop.permute.xlu0 %3344
  %3348 = vset.pattern.permute.xlu0 3
  %3349 = vperm.xlu0 %3348, %v2843
  %v3350 = vpop.permute.xlu0 %3349
  %3353 = vset.pattern.permute.xlu0 3
  %3354 = vperm.xlu0 %3353, %v2845
  %v3355 = vpop.permute.xlu0 %3354
  %3358 = vset.pattern.permute.xlu0 3
  %3359 = vperm.xlu0 %3358, %v2847
  %v3360 = vpop.permute.xlu0 %3359
  %3363 = vset.pattern.permute.xlu0 3
  %3364 = vperm.xlu0 %3363, %v2849
  %v3365 = vpop.permute.xlu0 %3364
  %3368 = vset.pattern.permute.xlu0 3
  %3369 = vperm.xlu0 %3368, %v2851
  %v3370 = vpop.permute.xlu0 %3369
  %3373 = vset.pattern.permute.xlu0 3
  %3374 = vperm.xlu0 %3373, %v2853
  %v3375 = vpop.permute.xlu0 %3374
  %3378 = vset.pattern.permute.xlu0 3
  %3379 = vperm.xlu0 %3378, %v2855
  %v3380 = vpop.permute.xlu0 %3379
  %3383 = vset.pattern.permute.xlu0 3
  %3384 = vperm.xlu0 %3383, %v2857
  %v3385 = vpop.permute.xlu0 %3384
  %3388 = vset.pattern.permute.xlu0 3
  %3389 = vperm.xlu0 %3388, %v2859
  %v3390 = vpop.permute.xlu0 %3389
  %3393 = vset.pattern.permute.xlu0 3
  %3394 = vperm.xlu0 %3393, %v2861
  %v3395 = vpop.permute.xlu0 %3394
  %3398 = vset.pattern.permute.xlu0 3
  %3399 = vperm.xlu0 %3398, %v2863
  %v3400 = vpop.permute.xlu0 %3399
  %3403 = vset.pattern.permute.xlu0 3
  %3404 = vperm.xlu0 %3403, %v2865
  %v3405 = vpop.permute.xlu0 %3404
  %3408 = vset.pattern.permute.xlu0 3
  %3409 = vperm.xlu0 %3408, %v2867
  %v3410 = vpop.permute.xlu0 %3409
  %3413 = vset.pattern.permute.xlu0 3
  %3414 = vperm.xlu0 %3413, %v2869
  %v3415 = vpop.permute.xlu0 %3414
  %3418 = vset.pattern.permute.xlu0 3
  %3419 = vperm.xlu0 %3418, %v2871
  %v3420 = vpop.permute.xlu0 %3419
  %3423 = vset.pattern.permute.xlu0 3
  %3424 = vperm.xlu0 %3423, %v2873
  %v3425 = vpop.permute.xlu0 %3424
  %v3427 = vmul.f32 %v3330, %v371
  %v3428 = vmul.f32 %v3335, %v372
  %v3429 = vmul.f32 %v3340, %v373
  %v3430 = vmul.f32 %v3345, %v374
  %v3431 = vmul.f32 %v3350, %v375
  %v3432 = vmul.f32 %v3355, %v376
  %v3433 = vmul.f32 %v3360, %v377
  %v3434 = vmul.f32 %v3365, %v378
  %v3435 = vmul.f32 %v3370, %v379
  %v3436 = vmul.f32 %v3375, %v380
  %v3437 = vmul.f32 %v3380, %v381
  %v3438 = vmul.f32 %v3385, %v382
  %v3439 = vmul.f32 %v3390, %v383
  %v3440 = vmul.f32 %v3395, %v384
  %v3441 = vmul.f32 %v3400, %v385
  %v3442 = vmul.f32 %v3405, %v386
  %v3443 = vmul.f32 %v3410, %v387
  %v3444 = vmul.f32 %v3415, %v388
  %v3445 = vmul.f32 %v3420, %v389
  %v3446 = vmul.f32 %v3425, %v390
  %3467 = vrot.lane.b32.xlu0 %v3229, 24
  %v3468 = vpop.permute.xlu0 %3467
  %3469 = vrot.lane.b32.xlu0 %v3234, 24
  %v3470 = vpop.permute.xlu0 %3469
  %3471 = vrot.lane.b32.xlu0 %v3239, 24
  %v3472 = vpop.permute.xlu0 %3471
  %3473 = vrot.lane.b32.xlu0 %v3244, 24
  %v3474 = vpop.permute.xlu0 %3473
  %3475 = vrot.lane.b32.xlu0 %v3249, 24
  %v3476 = vpop.permute.xlu0 %3475
  %3477 = vrot.lane.b32.xlu0 %v3254, 24
  %v3478 = vpop.permute.xlu0 %3477
  %3479 = vrot.lane.b32.xlu0 %v3259, 24
  %v3480 = vpop.permute.xlu0 %3479
  %3481 = vrot.lane.b32.xlu0 %v3264, 24
  %v3482 = vpop.permute.xlu0 %3481
  %3483 = vrot.lane.b32.xlu0 %v3269, 24
  %v3484 = vpop.permute.xlu0 %3483
  %3485 = vrot.lane.b32.xlu0 %v3274, 24
  %v3486 = vpop.permute.xlu0 %3485
  %3487 = vrot.lane.b32.xlu0 %v3279, 24
  %v3488 = vpop.permute.xlu0 %3487
  %3489 = vrot.lane.b32.xlu0 %v3284, 24
  %v3490 = vpop.permute.xlu0 %3489
  %3491 = vrot.lane.b32.xlu0 %v3289, 24
  %v3492 = vpop.permute.xlu0 %3491
  %3493 = vrot.lane.b32.xlu0 %v3294, 24
  %v3494 = vpop.permute.xlu0 %3493
  %3495 = vrot.lane.b32.xlu0 %v3299, 24
  %v3496 = vpop.permute.xlu0 %3495
  %3497 = vrot.lane.b32.xlu0 %v3304, 24
  %v3498 = vpop.permute.xlu0 %3497
  %3499 = vrot.lane.b32.xlu0 %v3309, 24
  %v3500 = vpop.permute.xlu0 %3499
  %3501 = vrot.lane.b32.xlu0 %v3314, 24
  %v3502 = vpop.permute.xlu0 %3501
  %3503 = vrot.lane.b32.xlu0 %v3319, 24
  %v3504 = vpop.permute.xlu0 %3503
  %3505 = vrot.lane.b32.xlu0 %v3324, 24
  %v3506 = vpop.permute.xlu0 %3505
  %v3527 = vadd.f32 %v3427, %v3468
  %v3528 = vadd.f32 %v3428, %v3470
  %v3529 = vadd.f32 %v3429, %v3472
  %v3530 = vadd.f32 %v3430, %v3474
  %v3531 = vadd.f32 %v3431, %v3476
  %v3532 = vadd.f32 %v3432, %v3478
  %v3533 = vadd.f32 %v3433, %v3480
  %v3534 = vadd.f32 %v3434, %v3482
  %v3535 = vadd.f32 %v3435, %v3484
  %v3536 = vadd.f32 %v3436, %v3486
  %v3537 = vadd.f32 %v3437, %v3488
  %v3538 = vadd.f32 %v3438, %v3490
  %v3539 = vadd.f32 %v3439, %v3492
  %v3540 = vadd.f32 %v3440, %v3494
  %v3541 = vadd.f32 %v3441, %v3496
  %v3542 = vadd.f32 %v3442, %v3498
  %v3543 = vadd.f32 %v3443, %v3500
  %v3544 = vadd.f32 %v3444, %v3502
  %v3545 = vadd.f32 %v3445, %v3504
  %v3546 = vadd.f32 %v3446, %v3506
  %v3547 = vsel %vm293, %v455, %v1144
  %v3548 = vsel %vm293, %v456, %v1145
  %v3549 = vsel %vm293, %v457, %v1146
  %v3550 = vsel %vm293, %v458, %v1147
  %v3551 = vsel %vm293, %v459, %v1148
  %v3552 = vsel %vm293, %v460, %v1149
  %v3553 = vsel %vm293, %v461, %v1150
  %v3554 = vsel %vm293, %v462, %v1151
  %v3555 = vsel %vm293, %v463, %v1152
  %v3556 = vsel %vm293, %v464, %v1153
  %v3557 = vsel %vm293, %v465, %v1154
  %v3558 = vsel %vm293, %v466, %v1155
  %v3559 = vsel %vm293, %v467, %v1156
  %v3560 = vsel %vm293, %v468, %v1157
  %v3561 = vsel %vm293, %v469, %v1158
  %v3562 = vsel %vm293, %v470, %v1159
  %v3563 = vsel %vm293, %v471, %v1160
  %v3564 = vsel %vm293, %v472, %v1161
  %v3565 = vsel %vm293, %v473, %v1162
  %v3566 = vsel %vm293, %v474, %v1163
  %vm3567 = vcmask 15360
  %v3568 = vsel %vm3567, %v3547, %v1977
  %v3569 = vsel %vm3567, %v3548, %v1978
  %v3570 = vsel %vm3567, %v3549, %v1979
  %v3571 = vsel %vm3567, %v3550, %v1980
  %v3572 = vsel %vm3567, %v3551, %v1981
  %v3573 = vsel %vm3567, %v3552, %v1982
  %v3574 = vsel %vm3567, %v3553, %v1983
  %v3575 = vsel %vm3567, %v3554, %v1984
  %v3576 = vsel %vm3567, %v3555, %v1985
  %v3577 = vsel %vm3567, %v3556, %v1986
  %v3578 = vsel %vm3567, %v3557, %v1987
  %v3579 = vsel %vm3567, %v3558, %v1988
  %v3580 = vsel %vm3567, %v3559, %v1989
  %v3581 = vsel %vm3567, %v3560, %v1990
  %v3582 = vsel %vm3567, %v3561, %v1991
  %v3583 = vsel %vm3567, %v3562, %v1992
  %v3584 = vsel %vm3567, %v3563, %v1993
  %v3585 = vsel %vm3567, %v3564, %v1994
  %v3586 = vsel %vm3567, %v3565, %v1995
  %v3587 = vsel %vm3567, %v3566, %v1996
  %vm3588 = vcmask 23552
  %v3589 = vsel %vm3588, %v3568, %v2794
  %v3590 = vsel %vm3588, %v3569, %v2795
  %v3591 = vsel %vm3588, %v3570, %v2796
  %v3592 = vsel %vm3588, %v3571, %v2797
  %v3593 = vsel %vm3588, %v3572, %v2798
  %v3594 = vsel %vm3588, %v3573, %v2799
  %v3595 = vsel %vm3588, %v3574, %v2800
  %v3596 = vsel %vm3588, %v3575, %v2801
  %v3597 = vsel %vm3588, %v3576, %v2802
  %v3598 = vsel %vm3588, %v3577, %v2803
  %v3599 = vsel %vm3588, %v3578, %v2804
  %v3600 = vsel %vm3588, %v3579, %v2805
  %v3601 = vsel %vm3588, %v3580, %v2806
  %v3602 = vsel %vm3588, %v3581, %v2807
  %v3603 = vsel %vm3588, %v3582, %v2808
  %v3604 = vsel %vm3588, %v3583, %v2809
  %v3605 = vsel %vm3588, %v3584, %v2810
  %v3606 = vsel %vm3588, %v3585, %v2811
  %v3607 = vsel %vm3588, %v3586, %v2812
  %v3608 = vsel %vm3588, %v3587, %v2813
  %vm3609 = vcmask 31744
  %3610 = vst.msk [vmem:[#allocation2] sm:$0xff] %vm3609, %v3589
  %3611 = vst.msk [vmem:[#allocation2 + $0x8] sm:$0xff] %vm3609, %v3590
  %3612 = vst.msk [vmem:[#allocation2 + $0x10] sm:$0xff] %vm3609, %v3591
  %3613 = vst.msk [vmem:[#allocation2 + $0x18] sm:$0xff] %vm3609, %v3592
  %3614 = vst.msk [vmem:[#allocation2 + $0x20] sm:$0xff] %vm3609, %v3593
  %3615 = vst.msk [vmem:[#allocation2 + $0x28] sm:$0xff] %vm3609, %v3594
  %3616 = vst.msk [vmem:[#allocation2 + $0x30] sm:$0xff] %vm3609, %v3595
  %3617 = vst.msk [vmem:[#allocation2 + $0x38] sm:$0xff] %vm3609, %v3596
  %3618 = vst.msk [vmem:[#allocation2 + $0x40] sm:$0xff] %vm3609, %v3597
  %3619 = vst.msk [vmem:[#allocation2 + $0x48] sm:$0xff] %vm3609, %v3598
  %3620 = vst.msk [vmem:[#allocation2 + $0x50] sm:$0xff] %vm3609, %v3599
  %3621 = vst.msk [vmem:[#allocation2 + $0x58] sm:$0xff] %vm3609, %v3600
  %3622 = vst.msk [vmem:[#allocation2 + $0x60] sm:$0xff] %vm3609, %v3601
  %3623 = vst.msk [vmem:[#allocation2 + $0x68] sm:$0xff] %vm3609, %v3602
  %3624 = vst.msk [vmem:[#allocation2 + $0x70] sm:$0xff] %vm3609, %v3603
  %3625 = vst.msk [vmem:[#allocation2 + $0x78] sm:$0xff] %vm3609, %v3604
  %3626 = vst.msk [vmem:[#allocation2 + $0x80] sm:$0xff] %vm3609, %v3605
  %3627 = vst.msk [vmem:[#allocation2 + $0x88] sm:$0xff] %vm3609, %v3606
  %3628 = vst.msk [vmem:[#allocation2 + $0x90] sm:$0xff] %vm3609, %v3607
  %3629 = vst.msk [vmem:[#allocation2 + $0x98] sm:$0xff] %vm3609, %v3608
  %v3630 = vsel %vm293, %v755, %v1444
  %v3631 = vsel %vm293, %v756, %v1445
  %v3632 = vsel %vm293, %v757, %v1446
  %v3633 = vsel %vm293, %v758, %v1447
  %v3634 = vsel %vm293, %v759, %v1448
  %v3635 = vsel %vm293, %v760, %v1449
  %v3636 = vsel %vm293, %v761, %v1450
  %v3637 = vsel %vm293, %v762, %v1451
  %v3638 = vsel %vm293, %v763, %v1452
  %v3639 = vsel %vm293, %v764, %v1453
  %v3640 = vsel %vm293, %v765, %v1454
  %v3641 = vsel %vm293, %v766, %v1455
  %v3642 = vsel %vm293, %v767, %v1456
  %v3643 = vsel %vm293, %v768, %v1457
  %v3644 = vsel %vm293, %v769, %v1458
  %v3645 = vsel %vm293, %v770, %v1459
  %v3646 = vsel %vm293, %v771, %v1460
  %v3647 = vsel %vm293, %v772, %v1461
  %v3648 = vsel %vm293, %v773, %v1462
  %v3649 = vsel %vm293, %v774, %v1463
  %v3650 = vsel %vm3567, %v3630, %v2277
  %v3651 = vsel %vm3567, %v3631, %v2278
  %v3652 = vsel %vm3567, %v3632, %v2279
  %v3653 = vsel %vm3567, %v3633, %v2280
  %v3654 = vsel %vm3567, %v3634, %v2281
  %v3655 = vsel %vm3567, %v3635, %v2282
  %v3656 = vsel %vm3567, %v3636, %v2283
  %v3657 = vsel %vm3567, %v3637, %v2284
  %v3658 = vsel %vm3567, %v3638, %v2285
  %v3659 = vsel %vm3567, %v3639, %v2286
  %v3660 = vsel %vm3567, %v3640, %v2287
  %v3661 = vsel %vm3567, %v3641, %v2288
  %v3662 = vsel %vm3567, %v3642, %v2289
  %v3663 = vsel %vm3567, %v3643, %v2290
  %v3664 = vsel %vm3567, %v3644, %v2291
  %v3665 = vsel %vm3567, %v3645, %v2292
  %v3666 = vsel %vm3567, %v3646, %v2293
  %v3667 = vsel %vm3567, %v3647, %v2294
  %v3668 = vsel %vm3567, %v3648, %v2295
  %v3669 = vsel %vm3567, %v3649, %v2296
  %v3670 = vsel %vm3588, %v3650, %v3094
  %v3671 = vsel %vm3588, %v3651, %v3095
  %v3672 = vsel %vm3588, %v3652, %v3096
  %v3673 = vsel %vm3588, %v3653, %v3097
  %v3674 = vsel %vm3588, %v3654, %v3098
  %v3675 = vsel %vm3588, %v3655, %v3099
  %v3676 = vsel %vm3588, %v3656, %v3100
  %v3677 = vsel %vm3588, %v3657, %v3101
  %v3678 = vsel %vm3588, %v3658, %v3102
  %v3679 = vsel %vm3588, %v3659, %v3103
  %v3680 = vsel %vm3588, %v3660, %v3104
  %v3681 = vsel %vm3588, %v3661, %v3105
  %v3682 = vsel %vm3588, %v3662, %v3106
  %v3683 = vsel %vm3588, %v3663, %v3107
  %v3684 = vsel %vm3588, %v3664, %v3108
  %v3685 = vsel %vm3588, %v3665, %v3109
  %v3686 = vsel %vm3588, %v3666, %v3110
  %v3687 = vsel %vm3588, %v3667, %v3111
  %v3688 = vsel %vm3588, %v3668, %v3112
  %v3689 = vsel %vm3588, %v3669, %v3113
  %3690 = vst.msk [vmem:[#allocation3] sm:$0xff] %vm3609, %v3670
  %3691 = vst.msk [vmem:[#allocation3 + $0x8] sm:$0xff] %vm3609, %v3671
  %3692 = vst.msk [vmem:[#allocation3 + $0x10] sm:$0xff] %vm3609, %v3672
  %3693 = vst.msk [vmem:[#allocation3 + $0x18] sm:$0xff] %vm3609, %v3673
  %3694 = vst.msk [vmem:[#allocation3 + $0x20] sm:$0xff] %vm3609, %v3674
  %3695 = vst.msk [vmem:[#allocation3 + $0x28] sm:$0xff] %vm3609, %v3675
  %3696 = vst.msk [vmem:[#allocation3 + $0x30] sm:$0xff] %vm3609, %v3676
  %3697 = vst.msk [vmem:[#allocation3 + $0x38] sm:$0xff] %vm3609, %v3677
  %3698 = vst.msk [vmem:[#allocation3 + $0x40] sm:$0xff] %vm3609, %v3678
  %3699 = vst.msk [vmem:[#allocation3 + $0x48] sm:$0xff] %vm3609, %v3679
  %3700 = vst.msk [vmem:[#allocation3 + $0x50] sm:$0xff] %vm3609, %v3680
  %3701 = vst.msk [vmem:[#allocation3 + $0x58] sm:$0xff] %vm3609, %v3681
  %3702 = vst.msk [vmem:[#allocation3 + $0x60] sm:$0xff] %vm3609, %v3682
  %3703 = vst.msk [vmem:[#allocation3 + $0x68] sm:$0xff] %vm3609, %v3683
  %3704 = vst.msk [vmem:[#allocation3 + $0x70] sm:$0xff] %vm3609, %v3684
  %3705 = vst.msk [vmem:[#allocation3 + $0x78] sm:$0xff] %vm3609, %v3685
  %3706 = vst.msk [vmem:[#allocation3 + $0x80] sm:$0xff] %vm3609, %v3686
  %3707 = vst.msk [vmem:[#allocation3 + $0x88] sm:$0xff] %vm3609, %v3687
  %3708 = vst.msk [vmem:[#allocation3 + $0x90] sm:$0xff] %vm3609, %v3688
  %3709 = vst.msk [vmem:[#allocation3 + $0x98] sm:$0xff] %vm3609, %v3689
  %vm3710 = vcmask 64512
  %v3711 = vsel %vm3710, %v1060, %v1893
  %v3712 = vsel %vm3710, %v1061, %v1894
  %v3713 = vsel %vm3710, %v1062, %v1895
  %v3714 = vsel %vm3710, %v1063, %v1896
  %v3715 = vsel %vm3710, %v1064, %v1897
  %v3716 = vsel %vm3710, %v1065, %v1898
  %v3717 = vsel %vm3710, %v1066, %v1899
  %v3718 = vsel %vm3710, %v1067, %v1900
  %v3719 = vsel %vm3710, %v1068, %v1901
  %v3720 = vsel %vm3710, %v1069, %v1902
  %v3721 = vsel %vm3710, %v1070, %v1903
  %v3722 = vsel %vm3710, %v1071, %v1904
  %v3723 = vsel %vm3710, %v1072, %v1905
  %v3724 = vsel %vm3710, %v1073, %v1906
  %v3725 = vsel %vm3710, %v1074, %v1907
  %v3726 = vsel %vm3710, %v1075, %v1908
  %v3727 = vsel %vm3710, %v1076, %v1909
  %v3728 = vsel %vm3710, %v1077, %v1910
  %v3729 = vsel %vm3710, %v1078, %v1911
  %v3730 = vsel %vm3710, %v1079, %v1912
  %vm3731 = vcmask 130048
  %v3732 = vsel %vm3731, %v3711, %v2710
  %v3733 = vsel %vm3731, %v3712, %v2711
  %v3734 = vsel %vm3731, %v3713, %v2712
  %v3735 = vsel %vm3731, %v3714, %v2713
  %v3736 = vsel %vm3731, %v3715, %v2714
  %v3737 = vsel %vm3731, %v3716, %v2715
  %v3738 = vsel %vm3731, %v3717, %v2716
  %v3739 = vsel %vm3731, %v3718, %v2717
  %v3740 = vsel %vm3731, %v3719, %v2718
  %v3741 = vsel %vm3731, %v3720, %v2719
  %v3742 = vsel %vm3731, %v3721, %v2720
  %v3743 = vsel %vm3731, %v3722, %v2721
  %v3744 = vsel %vm3731, %v3723, %v2722
  %v3745 = vsel %vm3731, %v3724, %v2723
  %v3746 = vsel %vm3731, %v3725, %v2724
  %v3747 = vsel %vm3731, %v3726, %v2725
  %v3748 = vsel %vm3731, %v3727, %v2726
  %v3749 = vsel %vm3731, %v3728, %v2727
  %v3750 = vsel %vm3731, %v3729, %v2728
  %v3751 = vsel %vm3731, %v3730, %v2729
  %vm3752 = vcmask 195584
  %v3753 = vsel %vm3752, %v3732, %v3527
  %v3754 = vsel %vm3752, %v3733, %v3528
  %v3755 = vsel %vm3752, %v3734, %v3529
  %v3756 = vsel %vm3752, %v3735, %v3530
  %v3757 = vsel %vm3752, %v3736, %v3531
  %v3758 = vsel %vm3752, %v3737, %v3532
  %v3759 = vsel %vm3752, %v3738, %v3533
  %v3760 = vsel %vm3752, %v3739, %v3534
  %v3761 = vsel %vm3752, %v3740, %v3535
  %v3762 = vsel %vm3752, %v3741, %v3536
  %v3763 = vsel %vm3752, %v3742, %v3537
  %v3764 = vsel %vm3752, %v3743, %v3538
  %v3765 = vsel %vm3752, %v3744, %v3539
  %v3766 = vsel %vm3752, %v3745, %v3540
  %v3767 = vsel %vm3752, %v3746, %v3541
  %v3768 = vsel %vm3752, %v3747, %v3542
  %v3769 = vsel %vm3752, %v3748, %v3543
  %v3770 = vsel %vm3752, %v3749, %v3544
  %v3771 = vsel %vm3752, %v3750, %v3545
  %v3772 = vsel %vm3752, %v3751, %v3546
  %vm3773 = vcmask 261120
  %3774 = vst.msk [vmem:[#allocation4] sm:$0xff] %vm3773, %v3753
  %3775 = vst.msk [vmem:[#allocation4 + $0x8] sm:$0xff] %vm3773, %v3754
  %3776 = vst.msk [vmem:[#allocation4 + $0x10] sm:$0xff] %vm3773, %v3755
  %3777 = vst.msk [vmem:[#allocation4 + $0x18] sm:$0xff] %vm3773, %v3756
  %3778 = vst.msk [vmem:[#allocation4 + $0x20] sm:$0xff] %vm3773, %v3757
  %3779 = vst.msk [vmem:[#allocation4 + $0x28] sm:$0xff] %vm3773, %v3758
  %3780 = vst.msk [vmem:[#allocation4 + $0x30] sm:$0xff] %vm3773, %v3759
  %3781 = vst.msk [vmem:[#allocation4 + $0x38] sm:$0xff] %vm3773, %v3760
  %3782 = vst.msk [vmem:[#allocation4 + $0x40] sm:$0xff] %vm3773, %v3761
  %3783 = vst.msk [vmem:[#allocation4 + $0x48] sm:$0xff] %vm3773, %v3762
  %3784 = vst.msk [vmem:[#allocation4 + $0x50] sm:$0xff] %vm3773, %v3763
  %3785 = vst.msk [vmem:[#allocation4 + $0x58] sm:$0xff] %vm3773, %v3764
  %3786 = vst.msk [vmem:[#allocation4 + $0x60] sm:$0xff] %vm3773, %v3765
  %3787 = vst.msk [vmem:[#allocation4 + $0x68] sm:$0xff] %vm3773, %v3766
  %3788 = vst.msk [vmem:[#allocation4 + $0x70] sm:$0xff] %vm3773, %v3767
  %3789 = vst.msk [vmem:[#allocation4 + $0x78] sm:$0xff] %vm3773, %v3768
  %3790 = vst.msk [vmem:[#allocation4 + $0x80] sm:$0xff] %vm3773, %v3769
  %3791 = vst.msk [vmem:[#allocation4 + $0x88] sm:$0xff] %vm3773, %v3770
  %3792 = vst.msk [vmem:[#allocation4 + $0x90] sm:$0xff] %vm3773, %v3771
  %3793 = vst.msk [vmem:[#allocation4 + $0x98] sm:$0xff] %vm3773, %v3772
  // Predicated region
  $region54: #{allset_transformer_forward.4} parent=0 // pred_check
    %p3794 = pneg %p41
  $region55: #{allset_transformer_forward.4} parent=0 // pred_check_branch
    %3796 = sbr.rel (%p3794) target = $region57
  $region56: #{allset_transformer_forward.4} parent=0 // pred_region
    %v3797 = vld [vmem:[#allocation5] sm:$0xff]
    %v3798 = vld [vmem:[#allocation5 + $0x8] sm:$0xff]
    %v3799 = vld [vmem:[#allocation5 + $0x10] sm:$0xff]
    %v3800 = vld [vmem:[#allocation5 + $0x18] sm:$0xff]
    %v3801 = vld [vmem:[#allocation5 + $0x20] sm:$0xff]
    %v3802 = vld [vmem:[#allocation5 + $0x28] sm:$0xff]
    %v3803 = vld [vmem:[#allocation5 + $0x30] sm:$0xff]
    %v3804 = vld [vmem:[#allocation5 + $0x38] sm:$0xff]
    %v3805 = vld [vmem:[#allocation5 + $0x40] sm:$0xff]
    %v3806 = vld [vmem:[#allocation5 + $0x48] sm:$0xff]
    %v3807 = vld [vmem:[#allocation5 + $0x50] sm:$0xff]
    %v3808 = vld [vmem:[#allocation5 + $0x58] sm:$0xff]
    %v3809 = vld [vmem:[#allocation5 + $0x60] sm:$0xff]
    %v3810 = vld [vmem:[#allocation5 + $0x68] sm:$0xff]
    %v3811 = vld [vmem:[#allocation5 + $0x70] sm:$0xff]
    %v3812 = vld [vmem:[#allocation5 + $0x78] sm:$0xff]
    %v3813 = vld [vmem:[#allocation5 + $0x80] sm:$0xff]
    %v3814 = vld [vmem:[#allocation5 + $0x88] sm:$0xff]
    %v3815 = vld [vmem:[#allocation5 + $0x90] sm:$0xff]
    %v3816 = vld [vmem:[#allocation5 + $0x98] sm:$0xff]
    %vm3817 = vcmp.gt.f32.partialorder %v3797, 0.0
    %vm3818 = vcmp.gt.f32.partialorder %v3798, 0.0
    %vm3819 = vcmp.gt.f32.partialorder %v3799, 0.0
    %vm3820 = vcmp.gt.f32.partialorder %v3800, 0.0
    %vm3821 = vcmp.gt.f32.partialorder %v3801, 0.0
    %vm3822 = vcmp.gt.f32.partialorder %v3802, 0.0
    %vm3823 = vcmp.gt.f32.partialorder %v3803, 0.0
    %vm3824 = vcmp.gt.f32.partialorder %v3804, 0.0
    %vm3825 = vcmp.gt.f32.partialorder %v3805, 0.0
    %vm3826 = vcmp.gt.f32.partialorder %v3806, 0.0
    %vm3827 = vcmp.gt.f32.partialorder %v3807, 0.0
    %vm3828 = vcmp.gt.f32.partialorder %v3808, 0.0
    %vm3829 = vcmp.gt.f32.partialorder %v3809, 0.0
    %vm3830 = vcmp.gt.f32.partialorder %v3810, 0.0
    %vm3831 = vcmp.gt.f32.partialorder %v3811, 0.0
    %vm3832 = vcmp.gt.f32.partialorder %v3812, 0.0
    %vm3833 = vcmp.gt.f32.partialorder %v3813, 0.0
    %vm3834 = vcmp.gt.f32.partialorder %v3814, 0.0
    %vm3835 = vcmp.gt.f32.partialorder %v3815, 0.0
    %vm3836 = vcmp.gt.f32.partialorder %v3816, 0.0
    %v3837 = vsel %vm3817, 1, 0
    %v3838 = vsel %vm3818, 1, 0
    %v3839 = vsel %vm3819, 1, 0
    %v3840 = vsel %vm3820, 1, 0
    %v3841 = vsel %vm3821, 1, 0
    %v3842 = vsel %vm3822, 1, 0
    %v3843 = vsel %vm3823, 1, 0
    %v3844 = vsel %vm3824, 1, 0
    %v3845 = vsel %vm3825, 1, 0
    %v3846 = vsel %vm3826, 1, 0
    %v3847 = vsel %vm3827, 1, 0
    %v3848 = vsel %vm3828, 1, 0
    %v3849 = vsel %vm3829, 1, 0
    %v3850 = vsel %vm3830, 1, 0
    %v3851 = vsel %vm3831, 1, 0
    %v3852 = vsel %vm3832, 1, 0
    %v3853 = vsel %vm3833, 1, 0
    %v3854 = vsel %vm3834, 1, 0
    %v3855 = vsel %vm3835, 1, 0
    %v3856 = vsel %vm3836, 1, 0
    %v3857 = vcvt.s32.f32 %v3837
    %v3858 = vcvt.s32.f32 %v3838
    %v3859 = vcvt.s32.f32 %v3839
    %v3860 = vcvt.s32.f32 %v3840
    %v3861 = vcvt.s32.f32 %v3841
    %v3862 = vcvt.s32.f32 %v3842
    %v3863 = vcvt.s32.f32 %v3843
    %v3864 = vcvt.s32.f32 %v3844
    %v3865 = vcvt.s32.f32 %v3845
    %v3866 = vcvt.s32.f32 %v3846
    %v3867 = vcvt.s32.f32 %v3847
    %v3868 = vcvt.s32.f32 %v3848
    %v3869 = vcvt.s32.f32 %v3849
    %v3870 = vcvt.s32.f32 %v3850
    %v3871 = vcvt.s32.f32 %v3851
    %v3872 = vcvt.s32.f32 %v3852
    %v3873 = vcvt.s32.f32 %v3853
    %v3874 = vcvt.s32.f32 %v3854
    %v3875 = vcvt.s32.f32 %v3855
    %v3876 = vcvt.s32.f32 %v3856
    %v3877 = vrcp.pop %v755
    %v3878 = vrcp.pop %v756
    %v3879 = vrcp.pop %v757
    %v3880 = vrcp.pop %v758
    %v3881 = vrcp.pop %v759
    %v3882 = vrcp.pop %v760
    %v3883 = vrcp.pop %v761
    %v3884 = vrcp.pop %v762
    %v3885 = vrcp.pop %v763
    %v3886 = vrcp.pop %v764
    %v3887 = vrcp.pop %v765
    %v3888 = vrcp.pop %v766
    %v3889 = vrcp.pop %v767
    %v3890 = vrcp.pop %v768
    %v3891 = vrcp.pop %v769
    %v3892 = vrcp.pop %v770
    %v3893 = vrcp.pop %v771
    %v3894 = vrcp.pop %v772
    %v3895 = vrcp.pop %v773
    %v3896 = vrcp.pop %v774
    %3898 = vset.pattern.permute.xlu0 0
    %3899 = vperm.xlu0 %3898, %v3877
    %v3900 = vpop.permute.xlu0 %3899
    %3903 = vset.pattern.permute.xlu0 0
    %3904 = vperm.xlu0 %3903, %v3878
    %v3905 = vpop.permute.xlu0 %3904
    %3908 = vset.pattern.permute.xlu0 0
    %3909 = vperm.xlu0 %3908, %v3879
    %v3910 = vpop.permute.xlu0 %3909
    %3913 = vset.pattern.permute.xlu0 0
    %3914 = vperm.xlu0 %3913, %v3880
    %v3915 = vpop.permute.xlu0 %3914
    %3918 = vset.pattern.permute.xlu0 0
    %3919 = vperm.xlu0 %3918, %v3881
    %v3920 = vpop.permute.xlu0 %3919
    %3923 = vset.pattern.permute.xlu0 0
    %3924 = vperm.xlu0 %3923, %v3882
    %v3925 = vpop.permute.xlu0 %3924
    %3928 = vset.pattern.permute.xlu0 0
    %3929 = vperm.xlu0 %3928, %v3883
    %v3930 = vpop.permute.xlu0 %3929
    %3933 = vset.pattern.permute.xlu0 0
    %3934 = vperm.xlu0 %3933, %v3884
    %v3935 = vpop.permute.xlu0 %3934
    %3938 = vset.pattern.permute.xlu0 0
    %3939 = vperm.xlu0 %3938, %v3885
    %v3940 = vpop.permute.xlu0 %3939
    %3943 = vset.pattern.permute.xlu0 0
    %3944 = vperm.xlu0 %3943, %v3886
    %v3945 = vpop.permute.xlu0 %3944
    %3948 = vset.pattern.permute.xlu0 0
    %3949 = vperm.xlu0 %3948, %v3887
    %v3950 = vpop.permute.xlu0 %3949
    %3953 = vset.pattern.permute.xlu0 0
    %3954 = vperm.xlu0 %3953, %v3888
    %v3955 = vpop.permute.xlu0 %3954
    %3958 = vset.pattern.permute.xlu0 0
    %3959 = vperm.xlu0 %3958, %v3889
    %v3960 = vpop.permute.xlu0 %3959
    %3963 = vset.pattern.permute.xlu0 0
    %3964 = vperm.xlu0 %3963, %v3890
    %v3965 = vpop.permute.xlu0 %3964
    %3968 = vset.pattern.permute.xlu0 0
    %3969 = vperm.xlu0 %3968, %v3891
    %v3970 = vpop.permute.xlu0 %3969
    %3973 = vset.pattern.permute.xlu0 0
    %3974 = vperm.xlu0 %3973, %v3892
    %v3975 = vpop.permute.xlu0 %3974
    %3978 = vset.pattern.permute.xlu0 0
    %3979 = vperm.xlu0 %3978, %v3893
    %v3980 = vpop.permute.xlu0 %3979
    %3983 = vset.pattern.permute.xlu0 0
    %3984 = vperm.xlu0 %3983, %v3894
    %v3985 = vpop.permute.xlu0 %3984
    %3988 = vset.pattern.permute.xlu0 0
    %3989 = vperm.xlu0 %3988, %v3895
    %v3990 = vpop.permute.xlu0 %3989
    %3993 = vset.pattern.permute.xlu0 0
    %3994 = vperm.xlu0 %3993, %v3896
    %v3995 = vpop.permute.xlu0 %3994
    %v3997 = vmul.f32 %v1060, %v3900
    %v3998 = vmul.f32 %v1061, %v3905
    %v3999 = vmul.f32 %v1062, %v3910
    %v4000 = vmul.f32 %v1063, %v3915
    %v4001 = vmul.f32 %v1064, %v3920
    %v4002 = vmul.f32 %v1065, %v3925
    %v4003 = vmul.f32 %v1066, %v3930
    %v4004 = vmul.f32 %v1067, %v3935
    %v4005 = vmul.f32 %v1068, %v3940
    %v4006 = vmul.f32 %v1069, %v3945
    %v4007 = vmul.f32 %v1070, %v3950
    %v4008 = vmul.f32 %v1071, %v3955
    %v4009 = vmul.f32 %v1072, %v3960
    %v4010 = vmul.f32 %v1073, %v3965
    %v4011 = vmul.f32 %v1074, %v3970
    %v4012 = vmul.f32 %v1075, %v3975
    %v4013 = vmul.f32 %v1076, %v3980
    %v4014 = vmul.f32 %v1077, %v3985
    %v4015 = vmul.f32 %v1078, %v3990
    %v4016 = vmul.f32 %v1079, %v3995
    %v4017 = vrcp.pop %v1444
    %v4018 = vrcp.pop %v1445
    %v4019 = vrcp.pop %v1446
    %v4020 = vrcp.pop %v1447
    %v4021 = vrcp.pop %v1448
    %v4022 = vrcp.pop %v1449
    %v4023 = vrcp.pop %v1450
    %v4024 = vrcp.pop %v1451
    %v4025 = vrcp.pop %v1452
    %v4026 = vrcp.pop %v1453
    %v4027 = vrcp.pop %v1454
    %v4028 = vrcp.pop %v1455
    %v4029 = vrcp.pop %v1456
    %v4030 = vrcp.pop %v1457
    %v4031 = vrcp.pop %v1458
    %v4032 = vrcp.pop %v1459
    %v4033 = vrcp.pop %v1460
    %v4034 = vrcp.pop %v1461
    %v4035 = vrcp.pop %v1462
    %v4036 = vrcp.pop %v1463
    %4038 = vset.pattern.permute.xlu0 1
    %4039 = vperm.xlu0 %4038, %v4017
    %v4040 = vpop.permute.xlu0 %4039
    %4043 = vset.pattern.permute.xlu0 1
    %4044 = vperm.xlu0 %4043, %v4018
    %v4045 = vpop.permute.xlu0 %4044
    %4048 = vset.pattern.permute.xlu0 1
    %4049 = vperm.xlu0 %4048, %v4019
    %v4050 = vpop.permute.xlu0 %4049
    %4053 = vset.pattern.permute.xlu0 1
    %4054 = vperm.xlu0 %4053, %v4020
    %v4055 = vpop.permute.xlu0 %4054
    %4058 = vset.pattern.permute.xlu0 1
    %4059 = vperm.xlu0 %4058, %v4021
    %v4060 = vpop.permute.xlu0 %4059
    %4063 = vset.pattern.permute.xlu0 1
    %4064 = vperm.xlu0 %4063, %v4022
    %v4065 = vpop.permute.xlu0 %4064
    %4068 = vset.pattern.permute.xlu0 1
    %4069 = vperm.xlu0 %4068, %v4023
    %v4070 = vpop.permute.xlu0 %4069
    %4073 = vset.pattern.permute.xlu0 1
    %4074 = vperm.xlu0 %4073, %v4024
    %v4075 = vpop.permute.xlu0 %4074
    %4078 = vset.pattern.permute.xlu0 1
    %4079 = vperm.xlu0 %4078, %v4025
    %v4080 = vpop.permute.xlu0 %4079
    %4083 = vset.pattern.permute.xlu0 1
    %4084 = vperm.xlu0 %4083, %v4026
    %v4085 = vpop.permute.xlu0 %4084
    %4088 = vset.pattern.permute.xlu0 1
    %4089 = vperm.xlu0 %4088, %v4027
    %v4090 = vpop.permute.xlu0 %4089
    %4093 = vset.pattern.permute.xlu0 1
    %4094 = vperm.xlu0 %4093, %v4028
    %v4095 = vpop.permute.xlu0 %4094
    %4098 = vset.pattern.permute.xlu0 1
    %4099 = vperm.xlu0 %4098, %v4029
    %v4100 = vpop.permute.xlu0 %4099
    %4103 = vset.pattern.permute.xlu0 1
    %4104 = vperm.xlu0 %4103, %v4030
    %v4105 = vpop.permute.xlu0 %4104
    %4108 = vset.pattern.permute.xlu0 1
    %4109 = vperm.xlu0 %4108, %v4031
    %v4110 = vpop.permute.xlu0 %4109
    %4113 = vset.pattern.permute.xlu0 1
    %4114 = vperm.xlu0 %4113, %v4032
    %v4115 = vpop.permute.xlu0 %4114
    %4118 = vset.pattern.permute.xlu0 1
    %4119 = vperm.xlu0 %4118, %v4033
    %v4120 = vpop.permute.xlu0 %4119
    %4123 = vset.pattern.permute.xlu0 1
    %4124 = vperm.xlu0 %4123, %v4034
    %v4125 = vpop.permute.xlu0 %4124
    %4128 = vset.pattern.permute.xlu0 1
    %4129 = vperm.xlu0 %4128, %v4035
    %v4130 = vpop.permute.xlu0 %4129
    %4133 = vset.pattern.permute.xlu0 1
    %4134 = vperm.xlu0 %4133, %v4036
    %v4135 = vpop.permute.xlu0 %4134
    %v4137 = vmul.f32 %v1893, %v4040
    %v4138 = vmul.f32 %v1894, %v4045
    %v4139 = vmul.f32 %v1895, %v4050
    %v4140 = vmul.f32 %v1896, %v4055
    %v4141 = vmul.f32 %v1897, %v4060
    %v4142 = vmul.f32 %v1898, %v4065
    %v4143 = vmul.f32 %v1899, %v4070
    %v4144 = vmul.f32 %v1900, %v4075
    %v4145 = vmul.f32 %v1901, %v4080
    %v4146 = vmul.f32 %v1902, %v4085
    %v4147 = vmul.f32 %v1903, %v4090
    %v4148 = vmul.f32 %v1904, %v4095
    %v4149 = vmul.f32 %v1905, %v4100
    %v4150 = vmul.f32 %v1906, %v4105
    %v4151 = vmul.f32 %v1907, %v4110
    %v4152 = vmul.f32 %v1908, %v4115
    %v4153 = vmul.f32 %v1909, %v4120
    %v4154 = vmul.f32 %v1910, %v4125
    %v4155 = vmul.f32 %v1911, %v4130
    %v4156 = vmul.f32 %v1912, %v4135
    %v4157 = vrcp.pop %v2277
    %v4158 = vrcp.pop %v2278
    %v4159 = vrcp.pop %v2279
    %v4160 = vrcp.pop %v2280
    %v4161 = vrcp.pop %v2281
    %v4162 = vrcp.pop %v2282
    %v4163 = vrcp.pop %v2283
    %v4164 = vrcp.pop %v2284
    %v4165 = vrcp.pop %v2285
    %v4166 = vrcp.pop %v2286
    %v4167 = vrcp.pop %v2287
    %v4168 = vrcp.pop %v2288
    %v4169 = vrcp.pop %v2289
    %v4170 = vrcp.pop %v2290
    %v4171 = vrcp.pop %v2291
    %v4172 = vrcp.pop %v2292
    %v4173 = vrcp.pop %v2293
    %v4174 = vrcp.pop %v2294
    %v4175 = vrcp.pop %v2295
    %v4176 = vrcp.pop %v2296
    %4178 = vset.pattern.permute.xlu0 2
    %4179 = vperm.xlu0 %4178, %v4157
    %v4180 = vpop.permute.xlu0 %4179
    %4183 = vset.pattern.permute.xlu0 2
    %4184 = vperm.xlu0 %4183, %v4158
    %v4185 = vpop.permute.xlu0 %4184
    %4188 = vset.pattern.permute.xlu0 2
    %4189 = vperm.xlu0 %4188, %v4159
    %v4190 = vpop.permute.xlu0 %4189
    %4193 = vset.pattern.permute.xlu0 2
    %4194 = vperm.xlu0 %4193, %v4160
    %v4195 = vpop.permute.xlu0 %4194
    %4198 = vset.pattern.permute.xlu0 2
    %4199 = vperm.xlu0 %4198, %v4161
    %v4200 = vpop.permute.xlu0 %4199
    %4203 = vset.pattern.permute.xlu0 2
    %4204 = vperm.xlu0 %4203, %v4162
    %v4205 = vpop.permute.xlu0 %4204
    %4208 = vset.pattern.permute.xlu0 2
    %4209 = vperm.xlu0 %4208, %v4163
    %v4210 = vpop.permute.xlu0 %4209
    %4213 = vset.pattern.permute.xlu0 2
    %4214 = vperm.xlu0 %4213, %v4164
    %v4215 = vpop.permute.xlu0 %4214
    %4218 = vset.pattern.permute.xlu0 2
    %4219 = vperm.xlu0 %4218, %v4165
    %v4220 = vpop.permute.xlu0 %4219
    %4223 = vset.pattern.permute.xlu0 2
    %4224 = vperm.xlu0 %4223, %v4166
    %v4225 = vpop.permute.xlu0 %4224
    %4228 = vset.pattern.permute.xlu0 2
    %4229 = vperm.xlu0 %4228, %v4167
    %v4230 = vpop.permute.xlu0 %4229
    %4233 = vset.pattern.permute.xlu0 2
    %4234 = vperm.xlu0 %4233, %v4168
    %v4235 = vpop.permute.xlu0 %4234
    %4238 = vset.pattern.permute.xlu0 2
    %4239 = vperm.xlu0 %4238, %v4169
    %v4240 = vpop.permute.xlu0 %4239
    %4243 = vset.pattern.permute.xlu0 2
    %4244 = vperm.xlu0 %4243, %v4170
    %v4245 = vpop.permute.xlu0 %4244
    %4248 = vset.pattern.permute.xlu0 2
    %4249 = vperm.xlu0 %4248, %v4171
    %v4250 = vpop.permute.xlu0 %4249
    %4253 = vset.pattern.permute.xlu0 2
    %4254 = vperm.xlu0 %4253, %v4172
    %v4255 = vpop.permute.xlu0 %4254
    %4258 = vset.pattern.permute.xlu0 2
    %4259 = vperm.xlu0 %4258, %v4173
    %v4260 = vpop.permute.xlu0 %4259
    %4263 = vset.pattern.permute.xlu0 2
    %4264 = vperm.xlu0 %4263, %v4174
    %v4265 = vpop.permute.xlu0 %4264
    %4268 = vset.pattern.permute.xlu0 2
    %4269 = vperm.xlu0 %4268, %v4175
    %v4270 = vpop.permute.xlu0 %4269
    %4273 = vset.pattern.permute.xlu0 2
    %4274 = vperm.xlu0 %4273, %v4176
    %v4275 = vpop.permute.xlu0 %4274
    %v4277 = vmul.f32 %v2710, %v4180
    %v4278 = vmul.f32 %v2711, %v4185
    %v4279 = vmul.f32 %v2712, %v4190
    %v4280 = vmul.f32 %v2713, %v4195
    %v4281 = vmul.f32 %v2714, %v4200
    %v4282 = vmul.f32 %v2715, %v4205
    %v4283 = vmul.f32 %v2716, %v4210
    %v4284 = vmul.f32 %v2717, %v4215
    %v4285 = vmul.f32 %v2718, %v4220
    %v4286 = vmul.f32 %v2719, %v4225
    %v4287 = vmul.f32 %v2720, %v4230
    %v4288 = vmul.f32 %v2721, %v4235
    %v4289 = vmul.f32 %v2722, %v4240
    %v4290 = vmul.f32 %v2723, %v4245
    %v4291 = vmul.f32 %v2724, %v4250
    %v4292 = vmul.f32 %v2725, %v4255
    %v4293 = vmul.f32 %v2726, %v4260
    %v4294 = vmul.f32 %v2727, %v4265
    %v4295 = vmul.f32 %v2728, %v4270
    %v4296 = vmul.f32 %v2729, %v4275
    %v4297 = vrcp.pop %v3094
    %v4298 = vrcp.pop %v3095
    %v4299 = vrcp.pop %v3096
    %v4300 = vrcp.pop %v3097
    %v4301 = vrcp.pop %v3098
    %v4302 = vrcp.pop %v3099
    %v4303 = vrcp.pop %v3100
    %v4304 = vrcp.pop %v3101
    %v4305 = vrcp.pop %v3102
    %v4306 = vrcp.pop %v3103
    %v4307 = vrcp.pop %v3104
    %v4308 = vrcp.pop %v3105
    %v4309 = vrcp.pop %v3106
    %v4310 = vrcp.pop %v3107
    %v4311 = vrcp.pop %v3108
    %v4312 = vrcp.pop %v3109
    %v4313 = vrcp.pop %v3110
    %v4314 = vrcp.pop %v3111
    %v4315 = vrcp.pop %v3112
    %v4316 = vrcp.pop %v3113
    %4318 = vset.pattern.permute.xlu0 3
    %4319 = vperm.xlu0 %4318, %v4297
    %v4320 = vpop.permute.xlu0 %4319
    %4323 = vset.pattern.permute.xlu0 3
    %4324 = vperm.xlu0 %4323, %v4298
    %v4325 = vpop.permute.xlu0 %4324
    %4328 = vset.pattern.permute.xlu0 3
    %4329 = vperm.xlu0 %4328, %v4299
    %v4330 = vpop.permute.xlu0 %4329
    %4333 = vset.pattern.permute.xlu0 3
    %4334 = vperm.xlu0 %4333, %v4300
    %v4335 = vpop.permute.xlu0 %4334
    %4338 = vset.pattern.permute.xlu0 3
    %4339 = vperm.xlu0 %4338, %v4301
    %v4340 = vpop.permute.xlu0 %4339
    %4343 = vset.pattern.permute.xlu0 3
    %4344 = vperm.xlu0 %4343, %v4302
    %v4345 = vpop.permute.xlu0 %4344
    %4348 = vset.pattern.permute.xlu0 3
    %4349 = vperm.xlu0 %4348, %v4303
    %v4350 = vpop.permute.xlu0 %4349
    %4353 = vset.pattern.permute.xlu0 3
    %4354 = vperm.xlu0 %4353, %v4304
    %v4355 = vpop.permute.xlu0 %4354
    %4358 = vset.pattern.permute.xlu0 3
    %4359 = vperm.xlu0 %4358, %v4305
    %v4360 = vpop.permute.xlu0 %4359
    %4363 = vset.pattern.permute.xlu0 3
    %4364 = vperm.xlu0 %4363, %v4306
    %v4365 = vpop.permute.xlu0 %4364
    %4368 = vset.pattern.permute.xlu0 3
    %4369 = vperm.xlu0 %4368, %v4307
    %v4370 = vpop.permute.xlu0 %4369
    %4373 = vset.pattern.permute.xlu0 3
    %4374 = vperm.xlu0 %4373, %v4308
    %v4375 = vpop.permute.xlu0 %4374
    %4378 = vset.pattern.permute.xlu0 3
    %4379 = vperm.xlu0 %4378, %v4309
    %v4380 = vpop.permute.xlu0 %4379
    %4383 = vset.pattern.permute.xlu0 3
    %4384 = vperm.xlu0 %4383, %v4310
    %v4385 = vpop.permute.xlu0 %4384
    %4388 = vset.pattern.permute.xlu0 3
    %4389 = vperm.xlu0 %4388, %v4311
    %v4390 = vpop.permute.xlu0 %4389
    %4393 = vset.pattern.permute.xlu0 3
    %4394 = vperm.xlu0 %4393, %v4312
    %v4395 = vpop.permute.xlu0 %4394
    %4398 = vset.pattern.permute.xlu0 3
    %4399 = vperm.xlu0 %4398, %v4313
    %v4400 = vpop.permute.xlu0 %4399
    %4403 = vset.pattern.permute.xlu0 3
    %4404 = vperm.xlu0 %4403, %v4314
    %v4405 = vpop.permute.xlu0 %4404
    %4408 = vset.pattern.permute.xlu0 3
    %4409 = vperm.xlu0 %4408, %v4315
    %v4410 = vpop.permute.xlu0 %4409
    %4413 = vset.pattern.permute.xlu0 3
    %4414 = vperm.xlu0 %4413, %v4316
    %v4415 = vpop.permute.xlu0 %4414
    %v4417 = vmul.f32 %v3527, %v4320
    %v4418 = vmul.f32 %v3528, %v4325
    %v4419 = vmul.f32 %v3529, %v4330
    %v4420 = vmul.f32 %v3530, %v4335
    %v4421 = vmul.f32 %v3531, %v4340
    %v4422 = vmul.f32 %v3532, %v4345
    %v4423 = vmul.f32 %v3533, %v4350
    %v4424 = vmul.f32 %v3534, %v4355
    %v4425 = vmul.f32 %v3535, %v4360
    %v4426 = vmul.f32 %v3536, %v4365
    %v4427 = vmul.f32 %v3537, %v4370
    %v4428 = vmul.f32 %v3538, %v4375
    %v4429 = vmul.f32 %v3539, %v4380
    %v4430 = vmul.f32 %v3540, %v4385
    %v4431 = vmul.f32 %v3541, %v4390
    %v4432 = vmul.f32 %v3542, %v4395
    %v4433 = vmul.f32 %v3543, %v4400
    %v4434 = vmul.f32 %v3544, %v4405
    %v4435 = vmul.f32 %v3545, %v4410
    %v4436 = vmul.f32 %v3546, %v4415
    %v4437 = vsel %vm3710, %v3997, %v4137
    %v4438 = vsel %vm3710, %v3998, %v4138
    %v4439 = vsel %vm3710, %v3999, %v4139
    %v4440 = vsel %vm3710, %v4000, %v4140
    %v4441 = vsel %vm3710, %v4001, %v4141
    %v4442 = vsel %vm3710, %v4002, %v4142
    %v4443 = vsel %vm3710, %v4003, %v4143
    %v4444 = vsel %vm3710, %v4004, %v4144
    %v4445 = vsel %vm3710, %v4005, %v4145
    %v4446 = vsel %vm3710, %v4006, %v4146
    %v4447 = vsel %vm3710, %v4007, %v4147
    %v4448 = vsel %vm3710, %v4008, %v4148
    %v4449 = vsel %vm3710, %v4009, %v4149
    %v4450 = vsel %vm3710, %v4010, %v4150
    %v4451 = vsel %vm3710, %v4011, %v4151
    %v4452 = vsel %vm3710, %v4012, %v4152
    %v4453 = vsel %vm3710, %v4013, %v4153
    %v4454 = vsel %vm3710, %v4014, %v4154
    %v4455 = vsel %vm3710, %v4015, %v4155
    %v4456 = vsel %vm3710, %v4016, %v4156
    %v4457 = vsel %vm3731, %v4437, %v4277
    %v4458 = vsel %vm3731, %v4438, %v4278
    %v4459 = vsel %vm3731, %v4439, %v4279
    %v4460 = vsel %vm3731, %v4440, %v4280
    %v4461 = vsel %vm3731, %v4441, %v4281
    %v4462 = vsel %vm3731, %v4442, %v4282
    %v4463 = vsel %vm3731, %v4443, %v4283
    %v4464 = vsel %vm3731, %v4444, %v4284
    %v4465 = vsel %vm3731, %v4445, %v4285
    %v4466 = vsel %vm3731, %v4446, %v4286
    %v4467 = vsel %vm3731, %v4447, %v4287
    %v4468 = vsel %vm3731, %v4448, %v4288
    %v4469 = vsel %vm3731, %v4449, %v4289
    %v4470 = vsel %vm3731, %v4450, %v4290
    %v4471 = vsel %vm3731, %v4451, %v4291
    %v4472 = vsel %vm3731, %v4452, %v4292
    %v4473 = vsel %vm3731, %v4453, %v4293
    %v4474 = vsel %vm3731, %v4454, %v4294
    %v4475 = vsel %vm3731, %v4455, %v4295
    %v4476 = vsel %vm3731, %v4456, %v4296
    %v4477 = vsel %vm3752, %v4457, %v4417
    %v4478 = vsel %vm3752, %v4458, %v4418
    %v4479 = vsel %vm3752, %v4459, %v4419
    %v4480 = vsel %vm3752, %v4460, %v4420
    %v4481 = vsel %vm3752, %v4461, %v4421
    %v4482 = vsel %vm3752, %v4462, %v4422
    %v4483 = vsel %vm3752, %v4463, %v4423
    %v4484 = vsel %vm3752, %v4464, %v4424
    %v4485 = vsel %vm3752, %v4465, %v4425
    %v4486 = vsel %vm3752, %v4466, %v4426
    %v4487 = vsel %vm3752, %v4467, %v4427
    %v4488 = vsel %vm3752, %v4468, %v4428
    %v4489 = vsel %vm3752, %v4469, %v4429
    %v4490 = vsel %vm3752, %v4470, %v4430
    %v4491 = vsel %vm3752, %v4471, %v4431
    %v4492 = vsel %vm3752, %v4472, %v4432
    %v4493 = vsel %vm3752, %v4473, %v4433
    %v4494 = vsel %vm3752, %v4474, %v4434
    %v4495 = vsel %vm3752, %v4475, %v4435
    %v4496 = vsel %vm3752, %v4476, %v4436
    %4498 = vset.pattern.permute.xlu0 0
    %4499 = vperm.xlu0 %4498, %v3857
    %v4500 = vpop.permute.xlu0 %4499
    %4503 = vset.pattern.permute.xlu0 0
    %4504 = vperm.xlu0 %4503, %v3858
    %v4505 = vpop.permute.xlu0 %4504
    %4508 = vset.pattern.permute.xlu0 0
    %4509 = vperm.xlu0 %4508, %v3859
    %v4510 = vpop.permute.xlu0 %4509
    %4513 = vset.pattern.permute.xlu0 0
    %4514 = vperm.xlu0 %4513, %v3860
    %v4515 = vpop.permute.xlu0 %4514
    %4518 = vset.pattern.permute.xlu0 0
    %4519 = vperm.xlu0 %4518, %v3861
    %v4520 = vpop.permute.xlu0 %4519
    %4523 = vset.pattern.permute.xlu0 0
    %4524 = vperm.xlu0 %4523, %v3862
    %v4525 = vpop.permute.xlu0 %4524
    %4528 = vset.pattern.permute.xlu0 0
    %4529 = vperm.xlu0 %4528, %v3863
    %v4530 = vpop.permute.xlu0 %4529
    %4533 = vset.pattern.permute.xlu0 0
    %4534 = vperm.xlu0 %4533, %v3864
    %v4535 = vpop.permute.xlu0 %4534
    %4538 = vset.pattern.permute.xlu0 0
    %4539 = vperm.xlu0 %4538, %v3865
    %v4540 = vpop.permute.xlu0 %4539
    %4543 = vset.pattern.permute.xlu0 0
    %4544 = vperm.xlu0 %4543, %v3866
    %v4545 = vpop.permute.xlu0 %4544
    %4548 = vset.pattern.permute.xlu0 0
    %4549 = vperm.xlu0 %4548, %v3867
    %v4550 = vpop.permute.xlu0 %4549
    %4553 = vset.pattern.permute.xlu0 0
    %4554 = vperm.xlu0 %4553, %v3868
    %v4555 = vpop.permute.xlu0 %4554
    %4558 = vset.pattern.permute.xlu0 0
    %4559 = vperm.xlu0 %4558, %v3869
    %v4560 = vpop.permute.xlu0 %4559
    %4563 = vset.pattern.permute.xlu0 0
    %4564 = vperm.xlu0 %4563, %v3870
    %v4565 = vpop.permute.xlu0 %4564
    %4568 = vset.pattern.permute.xlu0 0
    %4569 = vperm.xlu0 %4568, %v3871
    %v4570 = vpop.permute.xlu0 %4569
    %4573 = vset.pattern.permute.xlu0 0
    %4574 = vperm.xlu0 %4573, %v3872
    %v4575 = vpop.permute.xlu0 %4574
    %4578 = vset.pattern.permute.xlu0 0
    %4579 = vperm.xlu0 %4578, %v3873
    %v4580 = vpop.permute.xlu0 %4579
    %4583 = vset.pattern.permute.xlu0 0
    %4584 = vperm.xlu0 %4583, %v3874
    %v4585 = vpop.permute.xlu0 %4584
    %4588 = vset.pattern.permute.xlu0 0
    %4589 = vperm.xlu0 %4588, %v3875
    %v4590 = vpop.permute.xlu0 %4589
    %4593 = vset.pattern.permute.xlu0 0
    %4594 = vperm.xlu0 %4593, %v3876
    %v4595 = vpop.permute.xlu0 %4594
    %v4597 = vmul.f32 %v4477, %v4500
    %v4598 = vmul.f32 %v4478, %v4505
    %v4599 = vmul.f32 %v4479, %v4510
    %v4600 = vmul.f32 %v4480, %v4515
    %v4601 = vmul.f32 %v4481, %v4520
    %v4602 = vmul.f32 %v4482, %v4525
    %v4603 = vmul.f32 %v4483, %v4530
    %v4604 = vmul.f32 %v4484, %v4535
    %v4605 = vmul.f32 %v4485, %v4540
    %v4606 = vmul.f32 %v4486, %v4545
    %v4607 = vmul.f32 %v4487, %v4550
    %v4608 = vmul.f32 %v4488, %v4555
    %v4609 = vmul.f32 %v4489, %v4560
    %v4610 = vmul.f32 %v4490, %v4565
    %v4611 = vmul.f32 %v4491, %v4570
    %v4612 = vmul.f32 %v4492, %v4575
    %v4613 = vmul.f32 %v4493, %v4580
    %v4614 = vmul.f32 %v4494, %v4585
    %v4615 = vmul.f32 %v4495, %v4590
    %v4616 = vmul.f32 %v4496, %v4595
    %v4617 = vld [vmem:[%s3] sm:$0x1]
    %v4619 = vlaneseq
    %v4620 = vshrl.u32 %v4619, 7
    %v4621 = vsub.s32 0, %v4620
    %v4622 = vrot.slane %v4617, %v4621
    %v4624 = vadd.f32 %v4597, %v4622
    %v4625 = vadd.f32 %v4598, %v4622
    %v4626 = vadd.f32 %v4599, %v4622
    %v4627 = vadd.f32 %v4600, %v4622
    %v4628 = vadd.f32 %v4601, %v4622
    %v4629 = vadd.f32 %v4602, %v4622
    %v4630 = vadd.f32 %v4603, %v4622
    %v4631 = vadd.f32 %v4604, %v4622
    %v4632 = vadd.f32 %v4605, %v4622
    %v4633 = vadd.f32 %v4606, %v4622
    %v4634 = vadd.f32 %v4607, %v4622
    %v4635 = vadd.f32 %v4608, %v4622
    %v4636 = vadd.f32 %v4609, %v4622
    %v4637 = vadd.f32 %v4610, %v4622
    %v4638 = vadd.f32 %v4611, %v4622
    %v4639 = vadd.f32 %v4612, %v4622
    %v4640 = vadd.f32 %v4613, %v4622
    %v4641 = vadd.f32 %v4614, %v4622
    %v4642 = vadd.f32 %v4615, %v4622
    %v4643 = vadd.f32 %v4616, %v4622
    %v4644 = vsel %vm3773, %v4624, 0.0
    %4645 = vadd.xlane.f32.xlu0 %v4644
    %v4646 = vpop.xlane.xlu0 %4645
    %v4647 = vsel %vm3773, %v4625, 0.0
    %4648 = vadd.xlane.f32.xlu0 %v4647
    %v4649 = vpop.xlane.xlu0 %4648
    %v4650 = vsel %vm3773, %v4626, 0.0
    %4651 = vadd.xlane.f32.xlu0 %v4650
    %v4652 = vpop.xlane.xlu0 %4651
    %v4653 = vsel %vm3773, %v4627, 0.0
    %4654 = vadd.xlane.f32.xlu0 %v4653
    %v4655 = vpop.xlane.xlu0 %4654
    %v4656 = vsel %vm3773, %v4628, 0.0
    %4657 = vadd.xlane.f32.xlu0 %v4656
    %v4658 = vpop.xlane.xlu0 %4657
    %v4659 = vsel %vm3773, %v4629, 0.0
    %4660 = vadd.xlane.f32.xlu0 %v4659
    %v4661 = vpop.xlane.xlu0 %4660
    %v4662 = vsel %vm3773, %v4630, 0.0
    %4663 = vadd.xlane.f32.xlu0 %v4662
    %v4664 = vpop.xlane.xlu0 %4663
    %v4665 = vsel %vm3773, %v4631, 0.0
    %4666 = vadd.xlane.f32.xlu0 %v4665
    %v4667 = vpop.xlane.xlu0 %4666
    %v4668 = vsel %vm3773, %v4632, 0.0
    %4669 = vadd.xlane.f32.xlu0 %v4668
    %v4670 = vpop.xlane.xlu0 %4669
    %v4671 = vsel %vm3773, %v4633, 0.0
    %4672 = vadd.xlane.f32.xlu0 %v4671
    %v4673 = vpop.xlane.xlu0 %4672
    %v4674 = vsel %vm3773, %v4634, 0.0
    %4675 = vadd.xlane.f32.xlu0 %v4674
    %v4676 = vpop.xlane.xlu0 %4675
    %v4677 = vsel %vm3773, %v4635, 0.0
    %4678 = vadd.xlane.f32.xlu0 %v4677
    %v4679 = vpop.xlane.xlu0 %4678
    %v4680 = vsel %vm3773, %v4636, 0.0
    %4681 = vadd.xlane.f32.xlu0 %v4680
    %v4682 = vpop.xlane.xlu0 %4681
    %v4683 = vsel %vm3773, %v4637, 0.0
    %4684 = vadd.xlane.f32.xlu0 %v4683
    %v4685 = vpop.xlane.xlu0 %4684
    %v4686 = vsel %vm3773, %v4638, 0.0
    %4687 = vadd.xlane.f32.xlu0 %v4686
    %v4688 = vpop.xlane.xlu0 %4687
    %v4689 = vsel %vm3773, %v4639, 0.0
    %4690 = vadd.xlane.f32.xlu0 %v4689
    %v4691 = vpop.xlane.xlu0 %4690
    %v4692 = vsel %vm3773, %v4640, 0.0
    %4693 = vadd.xlane.f32.xlu0 %v4692
    %v4694 = vpop.xlane.xlu0 %4693
    %v4695 = vsel %vm3773, %v4641, 0.0
    %4696 = vadd.xlane.f32.xlu0 %v4695
    %v4697 = vpop.xlane.xlu0 %4696
    %v4698 = vsel %vm3773, %v4642, 0.0
    %4699 = vadd.xlane.f32.xlu0 %v4698
    %v4700 = vpop.xlane.xlu0 %4699
    %v4701 = vsel %vm3773, %v4643, 0.0
    %4702 = vadd.xlane.f32.xlu0 %v4701
    %v4703 = vpop.xlane.xlu0 %4702
    %v4704 = vrcp.pop 32.0
    %v4705 = vmul.f32 %v4646, %v4704
    %v4706 = vmul.f32 %v4649, %v4704
    %v4707 = vmul.f32 %v4652, %v4704
    %v4708 = vmul.f32 %v4655, %v4704
    %v4709 = vmul.f32 %v4658, %v4704
    %v4710 = vmul.f32 %v4661, %v4704
    %v4711 = vmul.f32 %v4664, %v4704
    %v4712 = vmul.f32 %v4667, %v4704
    %v4713 = vmul.f32 %v4670, %v4704
    %v4714 = vmul.f32 %v4673, %v4704
    %v4715 = vmul.f32 %v4676, %v4704
    %v4716 = vmul.f32 %v4679, %v4704
    %v4717 = vmul.f32 %v4682, %v4704
    %v4718 = vmul.f32 %v4685, %v4704
    %v4719 = vmul.f32 %v4688, %v4704
    %v4720 = vmul.f32 %v4691, %v4704
    %v4721 = vmul.f32 %v4694, %v4704
    %v4722 = vmul.f32 %v4697, %v4704
    %v4723 = vmul.f32 %v4700, %v4704
    %v4724 = vmul.f32 %v4703, %v4704
    %v4725 = vsub.f32 %v4624, %v4705
    %v4726 = vsub.f32 %v4625, %v4706
    %v4727 = vsub.f32 %v4626, %v4707
    %v4728 = vsub.f32 %v4627, %v4708
    %v4729 = vsub.f32 %v4628, %v4709
    %v4730 = vsub.f32 %v4629, %v4710
    %v4731 = vsub.f32 %v4630, %v4711
    %v4732 = vsub.f32 %v4631, %v4712
    %v4733 = vsub.f32 %v4632, %v4713
    %v4734 = vsub.f32 %v4633, %v4714
    %v4735 = vsub.f32 %v4634, %v4715
    %v4736 = vsub.f32 %v4635, %v4716
    %v4737 = vsub.f32 %v4636, %v4717
    %v4738 = vsub.f32 %v4637, %v4718
    %v4739 = vsub.f32 %v4638, %v4719
    %v4740 = vsub.f32 %v4639, %v4720
    %v4741 = vsub.f32 %v4640, %v4721
    %v4742 = vsub.f32 %v4641, %v4722
    %v4743 = vsub.f32 %v4642, %v4723
    %v4744 = vsub.f32 %v4643, %v4724
    %v4745 = vmul.f32 %v4725, %v4725
    %v4746 = vmul.f32 %v4726, %v4726
    %v4747 = vmul.f32 %v4727, %v4727
    %v4748 = vmul.f32 %v4728, %v4728
    %v4749 = vmul.f32 %v4729, %v4729
    %v4750 = vmul.f32 %v4730, %v4730
    %v4751 = vmul.f32 %v4731, %v4731
    %v4752 = vmul.f32 %v4732, %v4732
    %v4753 = vmul.f32 %v4733, %v4733
    %v4754 = vmul.f32 %v4734, %v4734
    %v4755 = vmul.f32 %v4735, %v4735
    %v4756 = vmul.f32 %v4736, %v4736
    %v4757 = vmul.f32 %v4737, %v4737
    %v4758 = vmul.f32 %v4738, %v4738
    %v4759 = vmul.f32 %v4739, %v4739
    %v4760 = vmul.f32 %v4740, %v4740
    %v4761 = vmul.f32 %v4741, %v4741
    %v4762 = vmul.f32 %v4742, %v4742
    %v4763 = vmul.f32 %v4743, %v4743
    %v4764 = vmul.f32 %v4744, %v4744
    %v4765 = vsel %vm3773, %v4745, 0.0
    %4766 = vadd.xlane.f32.xlu0 %v4765
    %v4767 = vpop.xlane.xlu0 %4766
    %v4768 = vsel %vm3773, %v4746, 0.0
    %4769 = vadd.xlane.f32.xlu0 %v4768
    %v4770 = vpop.xlane.xlu0 %4769
    %v4771 = vsel %vm3773, %v4747, 0.0
    %4772 = vadd.xlane.f32.xlu0 %v4771
    %v4773 = vpop.xlane.xlu0 %4772
    %v4774 = vsel %vm3773, %v4748, 0.0
    %4775 = vadd.xlane.f32.xlu0 %v4774
    %v4776 = vpop.xlane.xlu0 %4775
    %v4777 = vsel %vm3773, %v4749, 0.0
    %4778 = vadd.xlane.f32.xlu0 %v4777
    %v4779 = vpop.xlane.xlu0 %4778
    %v4780 = vsel %vm3773, %v4750, 0.0
    %4781 = vadd.xlane.f32.xlu0 %v4780
    %v4782 = vpop.xlane.xlu0 %4781
    %v4783 = vsel %vm3773, %v4751, 0.0
    %4784 = vadd.xlane.f32.xlu0 %v4783
    %v4785 = vpop.xlane.xlu0 %4784
    %v4786 = vsel %vm3773, %v4752, 0.0
    %4787 = vadd.xlane.f32.xlu0 %v4786
    %v4788 = vpop.xlane.xlu0 %4787
    %v4789 = vsel %vm3773, %v4753, 0.0
    %4790 = vadd.xlane.f32.xlu0 %v4789
    %v4791 = vpop.xlane.xlu0 %4790
    %v4792 = vsel %vm3773, %v4754, 0.0
    %4793 = vadd.xlane.f32.xlu0 %v4792
    %v4794 = vpop.xlane.xlu0 %4793
    %v4795 = vsel %vm3773, %v4755, 0.0
    %4796 = vadd.xlane.f32.xlu0 %v4795
    %v4797 = vpop.xlane.xlu0 %4796
    %v4798 = vsel %vm3773, %v4756, 0.0
    %4799 = vadd.xlane.f32.xlu0 %v4798
    %v4800 = vpop.xlane.xlu0 %4799
    %v4801 = vsel %vm3773, %v4757, 0.0
    %4802 = vadd.xlane.f32.xlu0 %v4801
    %v4803 = vpop.xlane.xlu0 %4802
    %v4804 = vsel %vm3773, %v4758, 0.0
    %4805 = vadd.xlane.f32.xlu0 %v4804
    %v4806 = vpop.xlane.xlu0 %4805
    %v4807 = vsel %vm3773, %v4759, 0.0
    %4808 = vadd.xlane.f32.xlu0 %v4807
    %v4809 = vpop.xlane.xlu0 %4808
    %v4810 = vsel %vm3773, %v4760, 0.0
    %4811 = vadd.xlane.f32.xlu0 %v4810
    %v4812 = vpop.xlane.xlu0 %4811
    %v4813 = vsel %vm3773, %v4761, 0.0
    %4814 = vadd.xlane.f32.xlu0 %v4813
    %v4815 = vpop.xlane.xlu0 %4814
    %v4816 = vsel %vm3773, %v4762, 0.0
    %4817 = vadd.xlane.f32.xlu0 %v4816
    %v4818 = vpop.xlane.xlu0 %4817
    %v4819 = vsel %vm3773, %v4763, 0.0
    %4820 = vadd.xlane.f32.xlu0 %v4819
    %v4821 = vpop.xlane.xlu0 %4820
    %v4822 = vsel %vm3773, %v4764, 0.0
    %4823 = vadd.xlane.f32.xlu0 %v4822
    %v4824 = vpop.xlane.xlu0 %4823
    %v4825 = vmul.f32 %v4767, %v4704
    %v4826 = vmul.f32 %v4770, %v4704
    %v4827 = vmul.f32 %v4773, %v4704
    %v4828 = vmul.f32 %v4776, %v4704
    %v4829 = vmul.f32 %v4779, %v4704
    %v4830 = vmul.f32 %v4782, %v4704
    %v4831 = vmul.f32 %v4785, %v4704
    %v4832 = vmul.f32 %v4788, %v4704
    %v4833 = vmul.f32 %v4791, %v4704
    %v4834 = vmul.f32 %v4794, %v4704
    %v4835 = vmul.f32 %v4797, %v4704
    %v4836 = vmul.f32 %v4800, %v4704
    %v4837 = vmul.f32 %v4803, %v4704
    %v4838 = vmul.f32 %v4806, %v4704
    %v4839 = vmul.f32 %v4809, %v4704
    %v4840 = vmul.f32 %v4812, %v4704
    %v4841 = vmul.f32 %v4815, %v4704
    %v4842 = vmul.f32 %v4818, %v4704
    %v4843 = vmul.f32 %v4821, %v4704
    %v4844 = vmul.f32 %v4824, %v4704
    %v4845 = vadd.f32 %v4825, 1e-05
    %v4846 = vadd.f32 %v4826, 1e-05
    %v4847 = vadd.f32 %v4827, 1e-05
    %v4848 = vadd.f32 %v4828, 1e-05
    %v4849 = vadd.f32 %v4829, 1e-05
    %v4850 = vadd.f32 %v4830, 1e-05
    %v4851 = vadd.f32 %v4831, 1e-05
    %v4852 = vadd.f32 %v4832, 1e-05
    %v4853 = vadd.f32 %v4833, 1e-05
    %v4854 = vadd.f32 %v4834, 1e-05
    %v4855 = vadd.f32 %v4835, 1e-05
    %v4856 = vadd.f32 %v4836, 1e-05
    %v4857 = vadd.f32 %v4837, 1e-05
    %v4858 = vadd.f32 %v4838, 1e-05
    %v4859 = vadd.f32 %v4839, 1e-05
    %v4860 = vadd.f32 %v4840, 1e-05
    %v4861 = vadd.f32 %v4841, 1e-05
    %v4862 = vadd.f32 %v4842, 1e-05
    %v4863 = vadd.f32 %v4843, 1e-05
    %v4864 = vadd.f32 %v4844, 1e-05
    %v4865 = vrsqrt.pop %v4845
    %v4866 = vrsqrt.pop %v4846
    %v4867 = vrsqrt.pop %v4847
    %v4868 = vrsqrt.pop %v4848
    %v4869 = vrsqrt.pop %v4849
    %v4870 = vrsqrt.pop %v4850
    %v4871 = vrsqrt.pop %v4851
    %v4872 = vrsqrt.pop %v4852
    %v4873 = vrsqrt.pop %v4853
    %v4874 = vrsqrt.pop %v4854
    %v4875 = vrsqrt.pop %v4855
    %v4876 = vrsqrt.pop %v4856
    %v4877 = vrsqrt.pop %v4857
    %v4878 = vrsqrt.pop %v4858
    %v4879 = vrsqrt.pop %v4859
    %v4880 = vrsqrt.pop %v4860
    %v4881 = vrsqrt.pop %v4861
    %v4882 = vrsqrt.pop %v4862
    %v4883 = vrsqrt.pop %v4863
    %v4884 = vrsqrt.pop %v4864
    %v4885 = vmul.f32 %v4725, %v4865
    %v4886 = vmul.f32 %v4726, %v4866
    %v4887 = vmul.f32 %v4727, %v4867
    %v4888 = vmul.f32 %v4728, %v4868
    %v4889 = vmul.f32 %v4729, %v4869
    %v4890 = vmul.f32 %v4730, %v4870
    %v4891 = vmul.f32 %v4731, %v4871
    %v4892 = vmul.f32 %v4732, %v4872
    %v4893 = vmul.f32 %v4733, %v4873
    %v4894 = vmul.f32 %v4734, %v4874
    %v4895 = vmul.f32 %v4735, %v4875
    %v4896 = vmul.f32 %v4736, %v4876
    %v4897 = vmul.f32 %v4737, %v4877
    %v4898 = vmul.f32 %v4738, %v4878
    %v4899 = vmul.f32 %v4739, %v4879
    %v4900 = vmul.f32 %v4740, %v4880
    %v4901 = vmul.f32 %v4741, %v4881
    %v4902 = vmul.f32 %v4742, %v4882
    %v4903 = vmul.f32 %v4743, %v4883
    %v4904 = vmul.f32 %v4744, %v4884
    %v4905 = vld [vmem:[%s4] sm:$0x1]
    %v4907 = vlaneseq
    %v4908 = vshrl.u32 %v4907, 7
    %v4909 = vsub.s32 0, %v4908
    %v4910 = vrot.slane %v4905, %v4909
    %v4912 = vmul.f32 %v4885, %v4910
    %v4913 = vmul.f32 %v4886, %v4910
    %v4914 = vmul.f32 %v4887, %v4910
    %v4915 = vmul.f32 %v4888, %v4910
    %v4916 = vmul.f32 %v4889, %v4910
    %v4917 = vmul.f32 %v4890, %v4910
    %v4918 = vmul.f32 %v4891, %v4910
    %v4919 = vmul.f32 %v4892, %v4910
    %v4920 = vmul.f32 %v4893, %v4910
    %v4921 = vmul.f32 %v4894, %v4910
    %v4922 = vmul.f32 %v4895, %v4910
    %v4923 = vmul.f32 %v4896, %v4910
    %v4924 = vmul.f32 %v4897, %v4910
    %v4925 = vmul.f32 %v4898, %v4910
    %v4926 = vmul.f32 %v4899, %v4910
    %v4927 = vmul.f32 %v4900, %v4910
    %v4928 = vmul.f32 %v4901, %v4910
    %v4929 = vmul.f32 %v4902, %v4910
    %v4930 = vmul.f32 %v4903, %v4910
    %v4931 = vmul.f32 %v4904, %v4910
    %v4932 = vld [vmem:[%s5] sm:$0x1]
    %v4934 = vlaneseq
    %v4935 = vshrl.u32 %v4934, 7
    %v4936 = vsub.s32 0, %v4935
    %v4937 = vrot.slane %v4932, %v4936
    %v4939 = vadd.f32 %v4912, %v4937
    %v4940 = vadd.f32 %v4913, %v4937
    %v4941 = vadd.f32 %v4914, %v4937
    %v4942 = vadd.f32 %v4915, %v4937
    %v4943 = vadd.f32 %v4916, %v4937
    %v4944 = vadd.f32 %v4917, %v4937
    %v4945 = vadd.f32 %v4918, %v4937
    %v4946 = vadd.f32 %v4919, %v4937
    %v4947 = vadd.f32 %v4920, %v4937
    %v4948 = vadd.f32 %v4921, %v4937
    %v4949 = vadd.f32 %v4922, %v4937
    %v4950 = vadd.f32 %v4923, %v4937
    %v4951 = vadd.f32 %v4924, %v4937
    %v4952 = vadd.f32 %v4925, %v4937
    %v4953 = vadd.f32 %v4926, %v4937
    %v4954 = vadd.f32 %v4927, %v4937
    %v4955 = vadd.f32 %v4928, %v4937
    %v4956 = vadd.f32 %v4929, %v4937
    %v4957 = vadd.f32 %v4930, %v4937
    %v4958 = vadd.f32 %v4931, %v4937
    %v4959 = vld [vmem:[%s6] sm:$0xff]
    %v4960 = vld [vmem:[%s6 + $0x8] sm:$0xff]
    %v4961 = vld [vmem:[%s6 + $0x10] sm:$0xff]
    %v4962 = vld [vmem:[%s6 + $0x18] sm:$0xff]
    %v4963 = vld [vmem:[%s7] sm:$0x1]
    %v4965 = vlaneseq
    %v4966 = vshrl.u32 %v4965, 7
    %v4967 = vsub.s32 0, %v4966
    %v4968 = vrot.slane %v4963, %v4967
    %v4971 = vsel %vm3773, %v4939, 0
    %v4974 = vsel %vm3773, %v4940, 0
    %v4977 = vsel %vm3773, %v4941, 0
    %v4980 = vsel %vm3773, %v4942, 0
    %v4983 = vsel %vm3773, %v4943, 0
    %v4986 = vsel %vm3773, %v4944, 0
    %v4989 = vsel %vm3773, %v4945, 0
    %v4992 = vsel %vm3773, %v4946, 0
    %v4995 = vsel %vm3773, %v4947, 0
    %v4998 = vsel %vm3773, %v4948, 0
    %v5001 = vsel %vm3773, %v4949, 0
    %v5004 = vsel %vm3773, %v4950, 0
    %v5007 = vsel %vm3773, %v4951, 0
    %v5010 = vsel %vm3773, %v4952, 0
    %v5013 = vsel %vm3773, %v4953, 0
    %v5016 = vsel %vm3773, %v4954, 0
    %v5019 = vsel %vm3773, %v4955, 0
    %v5022 = vsel %vm3773, %v4956, 0
    %v5025 = vsel %vm3773, %v4957, 0
    %v5028 = vsel %vm3773, %v4958, 0
    %5030 = vmatprep.subr.mxu0 0.0
    %5031 = vmatpush1.msra.mxu0 %v4959
    %5032 = vmatprep.subr.mxu0 0.0
    %5033 = vmatpush1.msra.mxu0 %v4960
    %5034 = vmatprep.subr.mxu0 0.0
    %5035 = vmatpush1.msra.mxu0 %v4961
    %5036 = vmatprep.subr.mxu0 0.0
    %5037 = vmatpush1.msra.mxu0 %v4962
    %5038 = vmatprep.subr.mxu0 0.0
    %5039 = vmatpush1.msra.mxu0 0.0
    %5040 = vmatprep.subr.mxu0 0.0
    %5041 = vmatpush1.msra.mxu0 0.0
    %5042 = vmatprep.subr.mxu0 0.0
    %5043 = vmatpush1.msra.mxu0 0.0
    %5044 = vmatprep.subr.mxu0 0.0
    %5045 = vmatpush1.msra.mxu0 0.0
    %5046 = vmatprep.subr.mxu0 0.0
    %5047 = vmatpush1.msra.mxu0 0.0
    %5048 = vmatprep.subr.mxu0 0.0
    %5049 = vmatpush1.msra.mxu0 0.0
    %5050 = vmatprep.subr.mxu0 0.0
    %5051 = vmatpush1.msra.mxu0 0.0
    %5052 = vmatprep.subr.mxu0 0.0
    %5053 = vmatpush1.msra.mxu0 0.0
    %5054 = vmatprep.subr.mxu0 0.0
    %5055 = vmatpush1.msra.mxu0 0.0
    %5056 = vmatprep.subr.mxu0 0.0
    %5057 = vmatpush1.msra.mxu0 0.0
    %5058 = vmatprep.subr.mxu0 0.0
    %5059 = vmatpush1.msra.mxu0 0.0
    %5060 = vmatprep.subr.mxu0 0.0
    %5061 = vmatpush1.msra.mxu0 0.0
    %5062 = vmatprep.subr.mxu0 0.0
    %5063 = vmatpush1.msra.mxu0 0.0
    %5064 = vmatprep.subr.mxu0 0.0
    %5065 = vmatpush1.msra.mxu0 0.0
    %5066 = vmatprep.subr.mxu0 0.0
    %5067 = vmatpush1.msra.mxu0 0.0
    %5068 = vmatprep.subr.mxu0 0.0
    %5069 = vmatpush1.msra.mxu0 0.0
    %5070 = vmatprep.subr.mxu0 0.0
    %5071 = vmatpush1.msra.mxu0 0.0
    %5072 = vmatprep.subr.mxu0 0.0
    %5073 = vmatpush1.msra.mxu0 0.0
    %5074 = vmatprep.subr.mxu0 0.0
    %5075 = vmatpush1.msra.mxu0 0.0
    %5076 = vmatprep.subr.mxu0 0.0
    %5077 = vmatpush1.msra.mxu0 0.0
    %5078 = vmatprep.subr.mxu0 0.0
    %5079 = vmatpush1.msra.mxu0 0.0
    %5080 = vmatprep.subr.mxu0 0.0
    %5081 = vmatpush1.msra.mxu0 0.0
    %5082 = vmatprep.subr.mxu0 0.0
    %5083 = vmatpush1.msra.mxu0 0.0
    %5084 = vmatprep.subr.mxu0 0.0
    %5085 = vmatpush1.msra.mxu0 0.0
    %5086 = vmatprep.subr.mxu0 0.0
    %5087 = vmatpush1.msra.mxu0 0.0
    %5088 = vmatprep.subr.mxu0 0.0
    %5089 = vmatpush1.msra.mxu0 0.0
    %5090 = vmatprep.subr.mxu0 0.0
    %5091 = vmatpush1.msra.mxu0 0.0
    %5092 = vmatprep.subr.mxu0 0.0
    %5093 = vmatpush1.msra.mxu0 0.0
    %5094 = vmatprep.mubr.f32.mxu0 0.0
    %5095 = vmatmul.mubr.f32.gmra.mrb[0].mxu0 %v4971
    %v5096 = vpop.f32.mrb[0].mxu0
    %v5097 = vadd.f32 %v4968, %v5096
    %v5098 = vpop.f32.mrb[0].mxu0
    %5099 = vmatprep.mubr.f32.mxu0 0.0
    %5100 = vmatmul.mubr.f32.gmra.mrb[0].mxu0 %v4974
    %v5101 = vpop.f32.mrb[0].mxu0
    %v5102 = vadd.f32 %v4968, %v5101
    %v5103 = vpop.f32.mrb[0].mxu0
    %5104 = vmatprep.mubr.f32.mxu0 0.0
    %5105 = vmatmul.mubr.f32.gmra.mrb[0].mxu0 %v4977
    %v5106 = vpop.f32.mrb[0].mxu0
    %v5107 = vadd.f32 %v4968, %v5106
    %v5108 = vpop.f32.mrb[0].mxu0
    %5109 = vmatprep.mubr.f32.mxu0 0.0
    %5110 = vmatmul.mubr.f32.gmra.mrb[0].mxu0 %v4980
    %v5111 = vpop.f32.mrb[0].mxu0
    %v5112 = vadd.f32 %v4968, %v5111
    %v5113 = vpop.f32.mrb[0].mxu0
    %5114 = vmatprep.mubr.f32.mxu0 0.0
    %5115 = vmatmul.mubr.f32.gmra.mrb[0].mxu0 %v4983
    %v5116 = vpop.f32.mrb[0].mxu0
    %v5117 = vadd.f32 %v4968, %v5116
    %v5118 = vpop.f32.mrb[0].mxu0
    %5119 = vmatprep.mubr.f32.mxu0 0.0
    %5120 = vmatmul.mubr.f32.gmra.mrb[0].mxu0 %v4986
    %v5121 = vpop.f32.mrb[0].mxu0
    %v5122 = vadd.f32 %v4968, %v5121
    %v5123 = vpop.f32.mrb[0].mxu0
    %5124 = vmatprep.mubr.f32.mxu0 0.0
    %5125 = vmatmul.mubr.f32.gmra.mrb[0].mxu0 %v4989
    %v5126 = vpop.f32.mrb[0].mxu0
    %v5127 = vadd.f32 %v4968, %v5126
    %v5128 = vpop.f32.mrb[0].mxu0
    %5129 = vmatprep.mubr.f32.mxu0 0.0
    %5130 = vmatmul.mubr.f32.gmra.mrb[0].mxu0 %v4992
    %v5131 = vpop.f32.mrb[0].mxu0
    %v5132 = vadd.f32 %v4968, %v5131
    %v5133 = vpop.f32.mrb[0].mxu0
    %5134 = vmatprep.mubr.f32.mxu0 0.0
    %5135 = vmatmul.mubr.f32.gmra.mrb[0].mxu0 %v4995
    %v5136 = vpop.f32.mrb[0].mxu0
    %v5137 = vadd.f32 %v4968, %v5136
    %v5138 = vpop.f32.mrb[0].mxu0
    %5139 = vmatprep.mubr.f32.mxu0 0.0
    %5140 = vmatmul.mubr.f32.gmra.mrb[0].mxu0 %v4998
    %v5141 = vpop.f32.mrb[0].mxu0
    %v5142 = vadd.f32 %v4968, %v5141
    %v5143 = vpop.f32.mrb[0].mxu0
    %5144 = vmatprep.mubr.f32.mxu0 0.0
    %5145 = vmatmul.mubr.f32.gmra.mrb[0].mxu0 %v5001
    %v5146 = vpop.f32.mrb[0].mxu0
    %v5147 = vadd.f32 %v4968, %v5146
    %v5148 = vpop.f32.mrb[0].mxu0
    %5149 = vmatprep.mubr.f32.mxu0 0.0
    %5150 = vmatmul.mubr.f32.gmra.mrb[0].mxu0 %v5004
    %v5151 = vpop.f32.mrb[0].mxu0
    %v5152 = vadd.f32 %v4968, %v5151
    %v5153 = vpop.f32.mrb[0].mxu0
    %5154 = vmatprep.mubr.f32.mxu0 0.0
    %5155 = vmatmul.mubr.f32.gmra.mrb[0].mxu0 %v5007
    %v5156 = vpop.f32.mrb[0].mxu0
    %v5157 = vadd.f32 %v4968, %v5156
    %v5158 = vpop.f32.mrb[0].mxu0
    %5159 = vmatprep.mubr.f32.mxu0 0.0
    %5160 = vmatmul.mubr.f32.gmra.mrb[0].mxu0 %v5010
    %v5161 = vpop.f32.mrb[0].mxu0
    %v5162 = vadd.f32 %v4968, %v5161
    %v5163 = vpop.f32.mrb[0].mxu0
    %5164 = vmatprep.mubr.f32.mxu0 0.0
    %5165 = vmatmul.mubr.f32.gmra.mrb[0].mxu0 %v5013
    %v5166 = vpop.f32.mrb[0].mxu0
    %v5167 = vadd.f32 %v4968, %v5166
    %v5168 = vpop.f32.mrb[0].mxu0
    %5169 = vmatprep.mubr.f32.mxu0 0.0
    %5170 = vmatmul.mubr.f32.gmra.mrb[0].mxu0 %v5016
    %v5171 = vpop.f32.mrb[0].mxu0
    %v5172 = vadd.f32 %v4968, %v5171
    %v5173 = vpop.f32.mrb[0].mxu0
    %5174 = vmatprep.mubr.f32.mxu0 0.0
    %5175 = vmatmul.mubr.f32.gmra.mrb[0].mxu0 %v5019
    %v5176 = vpop.f32.mrb[0].mxu0
    %v5177 = vadd.f32 %v4968, %v5176
    %v5178 = vpop.f32.mrb[0].mxu0
    %5179 = vmatprep.mubr.f32.mxu0 0.0
    %5180 = vmatmul.mubr.f32.gmra.mrb[0].mxu0 %v5022
    %v5181 = vpop.f32.mrb[0].mxu0
    %v5182 = vadd.f32 %v4968, %v5181
    %v5183 = vpop.f32.mrb[0].mxu0
    %5184 = vmatprep.mubr.f32.mxu0 0.0
    %5185 = vmatmul.mubr.f32.gmra.mrb[0].mxu0 %v5025
    %v5186 = vpop.f32.mrb[0].mxu0
    %v5187 = vadd.f32 %v4968, %v5186
    %v5188 = vpop.f32.mrb[0].mxu0
    %5189 = vmatprep.mubr.f32.mxu0 0.0
    %5190 = vmatmul.mubr.f32.gmra.mrb[0].mxu0 %v5028
    %v5191 = vpop.f32.mrb[0].mxu0
    %v5192 = vadd.f32 %v4968, %v5191
    %v5193 = vpop.f32.mrb[0].mxu0
    %5194 = vdwg.mxu0
    %v5195 = vmax.f32 %v5097, 0.0
    %v5196 = vmax.f32 %v5102, 0.0
    %v5197 = vmax.f32 %v5107, 0.0
    %v5198 = vmax.f32 %v5112, 0.0
    %v5199 = vmax.f32 %v5117, 0.0
    %v5200 = vmax.f32 %v5122, 0.0
    %v5201 = vmax.f32 %v5127, 0.0
    %v5202 = vmax.f32 %v5132, 0.0
    %v5203 = vmax.f32 %v5137, 0.0
    %v5204 = vmax.f32 %v5142, 0.0
    %v5205 = vmax.f32 %v5147, 0.0
    %v5206 = vmax.f32 %v5152, 0.0
    %v5207 = vmax.f32 %v5157, 0.0
    %v5208 = vmax.f32 %v5162, 0.0
    %v5209 = vmax.f32 %v5167, 0.0
    %v5210 = vmax.f32 %v5172, 0.0
    %v5211 = vmax.f32 %v5177, 0.0
    %v5212 = vmax.f32 %v5182, 0.0
    %v5213 = vmax.f32 %v5187, 0.0
    %v5214 = vmax.f32 %v5192, 0.0
    %v5215 = vld [vmem:[%s8] sm:$0xff]
    %v5216 = vld [vmem:[%s8 + $0x8] sm:$0xff]
    %v5217 = vld [vmem:[%s8 + $0x10] sm:$0xff]
    %v5218 = vld [vmem:[%s8 + $0x18] sm:$0xff]
    %v5219 = vld [vmem:[%s9] sm:$0x1]
    %v5221 = vlaneseq
    %v5222 = vshrl.u32 %v5221, 7
    %v5223 = vsub.s32 0, %v5222
    %v5224 = vrot.slane %v5219, %v5223
    %v5227 = vsel %vm3773, %v5195, 0
    %v5230 = vsel %vm3773, %v5196, 0
    %v5233 = vsel %vm3773, %v5197, 0
    %v5236 = vsel %vm3773, %v5198, 0
    %v5239 = vsel %vm3773, %v5199, 0
    %v5242 = vsel %vm3773, %v5200, 0
    %v5245 = vsel %vm3773, %v5201, 0
    %v5248 = vsel %vm3773, %v5202, 0
    %v5251 = vsel %vm3773, %v5203, 0
    %v5254 = vsel %vm3773, %v5204, 0
    %v5257 = vsel %vm3773, %v5205, 0
    %v5260 = vsel %vm3773, %v5206, 0
    %v5263 = vsel %vm3773, %v5207, 0
    %v5266 = vsel %vm3773, %v5208, 0
    %v5269 = vsel %vm3773, %v5209, 0
    %v5272 = vsel %vm3773, %v5210, 0
    %v5275 = vsel %vm3773, %v5211, 0
    %v5278 = vsel %vm3773, %v5212, 0
    %v5281 = vsel %vm3773, %v5213, 0
    %v5284 = vsel %vm3773, %v5214, 0
    %5286 = vmatprep.subr.mxu0 0.0
    %5287 = vmatpush1.msra.mxu0 %v5215
    %5288 = vmatprep.subr.mxu0 0.0
    %5289 = vmatpush1.msra.mxu0 %v5216
    %5290 = vmatprep.subr.mxu0 0.0
    %5291 = vmatpush1.msra.mxu0 %v5217
    %5292 = vmatprep.subr.mxu0 0.0
    %5293 = vmatpush1.msra.mxu0 %v5218
    %5294 = vmatprep.subr.mxu0 0.0
    %5295 = vmatpush1.msra.mxu0 0.0
    %5296 = vmatprep.subr.mxu0 0.0
    %5297 = vmatpush1.msra.mxu0 0.0
    %5298 = vmatprep.subr.mxu0 0.0
    %5299 = vmatpush1.msra.mxu0 0.0
    %5300 = vmatprep.subr.mxu0 0.0
    %5301 = vmatpush1.msra.mxu0 0.0
    %5302 = vmatprep.subr.mxu0 0.0
    %5303 = vmatpush1.msra.mxu0 0.0
    %5304 = vmatprep.subr.mxu0 0.0
    %5305 = vmatpush1.msra.mxu0 0.0
    %5306 = vmatprep.subr.mxu0 0.0
    %5307 = vmatpush1.msra.mxu0 0.0
    %5308 = vmatprep.subr.mxu0 0.0
    %5309 = vmatpush1.msra.mxu0 0.0
    %5310 = vmatprep.subr.mxu0 0.0
    %5311 = vmatpush1.msra.mxu0 0.0
    %5312 = vmatprep.subr.mxu0 0.0
    %5313 = vmatpush1.msra.mxu0 0.0
    %5314 = vmatprep.subr.mxu0 0.0
    %5315 = vmatpush1.msra.mxu0 0.0
    %5316 = vmatprep.subr.mxu0 0.0
    %5317 = vmatpush1.msra.mxu0 0.0
    %5318 = vmatprep.subr.mxu0 0.0
    %5319 = vmatpush1.msra.mxu0 0.0
    %5320 = vmatprep.subr.mxu0 0.0
    %5321 = vmatpush1.msra.mxu0 0.0
    %5322 = vmatprep.subr.mxu0 0.0
    %5323 = vmatpush1.msra.mxu0 0.0
    %5324 = vmatprep.subr.mxu0 0.0
    %5325 = vmatpush1.msra.mxu0 0.0
    %5326 = vmatprep.subr.mxu0 0.0
    %5327 = vmatpush1.msra.mxu0 0.0
    %5328 = vmatprep.subr.mxu0 0.0
    %5329 = vmatpush1.msra.mxu0 0.0
    %5330 = vmatprep.subr.mxu0 0.0
    %5331 = vmatpush1.msra.mxu0 0.0
    %5332 = vmatprep.subr.mxu0 0.0
    %5333 = vmatpush1.msra.mxu0 0.0
    %5334 = vmatprep.subr.mxu0 0.0
    %5335 = vmatpush1.msra.mxu0 0.0
    %5336 = vmatprep.subr.mxu0 0.0
    %5337 = vmatpush1.msra.mxu0 0.0
    %5338 = vmatprep.subr.mxu0 0.0
    %5339 = vmatpush1.msra.mxu0 0.0
    %5340 = vmatprep.subr.mxu0 0.0
    %5341 = vmatpush1.msra.mxu0 0.0
    %5342 = vmatprep.subr.mxu0 0.0
    %5343 = vmatpush1.msra.mxu0 0.0
    %5344 = vmatprep.subr.mxu0 0.0
    %5345 = vmatpush1.msra.mxu0 0.0
    %5346 = vmatprep.subr.mxu0 0.0
    %5347 = vmatpush1.msra.mxu0 0.0
    %5348 = vmatprep.subr.mxu0 0.0
    %5349 = vmatpush1.msra.mxu0 0.0
    %5350 = vmatprep.mubr.f32.mxu0 0.0
    %5351 = vmatmul.mubr.f32.gmra.mrb[0].mxu0 %v5227
    %v5352 = vpop.f32.mrb[0].mxu0
    %v5353 = vadd.f32 %v5224, %v5352
    %v5354 = vpop.f32.mrb[0].mxu0
    %5355 = vmatprep.mubr.f32.mxu0 0.0
    %5356 = vmatmul.mubr.f32.gmra.mrb[0].mxu0 %v5230
    %v5357 = vpop.f32.mrb[0].mxu0
    %v5358 = vadd.f32 %v5224, %v5357
    %v5359 = vpop.f32.mrb[0].mxu0
    %5360 = vmatprep.mubr.f32.mxu0 0.0
    %5361 = vmatmul.mubr.f32.gmra.mrb[0].mxu0 %v5233
    %v5362 = vpop.f32.mrb[0].mxu0
    %v5363 = vadd.f32 %v5224, %v5362
    %v5364 = vpop.f32.mrb[0].mxu0
    %5365 = vmatprep.mubr.f32.mxu0 0.0
    %5366 = vmatmul.mubr.f32.gmra.mrb[0].mxu0 %v5236
    %v5367 = vpop.f32.mrb[0].mxu0
    %v5368 = vadd.f32 %v5224, %v5367
    %v5369 = vpop.f32.mrb[0].mxu0
    %5370 = vmatprep.mubr.f32.mxu0 0.0
    %5371 = vmatmul.mubr.f32.gmra.mrb[0].mxu0 %v5239
    %v5372 = vpop.f32.mrb[0].mxu0
    %v5373 = vadd.f32 %v5224, %v5372
    %v5374 = vpop.f32.mrb[0].mxu0
    %5375 = vmatprep.mubr.f32.mxu0 0.0
    %5376 = vmatmul.mubr.f32.gmra.mrb[0].mxu0 %v5242
    %v5377 = vpop.f32.mrb[0].mxu0
    %v5378 = vadd.f32 %v5224, %v5377
    %v5379 = vpop.f32.mrb[0].mxu0
    %5380 = vmatprep.mubr.f32.mxu0 0.0
    %5381 = vmatmul.mubr.f32.gmra.mrb[0].mxu0 %v5245
    %v5382 = vpop.f32.mrb[0].mxu0
    %v5383 = vadd.f32 %v5224, %v5382
    %v5384 = vpop.f32.mrb[0].mxu0
    %5385 = vmatprep.mubr.f32.mxu0 0.0
    %5386 = vmatmul.mubr.f32.gmra.mrb[0].mxu0 %v5248
    %v5387 = vpop.f32.mrb[0].mxu0
    %v5388 = vadd.f32 %v5224, %v5387
    %v5389 = vpop.f32.mrb[0].mxu0
    %5390 = vmatprep.mubr.f32.mxu0 0.0
    %5391 = vmatmul.mubr.f32.gmra.mrb[0].mxu0 %v5251
    %v5392 = vpop.f32.mrb[0].mxu0
    %v5393 = vadd.f32 %v5224, %v5392
    %v5394 = vpop.f32.mrb[0].mxu0
    %5395 = vmatprep.mubr.f32.mxu0 0.0
    %5396 = vmatmul.mubr.f32.gmra.mrb[0].mxu0 %v5254
    %v5397 = vpop.f32.mrb[0].mxu0
    %v5398 = vadd.f32 %v5224, %v5397
    %v5399 = vpop.f32.mrb[0].mxu0
    %5400 = vmatprep.mubr.f32.mxu0 0.0
    %5401 = vmatmul.mubr.f32.gmra.mrb[0].mxu0 %v5257
    %v5402 = vpop.f32.mrb[0].mxu0
    %v5403 = vadd.f32 %v5224, %v5402
    %v5404 = vpop.f32.mrb[0].mxu0
    %5405 = vmatprep.mubr.f32.mxu0 0.0
    %5406 = vmatmul.mubr.f32.gmra.mrb[0].mxu0 %v5260
    %v5407 = vpop.f32.mrb[0].mxu0
    %v5408 = vadd.f32 %v5224, %v5407
    %v5409 = vpop.f32.mrb[0].mxu0
    %5410 = vmatprep.mubr.f32.mxu0 0.0
    %5411 = vmatmul.mubr.f32.gmra.mrb[0].mxu0 %v5263
    %v5412 = vpop.f32.mrb[0].mxu0
    %v5413 = vadd.f32 %v5224, %v5412
    %v5414 = vpop.f32.mrb[0].mxu0
    %5415 = vmatprep.mubr.f32.mxu0 0.0
    %5416 = vmatmul.mubr.f32.gmra.mrb[0].mxu0 %v5266
    %v5417 = vpop.f32.mrb[0].mxu0
    %v5418 = vadd.f32 %v5224, %v5417
    %v5419 = vpop.f32.mrb[0].mxu0
    %5420 = vmatprep.mubr.f32.mxu0 0.0
    %5421 = vmatmul.mubr.f32.gmra.mrb[0].mxu0 %v5269
    %v5422 = vpop.f32.mrb[0].mxu0
    %v5423 = vadd.f32 %v5224, %v5422
    %v5424 = vpop.f32.mrb[0].mxu0
    %5425 = vmatprep.mubr.f32.mxu0 0.0
    %5426 = vmatmul.mubr.f32.gmra.mrb[0].mxu0 %v5272
    %v5427 = vpop.f32.mrb[0].mxu0
    %v5428 = vadd.f32 %v5224, %v5427
    %v5429 = vpop.f32.mrb[0].mxu0
    %5430 = vmatprep.mubr.f32.mxu0 0.0
    %5431 = vmatmul.mubr.f32.gmra.mrb[0].mxu0 %v5275
    %v5432 = vpop.f32.mrb[0].mxu0
    %v5433 = vadd.f32 %v5224, %v5432
    %v5434 = vpop.f32.mrb[0].mxu0
    %5435 = vmatprep.mubr.f32.mxu0 0.0
    %5436 = vmatmul.mubr.f32.gmra.mrb[0].mxu0 %v5278
    %v5437 = vpop.f32.mrb[0].mxu0
    %v5438 = vadd.f32 %v5224, %v5437
    %v5439 = vpop.f32.mrb[0].mxu0
    %5440 = vmatprep.mubr.f32.mxu0 0.0
    %5441 = vmatmul.mubr.f32.gmra.mrb[0].mxu0 %v5281
    %v5442 = vpop.f32.mrb[0].mxu0
    %v5443 = vadd.f32 %v5224, %v5442
    %v5444 = vpop.f32.mrb[0].mxu0
    %5445 = vmatprep.mubr.f32.mxu0 0.0
    %5446 = vmatmul.mubr.f32.gmra.mrb[0].mxu0 %v5284
    %v5447 = vpop.f32.mrb[0].mxu0
    %v5448 = vadd.f32 %v5224, %v5447
    %v5449 = vpop.f32.mrb[0].mxu0
    %5450 = vdwg.mxu0
    %v5451 = vmax.f32 %v5353, 0.0
    %v5452 = vmax.f32 %v5358, 0.0
    %v5453 = vmax.f32 %v5363, 0.0
    %v5454 = vmax.f32 %v5368, 0.0
    %v5455 = vmax.f32 %v5373, 0.0
    %v5456 = vmax.f32 %v5378, 0.0
    %v5457 = vmax.f32 %v5383, 0.0
    %v5458 = vmax.f32 %v5388, 0.0
    %v5459 = vmax.f32 %v5393, 0.0
    %v5460 = vmax.f32 %v5398, 0.0
    %v5461 = vmax.f32 %v5403, 0.0
    %v5462 = vmax.f32 %v5408, 0.0
    %v5463 = vmax.f32 %v5413, 0.0
    %v5464 = vmax.f32 %v5418, 0.0
    %v5465 = vmax.f32 %v5423, 0.0
    %v5466 = vmax.f32 %v5428, 0.0
    %v5467 = vmax.f32 %v5433, 0.0
    %v5468 = vmax.f32 %v5438, 0.0
    %v5469 = vmax.f32 %v5443, 0.0
    %v5470 = vmax.f32 %v5448, 0.0
    %v5471 = vadd.f32 %v4939, %v5451
    %v5472 = vadd.f32 %v4940, %v5452
    %v5473 = vadd.f32 %v4941, %v5453
    %v5474 = vadd.f32 %v4942, %v5454
    %v5475 = vadd.f32 %v4943, %v5455
    %v5476 = vadd.f32 %v4944, %v5456
    %v5477 = vadd.f32 %v4945, %v5457
    %v5478 = vadd.f32 %v4946, %v5458
    %v5479 = vadd.f32 %v4947, %v5459
    %v5480 = vadd.f32 %v4948, %v5460
    %v5481 = vadd.f32 %v4949, %v5461
    %v5482 = vadd.f32 %v4950, %v5462
    %v5483 = vadd.f32 %v4951, %v5463
    %v5484 = vadd.f32 %v4952, %v5464
    %v5485 = vadd.f32 %v4953, %v5465
    %v5486 = vadd.f32 %v4954, %v5466
    %v5487 = vadd.f32 %v4955, %v5467
    %v5488 = vadd.f32 %v4956, %v5468
    %v5489 = vadd.f32 %v4957, %v5469
    %v5490 = vadd.f32 %v4958, %v5470
    %v5491 = vsel %vm3773, %v5471, 0.0
    %5492 = vadd.xlane.f32.xlu0 %v5491
    %v5493 = vpop.xlane.xlu0 %5492
    %v5494 = vsel %vm3773, %v5472, 0.0
    %5495 = vadd.xlane.f32.xlu0 %v5494
    %v5496 = vpop.xlane.xlu0 %5495
    %v5497 = vsel %vm3773, %v5473, 0.0
    %5498 = vadd.xlane.f32.xlu0 %v5497
    %v5499 = vpop.xlane.xlu0 %5498
    %v5500 = vsel %vm3773, %v5474, 0.0
    %5501 = vadd.xlane.f32.xlu0 %v5500
    %v5502 = vpop.xlane.xlu0 %5501
    %v5503 = vsel %vm3773, %v5475, 0.0
    %5504 = vadd.xlane.f32.xlu0 %v5503
    %v5505 = vpop.xlane.xlu0 %5504
    %v5506 = vsel %vm3773, %v5476, 0.0
    %5507 = vadd.xlane.f32.xlu0 %v5506
    %v5508 = vpop.xlane.xlu0 %5507
    %v5509 = vsel %vm3773, %v5477, 0.0
    %5510 = vadd.xlane.f32.xlu0 %v5509
    %v5511 = vpop.xlane.xlu0 %5510
    %v5512 = vsel %vm3773, %v5478, 0.0
    %5513 = vadd.xlane.f32.xlu0 %v5512
    %v5514 = vpop.xlane.xlu0 %5513
    %v5515 = vsel %vm3773, %v5479, 0.0
    %5516 = vadd.xlane.f32.xlu0 %v5515
    %v5517 = vpop.xlane.xlu0 %5516
    %v5518 = vsel %vm3773, %v5480, 0.0
    %5519 = vadd.xlane.f32.xlu0 %v5518
    %v5520 = vpop.xlane.xlu0 %5519
    %v5521 = vsel %vm3773, %v5481, 0.0
    %5522 = vadd.xlane.f32.xlu0 %v5521
    %v5523 = vpop.xlane.xlu0 %5522
    %v5524 = vsel %vm3773, %v5482, 0.0
    %5525 = vadd.xlane.f32.xlu0 %v5524
    %v5526 = vpop.xlane.xlu0 %5525
    %v5527 = vsel %vm3773, %v5483, 0.0
    %5528 = vadd.xlane.f32.xlu0 %v5527
    %v5529 = vpop.xlane.xlu0 %5528
    %v5530 = vsel %vm3773, %v5484, 0.0
    %5531 = vadd.xlane.f32.xlu0 %v5530
    %v5532 = vpop.xlane.xlu0 %5531
    %v5533 = vsel %vm3773, %v5485, 0.0
    %5534 = vadd.xlane.f32.xlu0 %v5533
    %v5535 = vpop.xlane.xlu0 %5534
    %v5536 = vsel %vm3773, %v5486, 0.0
    %5537 = vadd.xlane.f32.xlu0 %v5536
    %v5538 = vpop.xlane.xlu0 %5537
    %v5539 = vsel %vm3773, %v5487, 0.0
    %5540 = vadd.xlane.f32.xlu0 %v5539
    %v5541 = vpop.xlane.xlu0 %5540
    %v5542 = vsel %vm3773, %v5488, 0.0
    %5543 = vadd.xlane.f32.xlu0 %v5542
    %v5544 = vpop.xlane.xlu0 %5543
    %v5545 = vsel %vm3773, %v5489, 0.0
    %5546 = vadd.xlane.f32.xlu0 %v5545
    %v5547 = vpop.xlane.xlu0 %5546
    %v5548 = vsel %vm3773, %v5490, 0.0
    %5549 = vadd.xlane.f32.xlu0 %v5548
    %v5550 = vpop.xlane.xlu0 %5549
    %v5551 = vmul.f32 %v5493, %v4704
    %v5552 = vmul.f32 %v5496, %v4704
    %v5553 = vmul.f32 %v5499, %v4704
    %v5554 = vmul.f32 %v5502, %v4704
    %v5555 = vmul.f32 %v5505, %v4704
    %v5556 = vmul.f32 %v5508, %v4704
    %v5557 = vmul.f32 %v5511, %v4704
    %v5558 = vmul.f32 %v5514, %v4704
    %v5559 = vmul.f32 %v5517, %v4704
    %v5560 = vmul.f32 %v5520, %v4704
    %v5561 = vmul.f32 %v5523, %v4704
    %v5562 = vmul.f32 %v5526, %v4704
    %v5563 = vmul.f32 %v5529, %v4704
    %v5564 = vmul.f32 %v5532, %v4704
    %v5565 = vmul.f32 %v5535, %v4704
    %v5566 = vmul.f32 %v5538, %v4704
    %v5567 = vmul.f32 %v5541, %v4704
    %v5568 = vmul.f32 %v5544, %v4704
    %v5569 = vmul.f32 %v5547, %v4704
    %v5570 = vmul.f32 %v5550, %v4704
    %v5571 = vsub.f32 %v5471, %v5551
    %v5572 = vsub.f32 %v5472, %v5552
    %v5573 = vsub.f32 %v5473, %v5553
    %v5574 = vsub.f32 %v5474, %v5554
    %v5575 = vsub.f32 %v5475, %v5555
    %v5576 = vsub.f32 %v5476, %v5556
    %v5577 = vsub.f32 %v5477, %v5557
    %v5578 = vsub.f32 %v5478, %v5558
    %v5579 = vsub.f32 %v5479, %v5559
    %v5580 = vsub.f32 %v5480, %v5560
    %v5581 = vsub.f32 %v5481, %v5561
    %v5582 = vsub.f32 %v5482, %v5562
    %v5583 = vsub.f32 %v5483, %v5563
    %v5584 = vsub.f32 %v5484, %v5564
    %v5585 = vsub.f32 %v5485, %v5565
    %v5586 = vsub.f32 %v5486, %v5566
    %v5587 = vsub.f32 %v5487, %v5567
    %v5588 = vsub.f32 %v5488, %v5568
    %v5589 = vsub.f32 %v5489, %v5569
    %v5590 = vsub.f32 %v5490, %v5570
    %v5591 = vmul.f32 %v5571, %v5571
    %v5592 = vmul.f32 %v5572, %v5572
    %v5593 = vmul.f32 %v5573, %v5573
    %v5594 = vmul.f32 %v5574, %v5574
    %v5595 = vmul.f32 %v5575, %v5575
    %v5596 = vmul.f32 %v5576, %v5576
    %v5597 = vmul.f32 %v5577, %v5577
    %v5598 = vmul.f32 %v5578, %v5578
    %v5599 = vmul.f32 %v5579, %v5579
    %v5600 = vmul.f32 %v5580, %v5580
    %v5601 = vmul.f32 %v5581, %v5581
    %v5602 = vmul.f32 %v5582, %v5582
    %v5603 = vmul.f32 %v5583, %v5583
    %v5604 = vmul.f32 %v5584, %v5584
    %v5605 = vmul.f32 %v5585, %v5585
    %v5606 = vmul.f32 %v5586, %v5586
    %v5607 = vmul.f32 %v5587, %v5587
    %v5608 = vmul.f32 %v5588, %v5588
    %v5609 = vmul.f32 %v5589, %v5589
    %v5610 = vmul.f32 %v5590, %v5590
    %v5611 = vsel %vm3773, %v5591, 0.0
    %5612 = vadd.xlane.f32.xlu0 %v5611
    %v5613 = vpop.xlane.xlu0 %5612
    %v5614 = vsel %vm3773, %v5592, 0.0
    %5615 = vadd.xlane.f32.xlu0 %v5614
    %v5616 = vpop.xlane.xlu0 %5615
    %v5617 = vsel %vm3773, %v5593, 0.0
    %5618 = vadd.xlane.f32.xlu0 %v5617
    %v5619 = vpop.xlane.xlu0 %5618
    %v5620 = vsel %vm3773, %v5594, 0.0
    %5621 = vadd.xlane.f32.xlu0 %v5620
    %v5622 = vpop.xlane.xlu0 %5621
    %v5623 = vsel %vm3773, %v5595, 0.0
    %5624 = vadd.xlane.f32.xlu0 %v5623
    %v5625 = vpop.xlane.xlu0 %5624
    %v5626 = vsel %vm3773, %v5596, 0.0
    %5627 = vadd.xlane.f32.xlu0 %v5626
    %v5628 = vpop.xlane.xlu0 %5627
    %v5629 = vsel %vm3773, %v5597, 0.0
    %5630 = vadd.xlane.f32.xlu0 %v5629
    %v5631 = vpop.xlane.xlu0 %5630
    %v5632 = vsel %vm3773, %v5598, 0.0
    %5633 = vadd.xlane.f32.xlu0 %v5632
    %v5634 = vpop.xlane.xlu0 %5633
    %v5635 = vsel %vm3773, %v5599, 0.0
    %5636 = vadd.xlane.f32.xlu0 %v5635
    %v5637 = vpop.xlane.xlu0 %5636
    %v5638 = vsel %vm3773, %v5600, 0.0
    %5639 = vadd.xlane.f32.xlu0 %v5638
    %v5640 = vpop.xlane.xlu0 %5639
    %v5641 = vsel %vm3773, %v5601, 0.0
    %5642 = vadd.xlane.f32.xlu0 %v5641
    %v5643 = vpop.xlane.xlu0 %5642
    %v5644 = vsel %vm3773, %v5602, 0.0
    %5645 = vadd.xlane.f32.xlu0 %v5644
    %v5646 = vpop.xlane.xlu0 %5645
    %v5647 = vsel %vm3773, %v5603, 0.0
    %5648 = vadd.xlane.f32.xlu0 %v5647
    %v5649 = vpop.xlane.xlu0 %5648
    %v5650 = vsel %vm3773, %v5604, 0.0
    %5651 = vadd.xlane.f32.xlu0 %v5650
    %v5652 = vpop.xlane.xlu0 %5651
    %v5653 = vsel %vm3773, %v5605, 0.0
    %5654 = vadd.xlane.f32.xlu0 %v5653
    %v5655 = vpop.xlane.xlu0 %5654
    %v5656 = vsel %vm3773, %v5606, 0.0
    %5657 = vadd.xlane.f32.xlu0 %v5656
    %v5658 = vpop.xlane.xlu0 %5657
    %v5659 = vsel %vm3773, %v5607, 0.0
    %5660 = vadd.xlane.f32.xlu0 %v5659
    %v5661 = vpop.xlane.xlu0 %5660
    %v5662 = vsel %vm3773, %v5608, 0.0
    %5663 = vadd.xlane.f32.xlu0 %v5662
    %v5664 = vpop.xlane.xlu0 %5663
    %v5665 = vsel %vm3773, %v5609, 0.0
    %5666 = vadd.xlane.f32.xlu0 %v5665
    %v5667 = vpop.xlane.xlu0 %5666
    %v5668 = vsel %vm3773, %v5610, 0.0
    %5669 = vadd.xlane.f32.xlu0 %v5668
    %v5670 = vpop.xlane.xlu0 %5669
    %v5671 = vmul.f32 %v5613, %v4704
    %v5672 = vmul.f32 %v5616, %v4704
    %v5673 = vmul.f32 %v5619, %v4704
    %v5674 = vmul.f32 %v5622, %v4704
    %v5675 = vmul.f32 %v5625, %v4704
    %v5676 = vmul.f32 %v5628, %v4704
    %v5677 = vmul.f32 %v5631, %v4704
    %v5678 = vmul.f32 %v5634, %v4704
    %v5679 = vmul.f32 %v5637, %v4704
    %v5680 = vmul.f32 %v5640, %v4704
    %v5681 = vmul.f32 %v5643, %v4704
    %v5682 = vmul.f32 %v5646, %v4704
    %v5683 = vmul.f32 %v5649, %v4704
    %v5684 = vmul.f32 %v5652, %v4704
    %v5685 = vmul.f32 %v5655, %v4704
    %v5686 = vmul.f32 %v5658, %v4704
    %v5687 = vmul.f32 %v5661, %v4704
    %v5688 = vmul.f32 %v5664, %v4704
    %v5689 = vmul.f32 %v5667, %v4704
    %v5690 = vmul.f32 %v5670, %v4704
    %v5691 = vadd.f32 %v5671, 1e-05
    %v5692 = vadd.f32 %v5672, 1e-05
    %v5693 = vadd.f32 %v5673, 1e-05
    %v5694 = vadd.f32 %v5674, 1e-05
    %v5695 = vadd.f32 %v5675, 1e-05
    %v5696 = vadd.f32 %v5676, 1e-05
    %v5697 = vadd.f32 %v5677, 1e-05
    %v5698 = vadd.f32 %v5678, 1e-05
    %v5699 = vadd.f32 %v5679, 1e-05
    %v5700 = vadd.f32 %v5680, 1e-05
    %v5701 = vadd.f32 %v5681, 1e-05
    %v5702 = vadd.f32 %v5682, 1e-05
    %v5703 = vadd.f32 %v5683, 1e-05
    %v5704 = vadd.f32 %v5684, 1e-05
    %v5705 = vadd.f32 %v5685, 1e-05
    %v5706 = vadd.f32 %v5686, 1e-05
    %v5707 = vadd.f32 %v5687, 1e-05
    %v5708 = vadd.f32 %v5688, 1e-05
    %v5709 = vadd.f32 %v5689, 1e-05
    %v5710 = vadd.f32 %v5690, 1e-05
    %v5711 = vrsqrt.pop %v5691
    %v5712 = vrsqrt.pop %v5692
    %v5713 = vrsqrt.pop %v5693
    %v5714 = vrsqrt.pop %v5694
    %v5715 = vrsqrt.pop %v5695
    %v5716 = vrsqrt.pop %v5696
    %v5717 = vrsqrt.pop %v5697
    %v5718 = vrsqrt.pop %v5698
    %v5719 = vrsqrt.pop %v5699
    %v5720 = vrsqrt.pop %v5700
    %v5721 = vrsqrt.pop %v5701
    %v5722 = vrsqrt.pop %v5702
    %v5723 = vrsqrt.pop %v5703
    %v5724 = vrsqrt.pop %v5704
    %v5725 = vrsqrt.pop %v5705
    %v5726 = vrsqrt.pop %v5706
    %v5727 = vrsqrt.pop %v5707
    %v5728 = vrsqrt.pop %v5708
    %v5729 = vrsqrt.pop %v5709
    %v5730 = vrsqrt.pop %v5710
    %v5731 = vmul.f32 %v5571, %v5711
    %v5732 = vmul.f32 %v5572, %v5712
    %v5733 = vmul.f32 %v5573, %v5713
    %v5734 = vmul.f32 %v5574, %v5714
    %v5735 = vmul.f32 %v5575, %v5715
    %v5736 = vmul.f32 %v5576, %v5716
    %v5737 = vmul.f32 %v5577, %v5717
    %v5738 = vmul.f32 %v5578, %v5718
    %v5739 = vmul.f32 %v5579, %v5719
    %v5740 = vmul.f32 %v5580, %v5720
    %v5741 = vmul.f32 %v5581, %v5721
    %v5742 = vmul.f32 %v5582, %v5722
    %v5743 = vmul.f32 %v5583, %v5723
    %v5744 = vmul.f32 %v5584, %v5724
    %v5745 = vmul.f32 %v5585, %v5725
    %v5746 = vmul.f32 %v5586, %v5726
    %v5747 = vmul.f32 %v5587, %v5727
    %v5748 = vmul.f32 %v5588, %v5728
    %v5749 = vmul.f32 %v5589, %v5729
    %v5750 = vmul.f32 %v5590, %v5730
    %v5751 = vld [vmem:[%s10] sm:$0x1]
    %v5753 = vlaneseq
    %v5754 = vshrl.u32 %v5753, 7
    %v5755 = vsub.s32 0, %v5754
    %v5756 = vrot.slane %v5751, %v5755
    %v5758 = vmul.f32 %v5731, %v5756
    %v5759 = vmul.f32 %v5732, %v5756
    %v5760 = vmul.f32 %v5733, %v5756
    %v5761 = vmul.f32 %v5734, %v5756
    %v5762 = vmul.f32 %v5735, %v5756
    %v5763 = vmul.f32 %v5736, %v5756
    %v5764 = vmul.f32 %v5737, %v5756
    %v5765 = vmul.f32 %v5738, %v5756
    %v5766 = vmul.f32 %v5739, %v5756
    %v5767 = vmul.f32 %v5740, %v5756
    %v5768 = vmul.f32 %v5741, %v5756
    %v5769 = vmul.f32 %v5742, %v5756
    %v5770 = vmul.f32 %v5743, %v5756
    %v5771 = vmul.f32 %v5744, %v5756
    %v5772 = vmul.f32 %v5745, %v5756
    %v5773 = vmul.f32 %v5746, %v5756
    %v5774 = vmul.f32 %v5747, %v5756
    %v5775 = vmul.f32 %v5748, %v5756
    %v5776 = vmul.f32 %v5749, %v5756
    %v5777 = vmul.f32 %v5750, %v5756
    %v5778 = vld [vmem:[%s11] sm:$0x1]
    %v5780 = vlaneseq
    %v5781 = vshrl.u32 %v5780, 7
    %v5782 = vsub.s32 0, %v5781
    %v5783 = vrot.slane %v5778, %v5782
    %v5785 = vadd.f32 %v5758, %v5783
    %v5786 = vadd.f32 %v5759, %v5783
    %v5787 = vadd.f32 %v5760, %v5783
    %v5788 = vadd.f32 %v5761, %v5783
    %v5789 = vadd.f32 %v5762, %v5783
    %v5790 = vadd.f32 %v5763, %v5783
    %v5791 = vadd.f32 %v5764, %v5783
    %v5792 = vadd.f32 %v5765, %v5783
    %v5793 = vadd.f32 %v5766, %v5783
    %v5794 = vadd.f32 %v5767, %v5783
    %v5795 = vadd.f32 %v5768, %v5783
    %v5796 = vadd.f32 %v5769, %v5783
    %v5797 = vadd.f32 %v5770, %v5783
    %v5798 = vadd.f32 %v5771, %v5783
    %v5799 = vadd.f32 %v5772, %v5783
    %v5800 = vadd.f32 %v5773, %v5783
    %v5801 = vadd.f32 %v5774, %v5783
    %v5802 = vadd.f32 %v5775, %v5783
    %v5803 = vadd.f32 %v5776, %v5783
    %v5804 = vadd.f32 %v5777, %v5783
    %v5805 = vmax.f32 %v5785, 0.0
    %v5806 = vmax.f32 %v5786, 0.0
    %v5807 = vmax.f32 %v5787, 0.0
    %v5808 = vmax.f32 %v5788, 0.0
    %v5809 = vmax.f32 %v5789, 0.0
    %v5810 = vmax.f32 %v5790, 0.0
    %v5811 = vmax.f32 %v5791, 0.0
    %v5812 = vmax.f32 %v5792, 0.0
    %v5813 = vmax.f32 %v5793, 0.0
    %v5814 = vmax.f32 %v5794, 0.0
    %v5815 = vmax.f32 %v5795, 0.0
    %v5816 = vmax.f32 %v5796, 0.0
    %v5817 = vmax.f32 %v5797, 0.0
    %v5818 = vmax.f32 %v5798, 0.0
    %v5819 = vmax.f32 %v5799, 0.0
    %v5820 = vmax.f32 %v5800, 0.0
    %v5821 = vmax.f32 %v5801, 0.0
    %v5822 = vmax.f32 %v5802, 0.0
    %v5823 = vmax.f32 %v5803, 0.0
    %v5824 = vmax.f32 %v5804, 0.0
    %5825 = vst.msk [vmem:[%s12] sm:$0xff] %vm3773, %v5805
    %5826 = vst.msk [vmem:[%s12 + $0x8] sm:$0xff] %vm3773, %v5806
    %5827 = vst.msk [vmem:[%s12 + $0x10] sm:$0xff] %vm3773, %v5807
    %5828 = vst.msk [vmem:[%s12 + $0x18] sm:$0xff] %vm3773, %v5808
    %5829 = vst.msk [vmem:[%s12 + $0x20] sm:$0xff] %vm3773, %v5809
    %5830 = vst.msk [vmem:[%s12 + $0x28] sm:$0xff] %vm3773, %v5810
    %5831 = vst.msk [vmem:[%s12 + $0x30] sm:$0xff] %vm3773, %v5811
    %5832 = vst.msk [vmem:[%s12 + $0x38] sm:$0xff] %vm3773, %v5812
    %5833 = vst.msk [vmem:[%s12 + $0x40] sm:$0xff] %vm3773, %v5813
    %5834 = vst.msk [vmem:[%s12 + $0x48] sm:$0xff] %vm3773, %v5814
    %5835 = vst.msk [vmem:[%s12 + $0x50] sm:$0xff] %vm3773, %v5815
    %5836 = vst.msk [vmem:[%s12 + $0x58] sm:$0xff] %vm3773, %v5816
    %5837 = vst.msk [vmem:[%s12 + $0x60] sm:$0xff] %vm3773, %v5817
    %5838 = vst.msk [vmem:[%s12 + $0x68] sm:$0xff] %vm3773, %v5818
    %5839 = vst.msk [vmem:[%s12 + $0x70] sm:$0xff] %vm3773, %v5819
    %5840 = vst.msk [vmem:[%s12 + $0x78] sm:$0xff] %vm3773, %v5820
    %5841 = vst.msk [vmem:[%s12 + $0x80] sm:$0xff] %vm3773, %v5821
    %5842 = vst.msk [vmem:[%s12 + $0x88] sm:$0xff] %vm3773, %v5822
    %5843 = vst.msk [vmem:[%s12 + $0x90] sm:$0xff] %vm3773, %v5823
    %5844 = vst.msk [vmem:[%s12 + $0x98] sm:$0xff] %vm3773, %v5824
  $region57: #{allset_transformer_forward.4} parent=0 // pred_fallthru
    _
  // Predicated region
  $region58: #{allset_transformer_forward.4} parent=0 // pred_check
    _
  $region59: #{allset_transformer_forward.4} parent=0 // pred_check_branch
    %5846 = sbr.rel (0) target = $region61
  $region60: #{allset_transformer_forward.4} parent=0 // pred_region
    _
  $region61: #{allset_transformer_forward.4} parent=0 // pred_fallthru
    _
  // Predicated region
  $region62: #{allset_transformer_forward.4} parent=0 // pred_check
    _
  $region63: #{allset_transformer_forward.4} parent=0 // pred_check_branch
    %5848 = sbr.rel (0) target = $region65
  $region64: #{allset_transformer_forward.4} parent=0 // pred_region
    _
  $region65: #{allset_transformer_forward.4} parent=0 // pred_fallthru
    _

</llo_original>
